<compile_context>
chip_gen: v6e
topology: v6e:2x2x1
jax: 0.10.0
libtpu: 0.0.40
codegen_flags: <defaults>
</compile_context>

<pallas_src>
import numpy as np
import jax
import jax.numpy as jnp
from jax import lax
from jax.experimental import pallas as pl
from jax.experimental.pallas import tpu as pltpu


def _round_up(x, m):
    return ((x + m - 1) // m) * m


def _dual_core_chip():
    """True on chips with 2 TensorCores per chip (v7x)."""
    try:
        kind = jax.devices()[0].device_kind.lower()
    except Exception:
        return False
    return ("v7" in kind) or ("7x" in kind)


# -----------------------------------------------------------------------------
# Fused GRU kernel. Per (batch-block, time-block) grid step:
#   1) input projection gi = x @ W_ih + bias for the whole TT-step block with
#      one (TT*BB, Ep) x (Ep, 3Hp) MXU matmul into VMEM scratch (no HBM gi),
#   2) TT unrolled recurrence steps (h @ W_hh + gates) with the hidden state
#      carried across time-grid steps in a VMEM scratch buffer.
# Time blocks entirely past the block's max sequence length are skipped.
# -----------------------------------------------------------------------------
def gru_kernel(blkmax_ref, lens_ref, x_ref, wih_ref, gib_ref, whh_ref, bhn_ref,
               out_ref, hid_ref, h_scratch, gi_scratch):
    TT, BB, Ep = x_ref.shape
    Hp = hid_ref.shape[-1]
    b_block = pl.program_id(0)
    t_block = pl.program_id(1)
    t0 = t_block * TT

    @pl.when(t_block == 0)
    def _():
        h_scratch[...] = jnp.zeros_like(h_scratch)       # PyTorch default h0=0

    max_len = blkmax_ref[b_block]                        # SMEM scalar

    @pl.when(t0 < max_len)                               # skip dead time blocks
    def _():
        # ---- fused, time-parallel input projection for this block (MXU) ----
        xblk = x_ref[...].reshape(TT * BB, Ep)
        gi = jnp.dot(xblk, wih_ref[...], preferred_element_type=jnp.float32)
        gi_scratch[...] = (gi + gib_ref[...].astype(jnp.float32)
                           ).reshape(TT, BB, 3 * Hp)

        # hoisted loads (constant across the inner time loop)
        lens = lens_ref[...]                             # (BB, 1) int32
        whh = whh_ref[...]                               # (Hp, 3Hp)
        bhn = bhn_ref[...].astype(jnp.float32)           # (1, Hp)  b_hh_n

        def step(lt, h):
            t = t0 + lt
            gi_t = gi_scratch[lt]                        # (BB, 3Hp) f32
            gh = jnp.dot(h.astype(whh.dtype), whh,
                         preferred_element_type=jnp.float32)
            # gate order r, z, n (PyTorch); Hp-aligned lane slices
            r = jax.nn.sigmoid(gi_t[:, :Hp] + gh[:, :Hp])
            z = jax.nn.sigmoid(gi_t[:, Hp:2 * Hp] + gh[:, Hp:2 * Hp])
            n = jnp.tanh(gi_t[:, 2 * Hp:] + r * (gh[:, 2 * Hp:] + bhn))
            h_new = (1.0 - z) * n + z * h
            mask = t < lens                              # (BB, 1) bool
            out_ref[lt] = jnp.where(mask, h_new, 0.0).astype(out_ref.dtype)
            return jnp.where(mask, h_new, h)             # freeze finished seqs

        h_scratch[...] = lax.fori_loop(0, TT, step, h_scratch[...], unroll=True)

    @pl.when(t0 >= max_len)
    def _():
        out_ref[...] = jnp.zeros_like(out_ref)           # ragged / padded tail

    # write every grid step (robust w.r.t. output writeback semantics)
    hid_ref[0] = h_scratch[...].astype(hid_ref.dtype)


# -----------------------------------------------------------------------------
# Wrapper: pad to TPU-friendly geometry and launch the fused kernel.
# -----------------------------------------------------------------------------
def gru_forward_pallas(embedded, lens, w_ih, w_hh, b_ih, b_hh, *, tt=16,
                       single_buffer_weights=True):
    """embedded: [T,B,E], lens: [B] int, w_ih: [E,3H], w_hh: [H,3H]."""
    T, B, E = embedded.shape
    H = w_hh.shape[0]
    f = embedded.dtype                    # activation dtype (f32 here; bf16 ok)
    bytes_f = jnp.dtype(f).itemsize

    # padded geometry: lanes 128; sublanes 8 for f32 (16 for bf16 packing)
    Hp = _round_up(H, 128)
    Ep = _round_up(E, 128)
    sub = 8 if bytes_f >= 4 else 16
    if _dual_core_chip() and B > sub:
        Bp = _round_up(B, 2 * sub)        # 2 batch blocks -> both v7x TCs busy
        BB = Bp // 2
    else:
        Bp = _round_up(B, sub)
        BB = Bp
    nb = Bp // BB
    TT = max(1, min(tt, T))
    Tp = _round_up(T, TT)
    nt = Tp // TT

    # --- pad weights per gate so gate boundaries are lane-aligned -------------
    def pad_gates(w, in_dim, in_pad):     # (in_dim, 3H) -> (in_pad, 3Hp)
        gs = [w[:, i * H:(i + 1) * H] for i in range(3)]
        gs = [jnp.pad(g, ((0, in_pad - in_dim), (0, Hp - H))) for g in gs]
        return jnp.concatenate(gs, axis=1)

    def pad_bias(b):                      # (3H,) -> (3Hp,)
        return jnp.concatenate(
            [jnp.pad(b[i * H:(i + 1) * H], (0, Hp - H)) for i in range(3)])

    w_ih_p = pad_gates(w_ih, E, Ep).astype(f)
    w_hh_p = pad_gates(w_hh, H, Hp).astype(f)
    b_ih_p = pad_bias(b_ih)
    b_hh_p = pad_bias(b_hh)
    zeros_h = jnp.zeros((Hp,), b_hh_p.dtype)
    # fold r/z hidden biases into the precomputed input-projection bias
    gi_bias = (b_ih_p + jnp.concatenate(
        [b_hh_p[:Hp], b_hh_p[Hp:2 * Hp], zeros_h])).reshape(1, 3 * Hp).astype(f)
    b_hhn = b_hh_p[2 * Hp:].reshape(1, Hp).astype(f)     # stays inside r*(...)

    # --- pad activations / lengths -------------------------------------------
    x = jnp.pad(embedded, ((0, Tp - T), (0, Bp - B), (0, Ep - E))).astype(f)
    lens_flat = jnp.pad(lens.astype(jnp.int32), (0, Bp - B))
    lens_col = lens_flat.reshape(Bp, 1)
    # per-batch-block max length, scalar-prefetched into SMEM (block skipping)
    blkmax = jnp.max(lens_flat.reshape(nb, BB), axis=1).astype(jnp.int32)
    # TODO(synk): the (BB,1) lens vector stays in VMEM for the per-row mask;
    # only the block-skip scalar moved to SMEM.

    # constant-index weight/bias blocks: single-buffer to halve their VMEM
    def resident(shape):
        if single_buffer_weights:
            return pl.BlockSpec(shape, lambda b, t, mx: (0,) * len(shape),
                                pipeline_mode=pl.Buffered(1))
        return pl.BlockSpec(shape, lambda b, t, mx: (0,) * len(shape))

    # rough scoped-VMEM requirement (weights + double-buffered x/out + scratch)
    wbuf = 1 if single_buffer_weights else 2
    est = (2 * TT * BB * Ep * bytes_f + 2 * TT * BB * Hp * bytes_f
           + 2 * BB * Hp * bytes_f
           + wbuf * (Ep + Hp + 2) * 3 * Hp * bytes_f
           + TT * BB * 3 * Hp * 4 + BB * Hp * 4)
    vmem_limit = int(min(max(2 * est, 32 * 1024 * 1024), 56 * 1024 * 1024))

    grid_spec = pltpu.PrefetchScalarGridSpec(
        num_scalar_prefetch=1,
        grid=(nb, nt),
        in_specs=[
            pl.BlockSpec((BB, 1), lambda b, t, mx: (b, 0)),          # lens
            pl.BlockSpec((TT, BB, Ep), lambda b, t, mx: (t, b, 0)),  # x
            resident((Ep, 3 * Hp)),                                  # W_ih
            resident((1, 3 * Hp)),                                   # gi bias
            resident((Hp, 3 * Hp)),                                  # W_hh
            resident((1, Hp)),                                       # b_hh_n
        ],
        out_specs=[
            pl.BlockSpec((TT, BB, Hp), lambda b, t, mx: (t, b, 0)),  # outputs
            pl.BlockSpec((1, BB, Hp), lambda b, t, mx: (0, b, 0)),   # hidden
        ],
        scratch_shapes=[
            pltpu.VMEM((BB, Hp), jnp.float32),            # h carry
            pltpu.VMEM((TT, BB, 3 * Hp), jnp.float32),    # per-block gi
        ],
    )

    outs_p, hid_p = pl.pallas_call(
        gru_kernel,
        grid_spec=grid_spec,
        out_shape=(
            jax.ShapeDtypeStruct((Tp, Bp, Hp), f),
            jax.ShapeDtypeStruct((1, Bp, Hp), f),
        ),
        compiler_params=pltpu.CompilerParams(
            dimension_semantics=("parallel", "arbitrary"),
            vmem_limit_bytes=vmem_limit),
    )(blkmax, lens_col, x, w_ih_p, gi_bias, w_hh_p, b_hhn)

    return outs_p[:T, :B, :H], hid_p[:, :B, :H]


# -----------------------------------------------------------------------------
# EncoderRNN forward (embedding gather is glue; projection+recurrence is Pallas)
# -----------------------------------------------------------------------------
def encoder_rnn_forward(params, input_seqs, input_lens, *,
                        single_buffer_weights=True):
    """input_seqs: [T, B] int32 token ids; input_lens: [B] int32."""
    # TODO(synk): fold the embedding gather into the kernel (scalar-prefetched
    # token ids + pl.Element row index_map) to avoid the [T,B,E] HBM round trip.
    embedded = params["embedding"][input_seqs]            # [T, B, E]
    return gru_forward_pallas(
        embedded, input_lens,
        params["w_ih"], params["w_hh"], params["b_ih"], params["b_hh"],
        single_buffer_weights=single_buffer_weights)


# -----------------------------------------------------------------------------
# Deterministic parameter init (mirrors nn.Embedding + nn.GRU + init_gru)
# -----------------------------------------------------------------------------
def init_params(key, vocab, embed_size, hidden_size, padding_idx=3):
    k_emb, k_ih, k_hh, k_bih, k_bhh = jax.random.split(key, 5)
    emb = jax.random.normal(k_emb, (vocab, embed_size), jnp.float32)
    emb = emb.at[padding_idx].set(0.0)                    # padding_idx row = 0

    bound = 1.0 / np.sqrt(hidden_size)
    w_ih = jax.random.uniform(k_ih, (embed_size, 3 * hidden_size),
                              jnp.float32, -bound, bound)
    hh_blocks = []                                        # init_gru: orthogonal
    for kk in jax.random.split(k_hh, 3):
        m = jax.random.normal(kk, (hidden_size, hidden_size), jnp.float32)
        q, _ = jnp.linalg.qr(m)
        hh_blocks.append(q)
    w_hh = jnp.concatenate(hh_blocks, axis=1)             # (H, 3H), gates r,z,n
    b_ih = jax.random.uniform(k_bih, (3 * hidden_size,), jnp.float32, -bound, bound)
    b_hh = jax.random.uniform(k_bhh, (3 * hidden_size,), jnp.float32, -bound, bound)
    return {"embedding": emb, "w_ih": w_ih, "w_hh": w_hh,
            "b_ih": b_ih, "b_hh": b_hh}


# -----------------------------------------------------------------------------
# Pure-JAX reference (same semantics as pack_padded_sequence + GRU + pad)
# -----------------------------------------------------------------------------
def gru_forward_ref(embedded, lens, w_ih, w_hh, b_ih, b_hh):
    T, B, E = embedded.shape
    H = w_hh.shape[0]
    h = jnp.zeros((B, H), jnp.float32)
    outs = []
    for t in range(T):
        gi = embedded[t] @ w_ih + b_ih
        gh = h @ w_hh + b_hh
        r = jax.nn.sigmoid(gi[:, :H] + gh[:, :H])
        z = jax.nn.sigmoid(gi[:, H:2 * H] + gh[:, H:2 * H])
        n = jnp.tanh(gi[:, 2 * H:] + r * gh[:, 2 * H:])
        h_new = (1.0 - z) * n + z * h
        mask = (t < lens)[:, None]
        h = jnp.where(mask, h_new, h)
        outs.append(jnp.where(mask, h_new, 0.0))
    return jnp.stack(outs), h[None]


if __name__ == "__main__":
    # small shapes: vocab=16, embed=32, hidden=32, T=16, B=2
    VOCAB, EMBED, HIDDEN, T, B = 16, 32, 32, 16, 2
    key = jax.random.PRNGKey(0)
    k_params, k_tok = jax.random.split(key)

    params = init_params(k_params, VOCAB, EMBED, HIDDEN)
    input_seqs = jax.random.randint(k_tok, (T, B), 0, VOCAB, dtype=jnp.int32)
    input_lens = jnp.array([T, 5], dtype=jnp.int32)       # max(len) == T

    def run(single_buffer_weights):
        fwd = jax.jit(lambda p, s, l: encoder_rnn_forward(
            p, s, l, single_buffer_weights=single_buffer_weights))
        o, h = fwd(params, input_seqs, input_lens)
        return jax.block_until_ready(o), jax.block_until_ready(h)

    try:
        outputs, hidden = run(True)
    except Exception:
        # Fallback for JAX builds that reject pipeline_mode=pl.Buffered(1) on
        # the main grid: identical math with default double-buffered weights.
        outputs, hidden = run(False)

    # correctness check against a pure-JAX reference
    embedded = params["embedding"][input_seqs]
    ref_out, ref_hid = gru_forward_ref(
        embedded, input_lens, params["w_ih"], params["w_hh"],
        params["b_ih"], params["b_hh"])
    np.testing.assert_allclose(np.asarray(outputs), np.asarray(ref_out),
                               rtol=1e-4, atol=1e-4)
    np.testing.assert_allclose(np.asarray(hidden), np.asarray(ref_hid),
                               rtol=1e-4, atol=1e-4)

    assert outputs.shape == (T, B, HIDDEN) and hidden.shape == (1, B, HIDDEN)
    print("KERNEL_OK")
</pallas_src>

<mosaic_0001>
module attributes {stable_mosaic.version = 11 : i64} {
  func.func @gru_kernel(%arg0: i32, %arg1: i32, %arg2: memref<1xi32, #tpu.memory_space<smem>>, %arg3: memref<8x1xi32, #tpu.memory_space<vmem>>, %arg4: memref<16x8x128xf32, #tpu.memory_space<vmem>>, %arg5: memref<128x384xf32, #tpu.memory_space<vmem>>, %arg6: memref<1x384xf32, #tpu.memory_space<vmem>>, %arg7: memref<128x384xf32, #tpu.memory_space<vmem>>, %arg8: memref<1x128xf32, #tpu.memory_space<vmem>>, %arg9: memref<16x8x128xf32, #tpu.memory_space<vmem>>, %arg10: memref<1x8x128xf32, #tpu.memory_space<vmem>>, %arg11: memref<8x128xf32, #tpu.memory_space<vmem>>, %arg12: memref<16x8x384xf32, #tpu.memory_space<vmem>>) attributes {dimension_semantics = [#tpu.dimension_semantics<parallel>, #tpu.dimension_semantics<arbitrary>], iteration_bounds = array<i64: 1, 1>, scalar_prefetch = 1 : i64, scratch_operands = 2 : i64, tpu.core_type = #tpu.core_type<tc>, window_params = [{transform_indices = @transform_0, window_bounds = array<i64: 8, 1>}, {transform_indices = @transform_1, window_bounds = array<i64: 16, 8, 128>}, {pipeline_mode = #tpu.pipeline_mode<synchronous>, transform_indices = @transform_2, window_bounds = array<i64: 128, 384>}, {pipeline_mode = #tpu.pipeline_mode<synchronous>, transform_indices = @transform_3, window_bounds = array<i64: 1, 384>}, {pipeline_mode = #tpu.pipeline_mode<synchronous>, transform_indices = @transform_4, window_bounds = array<i64: 128, 384>}, {pipeline_mode = #tpu.pipeline_mode<synchronous>, transform_indices = @transform_5, window_bounds = array<i64: 1, 128>}, {transform_indices = @transform_6, window_bounds = array<i64: 16, 8, 128>}, {transform_indices = @transform_7, window_bounds = array<i64: 1, 8, 128>}]} {
    %c16_i32 = arith.constant 16 : i32
    %0 = arith.muli %arg1, %c16_i32 : i32
    %c0_i32 = arith.constant 0 : i32
    %1 = arith.cmpi eq, %arg1, %c0_i32 : i32
    %2 = arith.extui %1 : i1 to i32
    %c0_i32_0 = arith.constant 0 : i32
    %3 = arith.cmpi ne, %2, %c0_i32_0 : i32
    scf.if %3 {
      %cst = arith.constant 0.000000e+00 : f32
      %16 = vector.broadcast %cst : f32 to vector<8x128xf32>
      %c0_7 = arith.constant 0 : index
      %c0_8 = arith.constant 0 : index
      %17 = vector.load %arg11[%c0_7, %c0_8] : memref<8x128xf32, #tpu.memory_space<vmem>>, vector<8x128xf32>
      tpu.vector_store %arg11[%c0_7, %c0_8], %16 {strides = array<i32>} : memref<8x128xf32, #tpu.memory_space<vmem>>, vector<8x128xf32>,
    } else {
    }
    %4 = arith.index_cast %arg0 : i32 to index
    %5 = memref.load %arg2[%4] : memref<1xi32, #tpu.memory_space<smem>>
    %6 = arith.cmpi slt, %0, %5 : i32
    %7 = arith.extui %6 : i1 to i32
    %c0_i32_1 = arith.constant 0 : i32
    %8 = arith.cmpi ne, %7, %c0_i32_1 : i32
    scf.if %8 {
      %c0_7 = arith.constant 0 : index
      %c0_8 = arith.constant 0 : index
      %c0_9 = arith.constant 0 : index
      %16 = vector.load %arg4[%c0_7, %c0_8, %c0_9] : memref<16x8x128xf32, #tpu.memory_space<vmem>>, vector<16x8x128xf32>
      %17 = vector.shape_cast %16 : vector<16x8x128xf32> to vector<128x128xf32>
      %c0_10 = arith.constant 0 : index
      %c0_11 = arith.constant 0 : index
      %18 = vector.load %arg5[%c0_10, %c0_11] : memref<128x384xf32, #tpu.memory_space<vmem>>, vector<128x384xf32>
      %cst = arith.constant dense<0.000000e+00> : vector<128x384xf32>
      %19 = tpu.matmul %17, %18, %cst {dimension_numbers = #tpu.dot_dimension_numbers<[1], [0], [0], [1], [0, 0, 1, 1], [], []>} : vector<128x128xf32>, vector<128x384xf32>, vector<128x384xf32> -> vector<128x384xf32>
      %c0_12 = arith.constant 0 : index
      %c0_13 = arith.constant 0 : index
      %20 = vector.load %arg6[%c0_12, %c0_13] : memref<1x384xf32, #tpu.memory_space<vmem>>, vector<1x384xf32>
      %21 = vector.broadcast %20 : vector<1x384xf32> to vector<128x384xf32>
      %22 = arith.addf %19, %21 : vector<128x384xf32>
      %23 = vector.shape_cast %22 : vector<128x384xf32> to vector<16x8x384xf32>
      %c0_14 = arith.constant 0 : index
      %c0_15 = arith.constant 0 : index
      %c0_16 = arith.constant 0 : index
      %24 = vector.load %arg12[%c0_14, %c0_15, %c0_16] : memref<16x8x384xf32, #tpu.memory_space<vmem>>, vector<16x8x384xf32>
      tpu.vector_store %arg12[%c0_14, %c0_15, %c0_16], %23 {strides = array<i32>} : memref<16x8x384xf32, #tpu.memory_space<vmem>>, vector<16x8x384xf32>,
      %c0_17 = arith.constant 0 : index
      %c0_18 = arith.constant 0 : index
      %25 = vector.load %arg3[%c0_17, %c0_18] : memref<8x1xi32, #tpu.memory_space<vmem>>, vector<8x1xi32>
      %c0_19 = arith.constant 0 : index
      %c0_20 = arith.constant 0 : index
      %26 = vector.load %arg7[%c0_19, %c0_20] : memref<128x384xf32, #tpu.memory_space<vmem>>, vector<128x384xf32>
      %c0_21 = arith.constant 0 : index
      %c0_22 = arith.constant 0 : index
      %27 = vector.load %arg8[%c0_21, %c0_22] : memref<1x128xf32, #tpu.memory_space<vmem>>, vector<1x128xf32>
      %c0_23 = arith.constant 0 : index
      %c0_24 = arith.constant 0 : index
      %28 = vector.load %arg11[%c0_23, %c0_24] : memref<8x128xf32, #tpu.memory_space<vmem>>, vector<8x128xf32>
      %c0_i32_25 = arith.constant 0 : i32
      %29 = arith.addi %0, %c0_i32_25 : i32
      %30 = arith.index_cast %c0_i32_25 : i32 to index
      %c0_26 = arith.constant 0 : index
      %c0_27 = arith.constant 0 : index
      %31 = vector.load %arg12[%30, %c0_26, %c0_27] : memref<16x8x384xf32, #tpu.memory_space<vmem>>, vector<1x8x384xf32>
      %32 = vector.shape_cast %31 : vector<1x8x384xf32> to vector<8x384xf32>
      %cst_28 = arith.constant dense<0.000000e+00> : vector<8x384xf32>
      %33 = tpu.matmul %28, %26, %cst_28 {dimension_numbers = #tpu.dot_dimension_numbers<[1], [0], [0], [1], [0, 0, 1, 1], [], []>} : vector<8x128xf32>, vector<128x384xf32>, vector<8x384xf32> -> vector<8x384xf32>
      %34 = vector.extract_strided_slice %32 {offsets = [0, 0], sizes = [8, 128], strides = [1, 1]} : vector<8x384xf32> to vector<8x128xf32>
      %35 = vector.extract_strided_slice %33 {offsets = [0, 0], sizes = [8, 128], strides = [1, 1]} : vector<8x384xf32> to vector<8x128xf32>
      %36 = arith.addf %34, %35 : vector<8x128xf32>
      %37 = arith.negf %36 : vector<8x128xf32>
      %38 = math.exp %37 : vector<8x128xf32>
      %cst_29 = arith.constant 1.000000e+00 : f32
      %39 = vector.broadcast %cst_29 : f32 to vector<8x128xf32>
      %40 = arith.addf %39, %38 : vector<8x128xf32>
      %41 = arith.divf %39, %40 : vector<8x128xf32>
      %42 = vector.extract_strided_slice %32 {offsets = [0, 128], sizes = [8, 128], strides = [1, 1]} : vector<8x384xf32> to vector<8x128xf32>
      %43 = vector.extract_strided_slice %33 {offsets = [0, 128], sizes = [8, 128], strides = [1, 1]} : vector<8x384xf32> to vector<8x128xf32>
      %44 = arith.addf %42, %43 : vector<8x128xf32>
      %45 = arith.negf %44 : vector<8x128xf32>
      %46 = math.exp %45 : vector<8x128xf32>
      %cst_30 = arith.constant 1.000000e+00 : f32
      %47 = vector.broadcast %cst_30 : f32 to vector<8x128xf32>
      %48 = arith.addf %47, %46 : vector<8x128xf32>
      %49 = arith.divf %47, %48 : vector<8x128xf32>
      %50 = vector.extract_strided_slice %32 {offsets = [0, 256], sizes = [8, 128], strides = [1, 1]} : vector<8x384xf32> to vector<8x128xf32>
      %51 = vector.extract_strided_slice %33 {offsets = [0, 256], sizes = [8, 128], strides = [1, 1]} : vector<8x384xf32> to vector<8x128xf32>
      %52 = vector.broadcast %27 : vector<1x128xf32> to vector<8x128xf32>
      %53 = arith.addf %51, %52 : vector<8x128xf32>
      %54 = arith.mulf %41, %53 : vector<8x128xf32>
      %55 = arith.addf %50, %54 : vector<8x128xf32>
      %56 = math.tanh %55 : vector<8x128xf32>
      %cst_31 = arith.constant 1.000000e+00 : f32
      %57 = vector.broadcast %cst_31 : f32 to vector<8x128xf32>
      %58 = arith.subf %57, %49 : vector<8x128xf32>
      %59 = arith.mulf %58, %56 : vector<8x128xf32>
      %60 = arith.mulf %49, %28 : vector<8x128xf32>
      %61 = arith.addf %59, %60 : vector<8x128xf32>
      %62 = vector.broadcast %29 : i32 to vector<8x1xi32>
      %63 = arith.cmpi slt, %62, %25 : vector<8x1xi32>
      %cst_32 = arith.constant 0.000000e+00 : f32
      %64 = vector.shape_cast %63 : vector<8x1xi1> to vector<8x1xi1>
      %65 = vector.broadcast %64 : vector<8x1xi1> to vector<8x128xi1>
      %66 = vector.broadcast %cst_32 : f32 to vector<8x128xf32>
      %67 = arith.select %65, %61, %66 : vector<8x128xi1>, vector<8x128xf32>
      %68 = arith.index_cast %c0_i32_25 : i32 to index
      %c0_33 = arith.constant 0 : index
      %c0_34 = arith.constant 0 : index
      %69 = vector.load %arg9[%68, %c0_33, %c0_34] : memref<16x8x128xf32, #tpu.memory_space<vmem>>, vector<1x8x128xf32>
      %70 = vector.shape_cast %69 : vector<1x8x128xf32> to vector<8x128xf32>
      %71 = vector.shape_cast %67 : vector<8x128xf32> to vector<1x8x128xf32>
      tpu.vector_store %arg9[%68, %c0_33, %c0_34], %71 {strides = array<i32>} : memref<16x8x128xf32, #tpu.memory_space<vmem>>, vector<1x8x128xf32>,
      %72 = vector.shape_cast %63 : vector<8x1xi1> to vector<8x1xi1>
      %73 = vector.broadcast %72 : vector<8x1xi1> to vector<8x128xi1>
      %74 = arith.select %73, %61, %28 : vector<8x128xi1>, vector<8x128xf32>
      %c1_i32 = arith.constant 1 : i32
      %75 = arith.addi %0, %c1_i32 : i32
      %76 = arith.index_cast %c1_i32 : i32 to index
      %c0_35 = arith.constant 0 : index
      %c0_36 = arith.constant 0 : index
      %77 = vector.load %arg12[%76, %c0_35, %c0_36] : memref<16x8x384xf32, #tpu.memory_space<vmem>>, vector<1x8x384xf32>
      %78 = vector.shape_cast %77 : vector<1x8x384xf32> to vector<8x384xf32>
      %cst_37 = arith.constant dense<0.000000e+00> : vector<8x384xf32>
      %79 = tpu.matmul %74, %26, %cst_37 {dimension_numbers = #tpu.dot_dimension_numbers<[1], [0], [0], [1], [0, 0, 1, 1], [], []>} : vector<8x128xf32>, vector<128x384xf32>, vector<8x384xf32> -> vector<8x384xf32>
      %80 = vector.extract_strided_slice %78 {offsets = [0, 0], sizes = [8, 128], strides = [1, 1]} : vector<8x384xf32> to vector<8x128xf32>
      %81 = vector.extract_strided_slice %79 {offsets = [0, 0], sizes = [8, 128], strides = [1, 1]} : vector<8x384xf32> to vector<8x128xf32>
      %82 = arith.addf %80, %81 : vector<8x128xf32>
      %83 = arith.negf %82 : vector<8x128xf32>
      %84 = math.exp %83 : vector<8x128xf32>
      %cst_38 = arith.constant 1.000000e+00 : f32
      %85 = vector.broadcast %cst_38 : f32 to vector<8x128xf32>
      %86 = arith.addf %85, %84 : vector<8x128xf32>
      %87 = arith.divf %85, %86 : vector<8x128xf32>
      %88 = vector.extract_strided_slice %78 {offsets = [0, 128], sizes = [8, 128], strides = [1, 1]} : vector<8x384xf32> to vector<8x128xf32>
      %89 = vector.extract_strided_slice %79 {offsets = [0, 128], sizes = [8, 128], strides = [1, 1]} : vector<8x384xf32> to vector<8x128xf32>
      %90 = arith.addf %88, %89 : vector<8x128xf32>
      %91 = arith.negf %90 : vector<8x128xf32>
      %92 = math.exp %91 : vector<8x128xf32>
      %cst_39 = arith.constant 1.000000e+00 : f32
      %93 = vector.broadcast %cst_39 : f32 to vector<8x128xf32>
      %94 = arith.addf %93, %92 : vector<8x128xf32>
      %95 = arith.divf %93, %94 : vector<8x128xf32>
      %96 = vector.extract_strided_slice %78 {offsets = [0, 256], sizes = [8, 128], strides = [1, 1]} : vector<8x384xf32> to vector<8x128xf32>
      %97 = vector.extract_strided_slice %79 {offsets = [0, 256], sizes = [8, 128], strides = [1, 1]} : vector<8x384xf32> to vector<8x128xf32>
      %98 = vector.broadcast %27 : vector<1x128xf32> to vector<8x128xf32>
      %99 = arith.addf %97, %98 : vector<8x128xf32>
      %100 = arith.mulf %87, %99 : vector<8x128xf32>
      %101 = arith.addf %96, %100 : vector<8x128xf32>
      %102 = math.tanh %101 : vector<8x128xf32>
      %cst_40 = arith.constant 1.000000e+00 : f32
      %103 = vector.broadcast %cst_40 : f32 to vector<8x128xf32>
      %104 = arith.subf %103, %95 : vector<8x128xf32>
      %105 = arith.mulf %104, %102 : vector<8x128xf32>
      %106 = arith.mulf %95, %74 : vector<8x128xf32>
      %107 = arith.addf %105, %106 : vector<8x128xf32>
      %108 = vector.broadcast %75 : i32 to vector<8x1xi32>
      %109 = arith.cmpi slt, %108, %25 : vector<8x1xi32>
      %cst_41 = arith.constant 0.000000e+00 : f32
      %110 = vector.shape_cast %109 : vector<8x1xi1> to vector<8x1xi1>
      %111 = vector.broadcast %110 : vector<8x1xi1> to vector<8x128xi1>
      %112 = vector.broadcast %cst_41 : f32 to vector<8x128xf32>
      %113 = arith.select %111, %107, %112 : vector<8x128xi1>, vector<8x128xf32>
      %114 = arith.index_cast %c1_i32 : i32 to index
      %c0_42 = arith.constant 0 : index
      %c0_43 = arith.constant 0 : index
      %115 = vector.load %arg9[%114, %c0_42, %c0_43] : memref<16x8x128xf32, #tpu.memory_space<vmem>>, vector<1x8x128xf32>
      %116 = vector.shape_cast %115 : vector<1x8x128xf32> to vector<8x128xf32>
      %117 = vector.shape_cast %113 : vector<8x128xf32> to vector<1x8x128xf32>
      tpu.vector_store %arg9[%114, %c0_42, %c0_43], %117 {strides = array<i32>} : memref<16x8x128xf32, #tpu.memory_space<vmem>>, vector<1x8x128xf32>,
      %118 = vector.shape_cast %109 : vector<8x1xi1> to vector<8x1xi1>
      %119 = vector.broadcast %118 : vector<8x1xi1> to vector<8x128xi1>
      %120 = arith.select %119, %107, %74 : vector<8x128xi1>, vector<8x128xf32>
      %c2_i32 = arith.constant 2 : i32
      %121 = arith.addi %0, %c2_i32 : i32
      %122 = arith.index_cast %c2_i32 : i32 to index
      %c0_44 = arith.constant 0 : index
      %c0_45 = arith.constant 0 : index
      %123 = vector.load %arg12[%122, %c0_44, %c0_45] : memref<16x8x384xf32, #tpu.memory_space<vmem>>, vector<1x8x384xf32>
      %124 = vector.shape_cast %123 : vector<1x8x384xf32> to vector<8x384xf32>
      %cst_46 = arith.constant dense<0.000000e+00> : vector<8x384xf32>
      %125 = tpu.matmul %120, %26, %cst_46 {dimension_numbers = #tpu.dot_dimension_numbers<[1], [0], [0], [1], [0, 0, 1, 1], [], []>} : vector<8x128xf32>, vector<128x384xf32>, vector<8x384xf32> -> vector<8x384xf32>
      %126 = vector.extract_strided_slice %124 {offsets = [0, 0], sizes = [8, 128], strides = [1, 1]} : vector<8x384xf32> to vector<8x128xf32>
      %127 = vector.extract_strided_slice %125 {offsets = [0, 0], sizes = [8, 128], strides = [1, 1]} : vector<8x384xf32> to vector<8x128xf32>
      %128 = arith.addf %126, %127 : vector<8x128xf32>
      %129 = arith.negf %128 : vector<8x128xf32>
      %130 = math.exp %129 : vector<8x128xf32>
      %cst_47 = arith.constant 1.000000e+00 : f32
      %131 = vector.broadcast %cst_47 : f32 to vector<8x128xf32>
      %132 = arith.addf %131, %130 : vector<8x128xf32>
      %133 = arith.divf %131, %132 : vector<8x128xf32>
      %134 = vector.extract_strided_slice %124 {offsets = [0, 128], sizes = [8, 128], strides = [1, 1]} : vector<8x384xf32> to vector<8x128xf32>
      %135 = vector.extract_strided_slice %125 {offsets = [0, 128], sizes = [8, 128], strides = [1, 1]} : vector<8x384xf32> to vector<8x128xf32>
      %136 = arith.addf %134, %135 : vector<8x128xf32>
      %137 = arith.negf %136 : vector<8x128xf32>
      %138 = math.exp %137 : vector<8x128xf32>
      %cst_48 = arith.constant 1.000000e+00 : f32
      %139 = vector.broadcast %cst_48 : f32 to vector<8x128xf32>
      %140 = arith.addf %139, %138 : vector<8x128xf32>
      %141 = arith.divf %139, %140 : vector<8x128xf32>
      %142 = vector.extract_strided_slice %124 {offsets = [0, 256], sizes = [8, 128], strides = [1, 1]} : vector<8x384xf32> to vector<8x128xf32>
      %143 = vector.extract_strided_slice %125 {offsets = [0, 256], sizes = [8, 128], strides = [1, 1]} : vector<8x384xf32> to vector<8x128xf32>
      %144 = vector.broadcast %27 : vector<1x128xf32> to vector<8x128xf32>
      %145 = arith.addf %143, %144 : vector<8x128xf32>
      %146 = arith.mulf %133, %145 : vector<8x128xf32>
      %147 = arith.addf %142, %146 : vector<8x128xf32>
      %148 = math.tanh %147 : vector<8x128xf32>
      %cst_49 = arith.constant 1.000000e+00 : f32
      %149 = vector.broadcast %cst_49 : f32 to vector<8x128xf32>
      %150 = arith.subf %149, %141 : vector<8x128xf32>
      %151 = arith.mulf %150, %148 : vector<8x128xf32>
      %152 = arith.mulf %141, %120 : vector<8x128xf32>
      %153 = arith.addf %151, %152 : vector<8x128xf32>
      %154 = vector.broadcast %121 : i32 to vector<8x1xi32>
      %155 = arith.cmpi slt, %154, %25 : vector<8x1xi32>
      %cst_50 = arith.constant 0.000000e+00 : f32
      %156 = vector.shape_cast %155 : vector<8x1xi1> to vector<8x1xi1>
      %157 = vector.broadcast %156 : vector<8x1xi1> to vector<8x128xi1>
      %158 = vector.broadcast %cst_50 : f32 to vector<8x128xf32>
      %159 = arith.select %157, %153, %158 : vector<8x128xi1>, vector<8x128xf32>
      %160 = arith.index_cast %c2_i32 : i32 to index
      %c0_51 = arith.constant 0 : index
      %c0_52 = arith.constant 0 : index
      %161 = vector.load %arg9[%160, %c0_51, %c0_52] : memref<16x8x128xf32, #tpu.memory_space<vmem>>, vector<1x8x128xf32>
      %162 = vector.shape_cast %161 : vector<1x8x128xf32> to vector<8x128xf32>
      %163 = vector.shape_cast %159 : vector<8x128xf32> to vector<1x8x128xf32>
      tpu.vector_store %arg9[%160, %c0_51, %c0_52], %163 {strides = array<i32>} : memref<16x8x128xf32, #tpu.memory_space<vmem>>, vector<1x8x128xf32>,
      %164 = vector.shape_cast %155 : vector<8x1xi1> to vector<8x1xi1>
      %165 = vector.broadcast %164 : vector<8x1xi1> to vector<8x128xi1>
      %166 = arith.select %165, %153, %120 : vector<8x128xi1>, vector<8x128xf32>
      %c3_i32 = arith.constant 3 : i32
      %167 = arith.addi %0, %c3_i32 : i32
      %168 = arith.index_cast %c3_i32 : i32 to index
      %c0_53 = arith.constant 0 : index
      %c0_54 = arith.constant 0 : index
      %169 = vector.load %arg12[%168, %c0_53, %c0_54] : memref<16x8x384xf32, #tpu.memory_space<vmem>>, vector<1x8x384xf32>
      %170 = vector.shape_cast %169 : vector<1x8x384xf32> to vector<8x384xf32>
      %cst_55 = arith.constant dense<0.000000e+00> : vector<8x384xf32>
      %171 = tpu.matmul %166, %26, %cst_55 {dimension_numbers = #tpu.dot_dimension_numbers<[1], [0], [0], [1], [0, 0, 1, 1], [], []>} : vector<8x128xf32>, vector<128x384xf32>, vector<8x384xf32> -> vector<8x384xf32>
      %172 = vector.extract_strided_slice %170 {offsets = [0, 0], sizes = [8, 128], strides = [1, 1]} : vector<8x384xf32> to vector<8x128xf32>
      %173 = vector.extract_strided_slice %171 {offsets = [0, 0], sizes = [8, 128], strides = [1, 1]} : vector<8x384xf32> to vector<8x128xf32>
      %174 = arith.addf %172, %173 : vector<8x128xf32>
      %175 = arith.negf %174 : vector<8x128xf32>
      %176 = math.exp %175 : vector<8x128xf32>
      %cst_56 = arith.constant 1.000000e+00 : f32
      %177 = vector.broadcast %cst_56 : f32 to vector<8x128xf32>
      %178 = arith.addf %177, %176 : vector<8x128xf32>
      %179 = arith.divf %177, %178 : vector<8x128xf32>
      %180 = vector.extract_strided_slice %170 {offsets = [0, 128], sizes = [8, 128], strides = [1, 1]} : vector<8x384xf32> to vector<8x128xf32>
      %181 = vector.extract_strided_slice %171 {offsets = [0, 128], sizes = [8, 128], strides = [1, 1]} : vector<8x384xf32> to vector<8x128xf32>
      %182 = arith.addf %180, %181 : vector<8x128xf32>
      %183 = arith.negf %182 : vector<8x128xf32>
      %184 = math.exp %183 : vector<8x128xf32>
      %cst_57 = arith.constant 1.000000e+00 : f32
      %185 = vector.broadcast %cst_57 : f32 to vector<8x128xf32>
      %186 = arith.addf %185, %184 : vector<8x128xf32>
      %187 = arith.divf %185, %186 : vector<8x128xf32>
      %188 = vector.extract_strided_slice %170 {offsets = [0, 256], sizes = [8, 128], strides = [1, 1]} : vector<8x384xf32> to vector<8x128xf32>
      %189 = vector.extract_strided_slice %171 {offsets = [0, 256], sizes = [8, 128], strides = [1, 1]} : vector<8x384xf32> to vector<8x128xf32>
      %190 = vector.broadcast %27 : vector<1x128xf32> to vector<8x128xf32>
      %191 = arith.addf %189, %190 : vector<8x128xf32>
      %192 = arith.mulf %179, %191 : vector<8x128xf32>
      %193 = arith.addf %188, %192 : vector<8x128xf32>
      %194 = math.tanh %193 : vector<8x128xf32>
      %cst_58 = arith.constant 1.000000e+00 : f32
      %195 = vector.broadcast %cst_58 : f32 to vector<8x128xf32>
      %196 = arith.subf %195, %187 : vector<8x128xf32>
      %197 = arith.mulf %196, %194 : vector<8x128xf32>
      %198 = arith.mulf %187, %166 : vector<8x128xf32>
      %199 = arith.addf %197, %198 : vector<8x128xf32>
      %200 = vector.broadcast %167 : i32 to vector<8x1xi32>
      %201 = arith.cmpi slt, %200, %25 : vector<8x1xi32>
      %cst_59 = arith.constant 0.000000e+00 : f32
      %202 = vector.shape_cast %201 : vector<8x1xi1> to vector<8x1xi1>
      %203 = vector.broadcast %202 : vector<8x1xi1> to vector<8x128xi1>
      %204 = vector.broadcast %cst_59 : f32 to vector<8x128xf32>
      %205 = arith.select %203, %199, %204 : vector<8x128xi1>, vector<8x128xf32>
      %206 = arith.index_cast %c3_i32 : i32 to index
      %c0_60 = arith.constant 0 : index
      %c0_61 = arith.constant 0 : index
      %207 = vector.load %arg9[%206, %c0_60, %c0_61] : memref<16x8x128xf32, #tpu.memory_space<vmem>>, vector<1x8x128xf32>
      %208 = vector.shape_cast %207 : vector<1x8x128xf32> to vector<8x128xf32>
      %209 = vector.shape_cast %205 : vector<8x128xf32> to vector<1x8x128xf32>
      tpu.vector_store %arg9[%206, %c0_60, %c0_61], %209 {strides = array<i32>} : memref<16x8x128xf32, #tpu.memory_space<vmem>>, vector<1x8x128xf32>,
      %210 = vector.shape_cast %201 : vector<8x1xi1> to vector<8x1xi1>
      %211 = vector.broadcast %210 : vector<8x1xi1> to vector<8x128xi1>
      %212 = arith.select %211, %199, %166 : vector<8x128xi1>, vector<8x128xf32>
      %c4_i32 = arith.constant 4 : i32
      %213 = arith.addi %0, %c4_i32 : i32
      %214 = arith.index_cast %c4_i32 : i32 to index
      %c0_62 = arith.constant 0 : index
      %c0_63 = arith.constant 0 : index
      %215 = vector.load %arg12[%214, %c0_62, %c0_63] : memref<16x8x384xf32, #tpu.memory_space<vmem>>, vector<1x8x384xf32>
      %216 = vector.shape_cast %215 : vector<1x8x384xf32> to vector<8x384xf32>
      %cst_64 = arith.constant dense<0.000000e+00> : vector<8x384xf32>
      %217 = tpu.matmul %212, %26, %cst_64 {dimension_numbers = #tpu.dot_dimension_numbers<[1], [0], [0], [1], [0, 0, 1, 1], [], []>} : vector<8x128xf32>, vector<128x384xf32>, vector<8x384xf32> -> vector<8x384xf32>
      %218 = vector.extract_strided_slice %216 {offsets = [0, 0], sizes = [8, 128], strides = [1, 1]} : vector<8x384xf32> to vector<8x128xf32>
      %219 = vector.extract_strided_slice %217 {offsets = [0, 0], sizes = [8, 128], strides = [1, 1]} : vector<8x384xf32> to vector<8x128xf32>
      %220 = arith.addf %218, %219 : vector<8x128xf32>
      %221 = arith.negf %220 : vector<8x128xf32>
      %222 = math.exp %221 : vector<8x128xf32>
      %cst_65 = arith.constant 1.000000e+00 : f32
      %223 = vector.broadcast %cst_65 : f32 to vector<8x128xf32>
      %224 = arith.addf %223, %222 : vector<8x128xf32>
      %225 = arith.divf %223, %224 : vector<8x128xf32>
      %226 = vector.extract_strided_slice %216 {offsets = [0, 128], sizes = [8, 128], strides = [1, 1]} : vector<8x384xf32> to vector<8x128xf32>
      %227 = vector.extract_strided_slice %217 {offsets = [0, 128], sizes = [8, 128], strides = [1, 1]} : vector<8x384xf32> to vector<8x128xf32>
      %228 = arith.addf %226, %227 : vector<8x128xf32>
      %229 = arith.negf %228 : vector<8x128xf32>
      %230 = math.exp %229 : vector<8x128xf32>
      %cst_66 = arith.constant 1.000000e+00 : f32
      %231 = vector.broadcast %cst_66 : f32 to vector<8x128xf32>
      %232 = arith.addf %231, %230 : vector<8x128xf32>
      %233 = arith.divf %231, %232 : vector<8x128xf32>
      %234 = vector.extract_strided_slice %216 {offsets = [0, 256], sizes = [8, 128], strides = [1, 1]} : vector<8x384xf32> to vector<8x128xf32>
      %235 = vector.extract_strided_slice %217 {offsets = [0, 256], sizes = [8, 128], strides = [1, 1]} : vector<8x384xf32> to vector<8x128xf32>
      %236 = vector.broadcast %27 : vector<1x128xf32> to vector<8x128xf32>
      %237 = arith.addf %235, %236 : vector<8x128xf32>
      %238 = arith.mulf %225, %237 : vector<8x128xf32>
      %239 = arith.addf %234, %238 : vector<8x128xf32>
      %240 = math.tanh %239 : vector<8x128xf32>
      %cst_67 = arith.constant 1.000000e+00 : f32
      %241 = vector.broadcast %cst_67 : f32 to vector<8x128xf32>
      %242 = arith.subf %241, %233 : vector<8x128xf32>
      %243 = arith.mulf %242, %240 : vector<8x128xf32>
      %244 = arith.mulf %233, %212 : vector<8x128xf32>
      %245 = arith.addf %243, %244 : vector<8x128xf32>
      %246 = vector.broadcast %213 : i32 to vector<8x1xi32>
      %247 = arith.cmpi slt, %246, %25 : vector<8x1xi32>
      %cst_68 = arith.constant 0.000000e+00 : f32
      %248 = vector.shape_cast %247 : vector<8x1xi1> to vector<8x1xi1>
      %249 = vector.broadcast %248 : vector<8x1xi1> to vector<8x128xi1>
      %250 = vector.broadcast %cst_68 : f32 to vector<8x128xf32>
      %251 = arith.select %249, %245, %250 : vector<8x128xi1>, vector<8x128xf32>
      %252 = arith.index_cast %c4_i32 : i32 to index
      %c0_69 = arith.constant 0 : index
      %c0_70 = arith.constant 0 : index
      %253 = vector.load %arg9[%252, %c0_69, %c0_70] : memref<16x8x128xf32, #tpu.memory_space<vmem>>, vector<1x8x128xf32>
      %254 = vector.shape_cast %253 : vector<1x8x128xf32> to vector<8x128xf32>
      %255 = vector.shape_cast %251 : vector<8x128xf32> to vector<1x8x128xf32>
      tpu.vector_store %arg9[%252, %c0_69, %c0_70], %255 {strides = array<i32>} : memref<16x8x128xf32, #tpu.memory_space<vmem>>, vector<1x8x128xf32>,
      %256 = vector.shape_cast %247 : vector<8x1xi1> to vector<8x1xi1>
      %257 = vector.broadcast %256 : vector<8x1xi1> to vector<8x128xi1>
      %258 = arith.select %257, %245, %212 : vector<8x128xi1>, vector<8x128xf32>
      %c5_i32 = arith.constant 5 : i32
      %259 = arith.addi %0, %c5_i32 : i32
      %260 = arith.index_cast %c5_i32 : i32 to index
      %c0_71 = arith.constant 0 : index
      %c0_72 = arith.constant 0 : index
      %261 = vector.load %arg12[%260, %c0_71, %c0_72] : memref<16x8x384xf32, #tpu.memory_space<vmem>>, vector<1x8x384xf32>
      %262 = vector.shape_cast %261 : vector<1x8x384xf32> to vector<8x384xf32>
      %cst_73 = arith.constant dense<0.000000e+00> : vector<8x384xf32>
      %263 = tpu.matmul %258, %26, %cst_73 {dimension_numbers = #tpu.dot_dimension_numbers<[1], [0], [0], [1], [0, 0, 1, 1], [], []>} : vector<8x128xf32>, vector<128x384xf32>, vector<8x384xf32> -> vector<8x384xf32>
      %264 = vector.extract_strided_slice %262 {offsets = [0, 0], sizes = [8, 128], strides = [1, 1]} : vector<8x384xf32> to vector<8x128xf32>
      %265 = vector.extract_strided_slice %263 {offsets = [0, 0], sizes = [8, 128], strides = [1, 1]} : vector<8x384xf32> to vector<8x128xf32>
      %266 = arith.addf %264, %265 : vector<8x128xf32>
      %267 = arith.negf %266 : vector<8x128xf32>
      %268 = math.exp %267 : vector<8x128xf32>
      %cst_74 = arith.constant 1.000000e+00 : f32
      %269 = vector.broadcast %cst_74 : f32 to vector<8x128xf32>
      %270 = arith.addf %269, %268 : vector<8x128xf32>
      %271 = arith.divf %269, %270 : vector<8x128xf32>
      %272 = vector.extract_strided_slice %262 {offsets = [0, 128], sizes = [8, 128], strides = [1, 1]} : vector<8x384xf32> to vector<8x128xf32>
      %273 = vector.extract_strided_slice %263 {offsets = [0, 128], sizes = [8, 128], strides = [1, 1]} : vector<8x384xf32> to vector<8x128xf32>
      %274 = arith.addf %272, %273 : vector<8x128xf32>
      %275 = arith.negf %274 : vector<8x128xf32>
      %276 = math.exp %275 : vector<8x128xf32>
      %cst_75 = arith.constant 1.000000e+00 : f32
      %277 = vector.broadcast %cst_75 : f32 to vector<8x128xf32>
      %278 = arith.addf %277, %276 : vector<8x128xf32>
      %279 = arith.divf %277, %278 : vector<8x128xf32>
      %280 = vector.extract_strided_slice %262 {offsets = [0, 256], sizes = [8, 128], strides = [1, 1]} : vector<8x384xf32> to vector<8x128xf32>
      %281 = vector.extract_strided_slice %263 {offsets = [0, 256], sizes = [8, 128], strides = [1, 1]} : vector<8x384xf32> to vector<8x128xf32>
      %282 = vector.broadcast %27 : vector<1x128xf32> to vector<8x128xf32>
      %283 = arith.addf %281, %282 : vector<8x128xf32>
      %284 = arith.mulf %271, %283 : vector<8x128xf32>
      %285 = arith.addf %280, %284 : vector<8x128xf32>
      %286 = math.tanh %285 : vector<8x128xf32>
      %cst_76 = arith.constant 1.000000e+00 : f32
      %287 = vector.broadcast %cst_76 : f32 to vector<8x128xf32>
      %288 = arith.subf %287, %279 : vector<8x128xf32>
      %289 = arith.mulf %288, %286 : vector<8x128xf32>
      %290 = arith.mulf %279, %258 : vector<8x128xf32>
      %291 = arith.addf %289, %290 : vector<8x128xf32>
      %292 = vector.broadcast %259 : i32 to vector<8x1xi32>
      %293 = arith.cmpi slt, %292, %25 : vector<8x1xi32>
      %cst_77 = arith.constant 0.000000e+00 : f32
      %294 = vector.shape_cast %293 : vector<8x1xi1> to vector<8x1xi1>
      %295 = vector.broadcast %294 : vector<8x1xi1> to vector<8x128xi1>
      %296 = vector.broadcast %cst_77 : f32 to vector<8x128xf32>
      %297 = arith.select %295, %291, %296 : vector<8x128xi1>, vector<8x128xf32>
      %298 = arith.index_cast %c5_i32 : i32 to index
      %c0_78 = arith.constant 0 : index
      %c0_79 = arith.constant 0 : index
      %299 = vector.load %arg9[%298, %c0_78, %c0_79] : memref<16x8x128xf32, #tpu.memory_space<vmem>>, vector<1x8x128xf32>
      %300 = vector.shape_cast %299 : vector<1x8x128xf32> to vector<8x128xf32>
      %301 = vector.shape_cast %297 : vector<8x128xf32> to vector<1x8x128xf32>
      tpu.vector_store %arg9[%298, %c0_78, %c0_79], %301 {strides = array<i32>} : memref<16x8x128xf32, #tpu.memory_space<vmem>>, vector<1x8x128xf32>,
      %302 = vector.shape_cast %293 : vector<8x1xi1> to vector<8x1xi1>
      %303 = vector.broadcast %302 : vector<8x1xi1> to vector<8x128xi1>
      %304 = arith.select %303, %291, %258 : vector<8x128xi1>, vector<8x128xf32>
      %c6_i32 = arith.constant 6 : i32
      %305 = arith.addi %0, %c6_i32 : i32
      %306 = arith.index_cast %c6_i32 : i32 to index
      %c0_80 = arith.constant 0 : index
      %c0_81 = arith.constant 0 : index
      %307 = vector.load %arg12[%306, %c0_80, %c0_81] : memref<16x8x384xf32, #tpu.memory_space<vmem>>, vector<1x8x384xf32>
      %308 = vector.shape_cast %307 : vector<1x8x384xf32> to vector<8x384xf32>
      %cst_82 = arith.constant dense<0.000000e+00> : vector<8x384xf32>
      %309 = tpu.matmul %304, %26, %cst_82 {dimension_numbers = #tpu.dot_dimension_numbers<[1], [0], [0], [1], [0, 0, 1, 1], [], []>} : vector<8x128xf32>, vector<128x384xf32>, vector<8x384xf32> -> vector<8x384xf32>
      %310 = vector.extract_strided_slice %308 {offsets = [0, 0], sizes = [8, 128], strides = [1, 1]} : vector<8x384xf32> to vector<8x128xf32>
      %311 = vector.extract_strided_slice %309 {offsets = [0, 0], sizes = [8, 128], strides = [1, 1]} : vector<8x384xf32> to vector<8x128xf32>
      %312 = arith.addf %310, %311 : vector<8x128xf32>
      %313 = arith.negf %312 : vector<8x128xf32>
      %314 = math.exp %313 : vector<8x128xf32>
      %cst_83 = arith.constant 1.000000e+00 : f32
      %315 = vector.broadcast %cst_83 : f32 to vector<8x128xf32>
      %316 = arith.addf %315, %314 : vector<8x128xf32>
      %317 = arith.divf %315, %316 : vector<8x128xf32>
      %318 = vector.extract_strided_slice %308 {offsets = [0, 128], sizes = [8, 128], strides = [1, 1]} : vector<8x384xf32> to vector<8x128xf32>
      %319 = vector.extract_strided_slice %309 {offsets = [0, 128], sizes = [8, 128], strides = [1, 1]} : vector<8x384xf32> to vector<8x128xf32>
      %320 = arith.addf %318, %319 : vector<8x128xf32>
      %321 = arith.negf %320 : vector<8x128xf32>
      %322 = math.exp %321 : vector<8x128xf32>
      %cst_84 = arith.constant 1.000000e+00 : f32
      %323 = vector.broadcast %cst_84 : f32 to vector<8x128xf32>
      %324 = arith.addf %323, %322 : vector<8x128xf32>
      %325 = arith.divf %323, %324 : vector<8x128xf32>
      %326 = vector.extract_strided_slice %308 {offsets = [0, 256], sizes = [8, 128], strides = [1, 1]} : vector<8x384xf32> to vector<8x128xf32>
      %327 = vector.extract_strided_slice %309 {offsets = [0, 256], sizes = [8, 128], strides = [1, 1]} : vector<8x384xf32> to vector<8x128xf32>
      %328 = vector.broadcast %27 : vector<1x128xf32> to vector<8x128xf32>
      %329 = arith.addf %327, %328 : vector<8x128xf32>
      %330 = arith.mulf %317, %329 : vector<8x128xf32>
      %331 = arith.addf %326, %330 : vector<8x128xf32>
      %332 = math.tanh %331 : vector<8x128xf32>
      %cst_85 = arith.constant 1.000000e+00 : f32
      %333 = vector.broadcast %cst_85 : f32 to vector<8x128xf32>
      %334 = arith.subf %333, %325 : vector<8x128xf32>
      %335 = arith.mulf %334, %332 : vector<8x128xf32>
      %336 = arith.mulf %325, %304 : vector<8x128xf32>
      %337 = arith.addf %335, %336 : vector<8x128xf32>
      %338 = vector.broadcast %305 : i32 to vector<8x1xi32>
      %339 = arith.cmpi slt, %338, %25 : vector<8x1xi32>
      %cst_86 = arith.constant 0.000000e+00 : f32
      %340 = vector.shape_cast %339 : vector<8x1xi1> to vector<8x1xi1>
      %341 = vector.broadcast %340 : vector<8x1xi1> to vector<8x128xi1>
      %342 = vector.broadcast %cst_86 : f32 to vector<8x128xf32>
      %343 = arith.select %341, %337, %342 : vector<8x128xi1>, vector<8x128xf32>
      %344 = arith.index_cast %c6_i32 : i32 to index
      %c0_87 = arith.constant 0 : index
      %c0_88 = arith.constant 0 : index
      %345 = vector.load %arg9[%344, %c0_87, %c0_88] : memref<16x8x128xf32, #tpu.memory_space<vmem>>, vector<1x8x128xf32>
      %346 = vector.shape_cast %345 : vector<1x8x128xf32> to vector<8x128xf32>
      %347 = vector.shape_cast %343 : vector<8x128xf32> to vector<1x8x128xf32>
      tpu.vector_store %arg9[%344, %c0_87, %c0_88], %347 {strides = array<i32>} : memref<16x8x128xf32, #tpu.memory_space<vmem>>, vector<1x8x128xf32>,
      %348 = vector.shape_cast %339 : vector<8x1xi1> to vector<8x1xi1>
      %349 = vector.broadcast %348 : vector<8x1xi1> to vector<8x128xi1>
      %350 = arith.select %349, %337, %304 : vector<8x128xi1>, vector<8x128xf32>
      %c7_i32 = arith.constant 7 : i32
      %351 = arith.addi %0, %c7_i32 : i32
      %352 = arith.index_cast %c7_i32 : i32 to index
      %c0_89 = arith.constant 0 : index
      %c0_90 = arith.constant 0 : index
      %353 = vector.load %arg12[%352, %c0_89, %c0_90] : memref<16x8x384xf32, #tpu.memory_space<vmem>>, vector<1x8x384xf32>
      %354 = vector.shape_cast %353 : vector<1x8x384xf32> to vector<8x384xf32>
      %cst_91 = arith.constant dense<0.000000e+00> : vector<8x384xf32>
      %355 = tpu.matmul %350, %26, %cst_91 {dimension_numbers = #tpu.dot_dimension_numbers<[1], [0], [0], [1], [0, 0, 1, 1], [], []>} : vector<8x128xf32>, vector<128x384xf32>, vector<8x384xf32> -> vector<8x384xf32>
      %356 = vector.extract_strided_slice %354 {offsets = [0, 0], sizes = [8, 128], strides = [1, 1]} : vector<8x384xf32> to vector<8x128xf32>
      %357 = vector.extract_strided_slice %355 {offsets = [0, 0], sizes = [8, 128], strides = [1, 1]} : vector<8x384xf32> to vector<8x128xf32>
      %358 = arith.addf %356, %357 : vector<8x128xf32>
      %359 = arith.negf %358 : vector<8x128xf32>
      %360 = math.exp %359 : vector<8x128xf32>
      %cst_92 = arith.constant 1.000000e+00 : f32
      %361 = vector.broadcast %cst_92 : f32 to vector<8x128xf32>
      %362 = arith.addf %361, %360 : vector<8x128xf32>
      %363 = arith.divf %361, %362 : vector<8x128xf32>
      %364 = vector.extract_strided_slice %354 {offsets = [0, 128], sizes = [8, 128], strides = [1, 1]} : vector<8x384xf32> to vector<8x128xf32>
      %365 = vector.extract_strided_slice %355 {offsets = [0, 128], sizes = [8, 128], strides = [1, 1]} : vector<8x384xf32> to vector<8x128xf32>
      %366 = arith.addf %364, %365 : vector<8x128xf32>
      %367 = arith.negf %366 : vector<8x128xf32>
      %368 = math.exp %367 : vector<8x128xf32>
      %cst_93 = arith.constant 1.000000e+00 : f32
      %369 = vector.broadcast %cst_93 : f32 to vector<8x128xf32>
      %370 = arith.addf %369, %368 : vector<8x128xf32>
      %371 = arith.divf %369, %370 : vector<8x128xf32>
      %372 = vector.extract_strided_slice %354 {offsets = [0, 256], sizes = [8, 128], strides = [1, 1]} : vector<8x384xf32> to vector<8x128xf32>
      %373 = vector.extract_strided_slice %355 {offsets = [0, 256], sizes = [8, 128], strides = [1, 1]} : vector<8x384xf32> to vector<8x128xf32>
      %374 = vector.broadcast %27 : vector<1x128xf32> to vector<8x128xf32>
      %375 = arith.addf %373, %374 : vector<8x128xf32>
      %376 = arith.mulf %363, %375 : vector<8x128xf32>
      %377 = arith.addf %372, %376 : vector<8x128xf32>
      %378 = math.tanh %377 : vector<8x128xf32>
      %cst_94 = arith.constant 1.000000e+00 : f32
      %379 = vector.broadcast %cst_94 : f32 to vector<8x128xf32>
      %380 = arith.subf %379, %371 : vector<8x128xf32>
      %381 = arith.mulf %380, %378 : vector<8x128xf32>
      %382 = arith.mulf %371, %350 : vector<8x128xf32>
      %383 = arith.addf %381, %382 : vector<8x128xf32>
      %384 = vector.broadcast %351 : i32 to vector<8x1xi32>
      %385 = arith.cmpi slt, %384, %25 : vector<8x1xi32>
      %cst_95 = arith.constant 0.000000e+00 : f32
      %386 = vector.shape_cast %385 : vector<8x1xi1> to vector<8x1xi1>
      %387 = vector.broadcast %386 : vector<8x1xi1> to vector<8x128xi1>
      %388 = vector.broadcast %cst_95 : f32 to vector<8x128xf32>
      %389 = arith.select %387, %383, %388 : vector<8x128xi1>, vector<8x128xf32>
      %390 = arith.index_cast %c7_i32 : i32 to index
      %c0_96 = arith.constant 0 : index
      %c0_97 = arith.constant 0 : index
      %391 = vector.load %arg9[%390, %c0_96, %c0_97] : memref<16x8x128xf32, #tpu.memory_space<vmem>>, vector<1x8x128xf32>
      %392 = vector.shape_cast %391 : vector<1x8x128xf32> to vector<8x128xf32>
      %393 = vector.shape_cast %389 : vector<8x128xf32> to vector<1x8x128xf32>
      tpu.vector_store %arg9[%390, %c0_96, %c0_97], %393 {strides = array<i32>} : memref<16x8x128xf32, #tpu.memory_space<vmem>>, vector<1x8x128xf32>,
      %394 = vector.shape_cast %385 : vector<8x1xi1> to vector<8x1xi1>
      %395 = vector.broadcast %394 : vector<8x1xi1> to vector<8x128xi1>
      %396 = arith.select %395, %383, %350 : vector<8x128xi1>, vector<8x128xf32>
      %c8_i32 = arith.constant 8 : i32
      %397 = arith.addi %0, %c8_i32 : i32
      %398 = arith.index_cast %c8_i32 : i32 to index
      %c0_98 = arith.constant 0 : index
      %c0_99 = arith.constant 0 : index
      %399 = vector.load %arg12[%398, %c0_98, %c0_99] : memref<16x8x384xf32, #tpu.memory_space<vmem>>, vector<1x8x384xf32>
      %400 = vector.shape_cast %399 : vector<1x8x384xf32> to vector<8x384xf32>
      %cst_100 = arith.constant dense<0.000000e+00> : vector<8x384xf32>
      %401 = tpu.matmul %396, %26, %cst_100 {dimension_numbers = #tpu.dot_dimension_numbers<[1], [0], [0], [1], [0, 0, 1, 1], [], []>} : vector<8x128xf32>, vector<128x384xf32>, vector<8x384xf32> -> vector<8x384xf32>
      %402 = vector.extract_strided_slice %400 {offsets = [0, 0], sizes = [8, 128], strides = [1, 1]} : vector<8x384xf32> to vector<8x128xf32>
      %403 = vector.extract_strided_slice %401 {offsets = [0, 0], sizes = [8, 128], strides = [1, 1]} : vector<8x384xf32> to vector<8x128xf32>
      %404 = arith.addf %402, %403 : vector<8x128xf32>
      %405 = arith.negf %404 : vector<8x128xf32>
      %406 = math.exp %405 : vector<8x128xf32>
      %cst_101 = arith.constant 1.000000e+00 : f32
      %407 = vector.broadcast %cst_101 : f32 to vector<8x128xf32>
      %408 = arith.addf %407, %406 : vector<8x128xf32>
      %409 = arith.divf %407, %408 : vector<8x128xf32>
      %410 = vector.extract_strided_slice %400 {offsets = [0, 128], sizes = [8, 128], strides = [1, 1]} : vector<8x384xf32> to vector<8x128xf32>
      %411 = vector.extract_strided_slice %401 {offsets = [0, 128], sizes = [8, 128], strides = [1, 1]} : vector<8x384xf32> to vector<8x128xf32>
      %412 = arith.addf %410, %411 : vector<8x128xf32>
      %413 = arith.negf %412 : vector<8x128xf32>
      %414 = math.exp %413 : vector<8x128xf32>
      %cst_102 = arith.constant 1.000000e+00 : f32
      %415 = vector.broadcast %cst_102 : f32 to vector<8x128xf32>
      %416 = arith.addf %415, %414 : vector<8x128xf32>
      %417 = arith.divf %415, %416 : vector<8x128xf32>
      %418 = vector.extract_strided_slice %400 {offsets = [0, 256], sizes = [8, 128], strides = [1, 1]} : vector<8x384xf32> to vector<8x128xf32>
      %419 = vector.extract_strided_slice %401 {offsets = [0, 256], sizes = [8, 128], strides = [1, 1]} : vector<8x384xf32> to vector<8x128xf32>
      %420 = vector.broadcast %27 : vector<1x128xf32> to vector<8x128xf32>
      %421 = arith.addf %419, %420 : vector<8x128xf32>
      %422 = arith.mulf %409, %421 : vector<8x128xf32>
      %423 = arith.addf %418, %422 : vector<8x128xf32>
      %424 = math.tanh %423 : vector<8x128xf32>
      %cst_103 = arith.constant 1.000000e+00 : f32
      %425 = vector.broadcast %cst_103 : f32 to vector<8x128xf32>
      %426 = arith.subf %425, %417 : vector<8x128xf32>
      %427 = arith.mulf %426, %424 : vector<8x128xf32>
      %428 = arith.mulf %417, %396 : vector<8x128xf32>
      %429 = arith.addf %427, %428 : vector<8x128xf32>
      %430 = vector.broadcast %397 : i32 to vector<8x1xi32>
      %431 = arith.cmpi slt, %430, %25 : vector<8x1xi32>
      %cst_104 = arith.constant 0.000000e+00 : f32
      %432 = vector.shape_cast %431 : vector<8x1xi1> to vector<8x1xi1>
      %433 = vector.broadcast %432 : vector<8x1xi1> to vector<8x128xi1>
      %434 = vector.broadcast %cst_104 : f32 to vector<8x128xf32>
      %435 = arith.select %433, %429, %434 : vector<8x128xi1>, vector<8x128xf32>
      %436 = arith.index_cast %c8_i32 : i32 to index
      %c0_105 = arith.constant 0 : index
      %c0_106 = arith.constant 0 : index
      %437 = vector.load %arg9[%436, %c0_105, %c0_106] : memref<16x8x128xf32, #tpu.memory_space<vmem>>, vector<1x8x128xf32>
      %438 = vector.shape_cast %437 : vector<1x8x128xf32> to vector<8x128xf32>
      %439 = vector.shape_cast %435 : vector<8x128xf32> to vector<1x8x128xf32>
      tpu.vector_store %arg9[%436, %c0_105, %c0_106], %439 {strides = array<i32>} : memref<16x8x128xf32, #tpu.memory_space<vmem>>, vector<1x8x128xf32>,
      %440 = vector.shape_cast %431 : vector<8x1xi1> to vector<8x1xi1>
      %441 = vector.broadcast %440 : vector<8x1xi1> to vector<8x128xi1>
      %442 = arith.select %441, %429, %396 : vector<8x128xi1>, vector<8x128xf32>
      %c9_i32 = arith.constant 9 : i32
      %443 = arith.addi %0, %c9_i32 : i32
      %444 = arith.index_cast %c9_i32 : i32 to index
      %c0_107 = arith.constant 0 : index
      %c0_108 = arith.constant 0 : index
      %445 = vector.load %arg12[%444, %c0_107, %c0_108] : memref<16x8x384xf32, #tpu.memory_space<vmem>>, vector<1x8x384xf32>
      %446 = vector.shape_cast %445 : vector<1x8x384xf32> to vector<8x384xf32>
      %cst_109 = arith.constant dense<0.000000e+00> : vector<8x384xf32>
      %447 = tpu.matmul %442, %26, %cst_109 {dimension_numbers = #tpu.dot_dimension_numbers<[1], [0], [0], [1], [0, 0, 1, 1], [], []>} : vector<8x128xf32>, vector<128x384xf32>, vector<8x384xf32> -> vector<8x384xf32>
      %448 = vector.extract_strided_slice %446 {offsets = [0, 0], sizes = [8, 128], strides = [1, 1]} : vector<8x384xf32> to vector<8x128xf32>
      %449 = vector.extract_strided_slice %447 {offsets = [0, 0], sizes = [8, 128], strides = [1, 1]} : vector<8x384xf32> to vector<8x128xf32>
      %450 = arith.addf %448, %449 : vector<8x128xf32>
      %451 = arith.negf %450 : vector<8x128xf32>
      %452 = math.exp %451 : vector<8x128xf32>
      %cst_110 = arith.constant 1.000000e+00 : f32
      %453 = vector.broadcast %cst_110 : f32 to vector<8x128xf32>
      %454 = arith.addf %453, %452 : vector<8x128xf32>
      %455 = arith.divf %453, %454 : vector<8x128xf32>
      %456 = vector.extract_strided_slice %446 {offsets = [0, 128], sizes = [8, 128], strides = [1, 1]} : vector<8x384xf32> to vector<8x128xf32>
      %457 = vector.extract_strided_slice %447 {offsets = [0, 128], sizes = [8, 128], strides = [1, 1]} : vector<8x384xf32> to vector<8x128xf32>
      %458 = arith.addf %456, %457 : vector<8x128xf32>
      %459 = arith.negf %458 : vector<8x128xf32>
      %460 = math.exp %459 : vector<8x128xf32>
      %cst_111 = arith.constant 1.000000e+00 : f32
      %461 = vector.broadcast %cst_111 : f32 to vector<8x128xf32>
      %462 = arith.addf %461, %460 : vector<8x128xf32>
      %463 = arith.divf %461, %462 : vector<8x128xf32>
      %464 = vector.extract_strided_slice %446 {offsets = [0, 256], sizes = [8, 128], strides = [1, 1]} : vector<8x384xf32> to vector<8x128xf32>
      %465 = vector.extract_strided_slice %447 {offsets = [0, 256], sizes = [8, 128], strides = [1, 1]} : vector<8x384xf32> to vector<8x128xf32>
      %466 = vector.broadcast %27 : vector<1x128xf32> to vector<8x128xf32>
      %467 = arith.addf %465, %466 : vector<8x128xf32>
      %468 = arith.mulf %455, %467 : vector<8x128xf32>
      %469 = arith.addf %464, %468 : vector<8x128xf32>
      %470 = math.tanh %469 : vector<8x128xf32>
      %cst_112 = arith.constant 1.000000e+00 : f32
      %471 = vector.broadcast %cst_112 : f32 to vector<8x128xf32>
      %472 = arith.subf %471, %463 : vector<8x128xf32>
      %473 = arith.mulf %472, %470 : vector<8x128xf32>
      %474 = arith.mulf %463, %442 : vector<8x128xf32>
      %475 = arith.addf %473, %474 : vector<8x128xf32>
      %476 = vector.broadcast %443 : i32 to vector<8x1xi32>
      %477 = arith.cmpi slt, %476, %25 : vector<8x1xi32>
      %cst_113 = arith.constant 0.000000e+00 : f32
      %478 = vector.shape_cast %477 : vector<8x1xi1> to vector<8x1xi1>
      %479 = vector.broadcast %478 : vector<8x1xi1> to vector<8x128xi1>
      %480 = vector.broadcast %cst_113 : f32 to vector<8x128xf32>
      %481 = arith.select %479, %475, %480 : vector<8x128xi1>, vector<8x128xf32>
      %482 = arith.index_cast %c9_i32 : i32 to index
      %c0_114 = arith.constant 0 : index
      %c0_115 = arith.constant 0 : index
      %483 = vector.load %arg9[%482, %c0_114, %c0_115] : memref<16x8x128xf32, #tpu.memory_space<vmem>>, vector<1x8x128xf32>
      %484 = vector.shape_cast %483 : vector<1x8x128xf32> to vector<8x128xf32>
      %485 = vector.shape_cast %481 : vector<8x128xf32> to vector<1x8x128xf32>
      tpu.vector_store %arg9[%482, %c0_114, %c0_115], %485 {strides = array<i32>} : memref<16x8x128xf32, #tpu.memory_space<vmem>>, vector<1x8x128xf32>,
      %486 = vector.shape_cast %477 : vector<8x1xi1> to vector<8x1xi1>
      %487 = vector.broadcast %486 : vector<8x1xi1> to vector<8x128xi1>
      %488 = arith.select %487, %475, %442 : vector<8x128xi1>, vector<8x128xf32>
      %c10_i32 = arith.constant 10 : i32
      %489 = arith.addi %0, %c10_i32 : i32
      %490 = arith.index_cast %c10_i32 : i32 to index
      %c0_116 = arith.constant 0 : index
      %c0_117 = arith.constant 0 : index
      %491 = vector.load %arg12[%490, %c0_116, %c0_117] : memref<16x8x384xf32, #tpu.memory_space<vmem>>, vector<1x8x384xf32>
      %492 = vector.shape_cast %491 : vector<1x8x384xf32> to vector<8x384xf32>
      %cst_118 = arith.constant dense<0.000000e+00> : vector<8x384xf32>
      %493 = tpu.matmul %488, %26, %cst_118 {dimension_numbers = #tpu.dot_dimension_numbers<[1], [0], [0], [1], [0, 0, 1, 1], [], []>} : vector<8x128xf32>, vector<128x384xf32>, vector<8x384xf32> -> vector<8x384xf32>
      %494 = vector.extract_strided_slice %492 {offsets = [0, 0], sizes = [8, 128], strides = [1, 1]} : vector<8x384xf32> to vector<8x128xf32>
      %495 = vector.extract_strided_slice %493 {offsets = [0, 0], sizes = [8, 128], strides = [1, 1]} : vector<8x384xf32> to vector<8x128xf32>
      %496 = arith.addf %494, %495 : vector<8x128xf32>
      %497 = arith.negf %496 : vector<8x128xf32>
      %498 = math.exp %497 : vector<8x128xf32>
      %cst_119 = arith.constant 1.000000e+00 : f32
      %499 = vector.broadcast %cst_119 : f32 to vector<8x128xf32>
      %500 = arith.addf %499, %498 : vector<8x128xf32>
      %501 = arith.divf %499, %500 : vector<8x128xf32>
      %502 = vector.extract_strided_slice %492 {offsets = [0, 128], sizes = [8, 128], strides = [1, 1]} : vector<8x384xf32> to vector<8x128xf32>
      %503 = vector.extract_strided_slice %493 {offsets = [0, 128], sizes = [8, 128], strides = [1, 1]} : vector<8x384xf32> to vector<8x128xf32>
      %504 = arith.addf %502, %503 : vector<8x128xf32>
      %505 = arith.negf %504 : vector<8x128xf32>
      %506 = math.exp %505 : vector<8x128xf32>
      %cst_120 = arith.constant 1.000000e+00 : f32
      %507 = vector.broadcast %cst_120 : f32 to vector<8x128xf32>
      %508 = arith.addf %507, %506 : vector<8x128xf32>
      %509 = arith.divf %507, %508 : vector<8x128xf32>
      %510 = vector.extract_strided_slice %492 {offsets = [0, 256], sizes = [8, 128], strides = [1, 1]} : vector<8x384xf32> to vector<8x128xf32>
      %511 = vector.extract_strided_slice %493 {offsets = [0, 256], sizes = [8, 128], strides = [1, 1]} : vector<8x384xf32> to vector<8x128xf32>
      %512 = vector.broadcast %27 : vector<1x128xf32> to vector<8x128xf32>
      %513 = arith.addf %511, %512 : vector<8x128xf32>
      %514 = arith.mulf %501, %513 : vector<8x128xf32>
      %515 = arith.addf %510, %514 : vector<8x128xf32>
      %516 = math.tanh %515 : vector<8x128xf32>
      %cst_121 = arith.constant 1.000000e+00 : f32
      %517 = vector.broadcast %cst_121 : f32 to vector<8x128xf32>
      %518 = arith.subf %517, %509 : vector<8x128xf32>
      %519 = arith.mulf %518, %516 : vector<8x128xf32>
      %520 = arith.mulf %509, %488 : vector<8x128xf32>
      %521 = arith.addf %519, %520 : vector<8x128xf32>
      %522 = vector.broadcast %489 : i32 to vector<8x1xi32>
      %523 = arith.cmpi slt, %522, %25 : vector<8x1xi32>
      %cst_122 = arith.constant 0.000000e+00 : f32
      %524 = vector.shape_cast %523 : vector<8x1xi1> to vector<8x1xi1>
      %525 = vector.broadcast %524 : vector<8x1xi1> to vector<8x128xi1>
      %526 = vector.broadcast %cst_122 : f32 to vector<8x128xf32>
      %527 = arith.select %525, %521, %526 : vector<8x128xi1>, vector<8x128xf32>
      %528 = arith.index_cast %c10_i32 : i32 to index
      %c0_123 = arith.constant 0 : index
      %c0_124 = arith.constant 0 : index
      %529 = vector.load %arg9[%528, %c0_123, %c0_124] : memref<16x8x128xf32, #tpu.memory_space<vmem>>, vector<1x8x128xf32>
      %530 = vector.shape_cast %529 : vector<1x8x128xf32> to vector<8x128xf32>
      %531 = vector.shape_cast %527 : vector<8x128xf32> to vector<1x8x128xf32>
      tpu.vector_store %arg9[%528, %c0_123, %c0_124], %531 {strides = array<i32>} : memref<16x8x128xf32, #tpu.memory_space<vmem>>, vector<1x8x128xf32>,
      %532 = vector.shape_cast %523 : vector<8x1xi1> to vector<8x1xi1>
      %533 = vector.broadcast %532 : vector<8x1xi1> to vector<8x128xi1>
      %534 = arith.select %533, %521, %488 : vector<8x128xi1>, vector<8x128xf32>
      %c11_i32 = arith.constant 11 : i32
      %535 = arith.addi %0, %c11_i32 : i32
      %536 = arith.index_cast %c11_i32 : i32 to index
      %c0_125 = arith.constant 0 : index
      %c0_126 = arith.constant 0 : index
      %537 = vector.load %arg12[%536, %c0_125, %c0_126] : memref<16x8x384xf32, #tpu.memory_space<vmem>>, vector<1x8x384xf32>
      %538 = vector.shape_cast %537 : vector<1x8x384xf32> to vector<8x384xf32>
      %cst_127 = arith.constant dense<0.000000e+00> : vector<8x384xf32>
      %539 = tpu.matmul %534, %26, %cst_127 {dimension_numbers = #tpu.dot_dimension_numbers<[1], [0], [0], [1], [0, 0, 1, 1], [], []>} : vector<8x128xf32>, vector<128x384xf32>, vector<8x384xf32> -> vector<8x384xf32>
      %540 = vector.extract_strided_slice %538 {offsets = [0, 0], sizes = [8, 128], strides = [1, 1]} : vector<8x384xf32> to vector<8x128xf32>
      %541 = vector.extract_strided_slice %539 {offsets = [0, 0], sizes = [8, 128], strides = [1, 1]} : vector<8x384xf32> to vector<8x128xf32>
      %542 = arith.addf %540, %541 : vector<8x128xf32>
      %543 = arith.negf %542 : vector<8x128xf32>
      %544 = math.exp %543 : vector<8x128xf32>
      %cst_128 = arith.constant 1.000000e+00 : f32
      %545 = vector.broadcast %cst_128 : f32 to vector<8x128xf32>
      %546 = arith.addf %545, %544 : vector<8x128xf32>
      %547 = arith.divf %545, %546 : vector<8x128xf32>
      %548 = vector.extract_strided_slice %538 {offsets = [0, 128], sizes = [8, 128], strides = [1, 1]} : vector<8x384xf32> to vector<8x128xf32>
      %549 = vector.extract_strided_slice %539 {offsets = [0, 128], sizes = [8, 128], strides = [1, 1]} : vector<8x384xf32> to vector<8x128xf32>
      %550 = arith.addf %548, %549 : vector<8x128xf32>
      %551 = arith.negf %550 : vector<8x128xf32>
      %552 = math.exp %551 : vector<8x128xf32>
      %cst_129 = arith.constant 1.000000e+00 : f32
      %553 = vector.broadcast %cst_129 : f32 to vector<8x128xf32>
      %554 = arith.addf %553, %552 : vector<8x128xf32>
      %555 = arith.divf %553, %554 : vector<8x128xf32>
      %556 = vector.extract_strided_slice %538 {offsets = [0, 256], sizes = [8, 128], strides = [1, 1]} : vector<8x384xf32> to vector<8x128xf32>
      %557 = vector.extract_strided_slice %539 {offsets = [0, 256], sizes = [8, 128], strides = [1, 1]} : vector<8x384xf32> to vector<8x128xf32>
      %558 = vector.broadcast %27 : vector<1x128xf32> to vector<8x128xf32>
      %559 = arith.addf %557, %558 : vector<8x128xf32>
      %560 = arith.mulf %547, %559 : vector<8x128xf32>
      %561 = arith.addf %556, %560 : vector<8x128xf32>
      %562 = math.tanh %561 : vector<8x128xf32>
      %cst_130 = arith.constant 1.000000e+00 : f32
      %563 = vector.broadcast %cst_130 : f32 to vector<8x128xf32>
      %564 = arith.subf %563, %555 : vector<8x128xf32>
      %565 = arith.mulf %564, %562 : vector<8x128xf32>
      %566 = arith.mulf %555, %534 : vector<8x128xf32>
      %567 = arith.addf %565, %566 : vector<8x128xf32>
      %568 = vector.broadcast %535 : i32 to vector<8x1xi32>
      %569 = arith.cmpi slt, %568, %25 : vector<8x1xi32>
      %cst_131 = arith.constant 0.000000e+00 : f32
      %570 = vector.shape_cast %569 : vector<8x1xi1> to vector<8x1xi1>
      %571 = vector.broadcast %570 : vector<8x1xi1> to vector<8x128xi1>
      %572 = vector.broadcast %cst_131 : f32 to vector<8x128xf32>
      %573 = arith.select %571, %567, %572 : vector<8x128xi1>, vector<8x128xf32>
      %574 = arith.index_cast %c11_i32 : i32 to index
      %c0_132 = arith.constant 0 : index
      %c0_133 = arith.constant 0 : index
      %575 = vector.load %arg9[%574, %c0_132, %c0_133] : memref<16x8x128xf32, #tpu.memory_space<vmem>>, vector<1x8x128xf32>
      %576 = vector.shape_cast %575 : vector<1x8x128xf32> to vector<8x128xf32>
      %577 = vector.shape_cast %573 : vector<8x128xf32> to vector<1x8x128xf32>
      tpu.vector_store %arg9[%574, %c0_132, %c0_133], %577 {strides = array<i32>} : memref<16x8x128xf32, #tpu.memory_space<vmem>>, vector<1x8x128xf32>,
      %578 = vector.shape_cast %569 : vector<8x1xi1> to vector<8x1xi1>
      %579 = vector.broadcast %578 : vector<8x1xi1> to vector<8x128xi1>
      %580 = arith.select %579, %567, %534 : vector<8x128xi1>, vector<8x128xf32>
      %c12_i32 = arith.constant 12 : i32
      %581 = arith.addi %0, %c12_i32 : i32
      %582 = arith.index_cast %c12_i32 : i32 to index
      %c0_134 = arith.constant 0 : index
      %c0_135 = arith.constant 0 : index
      %583 = vector.load %arg12[%582, %c0_134, %c0_135] : memref<16x8x384xf32, #tpu.memory_space<vmem>>, vector<1x8x384xf32>
      %584 = vector.shape_cast %583 : vector<1x8x384xf32> to vector<8x384xf32>
      %cst_136 = arith.constant dense<0.000000e+00> : vector<8x384xf32>
      %585 = tpu.matmul %580, %26, %cst_136 {dimension_numbers = #tpu.dot_dimension_numbers<[1], [0], [0], [1], [0, 0, 1, 1], [], []>} : vector<8x128xf32>, vector<128x384xf32>, vector<8x384xf32> -> vector<8x384xf32>
      %586 = vector.extract_strided_slice %584 {offsets = [0, 0], sizes = [8, 128], strides = [1, 1]} : vector<8x384xf32> to vector<8x128xf32>
      %587 = vector.extract_strided_slice %585 {offsets = [0, 0], sizes = [8, 128], strides = [1, 1]} : vector<8x384xf32> to vector<8x128xf32>
      %588 = arith.addf %586, %587 : vector<8x128xf32>
      %589 = arith.negf %588 : vector<8x128xf32>
      %590 = math.exp %589 : vector<8x128xf32>
      %cst_137 = arith.constant 1.000000e+00 : f32
      %591 = vector.broadcast %cst_137 : f32 to vector<8x128xf32>
      %592 = arith.addf %591, %590 : vector<8x128xf32>
      %593 = arith.divf %591, %592 : vector<8x128xf32>
      %594 = vector.extract_strided_slice %584 {offsets = [0, 128], sizes = [8, 128], strides = [1, 1]} : vector<8x384xf32> to vector<8x128xf32>
      %595 = vector.extract_strided_slice %585 {offsets = [0, 128], sizes = [8, 128], strides = [1, 1]} : vector<8x384xf32> to vector<8x128xf32>
      %596 = arith.addf %594, %595 : vector<8x128xf32>
      %597 = arith.negf %596 : vector<8x128xf32>
      %598 = math.exp %597 : vector<8x128xf32>
      %cst_138 = arith.constant 1.000000e+00 : f32
      %599 = vector.broadcast %cst_138 : f32 to vector<8x128xf32>
      %600 = arith.addf %599, %598 : vector<8x128xf32>
      %601 = arith.divf %599, %600 : vector<8x128xf32>
      %602 = vector.extract_strided_slice %584 {offsets = [0, 256], sizes = [8, 128], strides = [1, 1]} : vector<8x384xf32> to vector<8x128xf32>
      %603 = vector.extract_strided_slice %585 {offsets = [0, 256], sizes = [8, 128], strides = [1, 1]} : vector<8x384xf32> to vector<8x128xf32>
      %604 = vector.broadcast %27 : vector<1x128xf32> to vector<8x128xf32>
      %605 = arith.addf %603, %604 : vector<8x128xf32>
      %606 = arith.mulf %593, %605 : vector<8x128xf32>
      %607 = arith.addf %602, %606 : vector<8x128xf32>
      %608 = math.tanh %607 : vector<8x128xf32>
      %cst_139 = arith.constant 1.000000e+00 : f32
      %609 = vector.broadcast %cst_139 : f32 to vector<8x128xf32>
      %610 = arith.subf %609, %601 : vector<8x128xf32>
      %611 = arith.mulf %610, %608 : vector<8x128xf32>
      %612 = arith.mulf %601, %580 : vector<8x128xf32>
      %613 = arith.addf %611, %612 : vector<8x128xf32>
      %614 = vector.broadcast %581 : i32 to vector<8x1xi32>
      %615 = arith.cmpi slt, %614, %25 : vector<8x1xi32>
      %cst_140 = arith.constant 0.000000e+00 : f32
      %616 = vector.shape_cast %615 : vector<8x1xi1> to vector<8x1xi1>
      %617 = vector.broadcast %616 : vector<8x1xi1> to vector<8x128xi1>
      %618 = vector.broadcast %cst_140 : f32 to vector<8x128xf32>
      %619 = arith.select %617, %613, %618 : vector<8x128xi1>, vector<8x128xf32>
      %620 = arith.index_cast %c12_i32 : i32 to index
      %c0_141 = arith.constant 0 : index
      %c0_142 = arith.constant 0 : index
      %621 = vector.load %arg9[%620, %c0_141, %c0_142] : memref<16x8x128xf32, #tpu.memory_space<vmem>>, vector<1x8x128xf32>
      %622 = vector.shape_cast %621 : vector<1x8x128xf32> to vector<8x128xf32>
      %623 = vector.shape_cast %619 : vector<8x128xf32> to vector<1x8x128xf32>
      tpu.vector_store %arg9[%620, %c0_141, %c0_142], %623 {strides = array<i32>} : memref<16x8x128xf32, #tpu.memory_space<vmem>>, vector<1x8x128xf32>,
      %624 = vector.shape_cast %615 : vector<8x1xi1> to vector<8x1xi1>
      %625 = vector.broadcast %624 : vector<8x1xi1> to vector<8x128xi1>
      %626 = arith.select %625, %613, %580 : vector<8x128xi1>, vector<8x128xf32>
      %c13_i32 = arith.constant 13 : i32
      %627 = arith.addi %0, %c13_i32 : i32
      %628 = arith.index_cast %c13_i32 : i32 to index
      %c0_143 = arith.constant 0 : index
      %c0_144 = arith.constant 0 : index
      %629 = vector.load %arg12[%628, %c0_143, %c0_144] : memref<16x8x384xf32, #tpu.memory_space<vmem>>, vector<1x8x384xf32>
      %630 = vector.shape_cast %629 : vector<1x8x384xf32> to vector<8x384xf32>
      %cst_145 = arith.constant dense<0.000000e+00> : vector<8x384xf32>
      %631 = tpu.matmul %626, %26, %cst_145 {dimension_numbers = #tpu.dot_dimension_numbers<[1], [0], [0], [1], [0, 0, 1, 1], [], []>} : vector<8x128xf32>, vector<128x384xf32>, vector<8x384xf32> -> vector<8x384xf32>
      %632 = vector.extract_strided_slice %630 {offsets = [0, 0], sizes = [8, 128], strides = [1, 1]} : vector<8x384xf32> to vector<8x128xf32>
      %633 = vector.extract_strided_slice %631 {offsets = [0, 0], sizes = [8, 128], strides = [1, 1]} : vector<8x384xf32> to vector<8x128xf32>
      %634 = arith.addf %632, %633 : vector<8x128xf32>
      %635 = arith.negf %634 : vector<8x128xf32>
      %636 = math.exp %635 : vector<8x128xf32>
      %cst_146 = arith.constant 1.000000e+00 : f32
      %637 = vector.broadcast %cst_146 : f32 to vector<8x128xf32>
      %638 = arith.addf %637, %636 : vector<8x128xf32>
      %639 = arith.divf %637, %638 : vector<8x128xf32>
      %640 = vector.extract_strided_slice %630 {offsets = [0, 128], sizes = [8, 128], strides = [1, 1]} : vector<8x384xf32> to vector<8x128xf32>
      %641 = vector.extract_strided_slice %631 {offsets = [0, 128], sizes = [8, 128], strides = [1, 1]} : vector<8x384xf32> to vector<8x128xf32>
      %642 = arith.addf %640, %641 : vector<8x128xf32>
      %643 = arith.negf %642 : vector<8x128xf32>
      %644 = math.exp %643 : vector<8x128xf32>
      %cst_147 = arith.constant 1.000000e+00 : f32
      %645 = vector.broadcast %cst_147 : f32 to vector<8x128xf32>
      %646 = arith.addf %645, %644 : vector<8x128xf32>
      %647 = arith.divf %645, %646 : vector<8x128xf32>
      %648 = vector.extract_strided_slice %630 {offsets = [0, 256], sizes = [8, 128], strides = [1, 1]} : vector<8x384xf32> to vector<8x128xf32>
      %649 = vector.extract_strided_slice %631 {offsets = [0, 256], sizes = [8, 128], strides = [1, 1]} : vector<8x384xf32> to vector<8x128xf32>
      %650 = vector.broadcast %27 : vector<1x128xf32> to vector<8x128xf32>
      %651 = arith.addf %649, %650 : vector<8x128xf32>
      %652 = arith.mulf %639, %651 : vector<8x128xf32>
      %653 = arith.addf %648, %652 : vector<8x128xf32>
      %654 = math.tanh %653 : vector<8x128xf32>
      %cst_148 = arith.constant 1.000000e+00 : f32
      %655 = vector.broadcast %cst_148 : f32 to vector<8x128xf32>
      %656 = arith.subf %655, %647 : vector<8x128xf32>
      %657 = arith.mulf %656, %654 : vector<8x128xf32>
      %658 = arith.mulf %647, %626 : vector<8x128xf32>
      %659 = arith.addf %657, %658 : vector<8x128xf32>
      %660 = vector.broadcast %627 : i32 to vector<8x1xi32>
      %661 = arith.cmpi slt, %660, %25 : vector<8x1xi32>
      %cst_149 = arith.constant 0.000000e+00 : f32
      %662 = vector.shape_cast %661 : vector<8x1xi1> to vector<8x1xi1>
      %663 = vector.broadcast %662 : vector<8x1xi1> to vector<8x128xi1>
      %664 = vector.broadcast %cst_149 : f32 to vector<8x128xf32>
      %665 = arith.select %663, %659, %664 : vector<8x128xi1>, vector<8x128xf32>
      %666 = arith.index_cast %c13_i32 : i32 to index
      %c0_150 = arith.constant 0 : index
      %c0_151 = arith.constant 0 : index
      %667 = vector.load %arg9[%666, %c0_150, %c0_151] : memref<16x8x128xf32, #tpu.memory_space<vmem>>, vector<1x8x128xf32>
      %668 = vector.shape_cast %667 : vector<1x8x128xf32> to vector<8x128xf32>
      %669 = vector.shape_cast %665 : vector<8x128xf32> to vector<1x8x128xf32>
      tpu.vector_store %arg9[%666, %c0_150, %c0_151], %669 {strides = array<i32>} : memref<16x8x128xf32, #tpu.memory_space<vmem>>, vector<1x8x128xf32>,
      %670 = vector.shape_cast %661 : vector<8x1xi1> to vector<8x1xi1>
      %671 = vector.broadcast %670 : vector<8x1xi1> to vector<8x128xi1>
      %672 = arith.select %671, %659, %626 : vector<8x128xi1>, vector<8x128xf32>
      %c14_i32 = arith.constant 14 : i32
      %673 = arith.addi %0, %c14_i32 : i32
      %674 = arith.index_cast %c14_i32 : i32 to index
      %c0_152 = arith.constant 0 : index
      %c0_153 = arith.constant 0 : index
      %675 = vector.load %arg12[%674, %c0_152, %c0_153] : memref<16x8x384xf32, #tpu.memory_space<vmem>>, vector<1x8x384xf32>
      %676 = vector.shape_cast %675 : vector<1x8x384xf32> to vector<8x384xf32>
      %cst_154 = arith.constant dense<0.000000e+00> : vector<8x384xf32>
      %677 = tpu.matmul %672, %26, %cst_154 {dimension_numbers = #tpu.dot_dimension_numbers<[1], [0], [0], [1], [0, 0, 1, 1], [], []>} : vector<8x128xf32>, vector<128x384xf32>, vector<8x384xf32> -> vector<8x384xf32>
      %678 = vector.extract_strided_slice %676 {offsets = [0, 0], sizes = [8, 128], strides = [1, 1]} : vector<8x384xf32> to vector<8x128xf32>
      %679 = vector.extract_strided_slice %677 {offsets = [0, 0], sizes = [8, 128], strides = [1, 1]} : vector<8x384xf32> to vector<8x128xf32>
      %680 = arith.addf %678, %679 : vector<8x128xf32>
      %681 = arith.negf %680 : vector<8x128xf32>
      %682 = math.exp %681 : vector<8x128xf32>
      %cst_155 = arith.constant 1.000000e+00 : f32
      %683 = vector.broadcast %cst_155 : f32 to vector<8x128xf32>
      %684 = arith.addf %683, %682 : vector<8x128xf32>
      %685 = arith.divf %683, %684 : vector<8x128xf32>
      %686 = vector.extract_strided_slice %676 {offsets = [0, 128], sizes = [8, 128], strides = [1, 1]} : vector<8x384xf32> to vector<8x128xf32>
      %687 = vector.extract_strided_slice %677 {offsets = [0, 128], sizes = [8, 128], strides = [1, 1]} : vector<8x384xf32> to vector<8x128xf32>
      %688 = arith.addf %686, %687 : vector<8x128xf32>
      %689 = arith.negf %688 : vector<8x128xf32>
      %690 = math.exp %689 : vector<8x128xf32>
      %cst_156 = arith.constant 1.000000e+00 : f32
      %691 = vector.broadcast %cst_156 : f32 to vector<8x128xf32>
      %692 = arith.addf %691, %690 : vector<8x128xf32>
      %693 = arith.divf %691, %692 : vector<8x128xf32>
      %694 = vector.extract_strided_slice %676 {offsets = [0, 256], sizes = [8, 128], strides = [1, 1]} : vector<8x384xf32> to vector<8x128xf32>
      %695 = vector.extract_strided_slice %677 {offsets = [0, 256], sizes = [8, 128], strides = [1, 1]} : vector<8x384xf32> to vector<8x128xf32>
      %696 = vector.broadcast %27 : vector<1x128xf32> to vector<8x128xf32>
      %697 = arith.addf %695, %696 : vector<8x128xf32>
      %698 = arith.mulf %685, %697 : vector<8x128xf32>
      %699 = arith.addf %694, %698 : vector<8x128xf32>
      %700 = math.tanh %699 : vector<8x128xf32>
      %cst_157 = arith.constant 1.000000e+00 : f32
      %701 = vector.broadcast %cst_157 : f32 to vector<8x128xf32>
      %702 = arith.subf %701, %693 : vector<8x128xf32>
      %703 = arith.mulf %702, %700 : vector<8x128xf32>
      %704 = arith.mulf %693, %672 : vector<8x128xf32>
      %705 = arith.addf %703, %704 : vector<8x128xf32>
      %706 = vector.broadcast %673 : i32 to vector<8x1xi32>
      %707 = arith.cmpi slt, %706, %25 : vector<8x1xi32>
      %cst_158 = arith.constant 0.000000e+00 : f32
      %708 = vector.shape_cast %707 : vector<8x1xi1> to vector<8x1xi1>
      %709 = vector.broadcast %708 : vector<8x1xi1> to vector<8x128xi1>
      %710 = vector.broadcast %cst_158 : f32 to vector<8x128xf32>
      %711 = arith.select %709, %705, %710 : vector<8x128xi1>, vector<8x128xf32>
      %712 = arith.index_cast %c14_i32 : i32 to index
      %c0_159 = arith.constant 0 : index
      %c0_160 = arith.constant 0 : index
      %713 = vector.load %arg9[%712, %c0_159, %c0_160] : memref<16x8x128xf32, #tpu.memory_space<vmem>>, vector<1x8x128xf32>
      %714 = vector.shape_cast %713 : vector<1x8x128xf32> to vector<8x128xf32>
      %715 = vector.shape_cast %711 : vector<8x128xf32> to vector<1x8x128xf32>
      tpu.vector_store %arg9[%712, %c0_159, %c0_160], %715 {strides = array<i32>} : memref<16x8x128xf32, #tpu.memory_space<vmem>>, vector<1x8x128xf32>,
      %716 = vector.shape_cast %707 : vector<8x1xi1> to vector<8x1xi1>
      %717 = vector.broadcast %716 : vector<8x1xi1> to vector<8x128xi1>
      %718 = arith.select %717, %705, %672 : vector<8x128xi1>, vector<8x128xf32>
      %c15_i32 = arith.constant 15 : i32
      %719 = arith.addi %0, %c15_i32 : i32
      %720 = arith.index_cast %c15_i32 : i32 to index
      %c0_161 = arith.constant 0 : index
      %c0_162 = arith.constant 0 : index
      %721 = vector.load %arg12[%720, %c0_161, %c0_162] : memref<16x8x384xf32, #tpu.memory_space<vmem>>, vector<1x8x384xf32>
      %722 = vector.shape_cast %721 : vector<1x8x384xf32> to vector<8x384xf32>
      %cst_163 = arith.constant dense<0.000000e+00> : vector<8x384xf32>
      %723 = tpu.matmul %718, %26, %cst_163 {dimension_numbers = #tpu.dot_dimension_numbers<[1], [0], [0], [1], [0, 0, 1, 1], [], []>} : vector<8x128xf32>, vector<128x384xf32>, vector<8x384xf32> -> vector<8x384xf32>
      %724 = vector.extract_strided_slice %722 {offsets = [0, 0], sizes = [8, 128], strides = [1, 1]} : vector<8x384xf32> to vector<8x128xf32>
      %725 = vector.extract_strided_slice %723 {offsets = [0, 0], sizes = [8, 128], strides = [1, 1]} : vector<8x384xf32> to vector<8x128xf32>
      %726 = arith.addf %724, %725 : vector<8x128xf32>
      %727 = arith.negf %726 : vector<8x128xf32>
      %728 = math.exp %727 : vector<8x128xf32>
      %cst_164 = arith.constant 1.000000e+00 : f32
      %729 = vector.broadcast %cst_164 : f32 to vector<8x128xf32>
      %730 = arith.addf %729, %728 : vector<8x128xf32>
      %731 = arith.divf %729, %730 : vector<8x128xf32>
      %732 = vector.extract_strided_slice %722 {offsets = [0, 128], sizes = [8, 128], strides = [1, 1]} : vector<8x384xf32> to vector<8x128xf32>
      %733 = vector.extract_strided_slice %723 {offsets = [0, 128], sizes = [8, 128], strides = [1, 1]} : vector<8x384xf32> to vector<8x128xf32>
      %734 = arith.addf %732, %733 : vector<8x128xf32>
      %735 = arith.negf %734 : vector<8x128xf32>
      %736 = math.exp %735 : vector<8x128xf32>
      %cst_165 = arith.constant 1.000000e+00 : f32
      %737 = vector.broadcast %cst_165 : f32 to vector<8x128xf32>
      %738 = arith.addf %737, %736 : vector<8x128xf32>
      %739 = arith.divf %737, %738 : vector<8x128xf32>
      %740 = vector.extract_strided_slice %722 {offsets = [0, 256], sizes = [8, 128], strides = [1, 1]} : vector<8x384xf32> to vector<8x128xf32>
      %741 = vector.extract_strided_slice %723 {offsets = [0, 256], sizes = [8, 128], strides = [1, 1]} : vector<8x384xf32> to vector<8x128xf32>
      %742 = vector.broadcast %27 : vector<1x128xf32> to vector<8x128xf32>
      %743 = arith.addf %741, %742 : vector<8x128xf32>
      %744 = arith.mulf %731, %743 : vector<8x128xf32>
      %745 = arith.addf %740, %744 : vector<8x128xf32>
      %746 = math.tanh %745 : vector<8x128xf32>
      %cst_166 = arith.constant 1.000000e+00 : f32
      %747 = vector.broadcast %cst_166 : f32 to vector<8x128xf32>
      %748 = arith.subf %747, %739 : vector<8x128xf32>
      %749 = arith.mulf %748, %746 : vector<8x128xf32>
      %750 = arith.mulf %739, %718 : vector<8x128xf32>
      %751 = arith.addf %749, %750 : vector<8x128xf32>
      %752 = vector.broadcast %719 : i32 to vector<8x1xi32>
      %753 = arith.cmpi slt, %752, %25 : vector<8x1xi32>
      %cst_167 = arith.constant 0.000000e+00 : f32
      %754 = vector.shape_cast %753 : vector<8x1xi1> to vector<8x1xi1>
      %755 = vector.broadcast %754 : vector<8x1xi1> to vector<8x128xi1>
      %756 = vector.broadcast %cst_167 : f32 to vector<8x128xf32>
      %757 = arith.select %755, %751, %756 : vector<8x128xi1>, vector<8x128xf32>
      %758 = arith.index_cast %c15_i32 : i32 to index
      %c0_168 = arith.constant 0 : index
      %c0_169 = arith.constant 0 : index
      %759 = vector.load %arg9[%758, %c0_168, %c0_169] : memref<16x8x128xf32, #tpu.memory_space<vmem>>, vector<1x8x128xf32>
      %760 = vector.shape_cast %759 : vector<1x8x128xf32> to vector<8x128xf32>
      %761 = vector.shape_cast %757 : vector<8x128xf32> to vector<1x8x128xf32>
      tpu.vector_store %arg9[%758, %c0_168, %c0_169], %761 {strides = array<i32>} : memref<16x8x128xf32, #tpu.memory_space<vmem>>, vector<1x8x128xf32>,
      %762 = vector.shape_cast %753 : vector<8x1xi1> to vector<8x1xi1>
      %763 = vector.broadcast %762 : vector<8x1xi1> to vector<8x128xi1>
      %764 = arith.select %763, %751, %718 : vector<8x128xi1>, vector<8x128xf32>
      %c16_i32_170 = arith.constant 16 : i32
      %c0_171 = arith.constant 0 : index
      %c0_172 = arith.constant 0 : index
      %765 = vector.load %arg11[%c0_171, %c0_172] : memref<8x128xf32, #tpu.memory_space<vmem>>, vector<8x128xf32>
      tpu.vector_store %arg11[%c0_171, %c0_172], %764 {strides = array<i32>} : memref<8x128xf32, #tpu.memory_space<vmem>>, vector<8x128xf32>,
    } else {
    }
    %9 = arith.cmpi sge, %0, %5 : i32
    %10 = arith.extui %9 : i1 to i32
    %c0_i32_2 = arith.constant 0 : i32
    %11 = arith.cmpi ne, %10, %c0_i32_2 : i32
    scf.if %11 {
      %cst = arith.constant 0.000000e+00 : f32
      %16 = vector.broadcast %cst : f32 to vector<16x8x128xf32>
      %c0_7 = arith.constant 0 : index
      %c0_8 = arith.constant 0 : index
      %c0_9 = arith.constant 0 : index
      %17 = vector.load %arg9[%c0_7, %c0_8, %c0_9] : memref<16x8x128xf32, #tpu.memory_space<vmem>>, vector<16x8x128xf32>
      tpu.vector_store %arg9[%c0_7, %c0_8, %c0_9], %16 {strides = array<i32>} : memref<16x8x128xf32, #tpu.memory_space<vmem>>, vector<16x8x128xf32>,
    } else {
    }
    %c0 = arith.constant 0 : index
    %c0_3 = arith.constant 0 : index
    %12 = vector.load %arg11[%c0, %c0_3] : memref<8x128xf32, #tpu.memory_space<vmem>>, vector<8x128xf32>
    %c0_4 = arith.constant 0 : index
    %c0_5 = arith.constant 0 : index
    %c0_6 = arith.constant 0 : index
    %13 = vector.load %arg10[%c0_4, %c0_5, %c0_6] : memref<1x8x128xf32, #tpu.memory_space<vmem>>, vector<1x8x128xf32>
    %14 = vector.shape_cast %13 : vector<1x8x128xf32> to vector<8x128xf32>
    %15 = vector.shape_cast %12 : vector<8x128xf32> to vector<1x8x128xf32>
    tpu.vector_store %arg10[%c0_4, %c0_5, %c0_6], %15 {strides = array<i32>} : memref<1x8x128xf32, #tpu.memory_space<vmem>>, vector<1x8x128xf32>,
    return
  }
  func.func @transform_0(%arg0: i32, %arg1: i32, %arg2: memref<1xi32, #tpu.memory_space<smem>>) -> (i32, i32) {
    %c0_i32 = arith.constant 0 : i32
    %c0_i32_0 = arith.constant 0 : i32
    return %arg0, %c0_i32 : i32, i32
  }
  func.func @transform_1(%arg0: i32, %arg1: i32, %arg2: memref<1xi32, #tpu.memory_space<smem>>) -> (i32, i32, i32) {
    %c0_i32 = arith.constant 0 : i32
    %c0_i32_0 = arith.constant 0 : i32
    return %arg1, %arg0, %c0_i32 : i32, i32, i32
  }
  func.func @transform_2(%arg0: i32, %arg1: i32, %arg2: memref<1xi32, #tpu.memory_space<smem>>) -> (i32, i32) {
    %c0_i32 = arith.constant 0 : i32
    %c0_i32_0 = arith.constant 0 : i32
    %c0_i32_1 = arith.constant 0 : i32
    return %c0_i32, %c0_i32_0 : i32, i32
  }
  func.func @transform_3(%arg0: i32, %arg1: i32, %arg2: memref<1xi32, #tpu.memory_space<smem>>) -> (i32, i32) {
    %c0_i32 = arith.constant 0 : i32
    %c0_i32_0 = arith.constant 0 : i32
    %c0_i32_1 = arith.constant 0 : i32
    return %c0_i32, %c0_i32_0 : i32, i32
  }
  func.func @transform_4(%arg0: i32, %arg1: i32, %arg2: memref<1xi32, #tpu.memory_space<smem>>) -> (i32, i32) {
    %c0_i32 = arith.constant 0 : i32
    %c0_i32_0 = arith.constant 0 : i32
    %c0_i32_1 = arith.constant 0 : i32
    return %c0_i32, %c0_i32_0 : i32, i32
  }
  func.func @transform_5(%arg0: i32, %arg1: i32, %arg2: memref<1xi32, #tpu.memory_space<smem>>) -> (i32, i32) {
    %c0_i32 = arith.constant 0 : i32
    %c0_i32_0 = arith.constant 0 : i32
    %c0_i32_1 = arith.constant 0 : i32
    return %c0_i32, %c0_i32_0 : i32, i32
  }
  func.func @transform_6(%arg0: i32, %arg1: i32, %arg2: memref<1xi32, #tpu.memory_space<smem>>) -> (i32, i32, i32) {
    %c0_i32 = arith.constant 0 : i32
    %c0_i32_0 = arith.constant 0 : i32
    return %arg1, %arg0, %c0_i32 : i32, i32, i32
  }
  func.func @transform_7(%arg0: i32, %arg1: i32, %arg2: memref<1xi32, #tpu.memory_space<smem>>) -> (i32, i32, i32) {
    %c0_i32 = arith.constant 0 : i32
    %c0_i32_0 = arith.constant 0 : i32
    %c0_i32_1 = arith.constant 0 : i32
    return %c0_i32, %arg0, %c0_i32_0 : i32, i32, i32
  }
}

module attributes {stable_mosaic.version = 11 : i64} {
  func.func @gru_kernel(%arg0: i32, %arg1: i32, %arg2: memref<1xi32, #tpu.memory_space<smem>>, %arg3: memref<8x1xi32, #tpu.memory_space<vmem>>, %arg4: memref<16x8x128xf32, #tpu.memory_space<vmem>>, %arg5: memref<128x384xf32, #tpu.memory_space<vmem>>, %arg6: memref<1x384xf32, #tpu.memory_space<vmem>>, %arg7: memref<128x384xf32, #tpu.memory_space<vmem>>, %arg8: memref<1x128xf32, #tpu.memory_space<vmem>>, %arg9: memref<16x8x128xf32, #tpu.memory_space<vmem>>, %arg10: memref<1x8x128xf32, #tpu.memory_space<vmem>>, %arg11: memref<8x128xf32, #tpu.memory_space<vmem>>, %arg12: memref<16x8x384xf32, #tpu.memory_space<vmem>>) attributes {dimension_semantics = [#tpu.dimension_semantics<parallel>, #tpu.dimension_semantics<arbitrary>], iteration_bounds = array<i64: 1, 1>, scalar_prefetch = 1 : i64, scratch_operands = 2 : i64, tpu.core_type = #tpu.core_type<tc>, window_params = [{transform_indices = @transform_0, window_bounds = array<i64: 8, 1>}, {transform_indices = @transform_1, window_bounds = array<i64: 16, 8, 128>}, {pipeline_mode = #tpu.pipeline_mode<synchronous>, transform_indices = @transform_2, window_bounds = array<i64: 128, 384>}, {pipeline_mode = #tpu.pipeline_mode<synchronous>, transform_indices = @transform_3, window_bounds = array<i64: 1, 384>}, {pipeline_mode = #tpu.pipeline_mode<synchronous>, transform_indices = @transform_4, window_bounds = array<i64: 128, 384>}, {pipeline_mode = #tpu.pipeline_mode<synchronous>, transform_indices = @transform_5, window_bounds = array<i64: 1, 128>}, {transform_indices = @transform_6, window_bounds = array<i64: 16, 8, 128>}, {transform_indices = @transform_7, window_bounds = array<i64: 1, 8, 128>}]} {
    %c16_i32 = arith.constant 16 : i32
    %0 = arith.muli %arg1, %c16_i32 : i32
    %c0_i32 = arith.constant 0 : i32
    %1 = arith.cmpi eq, %arg1, %c0_i32 : i32
    %2 = arith.extui %1 : i1 to i32
    %c0_i32_0 = arith.constant 0 : i32
    %3 = arith.cmpi ne, %2, %c0_i32_0 : i32
    scf.if %3 {
      %cst = arith.constant 0.000000e+00 : f32
      %16 = vector.broadcast %cst : f32 to vector<8x128xf32>
      %c0_7 = arith.constant 0 : index
      %c0_8 = arith.constant 0 : index
      %17 = vector.load %arg11[%c0_7, %c0_8] : memref<8x128xf32, #tpu.memory_space<vmem>>, vector<8x128xf32>
      tpu.vector_store %arg11[%c0_7, %c0_8], %16 {strides = array<i32>} : memref<8x128xf32, #tpu.memory_space<vmem>>, vector<8x128xf32>,
    } else {
    }
    %4 = arith.index_cast %arg0 : i32 to index
    %5 = memref.load %arg2[%4] : memref<1xi32, #tpu.memory_space<smem>>
    %6 = arith.cmpi slt, %0, %5 : i32
    %7 = arith.extui %6 : i1 to i32
    %c0_i32_1 = arith.constant 0 : i32
    %8 = arith.cmpi ne, %7, %c0_i32_1 : i32
    scf.if %8 {
      %c0_7 = arith.constant 0 : index
      %c0_8 = arith.constant 0 : index
      %c0_9 = arith.constant 0 : index
      %16 = vector.load %arg4[%c0_7, %c0_8, %c0_9] : memref<16x8x128xf32, #tpu.memory_space<vmem>>, vector<16x8x128xf32>
      %17 = vector.shape_cast %16 : vector<16x8x128xf32> to vector<128x128xf32>
      %c0_10 = arith.constant 0 : index
      %c0_11 = arith.constant 0 : index
      %18 = vector.load %arg5[%c0_10, %c0_11] : memref<128x384xf32, #tpu.memory_space<vmem>>, vector<128x384xf32>
      %cst = arith.constant dense<0.000000e+00> : vector<128x384xf32>
      %19 = tpu.matmul %17, %18, %cst {dimension_numbers = #tpu.dot_dimension_numbers<[1], [0], [0], [1], [0, 0, 1, 1], [], []>} : vector<128x128xf32>, vector<128x384xf32>, vector<128x384xf32> -> vector<128x384xf32>
      %c0_12 = arith.constant 0 : index
      %c0_13 = arith.constant 0 : index
      %20 = vector.load %arg6[%c0_12, %c0_13] : memref<1x384xf32, #tpu.memory_space<vmem>>, vector<1x384xf32>
      %21 = vector.broadcast %20 : vector<1x384xf32> to vector<128x384xf32>
      %22 = arith.addf %19, %21 : vector<128x384xf32>
      %23 = vector.shape_cast %22 : vector<128x384xf32> to vector<16x8x384xf32>
      %c0_14 = arith.constant 0 : index
      %c0_15 = arith.constant 0 : index
      %c0_16 = arith.constant 0 : index
      %24 = vector.load %arg12[%c0_14, %c0_15, %c0_16] : memref<16x8x384xf32, #tpu.memory_space<vmem>>, vector<16x8x384xf32>
      tpu.vector_store %arg12[%c0_14, %c0_15, %c0_16], %23 {strides = array<i32>} : memref<16x8x384xf32, #tpu.memory_space<vmem>>, vector<16x8x384xf32>,
      %c0_17 = arith.constant 0 : index
      %c0_18 = arith.constant 0 : index
      %25 = vector.load %arg3[%c0_17, %c0_18] : memref<8x1xi32, #tpu.memory_space<vmem>>, vector<8x1xi32>
      %c0_19 = arith.constant 0 : index
      %c0_20 = arith.constant 0 : index
      %26 = vector.load %arg7[%c0_19, %c0_20] : memref<128x384xf32, #tpu.memory_space<vmem>>, vector<128x384xf32>
      %c0_21 = arith.constant 0 : index
      %c0_22 = arith.constant 0 : index
      %27 = vector.load %arg8[%c0_21, %c0_22] : memref<1x128xf32, #tpu.memory_space<vmem>>, vector<1x128xf32>
      %c0_23 = arith.constant 0 : index
      %c0_24 = arith.constant 0 : index
      %28 = vector.load %arg11[%c0_23, %c0_24] : memref<8x128xf32, #tpu.memory_space<vmem>>, vector<8x128xf32>
      %c0_i32_25 = arith.constant 0 : i32
      %29 = arith.addi %0, %c0_i32_25 : i32
      %30 = arith.index_cast %c0_i32_25 : i32 to index
      %c0_26 = arith.constant 0 : index
      %c0_27 = arith.constant 0 : index
      %31 = vector.load %arg12[%30, %c0_26, %c0_27] : memref<16x8x384xf32, #tpu.memory_space<vmem>>, vector<1x8x384xf32>
      %32 = vector.shape_cast %31 : vector<1x8x384xf32> to vector<8x384xf32>
      %cst_28 = arith.constant dense<0.000000e+00> : vector<8x384xf32>
      %33 = tpu.matmul %28, %26, %cst_28 {dimension_numbers = #tpu.dot_dimension_numbers<[1], [0], [0], [1], [0, 0, 1, 1], [], []>} : vector<8x128xf32>, vector<128x384xf32>, vector<8x384xf32> -> vector<8x384xf32>
      %34 = vector.extract_strided_slice %32 {offsets = [0, 0], sizes = [8, 128], strides = [1, 1]} : vector<8x384xf32> to vector<8x128xf32>
      %35 = vector.extract_strided_slice %33 {offsets = [0, 0], sizes = [8, 128], strides = [1, 1]} : vector<8x384xf32> to vector<8x128xf32>
      %36 = arith.addf %34, %35 : vector<8x128xf32>
      %37 = arith.negf %36 : vector<8x128xf32>
      %38 = math.exp %37 : vector<8x128xf32>
      %cst_29 = arith.constant 1.000000e+00 : f32
      %39 = vector.broadcast %cst_29 : f32 to vector<8x128xf32>
      %40 = arith.addf %39, %38 : vector<8x128xf32>
      %41 = arith.divf %39, %40 : vector<8x128xf32>
      %42 = vector.extract_strided_slice %32 {offsets = [0, 128], sizes = [8, 128], strides = [1, 1]} : vector<8x384xf32> to vector<8x128xf32>
      %43 = vector.extract_strided_slice %33 {offsets = [0, 128], sizes = [8, 128], strides = [1, 1]} : vector<8x384xf32> to vector<8x128xf32>
      %44 = arith.addf %42, %43 : vector<8x128xf32>
      %45 = arith.negf %44 : vector<8x128xf32>
      %46 = math.exp %45 : vector<8x128xf32>
      %cst_30 = arith.constant 1.000000e+00 : f32
      %47 = vector.broadcast %cst_30 : f32 to vector<8x128xf32>
      %48 = arith.addf %47, %46 : vector<8x128xf32>
      %49 = arith.divf %47, %48 : vector<8x128xf32>
      %50 = vector.extract_strided_slice %32 {offsets = [0, 256], sizes = [8, 128], strides = [1, 1]} : vector<8x384xf32> to vector<8x128xf32>
      %51 = vector.extract_strided_slice %33 {offsets = [0, 256], sizes = [8, 128], strides = [1, 1]} : vector<8x384xf32> to vector<8x128xf32>
      %52 = vector.broadcast %27 : vector<1x128xf32> to vector<8x128xf32>
      %53 = arith.addf %51, %52 : vector<8x128xf32>
      %54 = arith.mulf %41, %53 : vector<8x128xf32>
      %55 = arith.addf %50, %54 : vector<8x128xf32>
      %56 = math.tanh %55 : vector<8x128xf32>
      %cst_31 = arith.constant 1.000000e+00 : f32
      %57 = vector.broadcast %cst_31 : f32 to vector<8x128xf32>
      %58 = arith.subf %57, %49 : vector<8x128xf32>
      %59 = arith.mulf %58, %56 : vector<8x128xf32>
      %60 = arith.mulf %49, %28 : vector<8x128xf32>
      %61 = arith.addf %59, %60 : vector<8x128xf32>
      %62 = vector.broadcast %29 : i32 to vector<8x1xi32>
      %63 = arith.cmpi slt, %62, %25 : vector<8x1xi32>
      %cst_32 = arith.constant 0.000000e+00 : f32
      %64 = vector.shape_cast %63 : vector<8x1xi1> to vector<8x1xi1>
      %65 = vector.broadcast %64 : vector<8x1xi1> to vector<8x128xi1>
      %66 = vector.broadcast %cst_32 : f32 to vector<8x128xf32>
      %67 = arith.select %65, %61, %66 : vector<8x128xi1>, vector<8x128xf32>
      %68 = arith.index_cast %c0_i32_25 : i32 to index
      %c0_33 = arith.constant 0 : index
      %c0_34 = arith.constant 0 : index
      %69 = vector.load %arg9[%68, %c0_33, %c0_34] : memref<16x8x128xf32, #tpu.memory_space<vmem>>, vector<1x8x128xf32>
      %70 = vector.shape_cast %69 : vector<1x8x128xf32> to vector<8x128xf32>
      %71 = vector.shape_cast %67 : vector<8x128xf32> to vector<1x8x128xf32>
      tpu.vector_store %arg9[%68, %c0_33, %c0_34], %71 {strides = array<i32>} : memref<16x8x128xf32, #tpu.memory_space<vmem>>, vector<1x8x128xf32>,
      %72 = vector.shape_cast %63 : vector<8x1xi1> to vector<8x1xi1>
      %73 = vector.broadcast %72 : vector<8x1xi1> to vector<8x128xi1>
      %74 = arith.select %73, %61, %28 : vector<8x128xi1>, vector<8x128xf32>
      %c1_i32 = arith.constant 1 : i32
      %75 = arith.addi %0, %c1_i32 : i32
      %76 = arith.index_cast %c1_i32 : i32 to index
      %c0_35 = arith.constant 0 : index
      %c0_36 = arith.constant 0 : index
      %77 = vector.load %arg12[%76, %c0_35, %c0_36] : memref<16x8x384xf32, #tpu.memory_space<vmem>>, vector<1x8x384xf32>
      %78 = vector.shape_cast %77 : vector<1x8x384xf32> to vector<8x384xf32>
      %cst_37 = arith.constant dense<0.000000e+00> : vector<8x384xf32>
      %79 = tpu.matmul %74, %26, %cst_37 {dimension_numbers = #tpu.dot_dimension_numbers<[1], [0], [0], [1], [0, 0, 1, 1], [], []>} : vector<8x128xf32>, vector<128x384xf32>, vector<8x384xf32> -> vector<8x384xf32>
      %80 = vector.extract_strided_slice %78 {offsets = [0, 0], sizes = [8, 128], strides = [1, 1]} : vector<8x384xf32> to vector<8x128xf32>
      %81 = vector.extract_strided_slice %79 {offsets = [0, 0], sizes = [8, 128], strides = [1, 1]} : vector<8x384xf32> to vector<8x128xf32>
      %82 = arith.addf %80, %81 : vector<8x128xf32>
      %83 = arith.negf %82 : vector<8x128xf32>
      %84 = math.exp %83 : vector<8x128xf32>
      %cst_38 = arith.constant 1.000000e+00 : f32
      %85 = vector.broadcast %cst_38 : f32 to vector<8x128xf32>
      %86 = arith.addf %85, %84 : vector<8x128xf32>
      %87 = arith.divf %85, %86 : vector<8x128xf32>
      %88 = vector.extract_strided_slice %78 {offsets = [0, 128], sizes = [8, 128], strides = [1, 1]} : vector<8x384xf32> to vector<8x128xf32>
      %89 = vector.extract_strided_slice %79 {offsets = [0, 128], sizes = [8, 128], strides = [1, 1]} : vector<8x384xf32> to vector<8x128xf32>
      %90 = arith.addf %88, %89 : vector<8x128xf32>
      %91 = arith.negf %90 : vector<8x128xf32>
      %92 = math.exp %91 : vector<8x128xf32>
      %cst_39 = arith.constant 1.000000e+00 : f32
      %93 = vector.broadcast %cst_39 : f32 to vector<8x128xf32>
      %94 = arith.addf %93, %92 : vector<8x128xf32>
      %95 = arith.divf %93, %94 : vector<8x128xf32>
      %96 = vector.extract_strided_slice %78 {offsets = [0, 256], sizes = [8, 128], strides = [1, 1]} : vector<8x384xf32> to vector<8x128xf32>
      %97 = vector.extract_strided_slice %79 {offsets = [0, 256], sizes = [8, 128], strides = [1, 1]} : vector<8x384xf32> to vector<8x128xf32>
      %98 = vector.broadcast %27 : vector<1x128xf32> to vector<8x128xf32>
      %99 = arith.addf %97, %98 : vector<8x128xf32>
      %100 = arith.mulf %87, %99 : vector<8x128xf32>
      %101 = arith.addf %96, %100 : vector<8x128xf32>
      %102 = math.tanh %101 : vector<8x128xf32>
      %cst_40 = arith.constant 1.000000e+00 : f32
      %103 = vector.broadcast %cst_40 : f32 to vector<8x128xf32>
      %104 = arith.subf %103, %95 : vector<8x128xf32>
      %105 = arith.mulf %104, %102 : vector<8x128xf32>
      %106 = arith.mulf %95, %74 : vector<8x128xf32>
      %107 = arith.addf %105, %106 : vector<8x128xf32>
      %108 = vector.broadcast %75 : i32 to vector<8x1xi32>
      %109 = arith.cmpi slt, %108, %25 : vector<8x1xi32>
      %cst_41 = arith.constant 0.000000e+00 : f32
      %110 = vector.shape_cast %109 : vector<8x1xi1> to vector<8x1xi1>
      %111 = vector.broadcast %110 : vector<8x1xi1> to vector<8x128xi1>
      %112 = vector.broadcast %cst_41 : f32 to vector<8x128xf32>
      %113 = arith.select %111, %107, %112 : vector<8x128xi1>, vector<8x128xf32>
      %114 = arith.index_cast %c1_i32 : i32 to index
      %c0_42 = arith.constant 0 : index
      %c0_43 = arith.constant 0 : index
      %115 = vector.load %arg9[%114, %c0_42, %c0_43] : memref<16x8x128xf32, #tpu.memory_space<vmem>>, vector<1x8x128xf32>
      %116 = vector.shape_cast %115 : vector<1x8x128xf32> to vector<8x128xf32>
      %117 = vector.shape_cast %113 : vector<8x128xf32> to vector<1x8x128xf32>
      tpu.vector_store %arg9[%114, %c0_42, %c0_43], %117 {strides = array<i32>} : memref<16x8x128xf32, #tpu.memory_space<vmem>>, vector<1x8x128xf32>,
      %118 = vector.shape_cast %109 : vector<8x1xi1> to vector<8x1xi1>
      %119 = vector.broadcast %118 : vector<8x1xi1> to vector<8x128xi1>
      %120 = arith.select %119, %107, %74 : vector<8x128xi1>, vector<8x128xf32>
      %c2_i32 = arith.constant 2 : i32
      %121 = arith.addi %0, %c2_i32 : i32
      %122 = arith.index_cast %c2_i32 : i32 to index
      %c0_44 = arith.constant 0 : index
      %c0_45 = arith.constant 0 : index
      %123 = vector.load %arg12[%122, %c0_44, %c0_45] : memref<16x8x384xf32, #tpu.memory_space<vmem>>, vector<1x8x384xf32>
      %124 = vector.shape_cast %123 : vector<1x8x384xf32> to vector<8x384xf32>
      %cst_46 = arith.constant dense<0.000000e+00> : vector<8x384xf32>
      %125 = tpu.matmul %120, %26, %cst_46 {dimension_numbers = #tpu.dot_dimension_numbers<[1], [0], [0], [1], [0, 0, 1, 1], [], []>} : vector<8x128xf32>, vector<128x384xf32>, vector<8x384xf32> -> vector<8x384xf32>
      %126 = vector.extract_strided_slice %124 {offsets = [0, 0], sizes = [8, 128], strides = [1, 1]} : vector<8x384xf32> to vector<8x128xf32>
      %127 = vector.extract_strided_slice %125 {offsets = [0, 0], sizes = [8, 128], strides = [1, 1]} : vector<8x384xf32> to vector<8x128xf32>
      %128 = arith.addf %126, %127 : vector<8x128xf32>
      %129 = arith.negf %128 : vector<8x128xf32>
      %130 = math.exp %129 : vector<8x128xf32>
      %cst_47 = arith.constant 1.000000e+00 : f32
      %131 = vector.broadcast %cst_47 : f32 to vector<8x128xf32>
      %132 = arith.addf %131, %130 : vector<8x128xf32>
      %133 = arith.divf %131, %132 : vector<8x128xf32>
      %134 = vector.extract_strided_slice %124 {offsets = [0, 128], sizes = [8, 128], strides = [1, 1]} : vector<8x384xf32> to vector<8x128xf32>
      %135 = vector.extract_strided_slice %125 {offsets = [0, 128], sizes = [8, 128], strides = [1, 1]} : vector<8x384xf32> to vector<8x128xf32>
      %136 = arith.addf %134, %135 : vector<8x128xf32>
      %137 = arith.negf %136 : vector<8x128xf32>
      %138 = math.exp %137 : vector<8x128xf32>
      %cst_48 = arith.constant 1.000000e+00 : f32
      %139 = vector.broadcast %cst_48 : f32 to vector<8x128xf32>
      %140 = arith.addf %139, %138 : vector<8x128xf32>
      %141 = arith.divf %139, %140 : vector<8x128xf32>
      %142 = vector.extract_strided_slice %124 {offsets = [0, 256], sizes = [8, 128], strides = [1, 1]} : vector<8x384xf32> to vector<8x128xf32>
      %143 = vector.extract_strided_slice %125 {offsets = [0, 256], sizes = [8, 128], strides = [1, 1]} : vector<8x384xf32> to vector<8x128xf32>
      %144 = vector.broadcast %27 : vector<1x128xf32> to vector<8x128xf32>
      %145 = arith.addf %143, %144 : vector<8x128xf32>
      %146 = arith.mulf %133, %145 : vector<8x128xf32>
      %147 = arith.addf %142, %146 : vector<8x128xf32>
      %148 = math.tanh %147 : vector<8x128xf32>
      %cst_49 = arith.constant 1.000000e+00 : f32
      %149 = vector.broadcast %cst_49 : f32 to vector<8x128xf32>
      %150 = arith.subf %149, %141 : vector<8x128xf32>
      %151 = arith.mulf %150, %148 : vector<8x128xf32>
      %152 = arith.mulf %141, %120 : vector<8x128xf32>
      %153 = arith.addf %151, %152 : vector<8x128xf32>
      %154 = vector.broadcast %121 : i32 to vector<8x1xi32>
      %155 = arith.cmpi slt, %154, %25 : vector<8x1xi32>
      %cst_50 = arith.constant 0.000000e+00 : f32
      %156 = vector.shape_cast %155 : vector<8x1xi1> to vector<8x1xi1>
      %157 = vector.broadcast %156 : vector<8x1xi1> to vector<8x128xi1>
      %158 = vector.broadcast %cst_50 : f32 to vector<8x128xf32>
      %159 = arith.select %157, %153, %158 : vector<8x128xi1>, vector<8x128xf32>
      %160 = arith.index_cast %c2_i32 : i32 to index
      %c0_51 = arith.constant 0 : index
      %c0_52 = arith.constant 0 : index
      %161 = vector.load %arg9[%160, %c0_51, %c0_52] : memref<16x8x128xf32, #tpu.memory_space<vmem>>, vector<1x8x128xf32>
      %162 = vector.shape_cast %161 : vector<1x8x128xf32> to vector<8x128xf32>
      %163 = vector.shape_cast %159 : vector<8x128xf32> to vector<1x8x128xf32>
      tpu.vector_store %arg9[%160, %c0_51, %c0_52], %163 {strides = array<i32>} : memref<16x8x128xf32, #tpu.memory_space<vmem>>, vector<1x8x128xf32>,
      %164 = vector.shape_cast %155 : vector<8x1xi1> to vector<8x1xi1>
      %165 = vector.broadcast %164 : vector<8x1xi1> to vector<8x128xi1>
      %166 = arith.select %165, %153, %120 : vector<8x128xi1>, vector<8x128xf32>
      %c3_i32 = arith.constant 3 : i32
      %167 = arith.addi %0, %c3_i32 : i32
      %168 = arith.index_cast %c3_i32 : i32 to index
      %c0_53 = arith.constant 0 : index
      %c0_54 = arith.constant 0 : index
      %169 = vector.load %arg12[%168, %c0_53, %c0_54] : memref<16x8x384xf32, #tpu.memory_space<vmem>>, vector<1x8x384xf32>
      %170 = vector.shape_cast %169 : vector<1x8x384xf32> to vector<8x384xf32>
      %cst_55 = arith.constant dense<0.000000e+00> : vector<8x384xf32>
      %171 = tpu.matmul %166, %26, %cst_55 {dimension_numbers = #tpu.dot_dimension_numbers<[1], [0], [0], [1], [0, 0, 1, 1], [], []>} : vector<8x128xf32>, vector<128x384xf32>, vector<8x384xf32> -> vector<8x384xf32>
      %172 = vector.extract_strided_slice %170 {offsets = [0, 0], sizes = [8, 128], strides = [1, 1]} : vector<8x384xf32> to vector<8x128xf32>
      %173 = vector.extract_strided_slice %171 {offsets = [0, 0], sizes = [8, 128], strides = [1, 1]} : vector<8x384xf32> to vector<8x128xf32>
      %174 = arith.addf %172, %173 : vector<8x128xf32>
      %175 = arith.negf %174 : vector<8x128xf32>
      %176 = math.exp %175 : vector<8x128xf32>
      %cst_56 = arith.constant 1.000000e+00 : f32
      %177 = vector.broadcast %cst_56 : f32 to vector<8x128xf32>
      %178 = arith.addf %177, %176 : vector<8x128xf32>
      %179 = arith.divf %177, %178 : vector<8x128xf32>
      %180 = vector.extract_strided_slice %170 {offsets = [0, 128], sizes = [8, 128], strides = [1, 1]} : vector<8x384xf32> to vector<8x128xf32>
      %181 = vector.extract_strided_slice %171 {offsets = [0, 128], sizes = [8, 128], strides = [1, 1]} : vector<8x384xf32> to vector<8x128xf32>
      %182 = arith.addf %180, %181 : vector<8x128xf32>
      %183 = arith.negf %182 : vector<8x128xf32>
      %184 = math.exp %183 : vector<8x128xf32>
      %cst_57 = arith.constant 1.000000e+00 : f32
      %185 = vector.broadcast %cst_57 : f32 to vector<8x128xf32>
      %186 = arith.addf %185, %184 : vector<8x128xf32>
      %187 = arith.divf %185, %186 : vector<8x128xf32>
      %188 = vector.extract_strided_slice %170 {offsets = [0, 256], sizes = [8, 128], strides = [1, 1]} : vector<8x384xf32> to vector<8x128xf32>
      %189 = vector.extract_strided_slice %171 {offsets = [0, 256], sizes = [8, 128], strides = [1, 1]} : vector<8x384xf32> to vector<8x128xf32>
      %190 = vector.broadcast %27 : vector<1x128xf32> to vector<8x128xf32>
      %191 = arith.addf %189, %190 : vector<8x128xf32>
      %192 = arith.mulf %179, %191 : vector<8x128xf32>
      %193 = arith.addf %188, %192 : vector<8x128xf32>
      %194 = math.tanh %193 : vector<8x128xf32>
      %cst_58 = arith.constant 1.000000e+00 : f32
      %195 = vector.broadcast %cst_58 : f32 to vector<8x128xf32>
      %196 = arith.subf %195, %187 : vector<8x128xf32>
      %197 = arith.mulf %196, %194 : vector<8x128xf32>
      %198 = arith.mulf %187, %166 : vector<8x128xf32>
      %199 = arith.addf %197, %198 : vector<8x128xf32>
      %200 = vector.broadcast %167 : i32 to vector<8x1xi32>
      %201 = arith.cmpi slt, %200, %25 : vector<8x1xi32>
      %cst_59 = arith.constant 0.000000e+00 : f32
      %202 = vector.shape_cast %201 : vector<8x1xi1> to vector<8x1xi1>
      %203 = vector.broadcast %202 : vector<8x1xi1> to vector<8x128xi1>
      %204 = vector.broadcast %cst_59 : f32 to vector<8x128xf32>
      %205 = arith.select %203, %199, %204 : vector<8x128xi1>, vector<8x128xf32>
      %206 = arith.index_cast %c3_i32 : i32 to index
      %c0_60 = arith.constant 0 : index
      %c0_61 = arith.constant 0 : index
      %207 = vector.load %arg9[%206, %c0_60, %c0_61] : memref<16x8x128xf32, #tpu.memory_space<vmem>>, vector<1x8x128xf32>
      %208 = vector.shape_cast %207 : vector<1x8x128xf32> to vector<8x128xf32>
      %209 = vector.shape_cast %205 : vector<8x128xf32> to vector<1x8x128xf32>
      tpu.vector_store %arg9[%206, %c0_60, %c0_61], %209 {strides = array<i32>} : memref<16x8x128xf32, #tpu.memory_space<vmem>>, vector<1x8x128xf32>,
      %210 = vector.shape_cast %201 : vector<8x1xi1> to vector<8x1xi1>
      %211 = vector.broadcast %210 : vector<8x1xi1> to vector<8x128xi1>
      %212 = arith.select %211, %199, %166 : vector<8x128xi1>, vector<8x128xf32>
      %c4_i32 = arith.constant 4 : i32
      %213 = arith.addi %0, %c4_i32 : i32
      %214 = arith.index_cast %c4_i32 : i32 to index
      %c0_62 = arith.constant 0 : index
      %c0_63 = arith.constant 0 : index
      %215 = vector.load %arg12[%214, %c0_62, %c0_63] : memref<16x8x384xf32, #tpu.memory_space<vmem>>, vector<1x8x384xf32>
      %216 = vector.shape_cast %215 : vector<1x8x384xf32> to vector<8x384xf32>
      %cst_64 = arith.constant dense<0.000000e+00> : vector<8x384xf32>
      %217 = tpu.matmul %212, %26, %cst_64 {dimension_numbers = #tpu.dot_dimension_numbers<[1], [0], [0], [1], [0, 0, 1, 1], [], []>} : vector<8x128xf32>, vector<128x384xf32>, vector<8x384xf32> -> vector<8x384xf32>
      %218 = vector.extract_strided_slice %216 {offsets = [0, 0], sizes = [8, 128], strides = [1, 1]} : vector<8x384xf32> to vector<8x128xf32>
      %219 = vector.extract_strided_slice %217 {offsets = [0, 0], sizes = [8, 128], strides = [1, 1]} : vector<8x384xf32> to vector<8x128xf32>
      %220 = arith.addf %218, %219 : vector<8x128xf32>
      %221 = arith.negf %220 : vector<8x128xf32>
      %222 = math.exp %221 : vector<8x128xf32>
      %cst_65 = arith.constant 1.000000e+00 : f32
      %223 = vector.broadcast %cst_65 : f32 to vector<8x128xf32>
      %224 = arith.addf %223, %222 : vector<8x128xf32>
      %225 = arith.divf %223, %224 : vector<8x128xf32>
      %226 = vector.extract_strided_slice %216 {offsets = [0, 128], sizes = [8, 128], strides = [1, 1]} : vector<8x384xf32> to vector<8x128xf32>
      %227 = vector.extract_strided_slice %217 {offsets = [0, 128], sizes = [8, 128], strides = [1, 1]} : vector<8x384xf32> to vector<8x128xf32>
      %228 = arith.addf %226, %227 : vector<8x128xf32>
      %229 = arith.negf %228 : vector<8x128xf32>
      %230 = math.exp %229 : vector<8x128xf32>
      %cst_66 = arith.constant 1.000000e+00 : f32
      %231 = vector.broadcast %cst_66 : f32 to vector<8x128xf32>
      %232 = arith.addf %231, %230 : vector<8x128xf32>
      %233 = arith.divf %231, %232 : vector<8x128xf32>
      %234 = vector.extract_strided_slice %216 {offsets = [0, 256], sizes = [8, 128], strides = [1, 1]} : vector<8x384xf32> to vector<8x128xf32>
      %235 = vector.extract_strided_slice %217 {offsets = [0, 256], sizes = [8, 128], strides = [1, 1]} : vector<8x384xf32> to vector<8x128xf32>
      %236 = vector.broadcast %27 : vector<1x128xf32> to vector<8x128xf32>
      %237 = arith.addf %235, %236 : vector<8x128xf32>
      %238 = arith.mulf %225, %237 : vector<8x128xf32>
      %239 = arith.addf %234, %238 : vector<8x128xf32>
      %240 = math.tanh %239 : vector<8x128xf32>
      %cst_67 = arith.constant 1.000000e+00 : f32
      %241 = vector.broadcast %cst_67 : f32 to vector<8x128xf32>
      %242 = arith.subf %241, %233 : vector<8x128xf32>
      %243 = arith.mulf %242, %240 : vector<8x128xf32>
      %244 = arith.mulf %233, %212 : vector<8x128xf32>
      %245 = arith.addf %243, %244 : vector<8x128xf32>
      %246 = vector.broadcast %213 : i32 to vector<8x1xi32>
      %247 = arith.cmpi slt, %246, %25 : vector<8x1xi32>
      %cst_68 = arith.constant 0.000000e+00 : f32
      %248 = vector.shape_cast %247 : vector<8x1xi1> to vector<8x1xi1>
      %249 = vector.broadcast %248 : vector<8x1xi1> to vector<8x128xi1>
      %250 = vector.broadcast %cst_68 : f32 to vector<8x128xf32>
      %251 = arith.select %249, %245, %250 : vector<8x128xi1>, vector<8x128xf32>
      %252 = arith.index_cast %c4_i32 : i32 to index
      %c0_69 = arith.constant 0 : index
      %c0_70 = arith.constant 0 : index
      %253 = vector.load %arg9[%252, %c0_69, %c0_70] : memref<16x8x128xf32, #tpu.memory_space<vmem>>, vector<1x8x128xf32>
      %254 = vector.shape_cast %253 : vector<1x8x128xf32> to vector<8x128xf32>
      %255 = vector.shape_cast %251 : vector<8x128xf32> to vector<1x8x128xf32>
      tpu.vector_store %arg9[%252, %c0_69, %c0_70], %255 {strides = array<i32>} : memref<16x8x128xf32, #tpu.memory_space<vmem>>, vector<1x8x128xf32>,
      %256 = vector.shape_cast %247 : vector<8x1xi1> to vector<8x1xi1>
      %257 = vector.broadcast %256 : vector<8x1xi1> to vector<8x128xi1>
      %258 = arith.select %257, %245, %212 : vector<8x128xi1>, vector<8x128xf32>
      %c5_i32 = arith.constant 5 : i32
      %259 = arith.addi %0, %c5_i32 : i32
      %260 = arith.index_cast %c5_i32 : i32 to index
      %c0_71 = arith.constant 0 : index
      %c0_72 = arith.constant 0 : index
      %261 = vector.load %arg12[%260, %c0_71, %c0_72] : memref<16x8x384xf32, #tpu.memory_space<vmem>>, vector<1x8x384xf32>
      %262 = vector.shape_cast %261 : vector<1x8x384xf32> to vector<8x384xf32>
      %cst_73 = arith.constant dense<0.000000e+00> : vector<8x384xf32>
      %263 = tpu.matmul %258, %26, %cst_73 {dimension_numbers = #tpu.dot_dimension_numbers<[1], [0], [0], [1], [0, 0, 1, 1], [], []>} : vector<8x128xf32>, vector<128x384xf32>, vector<8x384xf32> -> vector<8x384xf32>
      %264 = vector.extract_strided_slice %262 {offsets = [0, 0], sizes = [8, 128], strides = [1, 1]} : vector<8x384xf32> to vector<8x128xf32>
      %265 = vector.extract_strided_slice %263 {offsets = [0, 0], sizes = [8, 128], strides = [1, 1]} : vector<8x384xf32> to vector<8x128xf32>
      %266 = arith.addf %264, %265 : vector<8x128xf32>
      %267 = arith.negf %266 : vector<8x128xf32>
      %268 = math.exp %267 : vector<8x128xf32>
      %cst_74 = arith.constant 1.000000e+00 : f32
      %269 = vector.broadcast %cst_74 : f32 to vector<8x128xf32>
      %270 = arith.addf %269, %268 : vector<8x128xf32>
      %271 = arith.divf %269, %270 : vector<8x128xf32>
      %272 = vector.extract_strided_slice %262 {offsets = [0, 128], sizes = [8, 128], strides = [1, 1]} : vector<8x384xf32> to vector<8x128xf32>
      %273 = vector.extract_strided_slice %263 {offsets = [0, 128], sizes = [8, 128], strides = [1, 1]} : vector<8x384xf32> to vector<8x128xf32>
      %274 = arith.addf %272, %273 : vector<8x128xf32>
      %275 = arith.negf %274 : vector<8x128xf32>
      %276 = math.exp %275 : vector<8x128xf32>
      %cst_75 = arith.constant 1.000000e+00 : f32
      %277 = vector.broadcast %cst_75 : f32 to vector<8x128xf32>
      %278 = arith.addf %277, %276 : vector<8x128xf32>
      %279 = arith.divf %277, %278 : vector<8x128xf32>
      %280 = vector.extract_strided_slice %262 {offsets = [0, 256], sizes = [8, 128], strides = [1, 1]} : vector<8x384xf32> to vector<8x128xf32>
      %281 = vector.extract_strided_slice %263 {offsets = [0, 256], sizes = [8, 128], strides = [1, 1]} : vector<8x384xf32> to vector<8x128xf32>
      %282 = vector.broadcast %27 : vector<1x128xf32> to vector<8x128xf32>
      %283 = arith.addf %281, %282 : vector<8x128xf32>
      %284 = arith.mulf %271, %283 : vector<8x128xf32>
      %285 = arith.addf %280, %284 : vector<8x128xf32>
      %286 = math.tanh %285 : vector<8x128xf32>
      %cst_76 = arith.constant 1.000000e+00 : f32
      %287 = vector.broadcast %cst_76 : f32 to vector<8x128xf32>
      %288 = arith.subf %287, %279 : vector<8x128xf32>
      %289 = arith.mulf %288, %286 : vector<8x128xf32>
      %290 = arith.mulf %279, %258 : vector<8x128xf32>
      %291 = arith.addf %289, %290 : vector<8x128xf32>
      %292 = vector.broadcast %259 : i32 to vector<8x1xi32>
      %293 = arith.cmpi slt, %292, %25 : vector<8x1xi32>
      %cst_77 = arith.constant 0.000000e+00 : f32
      %294 = vector.shape_cast %293 : vector<8x1xi1> to vector<8x1xi1>
      %295 = vector.broadcast %294 : vector<8x1xi1> to vector<8x128xi1>
      %296 = vector.broadcast %cst_77 : f32 to vector<8x128xf32>
      %297 = arith.select %295, %291, %296 : vector<8x128xi1>, vector<8x128xf32>
      %298 = arith.index_cast %c5_i32 : i32 to index
      %c0_78 = arith.constant 0 : index
      %c0_79 = arith.constant 0 : index
      %299 = vector.load %arg9[%298, %c0_78, %c0_79] : memref<16x8x128xf32, #tpu.memory_space<vmem>>, vector<1x8x128xf32>
      %300 = vector.shape_cast %299 : vector<1x8x128xf32> to vector<8x128xf32>
      %301 = vector.shape_cast %297 : vector<8x128xf32> to vector<1x8x128xf32>
      tpu.vector_store %arg9[%298, %c0_78, %c0_79], %301 {strides = array<i32>} : memref<16x8x128xf32, #tpu.memory_space<vmem>>, vector<1x8x128xf32>,
      %302 = vector.shape_cast %293 : vector<8x1xi1> to vector<8x1xi1>
      %303 = vector.broadcast %302 : vector<8x1xi1> to vector<8x128xi1>
      %304 = arith.select %303, %291, %258 : vector<8x128xi1>, vector<8x128xf32>
      %c6_i32 = arith.constant 6 : i32
      %305 = arith.addi %0, %c6_i32 : i32
      %306 = arith.index_cast %c6_i32 : i32 to index
      %c0_80 = arith.constant 0 : index
      %c0_81 = arith.constant 0 : index
      %307 = vector.load %arg12[%306, %c0_80, %c0_81] : memref<16x8x384xf32, #tpu.memory_space<vmem>>, vector<1x8x384xf32>
      %308 = vector.shape_cast %307 : vector<1x8x384xf32> to vector<8x384xf32>
      %cst_82 = arith.constant dense<0.000000e+00> : vector<8x384xf32>
      %309 = tpu.matmul %304, %26, %cst_82 {dimension_numbers = #tpu.dot_dimension_numbers<[1], [0], [0], [1], [0, 0, 1, 1], [], []>} : vector<8x128xf32>, vector<128x384xf32>, vector<8x384xf32> -> vector<8x384xf32>
      %310 = vector.extract_strided_slice %308 {offsets = [0, 0], sizes = [8, 128], strides = [1, 1]} : vector<8x384xf32> to vector<8x128xf32>
      %311 = vector.extract_strided_slice %309 {offsets = [0, 0], sizes = [8, 128], strides = [1, 1]} : vector<8x384xf32> to vector<8x128xf32>
      %312 = arith.addf %310, %311 : vector<8x128xf32>
      %313 = arith.negf %312 : vector<8x128xf32>
      %314 = math.exp %313 : vector<8x128xf32>
      %cst_83 = arith.constant 1.000000e+00 : f32
      %315 = vector.broadcast %cst_83 : f32 to vector<8x128xf32>
      %316 = arith.addf %315, %314 : vector<8x128xf32>
      %317 = arith.divf %315, %316 : vector<8x128xf32>
      %318 = vector.extract_strided_slice %308 {offsets = [0, 128], sizes = [8, 128], strides = [1, 1]} : vector<8x384xf32> to vector<8x128xf32>
      %319 = vector.extract_strided_slice %309 {offsets = [0, 128], sizes = [8, 128], strides = [1, 1]} : vector<8x384xf32> to vector<8x128xf32>
      %320 = arith.addf %318, %319 : vector<8x128xf32>
      %321 = arith.negf %320 : vector<8x128xf32>
      %322 = math.exp %321 : vector<8x128xf32>
      %cst_84 = arith.constant 1.000000e+00 : f32
      %323 = vector.broadcast %cst_84 : f32 to vector<8x128xf32>
      %324 = arith.addf %323, %322 : vector<8x128xf32>
      %325 = arith.divf %323, %324 : vector<8x128xf32>
      %326 = vector.extract_strided_slice %308 {offsets = [0, 256], sizes = [8, 128], strides = [1, 1]} : vector<8x384xf32> to vector<8x128xf32>
      %327 = vector.extract_strided_slice %309 {offsets = [0, 256], sizes = [8, 128], strides = [1, 1]} : vector<8x384xf32> to vector<8x128xf32>
      %328 = vector.broadcast %27 : vector<1x128xf32> to vector<8x128xf32>
      %329 = arith.addf %327, %328 : vector<8x128xf32>
      %330 = arith.mulf %317, %329 : vector<8x128xf32>
      %331 = arith.addf %326, %330 : vector<8x128xf32>
      %332 = math.tanh %331 : vector<8x128xf32>
      %cst_85 = arith.constant 1.000000e+00 : f32
      %333 = vector.broadcast %cst_85 : f32 to vector<8x128xf32>
      %334 = arith.subf %333, %325 : vector<8x128xf32>
      %335 = arith.mulf %334, %332 : vector<8x128xf32>
      %336 = arith.mulf %325, %304 : vector<8x128xf32>
      %337 = arith.addf %335, %336 : vector<8x128xf32>
      %338 = vector.broadcast %305 : i32 to vector<8x1xi32>
      %339 = arith.cmpi slt, %338, %25 : vector<8x1xi32>
      %cst_86 = arith.constant 0.000000e+00 : f32
      %340 = vector.shape_cast %339 : vector<8x1xi1> to vector<8x1xi1>
      %341 = vector.broadcast %340 : vector<8x1xi1> to vector<8x128xi1>
      %342 = vector.broadcast %cst_86 : f32 to vector<8x128xf32>
      %343 = arith.select %341, %337, %342 : vector<8x128xi1>, vector<8x128xf32>
      %344 = arith.index_cast %c6_i32 : i32 to index
      %c0_87 = arith.constant 0 : index
      %c0_88 = arith.constant 0 : index
      %345 = vector.load %arg9[%344, %c0_87, %c0_88] : memref<16x8x128xf32, #tpu.memory_space<vmem>>, vector<1x8x128xf32>
      %346 = vector.shape_cast %345 : vector<1x8x128xf32> to vector<8x128xf32>
      %347 = vector.shape_cast %343 : vector<8x128xf32> to vector<1x8x128xf32>
      tpu.vector_store %arg9[%344, %c0_87, %c0_88], %347 {strides = array<i32>} : memref<16x8x128xf32, #tpu.memory_space<vmem>>, vector<1x8x128xf32>,
      %348 = vector.shape_cast %339 : vector<8x1xi1> to vector<8x1xi1>
      %349 = vector.broadcast %348 : vector<8x1xi1> to vector<8x128xi1>
      %350 = arith.select %349, %337, %304 : vector<8x128xi1>, vector<8x128xf32>
      %c7_i32 = arith.constant 7 : i32
      %351 = arith.addi %0, %c7_i32 : i32
      %352 = arith.index_cast %c7_i32 : i32 to index
      %c0_89 = arith.constant 0 : index
      %c0_90 = arith.constant 0 : index
      %353 = vector.load %arg12[%352, %c0_89, %c0_90] : memref<16x8x384xf32, #tpu.memory_space<vmem>>, vector<1x8x384xf32>
      %354 = vector.shape_cast %353 : vector<1x8x384xf32> to vector<8x384xf32>
      %cst_91 = arith.constant dense<0.000000e+00> : vector<8x384xf32>
      %355 = tpu.matmul %350, %26, %cst_91 {dimension_numbers = #tpu.dot_dimension_numbers<[1], [0], [0], [1], [0, 0, 1, 1], [], []>} : vector<8x128xf32>, vector<128x384xf32>, vector<8x384xf32> -> vector<8x384xf32>
      %356 = vector.extract_strided_slice %354 {offsets = [0, 0], sizes = [8, 128], strides = [1, 1]} : vector<8x384xf32> to vector<8x128xf32>
      %357 = vector.extract_strided_slice %355 {offsets = [0, 0], sizes = [8, 128], strides = [1, 1]} : vector<8x384xf32> to vector<8x128xf32>
      %358 = arith.addf %356, %357 : vector<8x128xf32>
      %359 = arith.negf %358 : vector<8x128xf32>
      %360 = math.exp %359 : vector<8x128xf32>
      %cst_92 = arith.constant 1.000000e+00 : f32
      %361 = vector.broadcast %cst_92 : f32 to vector<8x128xf32>
      %362 = arith.addf %361, %360 : vector<8x128xf32>
      %363 = arith.divf %361, %362 : vector<8x128xf32>
      %364 = vector.extract_strided_slice %354 {offsets = [0, 128], sizes = [8, 128], strides = [1, 1]} : vector<8x384xf32> to vector<8x128xf32>
      %365 = vector.extract_strided_slice %355 {offsets = [0, 128], sizes = [8, 128], strides = [1, 1]} : vector<8x384xf32> to vector<8x128xf32>
      %366 = arith.addf %364, %365 : vector<8x128xf32>
      %367 = arith.negf %366 : vector<8x128xf32>
      %368 = math.exp %367 : vector<8x128xf32>
      %cst_93 = arith.constant 1.000000e+00 : f32
      %369 = vector.broadcast %cst_93 : f32 to vector<8x128xf32>
      %370 = arith.addf %369, %368 : vector<8x128xf32>
      %371 = arith.divf %369, %370 : vector<8x128xf32>
      %372 = vector.extract_strided_slice %354 {offsets = [0, 256], sizes = [8, 128], strides = [1, 1]} : vector<8x384xf32> to vector<8x128xf32>
      %373 = vector.extract_strided_slice %355 {offsets = [0, 256], sizes = [8, 128], strides = [1, 1]} : vector<8x384xf32> to vector<8x128xf32>
      %374 = vector.broadcast %27 : vector<1x128xf32> to vector<8x128xf32>
      %375 = arith.addf %373, %374 : vector<8x128xf32>
      %376 = arith.mulf %363, %375 : vector<8x128xf32>
      %377 = arith.addf %372, %376 : vector<8x128xf32>
      %378 = math.tanh %377 : vector<8x128xf32>
      %cst_94 = arith.constant 1.000000e+00 : f32
      %379 = vector.broadcast %cst_94 : f32 to vector<8x128xf32>
      %380 = arith.subf %379, %371 : vector<8x128xf32>
      %381 = arith.mulf %380, %378 : vector<8x128xf32>
      %382 = arith.mulf %371, %350 : vector<8x128xf32>
      %383 = arith.addf %381, %382 : vector<8x128xf32>
      %384 = vector.broadcast %351 : i32 to vector<8x1xi32>
      %385 = arith.cmpi slt, %384, %25 : vector<8x1xi32>
      %cst_95 = arith.constant 0.000000e+00 : f32
      %386 = vector.shape_cast %385 : vector<8x1xi1> to vector<8x1xi1>
      %387 = vector.broadcast %386 : vector<8x1xi1> to vector<8x128xi1>
      %388 = vector.broadcast %cst_95 : f32 to vector<8x128xf32>
      %389 = arith.select %387, %383, %388 : vector<8x128xi1>, vector<8x128xf32>
      %390 = arith.index_cast %c7_i32 : i32 to index
      %c0_96 = arith.constant 0 : index
      %c0_97 = arith.constant 0 : index
      %391 = vector.load %arg9[%390, %c0_96, %c0_97] : memref<16x8x128xf32, #tpu.memory_space<vmem>>, vector<1x8x128xf32>
      %392 = vector.shape_cast %391 : vector<1x8x128xf32> to vector<8x128xf32>
      %393 = vector.shape_cast %389 : vector<8x128xf32> to vector<1x8x128xf32>
      tpu.vector_store %arg9[%390, %c0_96, %c0_97], %393 {strides = array<i32>} : memref<16x8x128xf32, #tpu.memory_space<vmem>>, vector<1x8x128xf32>,
      %394 = vector.shape_cast %385 : vector<8x1xi1> to vector<8x1xi1>
      %395 = vector.broadcast %394 : vector<8x1xi1> to vector<8x128xi1>
      %396 = arith.select %395, %383, %350 : vector<8x128xi1>, vector<8x128xf32>
      %c8_i32 = arith.constant 8 : i32
      %397 = arith.addi %0, %c8_i32 : i32
      %398 = arith.index_cast %c8_i32 : i32 to index
      %c0_98 = arith.constant 0 : index
      %c0_99 = arith.constant 0 : index
      %399 = vector.load %arg12[%398, %c0_98, %c0_99] : memref<16x8x384xf32, #tpu.memory_space<vmem>>, vector<1x8x384xf32>
      %400 = vector.shape_cast %399 : vector<1x8x384xf32> to vector<8x384xf32>
      %cst_100 = arith.constant dense<0.000000e+00> : vector<8x384xf32>
      %401 = tpu.matmul %396, %26, %cst_100 {dimension_numbers = #tpu.dot_dimension_numbers<[1], [0], [0], [1], [0, 0, 1, 1], [], []>} : vector<8x128xf32>, vector<128x384xf32>, vector<8x384xf32> -> vector<8x384xf32>
      %402 = vector.extract_strided_slice %400 {offsets = [0, 0], sizes = [8, 128], strides = [1, 1]} : vector<8x384xf32> to vector<8x128xf32>
      %403 = vector.extract_strided_slice %401 {offsets = [0, 0], sizes = [8, 128], strides = [1, 1]} : vector<8x384xf32> to vector<8x128xf32>
      %404 = arith.addf %402, %403 : vector<8x128xf32>
      %405 = arith.negf %404 : vector<8x128xf32>
      %406 = math.exp %405 : vector<8x128xf32>
      %cst_101 = arith.constant 1.000000e+00 : f32
      %407 = vector.broadcast %cst_101 : f32 to vector<8x128xf32>
      %408 = arith.addf %407, %406 : vector<8x128xf32>
      %409 = arith.divf %407, %408 : vector<8x128xf32>
      %410 = vector.extract_strided_slice %400 {offsets = [0, 128], sizes = [8, 128], strides = [1, 1]} : vector<8x384xf32> to vector<8x128xf32>
      %411 = vector.extract_strided_slice %401 {offsets = [0, 128], sizes = [8, 128], strides = [1, 1]} : vector<8x384xf32> to vector<8x128xf32>
      %412 = arith.addf %410, %411 : vector<8x128xf32>
      %413 = arith.negf %412 : vector<8x128xf32>
      %414 = math.exp %413 : vector<8x128xf32>
      %cst_102 = arith.constant 1.000000e+00 : f32
      %415 = vector.broadcast %cst_102 : f32 to vector<8x128xf32>
      %416 = arith.addf %415, %414 : vector<8x128xf32>
      %417 = arith.divf %415, %416 : vector<8x128xf32>
      %418 = vector.extract_strided_slice %400 {offsets = [0, 256], sizes = [8, 128], strides = [1, 1]} : vector<8x384xf32> to vector<8x128xf32>
      %419 = vector.extract_strided_slice %401 {offsets = [0, 256], sizes = [8, 128], strides = [1, 1]} : vector<8x384xf32> to vector<8x128xf32>
      %420 = vector.broadcast %27 : vector<1x128xf32> to vector<8x128xf32>
      %421 = arith.addf %419, %420 : vector<8x128xf32>
      %422 = arith.mulf %409, %421 : vector<8x128xf32>
      %423 = arith.addf %418, %422 : vector<8x128xf32>
      %424 = math.tanh %423 : vector<8x128xf32>
      %cst_103 = arith.constant 1.000000e+00 : f32
      %425 = vector.broadcast %cst_103 : f32 to vector<8x128xf32>
      %426 = arith.subf %425, %417 : vector<8x128xf32>
      %427 = arith.mulf %426, %424 : vector<8x128xf32>
      %428 = arith.mulf %417, %396 : vector<8x128xf32>
      %429 = arith.addf %427, %428 : vector<8x128xf32>
      %430 = vector.broadcast %397 : i32 to vector<8x1xi32>
      %431 = arith.cmpi slt, %430, %25 : vector<8x1xi32>
      %cst_104 = arith.constant 0.000000e+00 : f32
      %432 = vector.shape_cast %431 : vector<8x1xi1> to vector<8x1xi1>
      %433 = vector.broadcast %432 : vector<8x1xi1> to vector<8x128xi1>
      %434 = vector.broadcast %cst_104 : f32 to vector<8x128xf32>
      %435 = arith.select %433, %429, %434 : vector<8x128xi1>, vector<8x128xf32>
      %436 = arith.index_cast %c8_i32 : i32 to index
      %c0_105 = arith.constant 0 : index
      %c0_106 = arith.constant 0 : index
      %437 = vector.load %arg9[%436, %c0_105, %c0_106] : memref<16x8x128xf32, #tpu.memory_space<vmem>>, vector<1x8x128xf32>
      %438 = vector.shape_cast %437 : vector<1x8x128xf32> to vector<8x128xf32>
      %439 = vector.shape_cast %435 : vector<8x128xf32> to vector<1x8x128xf32>
      tpu.vector_store %arg9[%436, %c0_105, %c0_106], %439 {strides = array<i32>} : memref<16x8x128xf32, #tpu.memory_space<vmem>>, vector<1x8x128xf32>,
      %440 = vector.shape_cast %431 : vector<8x1xi1> to vector<8x1xi1>
      %441 = vector.broadcast %440 : vector<8x1xi1> to vector<8x128xi1>
      %442 = arith.select %441, %429, %396 : vector<8x128xi1>, vector<8x128xf32>
      %c9_i32 = arith.constant 9 : i32
      %443 = arith.addi %0, %c9_i32 : i32
      %444 = arith.index_cast %c9_i32 : i32 to index
      %c0_107 = arith.constant 0 : index
      %c0_108 = arith.constant 0 : index
      %445 = vector.load %arg12[%444, %c0_107, %c0_108] : memref<16x8x384xf32, #tpu.memory_space<vmem>>, vector<1x8x384xf32>
      %446 = vector.shape_cast %445 : vector<1x8x384xf32> to vector<8x384xf32>
      %cst_109 = arith.constant dense<0.000000e+00> : vector<8x384xf32>
      %447 = tpu.matmul %442, %26, %cst_109 {dimension_numbers = #tpu.dot_dimension_numbers<[1], [0], [0], [1], [0, 0, 1, 1], [], []>} : vector<8x128xf32>, vector<128x384xf32>, vector<8x384xf32> -> vector<8x384xf32>
      %448 = vector.extract_strided_slice %446 {offsets = [0, 0], sizes = [8, 128], strides = [1, 1]} : vector<8x384xf32> to vector<8x128xf32>
      %449 = vector.extract_strided_slice %447 {offsets = [0, 0], sizes = [8, 128], strides = [1, 1]} : vector<8x384xf32> to vector<8x128xf32>
      %450 = arith.addf %448, %449 : vector<8x128xf32>
      %451 = arith.negf %450 : vector<8x128xf32>
      %452 = math.exp %451 : vector<8x128xf32>
      %cst_110 = arith.constant 1.000000e+00 : f32
      %453 = vector.broadcast %cst_110 : f32 to vector<8x128xf32>
      %454 = arith.addf %453, %452 : vector<8x128xf32>
      %455 = arith.divf %453, %454 : vector<8x128xf32>
      %456 = vector.extract_strided_slice %446 {offsets = [0, 128], sizes = [8, 128], strides = [1, 1]} : vector<8x384xf32> to vector<8x128xf32>
      %457 = vector.extract_strided_slice %447 {offsets = [0, 128], sizes = [8, 128], strides = [1, 1]} : vector<8x384xf32> to vector<8x128xf32>
      %458 = arith.addf %456, %457 : vector<8x128xf32>
      %459 = arith.negf %458 : vector<8x128xf32>
      %460 = math.exp %459 : vector<8x128xf32>
      %cst_111 = arith.constant 1.000000e+00 : f32
      %461 = vector.broadcast %cst_111 : f32 to vector<8x128xf32>
      %462 = arith.addf %461, %460 : vector<8x128xf32>
      %463 = arith.divf %461, %462 : vector<8x128xf32>
      %464 = vector.extract_strided_slice %446 {offsets = [0, 256], sizes = [8, 128], strides = [1, 1]} : vector<8x384xf32> to vector<8x128xf32>
      %465 = vector.extract_strided_slice %447 {offsets = [0, 256], sizes = [8, 128], strides = [1, 1]} : vector<8x384xf32> to vector<8x128xf32>
      %466 = vector.broadcast %27 : vector<1x128xf32> to vector<8x128xf32>
      %467 = arith.addf %465, %466 : vector<8x128xf32>
      %468 = arith.mulf %455, %467 : vector<8x128xf32>
      %469 = arith.addf %464, %468 : vector<8x128xf32>
      %470 = math.tanh %469 : vector<8x128xf32>
      %cst_112 = arith.constant 1.000000e+00 : f32
      %471 = vector.broadcast %cst_112 : f32 to vector<8x128xf32>
      %472 = arith.subf %471, %463 : vector<8x128xf32>
      %473 = arith.mulf %472, %470 : vector<8x128xf32>
      %474 = arith.mulf %463, %442 : vector<8x128xf32>
      %475 = arith.addf %473, %474 : vector<8x128xf32>
      %476 = vector.broadcast %443 : i32 to vector<8x1xi32>
      %477 = arith.cmpi slt, %476, %25 : vector<8x1xi32>
      %cst_113 = arith.constant 0.000000e+00 : f32
      %478 = vector.shape_cast %477 : vector<8x1xi1> to vector<8x1xi1>
      %479 = vector.broadcast %478 : vector<8x1xi1> to vector<8x128xi1>
      %480 = vector.broadcast %cst_113 : f32 to vector<8x128xf32>
      %481 = arith.select %479, %475, %480 : vector<8x128xi1>, vector<8x128xf32>
      %482 = arith.index_cast %c9_i32 : i32 to index
      %c0_114 = arith.constant 0 : index
      %c0_115 = arith.constant 0 : index
      %483 = vector.load %arg9[%482, %c0_114, %c0_115] : memref<16x8x128xf32, #tpu.memory_space<vmem>>, vector<1x8x128xf32>
      %484 = vector.shape_cast %483 : vector<1x8x128xf32> to vector<8x128xf32>
      %485 = vector.shape_cast %481 : vector<8x128xf32> to vector<1x8x128xf32>
      tpu.vector_store %arg9[%482, %c0_114, %c0_115], %485 {strides = array<i32>} : memref<16x8x128xf32, #tpu.memory_space<vmem>>, vector<1x8x128xf32>,
      %486 = vector.shape_cast %477 : vector<8x1xi1> to vector<8x1xi1>
      %487 = vector.broadcast %486 : vector<8x1xi1> to vector<8x128xi1>
      %488 = arith.select %487, %475, %442 : vector<8x128xi1>, vector<8x128xf32>
      %c10_i32 = arith.constant 10 : i32
      %489 = arith.addi %0, %c10_i32 : i32
      %490 = arith.index_cast %c10_i32 : i32 to index
      %c0_116 = arith.constant 0 : index
      %c0_117 = arith.constant 0 : index
      %491 = vector.load %arg12[%490, %c0_116, %c0_117] : memref<16x8x384xf32, #tpu.memory_space<vmem>>, vector<1x8x384xf32>
      %492 = vector.shape_cast %491 : vector<1x8x384xf32> to vector<8x384xf32>
      %cst_118 = arith.constant dense<0.000000e+00> : vector<8x384xf32>
      %493 = tpu.matmul %488, %26, %cst_118 {dimension_numbers = #tpu.dot_dimension_numbers<[1], [0], [0], [1], [0, 0, 1, 1], [], []>} : vector<8x128xf32>, vector<128x384xf32>, vector<8x384xf32> -> vector<8x384xf32>
      %494 = vector.extract_strided_slice %492 {offsets = [0, 0], sizes = [8, 128], strides = [1, 1]} : vector<8x384xf32> to vector<8x128xf32>
      %495 = vector.extract_strided_slice %493 {offsets = [0, 0], sizes = [8, 128], strides = [1, 1]} : vector<8x384xf32> to vector<8x128xf32>
      %496 = arith.addf %494, %495 : vector<8x128xf32>
      %497 = arith.negf %496 : vector<8x128xf32>
      %498 = math.exp %497 : vector<8x128xf32>
      %cst_119 = arith.constant 1.000000e+00 : f32
      %499 = vector.broadcast %cst_119 : f32 to vector<8x128xf32>
      %500 = arith.addf %499, %498 : vector<8x128xf32>
      %501 = arith.divf %499, %500 : vector<8x128xf32>
      %502 = vector.extract_strided_slice %492 {offsets = [0, 128], sizes = [8, 128], strides = [1, 1]} : vector<8x384xf32> to vector<8x128xf32>
      %503 = vector.extract_strided_slice %493 {offsets = [0, 128], sizes = [8, 128], strides = [1, 1]} : vector<8x384xf32> to vector<8x128xf32>
      %504 = arith.addf %502, %503 : vector<8x128xf32>
      %505 = arith.negf %504 : vector<8x128xf32>
      %506 = math.exp %505 : vector<8x128xf32>
      %cst_120 = arith.constant 1.000000e+00 : f32
      %507 = vector.broadcast %cst_120 : f32 to vector<8x128xf32>
      %508 = arith.addf %507, %506 : vector<8x128xf32>
      %509 = arith.divf %507, %508 : vector<8x128xf32>
      %510 = vector.extract_strided_slice %492 {offsets = [0, 256], sizes = [8, 128], strides = [1, 1]} : vector<8x384xf32> to vector<8x128xf32>
      %511 = vector.extract_strided_slice %493 {offsets = [0, 256], sizes = [8, 128], strides = [1, 1]} : vector<8x384xf32> to vector<8x128xf32>
      %512 = vector.broadcast %27 : vector<1x128xf32> to vector<8x128xf32>
      %513 = arith.addf %511, %512 : vector<8x128xf32>
      %514 = arith.mulf %501, %513 : vector<8x128xf32>
      %515 = arith.addf %510, %514 : vector<8x128xf32>
      %516 = math.tanh %515 : vector<8x128xf32>
      %cst_121 = arith.constant 1.000000e+00 : f32
      %517 = vector.broadcast %cst_121 : f32 to vector<8x128xf32>
      %518 = arith.subf %517, %509 : vector<8x128xf32>
      %519 = arith.mulf %518, %516 : vector<8x128xf32>
      %520 = arith.mulf %509, %488 : vector<8x128xf32>
      %521 = arith.addf %519, %520 : vector<8x128xf32>
      %522 = vector.broadcast %489 : i32 to vector<8x1xi32>
      %523 = arith.cmpi slt, %522, %25 : vector<8x1xi32>
      %cst_122 = arith.constant 0.000000e+00 : f32
      %524 = vector.shape_cast %523 : vector<8x1xi1> to vector<8x1xi1>
      %525 = vector.broadcast %524 : vector<8x1xi1> to vector<8x128xi1>
      %526 = vector.broadcast %cst_122 : f32 to vector<8x128xf32>
      %527 = arith.select %525, %521, %526 : vector<8x128xi1>, vector<8x128xf32>
      %528 = arith.index_cast %c10_i32 : i32 to index
      %c0_123 = arith.constant 0 : index
      %c0_124 = arith.constant 0 : index
      %529 = vector.load %arg9[%528, %c0_123, %c0_124] : memref<16x8x128xf32, #tpu.memory_space<vmem>>, vector<1x8x128xf32>
      %530 = vector.shape_cast %529 : vector<1x8x128xf32> to vector<8x128xf32>
      %531 = vector.shape_cast %527 : vector<8x128xf32> to vector<1x8x128xf32>
      tpu.vector_store %arg9[%528, %c0_123, %c0_124], %531 {strides = array<i32>} : memref<16x8x128xf32, #tpu.memory_space<vmem>>, vector<1x8x128xf32>,
      %532 = vector.shape_cast %523 : vector<8x1xi1> to vector<8x1xi1>
      %533 = vector.broadcast %532 : vector<8x1xi1> to vector<8x128xi1>
      %534 = arith.select %533, %521, %488 : vector<8x128xi1>, vector<8x128xf32>
      %c11_i32 = arith.constant 11 : i32
      %535 = arith.addi %0, %c11_i32 : i32
      %536 = arith.index_cast %c11_i32 : i32 to index
      %c0_125 = arith.constant 0 : index
      %c0_126 = arith.constant 0 : index
      %537 = vector.load %arg12[%536, %c0_125, %c0_126] : memref<16x8x384xf32, #tpu.memory_space<vmem>>, vector<1x8x384xf32>
      %538 = vector.shape_cast %537 : vector<1x8x384xf32> to vector<8x384xf32>
      %cst_127 = arith.constant dense<0.000000e+00> : vector<8x384xf32>
      %539 = tpu.matmul %534, %26, %cst_127 {dimension_numbers = #tpu.dot_dimension_numbers<[1], [0], [0], [1], [0, 0, 1, 1], [], []>} : vector<8x128xf32>, vector<128x384xf32>, vector<8x384xf32> -> vector<8x384xf32>
      %540 = vector.extract_strided_slice %538 {offsets = [0, 0], sizes = [8, 128], strides = [1, 1]} : vector<8x384xf32> to vector<8x128xf32>
      %541 = vector.extract_strided_slice %539 {offsets = [0, 0], sizes = [8, 128], strides = [1, 1]} : vector<8x384xf32> to vector<8x128xf32>
      %542 = arith.addf %540, %541 : vector<8x128xf32>
      %543 = arith.negf %542 : vector<8x128xf32>
      %544 = math.exp %543 : vector<8x128xf32>
      %cst_128 = arith.constant 1.000000e+00 : f32
      %545 = vector.broadcast %cst_128 : f32 to vector<8x128xf32>
      %546 = arith.addf %545, %544 : vector<8x128xf32>
      %547 = arith.divf %545, %546 : vector<8x128xf32>
      %548 = vector.extract_strided_slice %538 {offsets = [0, 128], sizes = [8, 128], strides = [1, 1]} : vector<8x384xf32> to vector<8x128xf32>
      %549 = vector.extract_strided_slice %539 {offsets = [0, 128], sizes = [8, 128], strides = [1, 1]} : vector<8x384xf32> to vector<8x128xf32>
      %550 = arith.addf %548, %549 : vector<8x128xf32>
      %551 = arith.negf %550 : vector<8x128xf32>
      %552 = math.exp %551 : vector<8x128xf32>
      %cst_129 = arith.constant 1.000000e+00 : f32
      %553 = vector.broadcast %cst_129 : f32 to vector<8x128xf32>
      %554 = arith.addf %553, %552 : vector<8x128xf32>
      %555 = arith.divf %553, %554 : vector<8x128xf32>
      %556 = vector.extract_strided_slice %538 {offsets = [0, 256], sizes = [8, 128], strides = [1, 1]} : vector<8x384xf32> to vector<8x128xf32>
      %557 = vector.extract_strided_slice %539 {offsets = [0, 256], sizes = [8, 128], strides = [1, 1]} : vector<8x384xf32> to vector<8x128xf32>
      %558 = vector.broadcast %27 : vector<1x128xf32> to vector<8x128xf32>
      %559 = arith.addf %557, %558 : vector<8x128xf32>
      %560 = arith.mulf %547, %559 : vector<8x128xf32>
      %561 = arith.addf %556, %560 : vector<8x128xf32>
      %562 = math.tanh %561 : vector<8x128xf32>
      %cst_130 = arith.constant 1.000000e+00 : f32
      %563 = vector.broadcast %cst_130 : f32 to vector<8x128xf32>
      %564 = arith.subf %563, %555 : vector<8x128xf32>
      %565 = arith.mulf %564, %562 : vector<8x128xf32>
      %566 = arith.mulf %555, %534 : vector<8x128xf32>
      %567 = arith.addf %565, %566 : vector<8x128xf32>
      %568 = vector.broadcast %535 : i32 to vector<8x1xi32>
      %569 = arith.cmpi slt, %568, %25 : vector<8x1xi32>
      %cst_131 = arith.constant 0.000000e+00 : f32
      %570 = vector.shape_cast %569 : vector<8x1xi1> to vector<8x1xi1>
      %571 = vector.broadcast %570 : vector<8x1xi1> to vector<8x128xi1>
      %572 = vector.broadcast %cst_131 : f32 to vector<8x128xf32>
      %573 = arith.select %571, %567, %572 : vector<8x128xi1>, vector<8x128xf32>
      %574 = arith.index_cast %c11_i32 : i32 to index
      %c0_132 = arith.constant 0 : index
      %c0_133 = arith.constant 0 : index
      %575 = vector.load %arg9[%574, %c0_132, %c0_133] : memref<16x8x128xf32, #tpu.memory_space<vmem>>, vector<1x8x128xf32>
      %576 = vector.shape_cast %575 : vector<1x8x128xf32> to vector<8x128xf32>
      %577 = vector.shape_cast %573 : vector<8x128xf32> to vector<1x8x128xf32>
      tpu.vector_store %arg9[%574, %c0_132, %c0_133], %577 {strides = array<i32>} : memref<16x8x128xf32, #tpu.memory_space<vmem>>, vector<1x8x128xf32>,
      %578 = vector.shape_cast %569 : vector<8x1xi1> to vector<8x1xi1>
      %579 = vector.broadcast %578 : vector<8x1xi1> to vector<8x128xi1>
      %580 = arith.select %579, %567, %534 : vector<8x128xi1>, vector<8x128xf32>
      %c12_i32 = arith.constant 12 : i32
      %581 = arith.addi %0, %c12_i32 : i32
      %582 = arith.index_cast %c12_i32 : i32 to index
      %c0_134 = arith.constant 0 : index
      %c0_135 = arith.constant 0 : index
      %583 = vector.load %arg12[%582, %c0_134, %c0_135] : memref<16x8x384xf32, #tpu.memory_space<vmem>>, vector<1x8x384xf32>
      %584 = vector.shape_cast %583 : vector<1x8x384xf32> to vector<8x384xf32>
      %cst_136 = arith.constant dense<0.000000e+00> : vector<8x384xf32>
      %585 = tpu.matmul %580, %26, %cst_136 {dimension_numbers = #tpu.dot_dimension_numbers<[1], [0], [0], [1], [0, 0, 1, 1], [], []>} : vector<8x128xf32>, vector<128x384xf32>, vector<8x384xf32> -> vector<8x384xf32>
      %586 = vector.extract_strided_slice %584 {offsets = [0, 0], sizes = [8, 128], strides = [1, 1]} : vector<8x384xf32> to vector<8x128xf32>
      %587 = vector.extract_strided_slice %585 {offsets = [0, 0], sizes = [8, 128], strides = [1, 1]} : vector<8x384xf32> to vector<8x128xf32>
      %588 = arith.addf %586, %587 : vector<8x128xf32>
      %589 = arith.negf %588 : vector<8x128xf32>
      %590 = math.exp %589 : vector<8x128xf32>
      %cst_137 = arith.constant 1.000000e+00 : f32
      %591 = vector.broadcast %cst_137 : f32 to vector<8x128xf32>
      %592 = arith.addf %591, %590 : vector<8x128xf32>
      %593 = arith.divf %591, %592 : vector<8x128xf32>
      %594 = vector.extract_strided_slice %584 {offsets = [0, 128], sizes = [8, 128], strides = [1, 1]} : vector<8x384xf32> to vector<8x128xf32>
      %595 = vector.extract_strided_slice %585 {offsets = [0, 128], sizes = [8, 128], strides = [1, 1]} : vector<8x384xf32> to vector<8x128xf32>
      %596 = arith.addf %594, %595 : vector<8x128xf32>
      %597 = arith.negf %596 : vector<8x128xf32>
      %598 = math.exp %597 : vector<8x128xf32>
      %cst_138 = arith.constant 1.000000e+00 : f32
      %599 = vector.broadcast %cst_138 : f32 to vector<8x128xf32>
      %600 = arith.addf %599, %598 : vector<8x128xf32>
      %601 = arith.divf %599, %600 : vector<8x128xf32>
      %602 = vector.extract_strided_slice %584 {offsets = [0, 256], sizes = [8, 128], strides = [1, 1]} : vector<8x384xf32> to vector<8x128xf32>
      %603 = vector.extract_strided_slice %585 {offsets = [0, 256], sizes = [8, 128], strides = [1, 1]} : vector<8x384xf32> to vector<8x128xf32>
      %604 = vector.broadcast %27 : vector<1x128xf32> to vector<8x128xf32>
      %605 = arith.addf %603, %604 : vector<8x128xf32>
      %606 = arith.mulf %593, %605 : vector<8x128xf32>
      %607 = arith.addf %602, %606 : vector<8x128xf32>
      %608 = math.tanh %607 : vector<8x128xf32>
      %cst_139 = arith.constant 1.000000e+00 : f32
      %609 = vector.broadcast %cst_139 : f32 to vector<8x128xf32>
      %610 = arith.subf %609, %601 : vector<8x128xf32>
      %611 = arith.mulf %610, %608 : vector<8x128xf32>
      %612 = arith.mulf %601, %580 : vector<8x128xf32>
      %613 = arith.addf %611, %612 : vector<8x128xf32>
      %614 = vector.broadcast %581 : i32 to vector<8x1xi32>
      %615 = arith.cmpi slt, %614, %25 : vector<8x1xi32>
      %cst_140 = arith.constant 0.000000e+00 : f32
      %616 = vector.shape_cast %615 : vector<8x1xi1> to vector<8x1xi1>
      %617 = vector.broadcast %616 : vector<8x1xi1> to vector<8x128xi1>
      %618 = vector.broadcast %cst_140 : f32 to vector<8x128xf32>
      %619 = arith.select %617, %613, %618 : vector<8x128xi1>, vector<8x128xf32>
      %620 = arith.index_cast %c12_i32 : i32 to index
      %c0_141 = arith.constant 0 : index
      %c0_142 = arith.constant 0 : index
      %621 = vector.load %arg9[%620, %c0_141, %c0_142] : memref<16x8x128xf32, #tpu.memory_space<vmem>>, vector<1x8x128xf32>
      %622 = vector.shape_cast %621 : vector<1x8x128xf32> to vector<8x128xf32>
      %623 = vector.shape_cast %619 : vector<8x128xf32> to vector<1x8x128xf32>
      tpu.vector_store %arg9[%620, %c0_141, %c0_142], %623 {strides = array<i32>} : memref<16x8x128xf32, #tpu.memory_space<vmem>>, vector<1x8x128xf32>,
      %624 = vector.shape_cast %615 : vector<8x1xi1> to vector<8x1xi1>
      %625 = vector.broadcast %624 : vector<8x1xi1> to vector<8x128xi1>
      %626 = arith.select %625, %613, %580 : vector<8x128xi1>, vector<8x128xf32>
      %c13_i32 = arith.constant 13 : i32
      %627 = arith.addi %0, %c13_i32 : i32
      %628 = arith.index_cast %c13_i32 : i32 to index
      %c0_143 = arith.constant 0 : index
      %c0_144 = arith.constant 0 : index
      %629 = vector.load %arg12[%628, %c0_143, %c0_144] : memref<16x8x384xf32, #tpu.memory_space<vmem>>, vector<1x8x384xf32>
      %630 = vector.shape_cast %629 : vector<1x8x384xf32> to vector<8x384xf32>
      %cst_145 = arith.constant dense<0.000000e+00> : vector<8x384xf32>
      %631 = tpu.matmul %626, %26, %cst_145 {dimension_numbers = #tpu.dot_dimension_numbers<[1], [0], [0], [1], [0, 0, 1, 1], [], []>} : vector<8x128xf32>, vector<128x384xf32>, vector<8x384xf32> -> vector<8x384xf32>
      %632 = vector.extract_strided_slice %630 {offsets = [0, 0], sizes = [8, 128], strides = [1, 1]} : vector<8x384xf32> to vector<8x128xf32>
      %633 = vector.extract_strided_slice %631 {offsets = [0, 0], sizes = [8, 128], strides = [1, 1]} : vector<8x384xf32> to vector<8x128xf32>
      %634 = arith.addf %632, %633 : vector<8x128xf32>
      %635 = arith.negf %634 : vector<8x128xf32>
      %636 = math.exp %635 : vector<8x128xf32>
      %cst_146 = arith.constant 1.000000e+00 : f32
      %637 = vector.broadcast %cst_146 : f32 to vector<8x128xf32>
      %638 = arith.addf %637, %636 : vector<8x128xf32>
      %639 = arith.divf %637, %638 : vector<8x128xf32>
      %640 = vector.extract_strided_slice %630 {offsets = [0, 128], sizes = [8, 128], strides = [1, 1]} : vector<8x384xf32> to vector<8x128xf32>
      %641 = vector.extract_strided_slice %631 {offsets = [0, 128], sizes = [8, 128], strides = [1, 1]} : vector<8x384xf32> to vector<8x128xf32>
      %642 = arith.addf %640, %641 : vector<8x128xf32>
      %643 = arith.negf %642 : vector<8x128xf32>
      %644 = math.exp %643 : vector<8x128xf32>
      %cst_147 = arith.constant 1.000000e+00 : f32
      %645 = vector.broadcast %cst_147 : f32 to vector<8x128xf32>
      %646 = arith.addf %645, %644 : vector<8x128xf32>
      %647 = arith.divf %645, %646 : vector<8x128xf32>
      %648 = vector.extract_strided_slice %630 {offsets = [0, 256], sizes = [8, 128], strides = [1, 1]} : vector<8x384xf32> to vector<8x128xf32>
      %649 = vector.extract_strided_slice %631 {offsets = [0, 256], sizes = [8, 128], strides = [1, 1]} : vector<8x384xf32> to vector<8x128xf32>
      %650 = vector.broadcast %27 : vector<1x128xf32> to vector<8x128xf32>
      %651 = arith.addf %649, %650 : vector<8x128xf32>
      %652 = arith.mulf %639, %651 : vector<8x128xf32>
      %653 = arith.addf %648, %652 : vector<8x128xf32>
      %654 = math.tanh %653 : vector<8x128xf32>
      %cst_148 = arith.constant 1.000000e+00 : f32
      %655 = vector.broadcast %cst_148 : f32 to vector<8x128xf32>
      %656 = arith.subf %655, %647 : vector<8x128xf32>
      %657 = arith.mulf %656, %654 : vector<8x128xf32>
      %658 = arith.mulf %647, %626 : vector<8x128xf32>
      %659 = arith.addf %657, %658 : vector<8x128xf32>
      %660 = vector.broadcast %627 : i32 to vector<8x1xi32>
      %661 = arith.cmpi slt, %660, %25 : vector<8x1xi32>
      %cst_149 = arith.constant 0.000000e+00 : f32
      %662 = vector.shape_cast %661 : vector<8x1xi1> to vector<8x1xi1>
      %663 = vector.broadcast %662 : vector<8x1xi1> to vector<8x128xi1>
      %664 = vector.broadcast %cst_149 : f32 to vector<8x128xf32>
      %665 = arith.select %663, %659, %664 : vector<8x128xi1>, vector<8x128xf32>
      %666 = arith.index_cast %c13_i32 : i32 to index
      %c0_150 = arith.constant 0 : index
      %c0_151 = arith.constant 0 : index
      %667 = vector.load %arg9[%666, %c0_150, %c0_151] : memref<16x8x128xf32, #tpu.memory_space<vmem>>, vector<1x8x128xf32>
      %668 = vector.shape_cast %667 : vector<1x8x128xf32> to vector<8x128xf32>
      %669 = vector.shape_cast %665 : vector<8x128xf32> to vector<1x8x128xf32>
      tpu.vector_store %arg9[%666, %c0_150, %c0_151], %669 {strides = array<i32>} : memref<16x8x128xf32, #tpu.memory_space<vmem>>, vector<1x8x128xf32>,
      %670 = vector.shape_cast %661 : vector<8x1xi1> to vector<8x1xi1>
      %671 = vector.broadcast %670 : vector<8x1xi1> to vector<8x128xi1>
      %672 = arith.select %671, %659, %626 : vector<8x128xi1>, vector<8x128xf32>
      %c14_i32 = arith.constant 14 : i32
      %673 = arith.addi %0, %c14_i32 : i32
      %674 = arith.index_cast %c14_i32 : i32 to index
      %c0_152 = arith.constant 0 : index
      %c0_153 = arith.constant 0 : index
      %675 = vector.load %arg12[%674, %c0_152, %c0_153] : memref<16x8x384xf32, #tpu.memory_space<vmem>>, vector<1x8x384xf32>
      %676 = vector.shape_cast %675 : vector<1x8x384xf32> to vector<8x384xf32>
      %cst_154 = arith.constant dense<0.000000e+00> : vector<8x384xf32>
      %677 = tpu.matmul %672, %26, %cst_154 {dimension_numbers = #tpu.dot_dimension_numbers<[1], [0], [0], [1], [0, 0, 1, 1], [], []>} : vector<8x128xf32>, vector<128x384xf32>, vector<8x384xf32> -> vector<8x384xf32>
      %678 = vector.extract_strided_slice %676 {offsets = [0, 0], sizes = [8, 128], strides = [1, 1]} : vector<8x384xf32> to vector<8x128xf32>
      %679 = vector.extract_strided_slice %677 {offsets = [0, 0], sizes = [8, 128], strides = [1, 1]} : vector<8x384xf32> to vector<8x128xf32>
      %680 = arith.addf %678, %679 : vector<8x128xf32>
      %681 = arith.negf %680 : vector<8x128xf32>
      %682 = math.exp %681 : vector<8x128xf32>
      %cst_155 = arith.constant 1.000000e+00 : f32
      %683 = vector.broadcast %cst_155 : f32 to vector<8x128xf32>
      %684 = arith.addf %683, %682 : vector<8x128xf32>
      %685 = arith.divf %683, %684 : vector<8x128xf32>
      %686 = vector.extract_strided_slice %676 {offsets = [0, 128], sizes = [8, 128], strides = [1, 1]} : vector<8x384xf32> to vector<8x128xf32>
      %687 = vector.extract_strided_slice %677 {offsets = [0, 128], sizes = [8, 128], strides = [1, 1]} : vector<8x384xf32> to vector<8x128xf32>
      %688 = arith.addf %686, %687 : vector<8x128xf32>
      %689 = arith.negf %688 : vector<8x128xf32>
      %690 = math.exp %689 : vector<8x128xf32>
      %cst_156 = arith.constant 1.000000e+00 : f32
      %691 = vector.broadcast %cst_156 : f32 to vector<8x128xf32>
      %692 = arith.addf %691, %690 : vector<8x128xf32>
      %693 = arith.divf %691, %692 : vector<8x128xf32>
      %694 = vector.extract_strided_slice %676 {offsets = [0, 256], sizes = [8, 128], strides = [1, 1]} : vector<8x384xf32> to vector<8x128xf32>
      %695 = vector.extract_strided_slice %677 {offsets = [0, 256], sizes = [8, 128], strides = [1, 1]} : vector<8x384xf32> to vector<8x128xf32>
      %696 = vector.broadcast %27 : vector<1x128xf32> to vector<8x128xf32>
      %697 = arith.addf %695, %696 : vector<8x128xf32>
      %698 = arith.mulf %685, %697 : vector<8x128xf32>
      %699 = arith.addf %694, %698 : vector<8x128xf32>
      %700 = math.tanh %699 : vector<8x128xf32>
      %cst_157 = arith.constant 1.000000e+00 : f32
      %701 = vector.broadcast %cst_157 : f32 to vector<8x128xf32>
      %702 = arith.subf %701, %693 : vector<8x128xf32>
      %703 = arith.mulf %702, %700 : vector<8x128xf32>
      %704 = arith.mulf %693, %672 : vector<8x128xf32>
      %705 = arith.addf %703, %704 : vector<8x128xf32>
      %706 = vector.broadcast %673 : i32 to vector<8x1xi32>
      %707 = arith.cmpi slt, %706, %25 : vector<8x1xi32>
      %cst_158 = arith.constant 0.000000e+00 : f32
      %708 = vector.shape_cast %707 : vector<8x1xi1> to vector<8x1xi1>
      %709 = vector.broadcast %708 : vector<8x1xi1> to vector<8x128xi1>
      %710 = vector.broadcast %cst_158 : f32 to vector<8x128xf32>
      %711 = arith.select %709, %705, %710 : vector<8x128xi1>, vector<8x128xf32>
      %712 = arith.index_cast %c14_i32 : i32 to index
      %c0_159 = arith.constant 0 : index
      %c0_160 = arith.constant 0 : index
      %713 = vector.load %arg9[%712, %c0_159, %c0_160] : memref<16x8x128xf32, #tpu.memory_space<vmem>>, vector<1x8x128xf32>
      %714 = vector.shape_cast %713 : vector<1x8x128xf32> to vector<8x128xf32>
      %715 = vector.shape_cast %711 : vector<8x128xf32> to vector<1x8x128xf32>
      tpu.vector_store %arg9[%712, %c0_159, %c0_160], %715 {strides = array<i32>} : memref<16x8x128xf32, #tpu.memory_space<vmem>>, vector<1x8x128xf32>,
      %716 = vector.shape_cast %707 : vector<8x1xi1> to vector<8x1xi1>
      %717 = vector.broadcast %716 : vector<8x1xi1> to vector<8x128xi1>
      %718 = arith.select %717, %705, %672 : vector<8x128xi1>, vector<8x128xf32>
      %c15_i32 = arith.constant 15 : i32
      %719 = arith.addi %0, %c15_i32 : i32
      %720 = arith.index_cast %c15_i32 : i32 to index
      %c0_161 = arith.constant 0 : index
      %c0_162 = arith.constant 0 : index
      %721 = vector.load %arg12[%720, %c0_161, %c0_162] : memref<16x8x384xf32, #tpu.memory_space<vmem>>, vector<1x8x384xf32>
      %722 = vector.shape_cast %721 : vector<1x8x384xf32> to vector<8x384xf32>
      %cst_163 = arith.constant dense<0.000000e+00> : vector<8x384xf32>
      %723 = tpu.matmul %718, %26, %cst_163 {dimension_numbers = #tpu.dot_dimension_numbers<[1], [0], [0], [1], [0, 0, 1, 1], [], []>} : vector<8x128xf32>, vector<128x384xf32>, vector<8x384xf32> -> vector<8x384xf32>
      %724 = vector.extract_strided_slice %722 {offsets = [0, 0], sizes = [8, 128], strides = [1, 1]} : vector<8x384xf32> to vector<8x128xf32>
      %725 = vector.extract_strided_slice %723 {offsets = [0, 0], sizes = [8, 128], strides = [1, 1]} : vector<8x384xf32> to vector<8x128xf32>
      %726 = arith.addf %724, %725 : vector<8x128xf32>
      %727 = arith.negf %726 : vector<8x128xf32>
      %728 = math.exp %727 : vector<8x128xf32>
      %cst_164 = arith.constant 1.000000e+00 : f32
      %729 = vector.broadcast %cst_164 : f32 to vector<8x128xf32>
      %730 = arith.addf %729, %728 : vector<8x128xf32>
      %731 = arith.divf %729, %730 : vector<8x128xf32>
      %732 = vector.extract_strided_slice %722 {offsets = [0, 128], sizes = [8, 128], strides = [1, 1]} : vector<8x384xf32> to vector<8x128xf32>
      %733 = vector.extract_strided_slice %723 {offsets = [0, 128], sizes = [8, 128], strides = [1, 1]} : vector<8x384xf32> to vector<8x128xf32>
      %734 = arith.addf %732, %733 : vector<8x128xf32>
      %735 = arith.negf %734 : vector<8x128xf32>
      %736 = math.exp %735 : vector<8x128xf32>
      %cst_165 = arith.constant 1.000000e+00 : f32
      %737 = vector.broadcast %cst_165 : f32 to vector<8x128xf32>
      %738 = arith.addf %737, %736 : vector<8x128xf32>
      %739 = arith.divf %737, %738 : vector<8x128xf32>
      %740 = vector.extract_strided_slice %722 {offsets = [0, 256], sizes = [8, 128], strides = [1, 1]} : vector<8x384xf32> to vector<8x128xf32>
      %741 = vector.extract_strided_slice %723 {offsets = [0, 256], sizes = [8, 128], strides = [1, 1]} : vector<8x384xf32> to vector<8x128xf32>
      %742 = vector.broadcast %27 : vector<1x128xf32> to vector<8x128xf32>
      %743 = arith.addf %741, %742 : vector<8x128xf32>
      %744 = arith.mulf %731, %743 : vector<8x128xf32>
      %745 = arith.addf %740, %744 : vector<8x128xf32>
      %746 = math.tanh %745 : vector<8x128xf32>
      %cst_166 = arith.constant 1.000000e+00 : f32
      %747 = vector.broadcast %cst_166 : f32 to vector<8x128xf32>
      %748 = arith.subf %747, %739 : vector<8x128xf32>
      %749 = arith.mulf %748, %746 : vector<8x128xf32>
      %750 = arith.mulf %739, %718 : vector<8x128xf32>
      %751 = arith.addf %749, %750 : vector<8x128xf32>
      %752 = vector.broadcast %719 : i32 to vector<8x1xi32>
      %753 = arith.cmpi slt, %752, %25 : vector<8x1xi32>
      %cst_167 = arith.constant 0.000000e+00 : f32
      %754 = vector.shape_cast %753 : vector<8x1xi1> to vector<8x1xi1>
      %755 = vector.broadcast %754 : vector<8x1xi1> to vector<8x128xi1>
      %756 = vector.broadcast %cst_167 : f32 to vector<8x128xf32>
      %757 = arith.select %755, %751, %756 : vector<8x128xi1>, vector<8x128xf32>
      %758 = arith.index_cast %c15_i32 : i32 to index
      %c0_168 = arith.constant 0 : index
      %c0_169 = arith.constant 0 : index
      %759 = vector.load %arg9[%758, %c0_168, %c0_169] : memref<16x8x128xf32, #tpu.memory_space<vmem>>, vector<1x8x128xf32>
      %760 = vector.shape_cast %759 : vector<1x8x128xf32> to vector<8x128xf32>
      %761 = vector.shape_cast %757 : vector<8x128xf32> to vector<1x8x128xf32>
      tpu.vector_store %arg9[%758, %c0_168, %c0_169], %761 {strides = array<i32>} : memref<16x8x128xf32, #tpu.memory_space<vmem>>, vector<1x8x128xf32>,
      %762 = vector.shape_cast %753 : vector<8x1xi1> to vector<8x1xi1>
      %763 = vector.broadcast %762 : vector<8x1xi1> to vector<8x128xi1>
      %764 = arith.select %763, %751, %718 : vector<8x128xi1>, vector<8x128xf32>
      %c16_i32_170 = arith.constant 16 : i32
      %c0_171 = arith.constant 0 : index
      %c0_172 = arith.constant 0 : index
      %765 = vector.load %arg11[%c0_171, %c0_172] : memref<8x128xf32, #tpu.memory_space<vmem>>, vector<8x128xf32>
      tpu.vector_store %arg11[%c0_171, %c0_172], %764 {strides = array<i32>} : memref<8x128xf32, #tpu.memory_space<vmem>>, vector<8x128xf32>,
    } else {
    }
    %9 = arith.cmpi sge, %0, %5 : i32
    %10 = arith.extui %9 : i1 to i32
    %c0_i32_2 = arith.constant 0 : i32
    %11 = arith.cmpi ne, %10, %c0_i32_2 : i32
    scf.if %11 {
      %cst = arith.constant 0.000000e+00 : f32
      %16 = vector.broadcast %cst : f32 to vector<16x8x128xf32>
      %c0_7 = arith.constant 0 : index
      %c0_8 = arith.constant 0 : index
      %c0_9 = arith.constant 0 : index
      %17 = vector.load %arg9[%c0_7, %c0_8, %c0_9] : memref<16x8x128xf32, #tpu.memory_space<vmem>>, vector<16x8x128xf32>
      tpu.vector_store %arg9[%c0_7, %c0_8, %c0_9], %16 {strides = array<i32>} : memref<16x8x128xf32, #tpu.memory_space<vmem>>, vector<16x8x128xf32>,
    } else {
    }
    %c0 = arith.constant 0 : index
    %c0_3 = arith.constant 0 : index
    %12 = vector.load %arg11[%c0, %c0_3] : memref<8x128xf32, #tpu.memory_space<vmem>>, vector<8x128xf32>
    %c0_4 = arith.constant 0 : index
    %c0_5 = arith.constant 0 : index
    %c0_6 = arith.constant 0 : index
    %13 = vector.load %arg10[%c0_4, %c0_5, %c0_6] : memref<1x8x128xf32, #tpu.memory_space<vmem>>, vector<1x8x128xf32>
    %14 = vector.shape_cast %13 : vector<1x8x128xf32> to vector<8x128xf32>
    %15 = vector.shape_cast %12 : vector<8x128xf32> to vector<1x8x128xf32>
    tpu.vector_store %arg10[%c0_4, %c0_5, %c0_6], %15 {strides = array<i32>} : memref<1x8x128xf32, #tpu.memory_space<vmem>>, vector<1x8x128xf32>,
    return
  }
  func.func @transform_0(%arg0: i32, %arg1: i32, %arg2: memref<1xi32, #tpu.memory_space<smem>>) -> (i32, i32) {
    %c0_i32 = arith.constant 0 : i32
    %c0_i32_0 = arith.constant 0 : i32
    return %arg0, %c0_i32 : i32, i32
  }
  func.func @transform_1(%arg0: i32, %arg1: i32, %arg2: memref<1xi32, #tpu.memory_space<smem>>) -> (i32, i32, i32) {
    %c0_i32 = arith.constant 0 : i32
    %c0_i32_0 = arith.constant 0 : i32
    return %arg1, %arg0, %c0_i32 : i32, i32, i32
  }
  func.func @transform_2(%arg0: i32, %arg1: i32, %arg2: memref<1xi32, #tpu.memory_space<smem>>) -> (i32, i32) {
    %c0_i32 = arith.constant 0 : i32
    %c0_i32_0 = arith.constant 0 : i32
    %c0_i32_1 = arith.constant 0 : i32
    return %c0_i32, %c0_i32_0 : i32, i32
  }
  func.func @transform_3(%arg0: i32, %arg1: i32, %arg2: memref<1xi32, #tpu.memory_space<smem>>) -> (i32, i32) {
    %c0_i32 = arith.constant 0 : i32
    %c0_i32_0 = arith.constant 0 : i32
    %c0_i32_1 = arith.constant 0 : i32
    return %c0_i32, %c0_i32_0 : i32, i32
  }
  func.func @transform_4(%arg0: i32, %arg1: i32, %arg2: memref<1xi32, #tpu.memory_space<smem>>) -> (i32, i32) {
    %c0_i32 = arith.constant 0 : i32
    %c0_i32_0 = arith.constant 0 : i32
    %c0_i32_1 = arith.constant 0 : i32
    return %c0_i32, %c0_i32_0 : i32, i32
  }
  func.func @transform_5(%arg0: i32, %arg1: i32, %arg2: memref<1xi32, #tpu.memory_space<smem>>) -> (i32, i32) {
    %c0_i32 = arith.constant 0 : i32
    %c0_i32_0 = arith.constant 0 : i32
    %c0_i32_1 = arith.constant 0 : i32
    return %c0_i32, %c0_i32_0 : i32, i32
  }
  func.func @transform_6(%arg0: i32, %arg1: i32, %arg2: memref<1xi32, #tpu.memory_space<smem>>) -> (i32, i32, i32) {
    %c0_i32 = arith.constant 0 : i32
    %c0_i32_0 = arith.constant 0 : i32
    return %arg1, %arg0, %c0_i32 : i32, i32, i32
  }
  func.func @transform_7(%arg0: i32, %arg1: i32, %arg2: memref<1xi32, #tpu.memory_space<smem>>) -> (i32, i32, i32) {
    %c0_i32 = arith.constant 0 : i32
    %c0_i32_0 = arith.constant 0 : i32
    %c0_i32_1 = arith.constant 0 : i32
    return %c0_i32, %arg0, %c0_i32_0 : i32, i32, i32
  }
}

</mosaic_0001>

<llo_original>
// kernel: _lambda_.1
$region0: #{_lambda_.1}
  #allocation0 [shape = 'u32[]', space=smem, size = 0x4, offset = 0x4, fixed_abs, tag = 'smem constant byte address 0x4 - core index']
  #allocation1 [shape = 'u32[144,128]{1,0:T(1,128)}', space=vmem, size = 0x12000, scoped, tag = 'internal scratch']
  #allocation2 [shape = 'f32[8,128]{1,0:T(8,128)}', space=vmem, size = 0x1000, scoped, tag = 'scratch operand']
  #allocation3 [shape = 'f32[16,8,384]{2,1,0:T(8,128)}', space=vmem, size = 0x30000, scoped, tag = 'scratch operand']
  #allocation4 [shape = 's32[1]{0}', space=sflag, size = 0x4, scoped, tag = 'scoped memory for _lambda_.1']
  #allocation5 [shape = 's32[1]{0:T(128)S(6)}', space=smem, size = 0x200, scoped, tag = 'prefetched SMEM operand 0']
  %s0 = inlined_call_operand.<no memory space> [shape: s32[1], index: 0, kind: input, shape index: {}]
  %s1 = inlined_call_operand.vmem [shape: s32[8,1], index: 1, kind: input, shape index: {}]
  %s2 = inlined_call_operand.vmem [shape: f32[16,8,128], index: 2, kind: input, shape index: {}]
  %s3 = inlined_call_operand.vmem [shape: f32[128,384], index: 3, kind: input, shape index: {}]
  %s4 = inlined_call_operand.vmem [shape: f32[1,384], index: 4, kind: input, shape index: {}]
  %s5 = inlined_call_operand.vmem [shape: f32[128,384], index: 5, kind: input, shape index: {}]
  %s6 = inlined_call_operand.vmem [shape: f32[1,128], index: 6, kind: input, shape index: {}]
  %s7 = inlined_call_operand.vmem [shape: f32[16,8,128], index: 7, kind: output, shape index: {0}]
  %s8 = inlined_call_operand.vmem [shape: f32[1,8,128], index: 8, kind: output, shape index: {1}]
  %9 = xla_tuple %s7, %s8
  %s10 = sld [smem:[#allocation0]]
  $region54: #{_lambda_.1} parent=0
    _
  %s12 = ssub.s32 1, %s10
  %s13 = scalar_select 0, %s12, %s10
  %14 = sst [smem:[#allocation5]] %s0
  // Predicated region
  $region2: #{_lambda_.1} parent=0 // pred_check
    _
  $region3: #{_lambda_.1} parent=0 // pred_check_branch
    %16 = sbr.rel (0) target = $region5
  $region4: #{_lambda_.1} parent=0 // pred_region
    _
  $region5: #{_lambda_.1} parent=0 // pred_fallthru
    _
  // Predicated region
  $region6: #{_lambda_.1} parent=0 // pred_check
    _
  $region7: #{_lambda_.1} parent=0 // pred_check_branch
    %18 = sbr.rel (0) target = $region9
  $region8: #{_lambda_.1} parent=0 // pred_region
    _
  $region9: #{_lambda_.1} parent=0 // pred_fallthru
    _
  // Predicated region
  $region10: #{_lambda_.1} parent=0 // pred_check
    _
  $region11: #{_lambda_.1} parent=0 // pred_check_branch
    %20 = sbr.rel (0) target = $region13
  $region12: #{_lambda_.1} parent=0 // pred_region
    _
  $region13: #{_lambda_.1} parent=0 // pred_fallthru
    _
  // Predicated region
  $region14: #{_lambda_.1} parent=0 // pred_check
    _
  $region15: #{_lambda_.1} parent=0 // pred_check_branch
    %22 = sbr.rel (0) target = $region17
  $region16: #{_lambda_.1} parent=0 // pred_region
    _
  $region17: #{_lambda_.1} parent=0 // pred_fallthru
    _
  // Predicated region
  $region18: #{_lambda_.1} parent=0 // pred_check
    _
  $region19: #{_lambda_.1} parent=0 // pred_check_branch
    %24 = sbr.rel (0) target = $region21
  $region20: #{_lambda_.1} parent=0 // pred_region
    _
  $region21: #{_lambda_.1} parent=0 // pred_fallthru
    _
  // Predicated region
  $region22: #{_lambda_.1} parent=0 // pred_check
    _
  $region23: #{_lambda_.1} parent=0 // pred_check_branch
    %26 = sbr.rel (0) target = $region25
  $region24: #{_lambda_.1} parent=0 // pred_region
    _
  $region25: #{_lambda_.1} parent=0 // pred_fallthru
    _
  %s27 = smul.u32 0, 16
  %p28 = scmp.eq.s32.totalorder 0, 0
  // Predicated region
  $region26: #{_lambda_.1} parent=0 // pred_check
    %p29 = pneg %p28
  $region27: #{_lambda_.1} parent=0 // pred_check_branch
    %31 = sbr.rel (%p29) target = $region29
  $region28: #{_lambda_.1} parent=0 // pred_region
    %32 = vst [vmem:[#allocation2] sm:$0xff] 0.0
  $region29: #{_lambda_.1} parent=0 // pred_fallthru
    _
  %s33 = sld [smem:[#allocation5]]
  %p34 = scmp.lt.s32.totalorder %s27, %s33
  // Predicated region
  $region30: #{_lambda_.1} parent=0 // pred_check
    %p35 = pneg %p34
  $region31: #{_lambda_.1} parent=0 // pred_check_branch
    %37 = sbr.rel (%p35) target = $region33
  $region32: #{_lambda_.1} parent=0 // pred_region
    %v38 = vld [vmem:[%s2] sm:$0xff]
    %v39 = vld [vmem:[%s2 + $0x8] sm:$0xff]
    %v40 = vld [vmem:[%s2 + $0x10] sm:$0xff]
    %v41 = vld [vmem:[%s2 + $0x18] sm:$0xff]
    %v42 = vld [vmem:[%s2 + $0x20] sm:$0xff]
    %v43 = vld [vmem:[%s2 + $0x28] sm:$0xff]
    %v44 = vld [vmem:[%s2 + $0x30] sm:$0xff]
    %v45 = vld [vmem:[%s2 + $0x38] sm:$0xff]
    %v46 = vld [vmem:[%s2 + $0x40] sm:$0xff]
    %v47 = vld [vmem:[%s2 + $0x48] sm:$0xff]
    %v48 = vld [vmem:[%s2 + $0x50] sm:$0xff]
    %v49 = vld [vmem:[%s2 + $0x58] sm:$0xff]
    %v50 = vld [vmem:[%s2 + $0x60] sm:$0xff]
    %v51 = vld [vmem:[%s2 + $0x68] sm:$0xff]
    %v52 = vld [vmem:[%s2 + $0x70] sm:$0xff]
    %v53 = vld [vmem:[%s2 + $0x78] sm:$0xff]
    %v54 = vld [vmem:[%s3] sm:$0xff]
    %v55 = vld [vmem:[%s3 + $0x8] sm:$0xff]
    %v56 = vld [vmem:[%s3 + $0x10] sm:$0xff]
    %v57 = vld [vmem:[%s3 + $0x18] sm:$0xff]
    %v58 = vld [vmem:[%s3 + $0x20] sm:$0xff]
    %v59 = vld [vmem:[%s3 + $0x28] sm:$0xff]
    %v60 = vld [vmem:[%s3 + $0x30] sm:$0xff]
    %v61 = vld [vmem:[%s3 + $0x38] sm:$0xff]
    %v62 = vld [vmem:[%s3 + $0x40] sm:$0xff]
    %v63 = vld [vmem:[%s3 + $0x48] sm:$0xff]
    %v64 = vld [vmem:[%s3 + $0x50] sm:$0xff]
    %v65 = vld [vmem:[%s3 + $0x58] sm:$0xff]
    %v66 = vld [vmem:[%s3 + $0x60] sm:$0xff]
    %v67 = vld [vmem:[%s3 + $0x68] sm:$0xff]
    %v68 = vld [vmem:[%s3 + $0x70] sm:$0xff]
    %v69 = vld [vmem:[%s3 + $0x78] sm:$0xff]
    %v70 = vld [vmem:[%s3 + $0x80] sm:$0xff]
    %v71 = vld [vmem:[%s3 + $0x88] sm:$0xff]
    %v72 = vld [vmem:[%s3 + $0x90] sm:$0xff]
    %v73 = vld [vmem:[%s3 + $0x98] sm:$0xff]
    %v74 = vld [vmem:[%s3 + $0xa0] sm:$0xff]
    %v75 = vld [vmem:[%s3 + $0xa8] sm:$0xff]
    %v76 = vld [vmem:[%s3 + $0xb0] sm:$0xff]
    %v77 = vld [vmem:[%s3 + $0xb8] sm:$0xff]
    %v78 = vld [vmem:[%s3 + $0xc0] sm:$0xff]
    %v79 = vld [vmem:[%s3 + $0xc8] sm:$0xff]
    %v80 = vld [vmem:[%s3 + $0xd0] sm:$0xff]
    %v81 = vld [vmem:[%s3 + $0xd8] sm:$0xff]
    %v82 = vld [vmem:[%s3 + $0xe0] sm:$0xff]
    %v83 = vld [vmem:[%s3 + $0xe8] sm:$0xff]
    %v84 = vld [vmem:[%s3 + $0xf0] sm:$0xff]
    %v85 = vld [vmem:[%s3 + $0xf8] sm:$0xff]
    %v86 = vld [vmem:[%s3 + $0x100] sm:$0xff]
    %v87 = vld [vmem:[%s3 + $0x108] sm:$0xff]
    %v88 = vld [vmem:[%s3 + $0x110] sm:$0xff]
    %v89 = vld [vmem:[%s3 + $0x118] sm:$0xff]
    %v90 = vld [vmem:[%s3 + $0x120] sm:$0xff]
    %v91 = vld [vmem:[%s3 + $0x128] sm:$0xff]
    %v92 = vld [vmem:[%s3 + $0x130] sm:$0xff]
    %v93 = vld [vmem:[%s3 + $0x138] sm:$0xff]
    %v94 = vld [vmem:[%s3 + $0x140] sm:$0xff]
    %v95 = vld [vmem:[%s3 + $0x148] sm:$0xff]
    %v96 = vld [vmem:[%s3 + $0x150] sm:$0xff]
    %v97 = vld [vmem:[%s3 + $0x158] sm:$0xff]
    %v98 = vld [vmem:[%s3 + $0x160] sm:$0xff]
    %v99 = vld [vmem:[%s3 + $0x168] sm:$0xff]
    %v100 = vld [vmem:[%s3 + $0x170] sm:$0xff]
    %v101 = vld [vmem:[%s3 + $0x178] sm:$0xff]
    %v102 = vld [vmem:[%s4] sm:$0x7]
    %v104 = vlaneseq
    %v105 = vshrl.u32 %v104, 7
    %v106 = vsub.s32 0, %v105
    %v107 = vrot.slane %v102, %v106
    %v108 = vlaneseq
    %v109 = vshrl.u32 %v108, 7
    %v110 = vsub.s32 1, %v109
    %v111 = vrot.slane %v102, %v110
    %v112 = vlaneseq
    %v113 = vshrl.u32 %v112, 7
    %v114 = vsub.s32 2, %v113
    %v115 = vrot.slane %v102, %v114
    %119 = vmatprep.subr.mxu0 %v100
    %120 = vmatpush1.msra.mxu0 %v99
    %121 = vmatprep.subr.mxu0 %v97
    %122 = vmatpush1.msra.mxu0 %v96
    %123 = vmatprep.subr.mxu0 %v94
    %124 = vmatpush1.msra.mxu0 %v93
    %125 = vmatprep.subr.mxu0 %v91
    %126 = vmatpush1.msra.mxu0 %v90
    %127 = vmatprep.subr.mxu0 %v88
    %128 = vmatpush1.msra.mxu0 %v87
    %129 = vmatprep.subr.mxu0 %v85
    %130 = vmatpush1.msra.mxu0 %v84
    %131 = vmatprep.subr.mxu0 %v82
    %132 = vmatpush1.msra.mxu0 %v81
    %133 = vmatprep.subr.mxu0 %v79
    %134 = vmatpush1.msra.mxu0 %v78
    %135 = vmatprep.subr.mxu0 %v76
    %136 = vmatpush1.msra.mxu0 %v75
    %137 = vmatprep.subr.mxu0 %v73
    %138 = vmatpush1.msra.mxu0 %v72
    %139 = vmatprep.subr.mxu0 %v70
    %140 = vmatpush1.msra.mxu0 %v69
    %141 = vmatprep.subr.mxu0 %v67
    %142 = vmatpush1.msra.mxu0 %v66
    %143 = vmatprep.subr.mxu0 %v64
    %144 = vmatpush1.msra.mxu0 %v63
    %145 = vmatprep.subr.mxu0 %v61
    %146 = vmatpush1.msra.mxu0 %v60
    %147 = vmatprep.subr.mxu0 %v58
    %148 = vmatpush1.msra.mxu0 %v57
    %149 = vmatprep.subr.mxu0 %v55
    %150 = vmatpush1.msra.mxu0 %v54
    %151 = vmatprep.subr.mxu0 0.0
    %152 = vmatpush2.msra.mxu0 0.0
    %153 = vmatprep.subr.mxu0 0.0
    %154 = vmatpush2.msra.mxu0 0.0
    %155 = vmatprep.subr.mxu0 0.0
    %156 = vmatpush2.msra.mxu0 0.0
    %157 = vmatprep.subr.mxu0 0.0
    %158 = vmatpush2.msra.mxu0 0.0
    %159 = vmatprep.subr.mxu0 0.0
    %160 = vmatpush2.msra.mxu0 0.0
    %161 = vmatprep.subr.mxu0 0.0
    %162 = vmatpush2.msra.mxu0 0.0
    %163 = vmatprep.subr.mxu0 0.0
    %164 = vmatpush2.msra.mxu0 0.0
    %165 = vmatprep.subr.mxu0 0.0
    %166 = vmatpush2.msra.mxu0 0.0
    %167 = vmatprep.subr.mxu0 0.0
    %168 = vmatpush2.msra.mxu0 0.0
    %169 = vmatprep.subr.mxu0 0.0
    %170 = vmatpush2.msra.mxu0 0.0
    %171 = vmatprep.subr.mxu0 0.0
    %172 = vmatpush2.msra.mxu0 0.0
    %173 = vmatprep.subr.mxu0 0.0
    %174 = vmatpush2.msra.mxu0 0.0
    %175 = vmatprep.subr.mxu0 0.0
    %176 = vmatpush2.msra.mxu0 0.0
    %177 = vmatprep.subr.mxu0 0.0
    %178 = vmatpush2.msra.mxu0 0.0
    %179 = vmatprep.subr.mxu0 0.0
    %180 = vmatpush2.msra.mxu0 0.0
    %181 = vmatprep.subr.mxu0 0.0
    %182 = vmatpush2.msra.mxu0 0.0
    %183 = vmatprep.mubr.f32.mxu0 0.0
    %184 = vmatmul.mubr.f32.gmra.mxu0 %v38
    %v185 = vpop.f32.mrf.mxu0
    %v186 = vadd.f32 %v107, %v185
    %v187 = vpop.f32.mrf.mxu0
    %v188 = vadd.f32 %v111, %v187
    %189 = vmatprep.mubr.f32.mxu0 0.0
    %190 = vmatmul.mubr.f32.gmra.mxu0 %v39
    %v191 = vpop.f32.mrf.mxu0
    %v192 = vadd.f32 %v107, %v191
    %v193 = vpop.f32.mrf.mxu0
    %v194 = vadd.f32 %v111, %v193
    %195 = vmatprep.mubr.f32.mxu0 0.0
    %196 = vmatmul.mubr.f32.gmra.mxu0 %v40
    %v197 = vpop.f32.mrf.mxu0
    %v198 = vadd.f32 %v107, %v197
    %v199 = vpop.f32.mrf.mxu0
    %v200 = vadd.f32 %v111, %v199
    %201 = vmatprep.mubr.f32.mxu0 0.0
    %202 = vmatmul.mubr.f32.gmra.mxu0 %v41
    %v203 = vpop.f32.mrf.mxu0
    %v204 = vadd.f32 %v107, %v203
    %v205 = vpop.f32.mrf.mxu0
    %v206 = vadd.f32 %v111, %v205
    %207 = vmatprep.mubr.f32.mxu0 0.0
    %208 = vmatmul.mubr.f32.gmra.mxu0 %v42
    %v209 = vpop.f32.mrf.mxu0
    %v210 = vadd.f32 %v107, %v209
    %v211 = vpop.f32.mrf.mxu0
    %v212 = vadd.f32 %v111, %v211
    %213 = vmatprep.mubr.f32.mxu0 0.0
    %214 = vmatmul.mubr.f32.gmra.mxu0 %v43
    %v215 = vpop.f32.mrf.mxu0
    %v216 = vadd.f32 %v107, %v215
    %v217 = vpop.f32.mrf.mxu0
    %v218 = vadd.f32 %v111, %v217
    %219 = vmatprep.mubr.f32.mxu0 0.0
    %220 = vmatmul.mubr.f32.gmra.mxu0 %v44
    %v221 = vpop.f32.mrf.mxu0
    %v222 = vadd.f32 %v107, %v221
    %v223 = vpop.f32.mrf.mxu0
    %v224 = vadd.f32 %v111, %v223
    %225 = vmatprep.mubr.f32.mxu0 0.0
    %226 = vmatmul.mubr.f32.gmra.mxu0 %v45
    %v227 = vpop.f32.mrf.mxu0
    %v228 = vadd.f32 %v107, %v227
    %v229 = vpop.f32.mrf.mxu0
    %v230 = vadd.f32 %v111, %v229
    %231 = vmatprep.mubr.f32.mxu0 0.0
    %232 = vmatmul.mubr.f32.gmra.mxu0 %v46
    %v233 = vpop.f32.mrf.mxu0
    %v234 = vadd.f32 %v107, %v233
    %v235 = vpop.f32.mrf.mxu0
    %v236 = vadd.f32 %v111, %v235
    %237 = vmatprep.mubr.f32.mxu0 0.0
    %238 = vmatmul.mubr.f32.gmra.mxu0 %v47
    %v239 = vpop.f32.mrf.mxu0
    %v240 = vadd.f32 %v107, %v239
    %v241 = vpop.f32.mrf.mxu0
    %v242 = vadd.f32 %v111, %v241
    %243 = vmatprep.mubr.f32.mxu0 0.0
    %244 = vmatmul.mubr.f32.gmra.mxu0 %v48
    %v245 = vpop.f32.mrf.mxu0
    %v246 = vadd.f32 %v107, %v245
    %v247 = vpop.f32.mrf.mxu0
    %v248 = vadd.f32 %v111, %v247
    %249 = vmatprep.mubr.f32.mxu0 0.0
    %250 = vmatmul.mubr.f32.gmra.mxu0 %v49
    %v251 = vpop.f32.mrf.mxu0
    %v252 = vadd.f32 %v107, %v251
    %v253 = vpop.f32.mrf.mxu0
    %v254 = vadd.f32 %v111, %v253
    %255 = vmatprep.mubr.f32.mxu0 0.0
    %256 = vmatmul.mubr.f32.gmra.mxu0 %v50
    %v257 = vpop.f32.mrf.mxu0
    %v258 = vadd.f32 %v107, %v257
    %v259 = vpop.f32.mrf.mxu0
    %v260 = vadd.f32 %v111, %v259
    %261 = vmatprep.mubr.f32.mxu0 0.0
    %262 = vmatmul.mubr.f32.gmra.mxu0 %v51
    %v263 = vpop.f32.mrf.mxu0
    %v264 = vadd.f32 %v107, %v263
    %v265 = vpop.f32.mrf.mxu0
    %v266 = vadd.f32 %v111, %v265
    %267 = vmatprep.mubr.f32.mxu0 0.0
    %268 = vmatmul.mubr.f32.gmra.mxu0 %v52
    %v269 = vpop.f32.mrf.mxu0
    %v270 = vadd.f32 %v107, %v269
    %v271 = vpop.f32.mrf.mxu0
    %v272 = vadd.f32 %v111, %v271
    %273 = vmatprep.mubr.f32.mxu0 0.0
    %274 = vmatmul.mubr.f32.gmra.mxu0 %v53
    %v275 = vpop.f32.mrf.mxu0
    %v276 = vadd.f32 %v107, %v275
    %v277 = vpop.f32.mrf.mxu0
    %v278 = vadd.f32 %v111, %v277
    %279 = vdwg.mxu0
    %280 = vmatprep.subr.mxu0 0.0
    %281 = vmatpush1.msra.mxu0 %v101
    %282 = vmatprep.subr.mxu0 0.0
    %283 = vmatpush1.msra.mxu0 %v98
    %284 = vmatprep.subr.mxu0 0.0
    %285 = vmatpush1.msra.mxu0 %v95
    %286 = vmatprep.subr.mxu0 0.0
    %287 = vmatpush1.msra.mxu0 %v92
    %288 = vmatprep.subr.mxu0 0.0
    %289 = vmatpush1.msra.mxu0 %v89
    %290 = vmatprep.subr.mxu0 0.0
    %291 = vmatpush1.msra.mxu0 %v86
    %292 = vmatprep.subr.mxu0 0.0
    %293 = vmatpush1.msra.mxu0 %v83
    %294 = vmatprep.subr.mxu0 0.0
    %295 = vmatpush1.msra.mxu0 %v80
    %296 = vmatprep.subr.mxu0 0.0
    %297 = vmatpush1.msra.mxu0 %v77
    %298 = vmatprep.subr.mxu0 0.0
    %299 = vmatpush1.msra.mxu0 %v74
    %300 = vmatprep.subr.mxu0 0.0
    %301 = vmatpush1.msra.mxu0 %v71
    %302 = vmatprep.subr.mxu0 0.0
    %303 = vmatpush1.msra.mxu0 %v68
    %304 = vmatprep.subr.mxu0 0.0
    %305 = vmatpush1.msra.mxu0 %v65
    %306 = vmatprep.subr.mxu0 0.0
    %307 = vmatpush1.msra.mxu0 %v62
    %308 = vmatprep.subr.mxu0 0.0
    %309 = vmatpush1.msra.mxu0 %v59
    %310 = vmatprep.subr.mxu0 0.0
    %311 = vmatpush1.msra.mxu0 %v56
    %312 = vmatprep.subr.mxu0 0.0
    %313 = vmatpush2.msra.mxu0 0.0
    %314 = vmatprep.subr.mxu0 0.0
    %315 = vmatpush2.msra.mxu0 0.0
    %316 = vmatprep.subr.mxu0 0.0
    %317 = vmatpush2.msra.mxu0 0.0
    %318 = vmatprep.subr.mxu0 0.0
    %319 = vmatpush2.msra.mxu0 0.0
    %320 = vmatprep.subr.mxu0 0.0
    %321 = vmatpush2.msra.mxu0 0.0
    %322 = vmatprep.subr.mxu0 0.0
    %323 = vmatpush2.msra.mxu0 0.0
    %324 = vmatprep.subr.mxu0 0.0
    %325 = vmatpush2.msra.mxu0 0.0
    %326 = vmatprep.subr.mxu0 0.0
    %327 = vmatpush2.msra.mxu0 0.0
    %328 = vmatprep.subr.mxu0 0.0
    %329 = vmatpush2.msra.mxu0 0.0
    %330 = vmatprep.subr.mxu0 0.0
    %331 = vmatpush2.msra.mxu0 0.0
    %332 = vmatprep.subr.mxu0 0.0
    %333 = vmatpush2.msra.mxu0 0.0
    %334 = vmatprep.subr.mxu0 0.0
    %335 = vmatpush2.msra.mxu0 0.0
    %336 = vmatprep.subr.mxu0 0.0
    %337 = vmatpush2.msra.mxu0 0.0
    %338 = vmatprep.subr.mxu0 0.0
    %339 = vmatpush2.msra.mxu0 0.0
    %340 = vmatprep.subr.mxu0 0.0
    %341 = vmatpush2.msra.mxu0 0.0
    %342 = vmatprep.subr.mxu0 0.0
    %343 = vmatpush2.msra.mxu0 0.0
    %344 = vmatprep.mubr.f32.mxu0 0.0
    %345 = vmatmul.mubr.f32.gmra.mxu0 %v38
    %v346 = vpop.f32.mrf.mxu0
    %v347 = vadd.f32 %v115, %v346
    %v348 = vpop.f32.mrf.mxu0
    %349 = vmatprep.mubr.f32.mxu0 0.0
    %350 = vmatmul.mubr.f32.gmra.mxu0 %v39
    %v351 = vpop.f32.mrf.mxu0
    %v352 = vadd.f32 %v115, %v351
    %v353 = vpop.f32.mrf.mxu0
    %354 = vmatprep.mubr.f32.mxu0 0.0
    %355 = vmatmul.mubr.f32.gmra.mxu0 %v40
    %v356 = vpop.f32.mrf.mxu0
    %v357 = vadd.f32 %v115, %v356
    %v358 = vpop.f32.mrf.mxu0
    %359 = vmatprep.mubr.f32.mxu0 0.0
    %360 = vmatmul.mubr.f32.gmra.mxu0 %v41
    %v361 = vpop.f32.mrf.mxu0
    %v362 = vadd.f32 %v115, %v361
    %v363 = vpop.f32.mrf.mxu0
    %364 = vmatprep.mubr.f32.mxu0 0.0
    %365 = vmatmul.mubr.f32.gmra.mxu0 %v42
    %v366 = vpop.f32.mrf.mxu0
    %v367 = vadd.f32 %v115, %v366
    %v368 = vpop.f32.mrf.mxu0
    %369 = vmatprep.mubr.f32.mxu0 0.0
    %370 = vmatmul.mubr.f32.gmra.mxu0 %v43
    %v371 = vpop.f32.mrf.mxu0
    %v372 = vadd.f32 %v115, %v371
    %v373 = vpop.f32.mrf.mxu0
    %374 = vmatprep.mubr.f32.mxu0 0.0
    %375 = vmatmul.mubr.f32.gmra.mxu0 %v44
    %v376 = vpop.f32.mrf.mxu0
    %v377 = vadd.f32 %v115, %v376
    %v378 = vpop.f32.mrf.mxu0
    %379 = vmatprep.mubr.f32.mxu0 0.0
    %380 = vmatmul.mubr.f32.gmra.mxu0 %v45
    %v381 = vpop.f32.mrf.mxu0
    %v382 = vadd.f32 %v115, %v381
    %v383 = vpop.f32.mrf.mxu0
    %384 = vmatprep.mubr.f32.mxu0 0.0
    %385 = vmatmul.mubr.f32.gmra.mxu0 %v46
    %v386 = vpop.f32.mrf.mxu0
    %v387 = vadd.f32 %v115, %v386
    %v388 = vpop.f32.mrf.mxu0
    %389 = vmatprep.mubr.f32.mxu0 0.0
    %390 = vmatmul.mubr.f32.gmra.mxu0 %v47
    %v391 = vpop.f32.mrf.mxu0
    %v392 = vadd.f32 %v115, %v391
    %v393 = vpop.f32.mrf.mxu0
    %394 = vmatprep.mubr.f32.mxu0 0.0
    %395 = vmatmul.mubr.f32.gmra.mxu0 %v48
    %v396 = vpop.f32.mrf.mxu0
    %v397 = vadd.f32 %v115, %v396
    %v398 = vpop.f32.mrf.mxu0
    %399 = vmatprep.mubr.f32.mxu0 0.0
    %400 = vmatmul.mubr.f32.gmra.mxu0 %v49
    %v401 = vpop.f32.mrf.mxu0
    %v402 = vadd.f32 %v115, %v401
    %v403 = vpop.f32.mrf.mxu0
    %404 = vmatprep.mubr.f32.mxu0 0.0
    %405 = vmatmul.mubr.f32.gmra.mxu0 %v50
    %v406 = vpop.f32.mrf.mxu0
    %v407 = vadd.f32 %v115, %v406
    %v408 = vpop.f32.mrf.mxu0
    %409 = vmatprep.mubr.f32.mxu0 0.0
    %410 = vmatmul.mubr.f32.gmra.mxu0 %v51
    %v411 = vpop.f32.mrf.mxu0
    %v412 = vadd.f32 %v115, %v411
    %v413 = vpop.f32.mrf.mxu0
    %414 = vmatprep.mubr.f32.mxu0 0.0
    %415 = vmatmul.mubr.f32.gmra.mxu0 %v52
    %v416 = vpop.f32.mrf.mxu0
    %v417 = vadd.f32 %v115, %v416
    %v418 = vpop.f32.mrf.mxu0
    %419 = vmatprep.mubr.f32.mxu0 0.0
    %420 = vmatmul.mubr.f32.gmra.mxu0 %v53
    %v421 = vpop.f32.mrf.mxu0
    %v422 = vadd.f32 %v115, %v421
    %v423 = vpop.f32.mrf.mxu0
    %424 = vdwg.mxu0
    %425 = vst [vmem:[#allocation3] sm:$0xff] %v186
    %426 = vst [vmem:[#allocation3 + $0x8] sm:$0xff] %v188
    %427 = vst [vmem:[#allocation3 + $0x10] sm:$0xff] %v347
    %428 = vst [vmem:[#allocation3 + $0x18] sm:$0xff] %v192
    %429 = vst [vmem:[#allocation3 + $0x20] sm:$0xff] %v194
    %430 = vst [vmem:[#allocation3 + $0x28] sm:$0xff] %v352
    %431 = vst [vmem:[#allocation3 + $0x30] sm:$0xff] %v198
    %432 = vst [vmem:[#allocation3 + $0x38] sm:$0xff] %v200
    %433 = vst [vmem:[#allocation3 + $0x40] sm:$0xff] %v357
    %434 = vst [vmem:[#allocation3 + $0x48] sm:$0xff] %v204
    %435 = vst [vmem:[#allocation3 + $0x50] sm:$0xff] %v206
    %436 = vst [vmem:[#allocation3 + $0x58] sm:$0xff] %v362
    %437 = vst [vmem:[#allocation3 + $0x60] sm:$0xff] %v210
    %438 = vst [vmem:[#allocation3 + $0x68] sm:$0xff] %v212
    %439 = vst [vmem:[#allocation3 + $0x70] sm:$0xff] %v367
    %440 = vst [vmem:[#allocation3 + $0x78] sm:$0xff] %v216
    %441 = vst [vmem:[#allocation3 + $0x80] sm:$0xff] %v218
    %442 = vst [vmem:[#allocation3 + $0x88] sm:$0xff] %v372
    %443 = vst [vmem:[#allocation3 + $0x90] sm:$0xff] %v222
    %444 = vst [vmem:[#allocation3 + $0x98] sm:$0xff] %v224
    %445 = vst [vmem:[#allocation3 + $0xa0] sm:$0xff] %v377
    %446 = vst [vmem:[#allocation3 + $0xa8] sm:$0xff] %v228
    %447 = vst [vmem:[#allocation3 + $0xb0] sm:$0xff] %v230
    %448 = vst [vmem:[#allocation3 + $0xb8] sm:$0xff] %v382
    %449 = vst [vmem:[#allocation3 + $0xc0] sm:$0xff] %v234
    %450 = vst [vmem:[#allocation3 + $0xc8] sm:$0xff] %v236
    %451 = vst [vmem:[#allocation3 + $0xd0] sm:$0xff] %v387
    %452 = vst [vmem:[#allocation3 + $0xd8] sm:$0xff] %v240
    %453 = vst [vmem:[#allocation3 + $0xe0] sm:$0xff] %v242
    %454 = vst [vmem:[#allocation3 + $0xe8] sm:$0xff] %v392
    %455 = vst [vmem:[#allocation3 + $0xf0] sm:$0xff] %v246
    %456 = vst [vmem:[#allocation3 + $0xf8] sm:$0xff] %v248
    %457 = vst [vmem:[#allocation3 + $0x100] sm:$0xff] %v397
    %458 = vst [vmem:[#allocation3 + $0x108] sm:$0xff] %v252
    %459 = vst [vmem:[#allocation3 + $0x110] sm:$0xff] %v254
    %460 = vst [vmem:[#allocation3 + $0x118] sm:$0xff] %v402
    %461 = vst [vmem:[#allocation3 + $0x120] sm:$0xff] %v258
    %462 = vst [vmem:[#allocation3 + $0x128] sm:$0xff] %v260
    %463 = vst [vmem:[#allocation3 + $0x130] sm:$0xff] %v407
    %464 = vst [vmem:[#allocation3 + $0x138] sm:$0xff] %v264
    %465 = vst [vmem:[#allocation3 + $0x140] sm:$0xff] %v266
    %466 = vst [vmem:[#allocation3 + $0x148] sm:$0xff] %v412
    %467 = vst [vmem:[#allocation3 + $0x150] sm:$0xff] %v270
    %468 = vst [vmem:[#allocation3 + $0x158] sm:$0xff] %v272
    %469 = vst [vmem:[#allocation3 + $0x160] sm:$0xff] %v417
    %470 = vst [vmem:[#allocation3 + $0x168] sm:$0xff] %v276
    %471 = vst [vmem:[#allocation3 + $0x170] sm:$0xff] %v278
    %472 = vst [vmem:[#allocation3 + $0x178] sm:$0xff] %v422
    %v473 = vld [vmem:[%s1] sm:$0xff]
    %v474 = vld [vmem:[%s5] sm:$0xff]
    %v475 = vld [vmem:[%s5 + $0x8] sm:$0xff]
    %v476 = vld [vmem:[%s5 + $0x10] sm:$0xff]
    %v477 = vld [vmem:[%s5 + $0x18] sm:$0xff]
    %v478 = vld [vmem:[%s5 + $0x20] sm:$0xff]
    %v479 = vld [vmem:[%s5 + $0x28] sm:$0xff]
    %v480 = vld [vmem:[%s5 + $0x30] sm:$0xff]
    %v481 = vld [vmem:[%s5 + $0x38] sm:$0xff]
    %v482 = vld [vmem:[%s5 + $0x40] sm:$0xff]
    %v483 = vld [vmem:[%s5 + $0x48] sm:$0xff]
    %v484 = vld [vmem:[%s5 + $0x50] sm:$0xff]
    %v485 = vld [vmem:[%s5 + $0x58] sm:$0xff]
    %v486 = vld [vmem:[%s5 + $0x60] sm:$0xff]
    %v487 = vld [vmem:[%s5 + $0x68] sm:$0xff]
    %v488 = vld [vmem:[%s5 + $0x70] sm:$0xff]
    %v489 = vld [vmem:[%s5 + $0x78] sm:$0xff]
    %v490 = vld [vmem:[%s5 + $0x80] sm:$0xff]
    %v491 = vld [vmem:[%s5 + $0x88] sm:$0xff]
    %v492 = vld [vmem:[%s5 + $0x90] sm:$0xff]
    %v493 = vld [vmem:[%s5 + $0x98] sm:$0xff]
    %v494 = vld [vmem:[%s5 + $0xa0] sm:$0xff]
    %v495 = vld [vmem:[%s5 + $0xa8] sm:$0xff]
    %v496 = vld [vmem:[%s5 + $0xb0] sm:$0xff]
    %v497 = vld [vmem:[%s5 + $0xb8] sm:$0xff]
    %v498 = vld [vmem:[%s5 + $0xc0] sm:$0xff]
    %v499 = vld [vmem:[%s5 + $0xc8] sm:$0xff]
    %v500 = vld [vmem:[%s5 + $0xd0] sm:$0xff]
    %v501 = vld [vmem:[%s5 + $0xd8] sm:$0xff]
    %v502 = vld [vmem:[%s5 + $0xe0] sm:$0xff]
    %v503 = vld [vmem:[%s5 + $0xe8] sm:$0xff]
    %v504 = vld [vmem:[%s5 + $0xf0] sm:$0xff]
    %v505 = vld [vmem:[%s5 + $0xf8] sm:$0xff]
    %v506 = vld [vmem:[%s5 + $0x100] sm:$0xff]
    %v507 = vld [vmem:[%s5 + $0x108] sm:$0xff]
    %v508 = vld [vmem:[%s5 + $0x110] sm:$0xff]
    %v509 = vld [vmem:[%s5 + $0x118] sm:$0xff]
    %v510 = vld [vmem:[%s5 + $0x120] sm:$0xff]
    %v511 = vld [vmem:[%s5 + $0x128] sm:$0xff]
    %v512 = vld [vmem:[%s5 + $0x130] sm:$0xff]
    %v513 = vld [vmem:[%s5 + $0x138] sm:$0xff]
    %v514 = vld [vmem:[%s5 + $0x140] sm:$0xff]
    %v515 = vld [vmem:[%s5 + $0x148] sm:$0xff]
    %v516 = vld [vmem:[%s5 + $0x150] sm:$0xff]
    %v517 = vld [vmem:[%s5 + $0x158] sm:$0xff]
    %v518 = vld [vmem:[%s5 + $0x160] sm:$0xff]
    %v519 = vld [vmem:[%s5 + $0x168] sm:$0xff]
    %v520 = vld [vmem:[%s5 + $0x170] sm:$0xff]
    %v521 = vld [vmem:[%s5 + $0x178] sm:$0xff]
    %v522 = vld [vmem:[%s6] sm:$0x1]
    %v523 = vld [vmem:[#allocation2] sm:$0xff]
    %v524 = vld [vmem:[#allocation3] sm:$0xff]
    %v525 = vld [vmem:[#allocation3 + $0x8] sm:$0xff]
    %v526 = vld [vmem:[#allocation3 + $0x10] sm:$0xff]
    %527 = vmatprep.subr.mxu0 %v520
    %528 = vmatpush1.msra.mxu0 %v519
    %529 = vmatprep.subr.mxu0 %v517
    %530 = vmatpush1.msra.mxu0 %v516
    %531 = vmatprep.subr.mxu0 %v514
    %532 = vmatpush1.msra.mxu0 %v513
    %533 = vmatprep.subr.mxu0 %v511
    %534 = vmatpush1.msra.mxu0 %v510
    %535 = vmatprep.subr.mxu0 %v508
    %536 = vmatpush1.msra.mxu0 %v507
    %537 = vmatprep.subr.mxu0 %v505
    %538 = vmatpush1.msra.mxu0 %v504
    %539 = vmatprep.subr.mxu0 %v502
    %540 = vmatpush1.msra.mxu0 %v501
    %541 = vmatprep.subr.mxu0 %v499
    %542 = vmatpush1.msra.mxu0 %v498
    %543 = vmatprep.subr.mxu0 %v496
    %544 = vmatpush1.msra.mxu0 %v495
    %545 = vmatprep.subr.mxu0 %v493
    %546 = vmatpush1.msra.mxu0 %v492
    %547 = vmatprep.subr.mxu0 %v490
    %548 = vmatpush1.msra.mxu0 %v489
    %549 = vmatprep.subr.mxu0 %v487
    %550 = vmatpush1.msra.mxu0 %v486
    %551 = vmatprep.subr.mxu0 %v484
    %552 = vmatpush1.msra.mxu0 %v483
    %553 = vmatprep.subr.mxu0 %v481
    %554 = vmatpush1.msra.mxu0 %v480
    %555 = vmatprep.subr.mxu0 %v478
    %556 = vmatpush1.msra.mxu0 %v477
    %557 = vmatprep.subr.mxu0 %v475
    %558 = vmatpush1.msra.mxu0 %v474
    %559 = vmatprep.subr.mxu0 0.0
    %560 = vmatpush2.msra.mxu0 0.0
    %561 = vmatprep.subr.mxu0 0.0
    %562 = vmatpush2.msra.mxu0 0.0
    %563 = vmatprep.subr.mxu0 0.0
    %564 = vmatpush2.msra.mxu0 0.0
    %565 = vmatprep.subr.mxu0 0.0
    %566 = vmatpush2.msra.mxu0 0.0
    %567 = vmatprep.subr.mxu0 0.0
    %568 = vmatpush2.msra.mxu0 0.0
    %569 = vmatprep.subr.mxu0 0.0
    %570 = vmatpush2.msra.mxu0 0.0
    %571 = vmatprep.subr.mxu0 0.0
    %572 = vmatpush2.msra.mxu0 0.0
    %573 = vmatprep.subr.mxu0 0.0
    %574 = vmatpush2.msra.mxu0 0.0
    %575 = vmatprep.subr.mxu0 0.0
    %576 = vmatpush2.msra.mxu0 0.0
    %577 = vmatprep.subr.mxu0 0.0
    %578 = vmatpush2.msra.mxu0 0.0
    %579 = vmatprep.subr.mxu0 0.0
    %580 = vmatpush2.msra.mxu0 0.0
    %581 = vmatprep.subr.mxu0 0.0
    %582 = vmatpush2.msra.mxu0 0.0
    %583 = vmatprep.subr.mxu0 0.0
    %584 = vmatpush2.msra.mxu0 0.0
    %585 = vmatprep.subr.mxu0 0.0
    %586 = vmatpush2.msra.mxu0 0.0
    %587 = vmatprep.subr.mxu0 0.0
    %588 = vmatpush2.msra.mxu0 0.0
    %589 = vmatprep.subr.mxu0 0.0
    %590 = vmatpush2.msra.mxu0 0.0
    %591 = vmatprep.mubr.f32.mxu0 0.0
    %592 = vmatmul.mubr.f32.gmra.mxu0 %v523
    %v593 = vpop.f32.mrf.mxu0
    %v594 = vadd.f32 0.0, %v593
    %v595 = vpop.f32.mrf.mxu0
    %v596 = vadd.f32 0.0, %v595
    %597 = vdwg.mxu0
    %598 = vmatprep.subr.mxu0 0.0
    %599 = vmatpush1.msra.mxu0 %v521
    %600 = vmatprep.subr.mxu0 0.0
    %601 = vmatpush1.msra.mxu0 %v518
    %602 = vmatprep.subr.mxu0 0.0
    %603 = vmatpush1.msra.mxu0 %v515
    %604 = vmatprep.subr.mxu0 0.0
    %605 = vmatpush1.msra.mxu0 %v512
    %606 = vmatprep.subr.mxu0 0.0
    %607 = vmatpush1.msra.mxu0 %v509
    %608 = vmatprep.subr.mxu0 0.0
    %609 = vmatpush1.msra.mxu0 %v506
    %610 = vmatprep.subr.mxu0 0.0
    %611 = vmatpush1.msra.mxu0 %v503
    %612 = vmatprep.subr.mxu0 0.0
    %613 = vmatpush1.msra.mxu0 %v500
    %614 = vmatprep.subr.mxu0 0.0
    %615 = vmatpush1.msra.mxu0 %v497
    %616 = vmatprep.subr.mxu0 0.0
    %617 = vmatpush1.msra.mxu0 %v494
    %618 = vmatprep.subr.mxu0 0.0
    %619 = vmatpush1.msra.mxu0 %v491
    %620 = vmatprep.subr.mxu0 0.0
    %621 = vmatpush1.msra.mxu0 %v488
    %622 = vmatprep.subr.mxu0 0.0
    %623 = vmatpush1.msra.mxu0 %v485
    %624 = vmatprep.subr.mxu0 0.0
    %625 = vmatpush1.msra.mxu0 %v482
    %626 = vmatprep.subr.mxu0 0.0
    %627 = vmatpush1.msra.mxu0 %v479
    %628 = vmatprep.subr.mxu0 0.0
    %629 = vmatpush1.msra.mxu0 %v476
    %630 = vmatprep.subr.mxu0 0.0
    %631 = vmatpush2.msra.mxu0 0.0
    %632 = vmatprep.subr.mxu0 0.0
    %633 = vmatpush2.msra.mxu0 0.0
    %634 = vmatprep.subr.mxu0 0.0
    %635 = vmatpush2.msra.mxu0 0.0
    %636 = vmatprep.subr.mxu0 0.0
    %637 = vmatpush2.msra.mxu0 0.0
    %638 = vmatprep.subr.mxu0 0.0
    %639 = vmatpush2.msra.mxu0 0.0
    %640 = vmatprep.subr.mxu0 0.0
    %641 = vmatpush2.msra.mxu0 0.0
    %642 = vmatprep.subr.mxu0 0.0
    %643 = vmatpush2.msra.mxu0 0.0
    %644 = vmatprep.subr.mxu0 0.0
    %645 = vmatpush2.msra.mxu0 0.0
    %646 = vmatprep.subr.mxu0 0.0
    %647 = vmatpush2.msra.mxu0 0.0
    %648 = vmatprep.subr.mxu0 0.0
    %649 = vmatpush2.msra.mxu0 0.0
    %650 = vmatprep.subr.mxu0 0.0
    %651 = vmatpush2.msra.mxu0 0.0
    %652 = vmatprep.subr.mxu0 0.0
    %653 = vmatpush2.msra.mxu0 0.0
    %654 = vmatprep.subr.mxu0 0.0
    %655 = vmatpush2.msra.mxu0 0.0
    %656 = vmatprep.subr.mxu0 0.0
    %657 = vmatpush2.msra.mxu0 0.0
    %658 = vmatprep.subr.mxu0 0.0
    %659 = vmatpush2.msra.mxu0 0.0
    %660 = vmatprep.subr.mxu0 0.0
    %661 = vmatpush2.msra.mxu0 0.0
    %662 = vmatprep.mubr.f32.mxu0 0.0
    %663 = vmatmul.mubr.f32.gmra.mxu0 %v523
    %v664 = vpop.f32.mrf.mxu0
    %v665 = vadd.f32 0.0, %v664
    %v666 = vpop.f32.mrf.mxu0
    %667 = vdwg.mxu0
    %v668 = vadd.f32 %v524, %v594
    %v669 = vxor.u32 %v668, 2147483648
    %v670 = vmul.f32 %v669, 1.442695
    %v671 = vpow.pop %v670
    %v672 = vadd.f32 %v671, 1.0
    %v673 = vrcp.pop %v672
    %v674 = vmul.f32 1.0, %v673
    %v675 = vadd.f32 %v525, %v596
    %v676 = vxor.u32 %v675, 2147483648
    %v677 = vmul.f32 %v676, 1.442695
    %v678 = vpow.pop %v677
    %v679 = vadd.f32 %v678, 1.0
    %v680 = vrcp.pop %v679
    %v681 = vmul.f32 1.0, %v680
    %v683 = vlaneseq
    %v684 = vshrl.u32 %v683, 7
    %v685 = vsub.s32 0, %v684
    %v686 = vrot.slane %v522, %v685
    %v688 = vadd.f32 %v665, %v686
    %v689 = vmul.f32 %v674, %v688
    %v690 = vadd.f32 %v526, %v689
    %v691 = vtanh.pop %v690
    %v692 = vsub.f32 1.0, %v681
    %v693 = vmul.f32 %v692, %v691
    %v694 = vmul.f32 %v681, %v523
    %v695 = vadd.f32 %v693, %v694
    %v696 = vstv %s27
    %vm697 = vcmp.lt.s32.totalorder %v696, %v473
    %v698 = vsel %vm697, 1, 0
    %699 = vset.pattern.permute.xlu0 0
    %700 = vperm.xlu0 %699, %v698
    %v701 = vpop.permute.xlu0 %700
    %vm702 = vcmp.eq.s32.totalorder %v701, 1
    %v703 = vsel %vm702, %v695, 0.0
    %704 = vst [vmem:[%s7] sm:$0xff] %v703
    %v705 = vsel %vm702, %v695, %v523
    %s706 = sadd.s32 %s27, 1
    %s707 = scalar_lea.vmem [#allocation3], 24
    %v708 = vld [vmem:[%s707] sm:$0xff]
    %v709 = vld [vmem:[%s707 + $0x8] sm:$0xff]
    %v710 = vld [vmem:[%s707 + $0x10] sm:$0xff]
    %711 = vmatprep.subr.mxu0 %v520
    %712 = vmatpush1.msra.mxu0 %v519
    %713 = vmatprep.subr.mxu0 %v517
    %714 = vmatpush1.msra.mxu0 %v516
    %715 = vmatprep.subr.mxu0 %v514
    %716 = vmatpush1.msra.mxu0 %v513
    %717 = vmatprep.subr.mxu0 %v511
    %718 = vmatpush1.msra.mxu0 %v510
    %719 = vmatprep.subr.mxu0 %v508
    %720 = vmatpush1.msra.mxu0 %v507
    %721 = vmatprep.subr.mxu0 %v505
    %722 = vmatpush1.msra.mxu0 %v504
    %723 = vmatprep.subr.mxu0 %v502
    %724 = vmatpush1.msra.mxu0 %v501
    %725 = vmatprep.subr.mxu0 %v499
    %726 = vmatpush1.msra.mxu0 %v498
    %727 = vmatprep.subr.mxu0 %v496
    %728 = vmatpush1.msra.mxu0 %v495
    %729 = vmatprep.subr.mxu0 %v493
    %730 = vmatpush1.msra.mxu0 %v492
    %731 = vmatprep.subr.mxu0 %v490
    %732 = vmatpush1.msra.mxu0 %v489
    %733 = vmatprep.subr.mxu0 %v487
    %734 = vmatpush1.msra.mxu0 %v486
    %735 = vmatprep.subr.mxu0 %v484
    %736 = vmatpush1.msra.mxu0 %v483
    %737 = vmatprep.subr.mxu0 %v481
    %738 = vmatpush1.msra.mxu0 %v480
    %739 = vmatprep.subr.mxu0 %v478
    %740 = vmatpush1.msra.mxu0 %v477
    %741 = vmatprep.subr.mxu0 %v475
    %742 = vmatpush1.msra.mxu0 %v474
    %743 = vmatprep.subr.mxu0 0.0
    %744 = vmatpush2.msra.mxu0 0.0
    %745 = vmatprep.subr.mxu0 0.0
    %746 = vmatpush2.msra.mxu0 0.0
    %747 = vmatprep.subr.mxu0 0.0
    %748 = vmatpush2.msra.mxu0 0.0
    %749 = vmatprep.subr.mxu0 0.0
    %750 = vmatpush2.msra.mxu0 0.0
    %751 = vmatprep.subr.mxu0 0.0
    %752 = vmatpush2.msra.mxu0 0.0
    %753 = vmatprep.subr.mxu0 0.0
    %754 = vmatpush2.msra.mxu0 0.0
    %755 = vmatprep.subr.mxu0 0.0
    %756 = vmatpush2.msra.mxu0 0.0
    %757 = vmatprep.subr.mxu0 0.0
    %758 = vmatpush2.msra.mxu0 0.0
    %759 = vmatprep.subr.mxu0 0.0
    %760 = vmatpush2.msra.mxu0 0.0
    %761 = vmatprep.subr.mxu0 0.0
    %762 = vmatpush2.msra.mxu0 0.0
    %763 = vmatprep.subr.mxu0 0.0
    %764 = vmatpush2.msra.mxu0 0.0
    %765 = vmatprep.subr.mxu0 0.0
    %766 = vmatpush2.msra.mxu0 0.0
    %767 = vmatprep.subr.mxu0 0.0
    %768 = vmatpush2.msra.mxu0 0.0
    %769 = vmatprep.subr.mxu0 0.0
    %770 = vmatpush2.msra.mxu0 0.0
    %771 = vmatprep.subr.mxu0 0.0
    %772 = vmatpush2.msra.mxu0 0.0
    %773 = vmatprep.subr.mxu0 0.0
    %774 = vmatpush2.msra.mxu0 0.0
    %775 = vmatprep.mubr.f32.mxu0 0.0
    %776 = vmatmul.mubr.f32.gmra.mxu0 %v705
    %v777 = vpop.f32.mrf.mxu0
    %v778 = vadd.f32 0.0, %v777
    %v779 = vpop.f32.mrf.mxu0
    %v780 = vadd.f32 0.0, %v779
    %781 = vdwg.mxu0
    %782 = vmatprep.subr.mxu0 0.0
    %783 = vmatpush1.msra.mxu0 %v521
    %784 = vmatprep.subr.mxu0 0.0
    %785 = vmatpush1.msra.mxu0 %v518
    %786 = vmatprep.subr.mxu0 0.0
    %787 = vmatpush1.msra.mxu0 %v515
    %788 = vmatprep.subr.mxu0 0.0
    %789 = vmatpush1.msra.mxu0 %v512
    %790 = vmatprep.subr.mxu0 0.0
    %791 = vmatpush1.msra.mxu0 %v509
    %792 = vmatprep.subr.mxu0 0.0
    %793 = vmatpush1.msra.mxu0 %v506
    %794 = vmatprep.subr.mxu0 0.0
    %795 = vmatpush1.msra.mxu0 %v503
    %796 = vmatprep.subr.mxu0 0.0
    %797 = vmatpush1.msra.mxu0 %v500
    %798 = vmatprep.subr.mxu0 0.0
    %799 = vmatpush1.msra.mxu0 %v497
    %800 = vmatprep.subr.mxu0 0.0
    %801 = vmatpush1.msra.mxu0 %v494
    %802 = vmatprep.subr.mxu0 0.0
    %803 = vmatpush1.msra.mxu0 %v491
    %804 = vmatprep.subr.mxu0 0.0
    %805 = vmatpush1.msra.mxu0 %v488
    %806 = vmatprep.subr.mxu0 0.0
    %807 = vmatpush1.msra.mxu0 %v485
    %808 = vmatprep.subr.mxu0 0.0
    %809 = vmatpush1.msra.mxu0 %v482
    %810 = vmatprep.subr.mxu0 0.0
    %811 = vmatpush1.msra.mxu0 %v479
    %812 = vmatprep.subr.mxu0 0.0
    %813 = vmatpush1.msra.mxu0 %v476
    %814 = vmatprep.subr.mxu0 0.0
    %815 = vmatpush2.msra.mxu0 0.0
    %816 = vmatprep.subr.mxu0 0.0
    %817 = vmatpush2.msra.mxu0 0.0
    %818 = vmatprep.subr.mxu0 0.0
    %819 = vmatpush2.msra.mxu0 0.0
    %820 = vmatprep.subr.mxu0 0.0
    %821 = vmatpush2.msra.mxu0 0.0
    %822 = vmatprep.subr.mxu0 0.0
    %823 = vmatpush2.msra.mxu0 0.0
    %824 = vmatprep.subr.mxu0 0.0
    %825 = vmatpush2.msra.mxu0 0.0
    %826 = vmatprep.subr.mxu0 0.0
    %827 = vmatpush2.msra.mxu0 0.0
    %828 = vmatprep.subr.mxu0 0.0
    %829 = vmatpush2.msra.mxu0 0.0
    %830 = vmatprep.subr.mxu0 0.0
    %831 = vmatpush2.msra.mxu0 0.0
    %832 = vmatprep.subr.mxu0 0.0
    %833 = vmatpush2.msra.mxu0 0.0
    %834 = vmatprep.subr.mxu0 0.0
    %835 = vmatpush2.msra.mxu0 0.0
    %836 = vmatprep.subr.mxu0 0.0
    %837 = vmatpush2.msra.mxu0 0.0
    %838 = vmatprep.subr.mxu0 0.0
    %839 = vmatpush2.msra.mxu0 0.0
    %840 = vmatprep.subr.mxu0 0.0
    %841 = vmatpush2.msra.mxu0 0.0
    %842 = vmatprep.subr.mxu0 0.0
    %843 = vmatpush2.msra.mxu0 0.0
    %844 = vmatprep.subr.mxu0 0.0
    %845 = vmatpush2.msra.mxu0 0.0
    %846 = vmatprep.mubr.f32.mxu0 0.0
    %847 = vmatmul.mubr.f32.gmra.mxu0 %v705
    %v848 = vpop.f32.mrf.mxu0
    %v849 = vadd.f32 0.0, %v848
    %v850 = vpop.f32.mrf.mxu0
    %851 = vdwg.mxu0
    %v852 = vadd.f32 %v708, %v778
    %v853 = vxor.u32 %v852, 2147483648
    %v854 = vmul.f32 %v853, 1.442695
    %v855 = vpow.pop %v854
    %v856 = vadd.f32 %v855, 1.0
    %v857 = vrcp.pop %v856
    %v858 = vmul.f32 1.0, %v857
    %v859 = vadd.f32 %v709, %v780
    %v860 = vxor.u32 %v859, 2147483648
    %v861 = vmul.f32 %v860, 1.442695
    %v862 = vpow.pop %v861
    %v863 = vadd.f32 %v862, 1.0
    %v864 = vrcp.pop %v863
    %v865 = vmul.f32 1.0, %v864
    %v866 = vadd.f32 %v849, %v686
    %v867 = vmul.f32 %v858, %v866
    %v868 = vadd.f32 %v710, %v867
    %v869 = vtanh.pop %v868
    %v870 = vsub.f32 1.0, %v865
    %v871 = vmul.f32 %v870, %v869
    %v872 = vmul.f32 %v865, %v705
    %v873 = vadd.f32 %v871, %v872
    %v874 = vstv %s706
    %vm875 = vcmp.lt.s32.totalorder %v874, %v473
    %v876 = vsel %vm875, 1, 0
    %877 = vset.pattern.permute.xlu0 0
    %878 = vperm.xlu0 %877, %v876
    %v879 = vpop.permute.xlu0 %878
    %vm880 = vcmp.eq.s32.totalorder %v879, 1
    %v881 = vsel %vm880, %v873, 0.0
    %s882 = scalar_lea.vmem %s7, 8
    %883 = vst [vmem:[%s882] sm:$0xff] %v881
    %v884 = vsel %vm880, %v873, %v705
    %s885 = sadd.s32 %s27, 2
    %s886 = scalar_lea.vmem [#allocation3], 48
    %v887 = vld [vmem:[%s886] sm:$0xff]
    %v888 = vld [vmem:[%s886 + $0x8] sm:$0xff]
    %v889 = vld [vmem:[%s886 + $0x10] sm:$0xff]
    %890 = vmatprep.subr.mxu0 %v520
    %891 = vmatpush1.msra.mxu0 %v519
    %892 = vmatprep.subr.mxu0 %v517
    %893 = vmatpush1.msra.mxu0 %v516
    %894 = vmatprep.subr.mxu0 %v514
    %895 = vmatpush1.msra.mxu0 %v513
    %896 = vmatprep.subr.mxu0 %v511
    %897 = vmatpush1.msra.mxu0 %v510
    %898 = vmatprep.subr.mxu0 %v508
    %899 = vmatpush1.msra.mxu0 %v507
    %900 = vmatprep.subr.mxu0 %v505
    %901 = vmatpush1.msra.mxu0 %v504
    %902 = vmatprep.subr.mxu0 %v502
    %903 = vmatpush1.msra.mxu0 %v501
    %904 = vmatprep.subr.mxu0 %v499
    %905 = vmatpush1.msra.mxu0 %v498
    %906 = vmatprep.subr.mxu0 %v496
    %907 = vmatpush1.msra.mxu0 %v495
    %908 = vmatprep.subr.mxu0 %v493
    %909 = vmatpush1.msra.mxu0 %v492
    %910 = vmatprep.subr.mxu0 %v490
    %911 = vmatpush1.msra.mxu0 %v489
    %912 = vmatprep.subr.mxu0 %v487
    %913 = vmatpush1.msra.mxu0 %v486
    %914 = vmatprep.subr.mxu0 %v484
    %915 = vmatpush1.msra.mxu0 %v483
    %916 = vmatprep.subr.mxu0 %v481
    %917 = vmatpush1.msra.mxu0 %v480
    %918 = vmatprep.subr.mxu0 %v478
    %919 = vmatpush1.msra.mxu0 %v477
    %920 = vmatprep.subr.mxu0 %v475
    %921 = vmatpush1.msra.mxu0 %v474
    %922 = vmatprep.subr.mxu0 0.0
    %923 = vmatpush2.msra.mxu0 0.0
    %924 = vmatprep.subr.mxu0 0.0
    %925 = vmatpush2.msra.mxu0 0.0
    %926 = vmatprep.subr.mxu0 0.0
    %927 = vmatpush2.msra.mxu0 0.0
    %928 = vmatprep.subr.mxu0 0.0
    %929 = vmatpush2.msra.mxu0 0.0
    %930 = vmatprep.subr.mxu0 0.0
    %931 = vmatpush2.msra.mxu0 0.0
    %932 = vmatprep.subr.mxu0 0.0
    %933 = vmatpush2.msra.mxu0 0.0
    %934 = vmatprep.subr.mxu0 0.0
    %935 = vmatpush2.msra.mxu0 0.0
    %936 = vmatprep.subr.mxu0 0.0
    %937 = vmatpush2.msra.mxu0 0.0
    %938 = vmatprep.subr.mxu0 0.0
    %939 = vmatpush2.msra.mxu0 0.0
    %940 = vmatprep.subr.mxu0 0.0
    %941 = vmatpush2.msra.mxu0 0.0
    %942 = vmatprep.subr.mxu0 0.0
    %943 = vmatpush2.msra.mxu0 0.0
    %944 = vmatprep.subr.mxu0 0.0
    %945 = vmatpush2.msra.mxu0 0.0
    %946 = vmatprep.subr.mxu0 0.0
    %947 = vmatpush2.msra.mxu0 0.0
    %948 = vmatprep.subr.mxu0 0.0
    %949 = vmatpush2.msra.mxu0 0.0
    %950 = vmatprep.subr.mxu0 0.0
    %951 = vmatpush2.msra.mxu0 0.0
    %952 = vmatprep.subr.mxu0 0.0
    %953 = vmatpush2.msra.mxu0 0.0
    %954 = vmatprep.mubr.f32.mxu0 0.0
    %955 = vmatmul.mubr.f32.gmra.mxu0 %v884
    %v956 = vpop.f32.mrf.mxu0
    %v957 = vadd.f32 0.0, %v956
    %v958 = vpop.f32.mrf.mxu0
    %v959 = vadd.f32 0.0, %v958
    %960 = vdwg.mxu0
    %961 = vmatprep.subr.mxu0 0.0
    %962 = vmatpush1.msra.mxu0 %v521
    %963 = vmatprep.subr.mxu0 0.0
    %964 = vmatpush1.msra.mxu0 %v518
    %965 = vmatprep.subr.mxu0 0.0
    %966 = vmatpush1.msra.mxu0 %v515
    %967 = vmatprep.subr.mxu0 0.0
    %968 = vmatpush1.msra.mxu0 %v512
    %969 = vmatprep.subr.mxu0 0.0
    %970 = vmatpush1.msra.mxu0 %v509
    %971 = vmatprep.subr.mxu0 0.0
    %972 = vmatpush1.msra.mxu0 %v506
    %973 = vmatprep.subr.mxu0 0.0
    %974 = vmatpush1.msra.mxu0 %v503
    %975 = vmatprep.subr.mxu0 0.0
    %976 = vmatpush1.msra.mxu0 %v500
    %977 = vmatprep.subr.mxu0 0.0
    %978 = vmatpush1.msra.mxu0 %v497
    %979 = vmatprep.subr.mxu0 0.0
    %980 = vmatpush1.msra.mxu0 %v494
    %981 = vmatprep.subr.mxu0 0.0
    %982 = vmatpush1.msra.mxu0 %v491
    %983 = vmatprep.subr.mxu0 0.0
    %984 = vmatpush1.msra.mxu0 %v488
    %985 = vmatprep.subr.mxu0 0.0
    %986 = vmatpush1.msra.mxu0 %v485
    %987 = vmatprep.subr.mxu0 0.0
    %988 = vmatpush1.msra.mxu0 %v482
    %989 = vmatprep.subr.mxu0 0.0
    %990 = vmatpush1.msra.mxu0 %v479
    %991 = vmatprep.subr.mxu0 0.0
    %992 = vmatpush1.msra.mxu0 %v476
    %993 = vmatprep.subr.mxu0 0.0
    %994 = vmatpush2.msra.mxu0 0.0
    %995 = vmatprep.subr.mxu0 0.0
    %996 = vmatpush2.msra.mxu0 0.0
    %997 = vmatprep.subr.mxu0 0.0
    %998 = vmatpush2.msra.mxu0 0.0
    %999 = vmatprep.subr.mxu0 0.0
    %1000 = vmatpush2.msra.mxu0 0.0
    %1001 = vmatprep.subr.mxu0 0.0
    %1002 = vmatpush2.msra.mxu0 0.0
    %1003 = vmatprep.subr.mxu0 0.0
    %1004 = vmatpush2.msra.mxu0 0.0
    %1005 = vmatprep.subr.mxu0 0.0
    %1006 = vmatpush2.msra.mxu0 0.0
    %1007 = vmatprep.subr.mxu0 0.0
    %1008 = vmatpush2.msra.mxu0 0.0
    %1009 = vmatprep.subr.mxu0 0.0
    %1010 = vmatpush2.msra.mxu0 0.0
    %1011 = vmatprep.subr.mxu0 0.0
    %1012 = vmatpush2.msra.mxu0 0.0
    %1013 = vmatprep.subr.mxu0 0.0
    %1014 = vmatpush2.msra.mxu0 0.0
    %1015 = vmatprep.subr.mxu0 0.0
    %1016 = vmatpush2.msra.mxu0 0.0
    %1017 = vmatprep.subr.mxu0 0.0
    %1018 = vmatpush2.msra.mxu0 0.0
    %1019 = vmatprep.subr.mxu0 0.0
    %1020 = vmatpush2.msra.mxu0 0.0
    %1021 = vmatprep.subr.mxu0 0.0
    %1022 = vmatpush2.msra.mxu0 0.0
    %1023 = vmatprep.subr.mxu0 0.0
    %1024 = vmatpush2.msra.mxu0 0.0
    %1025 = vmatprep.mubr.f32.mxu0 0.0
    %1026 = vmatmul.mubr.f32.gmra.mxu0 %v884
    %v1027 = vpop.f32.mrf.mxu0
    %v1028 = vadd.f32 0.0, %v1027
    %v1029 = vpop.f32.mrf.mxu0
    %1030 = vdwg.mxu0
    %v1031 = vadd.f32 %v887, %v957
    %v1032 = vxor.u32 %v1031, 2147483648
    %v1033 = vmul.f32 %v1032, 1.442695
    %v1034 = vpow.pop %v1033
    %v1035 = vadd.f32 %v1034, 1.0
    %v1036 = vrcp.pop %v1035
    %v1037 = vmul.f32 1.0, %v1036
    %v1038 = vadd.f32 %v888, %v959
    %v1039 = vxor.u32 %v1038, 2147483648
    %v1040 = vmul.f32 %v1039, 1.442695
    %v1041 = vpow.pop %v1040
    %v1042 = vadd.f32 %v1041, 1.0
    %v1043 = vrcp.pop %v1042
    %v1044 = vmul.f32 1.0, %v1043
    %v1045 = vadd.f32 %v1028, %v686
    %v1046 = vmul.f32 %v1037, %v1045
    %v1047 = vadd.f32 %v889, %v1046
    %v1048 = vtanh.pop %v1047
    %v1049 = vsub.f32 1.0, %v1044
    %v1050 = vmul.f32 %v1049, %v1048
    %v1051 = vmul.f32 %v1044, %v884
    %v1052 = vadd.f32 %v1050, %v1051
    %v1053 = vstv %s885
    %vm1054 = vcmp.lt.s32.totalorder %v1053, %v473
    %v1055 = vsel %vm1054, 1, 0
    %1056 = vset.pattern.permute.xlu0 0
    %1057 = vperm.xlu0 %1056, %v1055
    %v1058 = vpop.permute.xlu0 %1057
    %vm1059 = vcmp.eq.s32.totalorder %v1058, 1
    %v1060 = vsel %vm1059, %v1052, 0.0
    %s1061 = scalar_lea.vmem %s7, 16
    %1062 = vst [vmem:[%s1061] sm:$0xff] %v1060
    %v1063 = vsel %vm1059, %v1052, %v884
    %s1064 = sadd.s32 %s27, 3
    %s1065 = scalar_lea.vmem [#allocation3], 72
    %v1066 = vld [vmem:[%s1065] sm:$0xff]
    %v1067 = vld [vmem:[%s1065 + $0x8] sm:$0xff]
    %v1068 = vld [vmem:[%s1065 + $0x10] sm:$0xff]
    %1069 = vmatprep.subr.mxu0 %v520
    %1070 = vmatpush1.msra.mxu0 %v519
    %1071 = vmatprep.subr.mxu0 %v517
    %1072 = vmatpush1.msra.mxu0 %v516
    %1073 = vmatprep.subr.mxu0 %v514
    %1074 = vmatpush1.msra.mxu0 %v513
    %1075 = vmatprep.subr.mxu0 %v511
    %1076 = vmatpush1.msra.mxu0 %v510
    %1077 = vmatprep.subr.mxu0 %v508
    %1078 = vmatpush1.msra.mxu0 %v507
    %1079 = vmatprep.subr.mxu0 %v505
    %1080 = vmatpush1.msra.mxu0 %v504
    %1081 = vmatprep.subr.mxu0 %v502
    %1082 = vmatpush1.msra.mxu0 %v501
    %1083 = vmatprep.subr.mxu0 %v499
    %1084 = vmatpush1.msra.mxu0 %v498
    %1085 = vmatprep.subr.mxu0 %v496
    %1086 = vmatpush1.msra.mxu0 %v495
    %1087 = vmatprep.subr.mxu0 %v493
    %1088 = vmatpush1.msra.mxu0 %v492
    %1089 = vmatprep.subr.mxu0 %v490
    %1090 = vmatpush1.msra.mxu0 %v489
    %1091 = vmatprep.subr.mxu0 %v487
    %1092 = vmatpush1.msra.mxu0 %v486
    %1093 = vmatprep.subr.mxu0 %v484
    %1094 = vmatpush1.msra.mxu0 %v483
    %1095 = vmatprep.subr.mxu0 %v481
    %1096 = vmatpush1.msra.mxu0 %v480
    %1097 = vmatprep.subr.mxu0 %v478
    %1098 = vmatpush1.msra.mxu0 %v477
    %1099 = vmatprep.subr.mxu0 %v475
    %1100 = vmatpush1.msra.mxu0 %v474
    %1101 = vmatprep.subr.mxu0 0.0
    %1102 = vmatpush2.msra.mxu0 0.0
    %1103 = vmatprep.subr.mxu0 0.0
    %1104 = vmatpush2.msra.mxu0 0.0
    %1105 = vmatprep.subr.mxu0 0.0
    %1106 = vmatpush2.msra.mxu0 0.0
    %1107 = vmatprep.subr.mxu0 0.0
    %1108 = vmatpush2.msra.mxu0 0.0
    %1109 = vmatprep.subr.mxu0 0.0
    %1110 = vmatpush2.msra.mxu0 0.0
    %1111 = vmatprep.subr.mxu0 0.0
    %1112 = vmatpush2.msra.mxu0 0.0
    %1113 = vmatprep.subr.mxu0 0.0
    %1114 = vmatpush2.msra.mxu0 0.0
    %1115 = vmatprep.subr.mxu0 0.0
    %1116 = vmatpush2.msra.mxu0 0.0
    %1117 = vmatprep.subr.mxu0 0.0
    %1118 = vmatpush2.msra.mxu0 0.0
    %1119 = vmatprep.subr.mxu0 0.0
    %1120 = vmatpush2.msra.mxu0 0.0
    %1121 = vmatprep.subr.mxu0 0.0
    %1122 = vmatpush2.msra.mxu0 0.0
    %1123 = vmatprep.subr.mxu0 0.0
    %1124 = vmatpush2.msra.mxu0 0.0
    %1125 = vmatprep.subr.mxu0 0.0
    %1126 = vmatpush2.msra.mxu0 0.0
    %1127 = vmatprep.subr.mxu0 0.0
    %1128 = vmatpush2.msra.mxu0 0.0
    %1129 = vmatprep.subr.mxu0 0.0
    %1130 = vmatpush2.msra.mxu0 0.0
    %1131 = vmatprep.subr.mxu0 0.0
    %1132 = vmatpush2.msra.mxu0 0.0
    %1133 = vmatprep.mubr.f32.mxu0 0.0
    %1134 = vmatmul.mubr.f32.gmra.mxu0 %v1063
    %v1135 = vpop.f32.mrf.mxu0
    %v1136 = vadd.f32 0.0, %v1135
    %v1137 = vpop.f32.mrf.mxu0
    %v1138 = vadd.f32 0.0, %v1137
    %1139 = vdwg.mxu0
    %1140 = vmatprep.subr.mxu0 0.0
    %1141 = vmatpush1.msra.mxu0 %v521
    %1142 = vmatprep.subr.mxu0 0.0
    %1143 = vmatpush1.msra.mxu0 %v518
    %1144 = vmatprep.subr.mxu0 0.0
    %1145 = vmatpush1.msra.mxu0 %v515
    %1146 = vmatprep.subr.mxu0 0.0
    %1147 = vmatpush1.msra.mxu0 %v512
    %1148 = vmatprep.subr.mxu0 0.0
    %1149 = vmatpush1.msra.mxu0 %v509
    %1150 = vmatprep.subr.mxu0 0.0
    %1151 = vmatpush1.msra.mxu0 %v506
    %1152 = vmatprep.subr.mxu0 0.0
    %1153 = vmatpush1.msra.mxu0 %v503
    %1154 = vmatprep.subr.mxu0 0.0
    %1155 = vmatpush1.msra.mxu0 %v500
    %1156 = vmatprep.subr.mxu0 0.0
    %1157 = vmatpush1.msra.mxu0 %v497
    %1158 = vmatprep.subr.mxu0 0.0
    %1159 = vmatpush1.msra.mxu0 %v494
    %1160 = vmatprep.subr.mxu0 0.0
    %1161 = vmatpush1.msra.mxu0 %v491
    %1162 = vmatprep.subr.mxu0 0.0
    %1163 = vmatpush1.msra.mxu0 %v488
    %1164 = vmatprep.subr.mxu0 0.0
    %1165 = vmatpush1.msra.mxu0 %v485
    %1166 = vmatprep.subr.mxu0 0.0
    %1167 = vmatpush1.msra.mxu0 %v482
    %1168 = vmatprep.subr.mxu0 0.0
    %1169 = vmatpush1.msra.mxu0 %v479
    %1170 = vmatprep.subr.mxu0 0.0
    %1171 = vmatpush1.msra.mxu0 %v476
    %1172 = vmatprep.subr.mxu0 0.0
    %1173 = vmatpush2.msra.mxu0 0.0
    %1174 = vmatprep.subr.mxu0 0.0
    %1175 = vmatpush2.msra.mxu0 0.0
    %1176 = vmatprep.subr.mxu0 0.0
    %1177 = vmatpush2.msra.mxu0 0.0
    %1178 = vmatprep.subr.mxu0 0.0
    %1179 = vmatpush2.msra.mxu0 0.0
    %1180 = vmatprep.subr.mxu0 0.0
    %1181 = vmatpush2.msra.mxu0 0.0
    %1182 = vmatprep.subr.mxu0 0.0
    %1183 = vmatpush2.msra.mxu0 0.0
    %1184 = vmatprep.subr.mxu0 0.0
    %1185 = vmatpush2.msra.mxu0 0.0
    %1186 = vmatprep.subr.mxu0 0.0
    %1187 = vmatpush2.msra.mxu0 0.0
    %1188 = vmatprep.subr.mxu0 0.0
    %1189 = vmatpush2.msra.mxu0 0.0
    %1190 = vmatprep.subr.mxu0 0.0
    %1191 = vmatpush2.msra.mxu0 0.0
    %1192 = vmatprep.subr.mxu0 0.0
    %1193 = vmatpush2.msra.mxu0 0.0
    %1194 = vmatprep.subr.mxu0 0.0
    %1195 = vmatpush2.msra.mxu0 0.0
    %1196 = vmatprep.subr.mxu0 0.0
    %1197 = vmatpush2.msra.mxu0 0.0
    %1198 = vmatprep.subr.mxu0 0.0
    %1199 = vmatpush2.msra.mxu0 0.0
    %1200 = vmatprep.subr.mxu0 0.0
    %1201 = vmatpush2.msra.mxu0 0.0
    %1202 = vmatprep.subr.mxu0 0.0
    %1203 = vmatpush2.msra.mxu0 0.0
    %1204 = vmatprep.mubr.f32.mxu0 0.0
    %1205 = vmatmul.mubr.f32.gmra.mxu0 %v1063
    %v1206 = vpop.f32.mrf.mxu0
    %v1207 = vadd.f32 0.0, %v1206
    %v1208 = vpop.f32.mrf.mxu0
    %1209 = vdwg.mxu0
    %v1210 = vadd.f32 %v1066, %v1136
    %v1211 = vxor.u32 %v1210, 2147483648
    %v1212 = vmul.f32 %v1211, 1.442695
    %v1213 = vpow.pop %v1212
    %v1214 = vadd.f32 %v1213, 1.0
    %v1215 = vrcp.pop %v1214
    %v1216 = vmul.f32 1.0, %v1215
    %v1217 = vadd.f32 %v1067, %v1138
    %v1218 = vxor.u32 %v1217, 2147483648
    %v1219 = vmul.f32 %v1218, 1.442695
    %v1220 = vpow.pop %v1219
    %v1221 = vadd.f32 %v1220, 1.0
    %v1222 = vrcp.pop %v1221
    %v1223 = vmul.f32 1.0, %v1222
    %v1224 = vadd.f32 %v1207, %v686
    %v1225 = vmul.f32 %v1216, %v1224
    %v1226 = vadd.f32 %v1068, %v1225
    %v1227 = vtanh.pop %v1226
    %v1228 = vsub.f32 1.0, %v1223
    %v1229 = vmul.f32 %v1228, %v1227
    %v1230 = vmul.f32 %v1223, %v1063
    %v1231 = vadd.f32 %v1229, %v1230
    %v1232 = vstv %s1064
    %vm1233 = vcmp.lt.s32.totalorder %v1232, %v473
    %v1234 = vsel %vm1233, 1, 0
    %1235 = vset.pattern.permute.xlu0 0
    %1236 = vperm.xlu0 %1235, %v1234
    %v1237 = vpop.permute.xlu0 %1236
    %vm1238 = vcmp.eq.s32.totalorder %v1237, 1
    %v1239 = vsel %vm1238, %v1231, 0.0
    %s1240 = scalar_lea.vmem %s7, 24
    %1241 = vst [vmem:[%s1240] sm:$0xff] %v1239
    %v1242 = vsel %vm1238, %v1231, %v1063
    %s1243 = sadd.s32 %s27, 4
    %s1244 = scalar_lea.vmem [#allocation3], 96
    %v1245 = vld [vmem:[%s1244] sm:$0xff]
    %v1246 = vld [vmem:[%s1244 + $0x8] sm:$0xff]
    %v1247 = vld [vmem:[%s1244 + $0x10] sm:$0xff]
    %1248 = vmatprep.subr.mxu0 %v520
    %1249 = vmatpush1.msra.mxu0 %v519
    %1250 = vmatprep.subr.mxu0 %v517
    %1251 = vmatpush1.msra.mxu0 %v516
    %1252 = vmatprep.subr.mxu0 %v514
    %1253 = vmatpush1.msra.mxu0 %v513
    %1254 = vmatprep.subr.mxu0 %v511
    %1255 = vmatpush1.msra.mxu0 %v510
    %1256 = vmatprep.subr.mxu0 %v508
    %1257 = vmatpush1.msra.mxu0 %v507
    %1258 = vmatprep.subr.mxu0 %v505
    %1259 = vmatpush1.msra.mxu0 %v504
    %1260 = vmatprep.subr.mxu0 %v502
    %1261 = vmatpush1.msra.mxu0 %v501
    %1262 = vmatprep.subr.mxu0 %v499
    %1263 = vmatpush1.msra.mxu0 %v498
    %1264 = vmatprep.subr.mxu0 %v496
    %1265 = vmatpush1.msra.mxu0 %v495
    %1266 = vmatprep.subr.mxu0 %v493
    %1267 = vmatpush1.msra.mxu0 %v492
    %1268 = vmatprep.subr.mxu0 %v490
    %1269 = vmatpush1.msra.mxu0 %v489
    %1270 = vmatprep.subr.mxu0 %v487
    %1271 = vmatpush1.msra.mxu0 %v486
    %1272 = vmatprep.subr.mxu0 %v484
    %1273 = vmatpush1.msra.mxu0 %v483
    %1274 = vmatprep.subr.mxu0 %v481
    %1275 = vmatpush1.msra.mxu0 %v480
    %1276 = vmatprep.subr.mxu0 %v478
    %1277 = vmatpush1.msra.mxu0 %v477
    %1278 = vmatprep.subr.mxu0 %v475
    %1279 = vmatpush1.msra.mxu0 %v474
    %1280 = vmatprep.subr.mxu0 0.0
    %1281 = vmatpush2.msra.mxu0 0.0
    %1282 = vmatprep.subr.mxu0 0.0
    %1283 = vmatpush2.msra.mxu0 0.0
    %1284 = vmatprep.subr.mxu0 0.0
    %1285 = vmatpush2.msra.mxu0 0.0
    %1286 = vmatprep.subr.mxu0 0.0
    %1287 = vmatpush2.msra.mxu0 0.0
    %1288 = vmatprep.subr.mxu0 0.0
    %1289 = vmatpush2.msra.mxu0 0.0
    %1290 = vmatprep.subr.mxu0 0.0
    %1291 = vmatpush2.msra.mxu0 0.0
    %1292 = vmatprep.subr.mxu0 0.0
    %1293 = vmatpush2.msra.mxu0 0.0
    %1294 = vmatprep.subr.mxu0 0.0
    %1295 = vmatpush2.msra.mxu0 0.0
    %1296 = vmatprep.subr.mxu0 0.0
    %1297 = vmatpush2.msra.mxu0 0.0
    %1298 = vmatprep.subr.mxu0 0.0
    %1299 = vmatpush2.msra.mxu0 0.0
    %1300 = vmatprep.subr.mxu0 0.0
    %1301 = vmatpush2.msra.mxu0 0.0
    %1302 = vmatprep.subr.mxu0 0.0
    %1303 = vmatpush2.msra.mxu0 0.0
    %1304 = vmatprep.subr.mxu0 0.0
    %1305 = vmatpush2.msra.mxu0 0.0
    %1306 = vmatprep.subr.mxu0 0.0
    %1307 = vmatpush2.msra.mxu0 0.0
    %1308 = vmatprep.subr.mxu0 0.0
    %1309 = vmatpush2.msra.mxu0 0.0
    %1310 = vmatprep.subr.mxu0 0.0
    %1311 = vmatpush2.msra.mxu0 0.0
    %1312 = vmatprep.mubr.f32.mxu0 0.0
    %1313 = vmatmul.mubr.f32.gmra.mxu0 %v1242
    %v1314 = vpop.f32.mrf.mxu0
    %v1315 = vadd.f32 0.0, %v1314
    %v1316 = vpop.f32.mrf.mxu0
    %v1317 = vadd.f32 0.0, %v1316
    %1318 = vdwg.mxu0
    %1319 = vmatprep.subr.mxu0 0.0
    %1320 = vmatpush1.msra.mxu0 %v521
    %1321 = vmatprep.subr.mxu0 0.0
    %1322 = vmatpush1.msra.mxu0 %v518
    %1323 = vmatprep.subr.mxu0 0.0
    %1324 = vmatpush1.msra.mxu0 %v515
    %1325 = vmatprep.subr.mxu0 0.0
    %1326 = vmatpush1.msra.mxu0 %v512
    %1327 = vmatprep.subr.mxu0 0.0
    %1328 = vmatpush1.msra.mxu0 %v509
    %1329 = vmatprep.subr.mxu0 0.0
    %1330 = vmatpush1.msra.mxu0 %v506
    %1331 = vmatprep.subr.mxu0 0.0
    %1332 = vmatpush1.msra.mxu0 %v503
    %1333 = vmatprep.subr.mxu0 0.0
    %1334 = vmatpush1.msra.mxu0 %v500
    %1335 = vmatprep.subr.mxu0 0.0
    %1336 = vmatpush1.msra.mxu0 %v497
    %1337 = vmatprep.subr.mxu0 0.0
    %1338 = vmatpush1.msra.mxu0 %v494
    %1339 = vmatprep.subr.mxu0 0.0
    %1340 = vmatpush1.msra.mxu0 %v491
    %1341 = vmatprep.subr.mxu0 0.0
    %1342 = vmatpush1.msra.mxu0 %v488
    %1343 = vmatprep.subr.mxu0 0.0
    %1344 = vmatpush1.msra.mxu0 %v485
    %1345 = vmatprep.subr.mxu0 0.0
    %1346 = vmatpush1.msra.mxu0 %v482
    %1347 = vmatprep.subr.mxu0 0.0
    %1348 = vmatpush1.msra.mxu0 %v479
    %1349 = vmatprep.subr.mxu0 0.0
    %1350 = vmatpush1.msra.mxu0 %v476
    %1351 = vmatprep.subr.mxu0 0.0
    %1352 = vmatpush2.msra.mxu0 0.0
    %1353 = vmatprep.subr.mxu0 0.0
    %1354 = vmatpush2.msra.mxu0 0.0
    %1355 = vmatprep.subr.mxu0 0.0
    %1356 = vmatpush2.msra.mxu0 0.0
    %1357 = vmatprep.subr.mxu0 0.0
    %1358 = vmatpush2.msra.mxu0 0.0
    %1359 = vmatprep.subr.mxu0 0.0
    %1360 = vmatpush2.msra.mxu0 0.0
    %1361 = vmatprep.subr.mxu0 0.0
    %1362 = vmatpush2.msra.mxu0 0.0
    %1363 = vmatprep.subr.mxu0 0.0
    %1364 = vmatpush2.msra.mxu0 0.0
    %1365 = vmatprep.subr.mxu0 0.0
    %1366 = vmatpush2.msra.mxu0 0.0
    %1367 = vmatprep.subr.mxu0 0.0
    %1368 = vmatpush2.msra.mxu0 0.0
    %1369 = vmatprep.subr.mxu0 0.0
    %1370 = vmatpush2.msra.mxu0 0.0
    %1371 = vmatprep.subr.mxu0 0.0
    %1372 = vmatpush2.msra.mxu0 0.0
    %1373 = vmatprep.subr.mxu0 0.0
    %1374 = vmatpush2.msra.mxu0 0.0
    %1375 = vmatprep.subr.mxu0 0.0
    %1376 = vmatpush2.msra.mxu0 0.0
    %1377 = vmatprep.subr.mxu0 0.0
    %1378 = vmatpush2.msra.mxu0 0.0
    %1379 = vmatprep.subr.mxu0 0.0
    %1380 = vmatpush2.msra.mxu0 0.0
    %1381 = vmatprep.subr.mxu0 0.0
    %1382 = vmatpush2.msra.mxu0 0.0
    %1383 = vmatprep.mubr.f32.mxu0 0.0
    %1384 = vmatmul.mubr.f32.gmra.mxu0 %v1242
    %v1385 = vpop.f32.mrf.mxu0
    %v1386 = vadd.f32 0.0, %v1385
    %v1387 = vpop.f32.mrf.mxu0
    %1388 = vdwg.mxu0
    %v1389 = vadd.f32 %v1245, %v1315
    %v1390 = vxor.u32 %v1389, 2147483648
    %v1391 = vmul.f32 %v1390, 1.442695
    %v1392 = vpow.pop %v1391
    %v1393 = vadd.f32 %v1392, 1.0
    %v1394 = vrcp.pop %v1393
    %v1395 = vmul.f32 1.0, %v1394
    %v1396 = vadd.f32 %v1246, %v1317
    %v1397 = vxor.u32 %v1396, 2147483648
    %v1398 = vmul.f32 %v1397, 1.442695
    %v1399 = vpow.pop %v1398
    %v1400 = vadd.f32 %v1399, 1.0
    %v1401 = vrcp.pop %v1400
    %v1402 = vmul.f32 1.0, %v1401
    %v1403 = vadd.f32 %v1386, %v686
    %v1404 = vmul.f32 %v1395, %v1403
    %v1405 = vadd.f32 %v1247, %v1404
    %v1406 = vtanh.pop %v1405
    %v1407 = vsub.f32 1.0, %v1402
    %v1408 = vmul.f32 %v1407, %v1406
    %v1409 = vmul.f32 %v1402, %v1242
    %v1410 = vadd.f32 %v1408, %v1409
    %v1411 = vstv %s1243
    %vm1412 = vcmp.lt.s32.totalorder %v1411, %v473
    %v1413 = vsel %vm1412, 1, 0
    %1414 = vset.pattern.permute.xlu0 0
    %1415 = vperm.xlu0 %1414, %v1413
    %v1416 = vpop.permute.xlu0 %1415
    %vm1417 = vcmp.eq.s32.totalorder %v1416, 1
    %v1418 = vsel %vm1417, %v1410, 0.0
    %s1419 = scalar_lea.vmem %s7, 32
    %1420 = vst [vmem:[%s1419] sm:$0xff] %v1418
    %v1421 = vsel %vm1417, %v1410, %v1242
    %s1422 = sadd.s32 %s27, 5
    %s1423 = scalar_lea.vmem [#allocation3], 120
    %v1424 = vld [vmem:[%s1423] sm:$0xff]
    %v1425 = vld [vmem:[%s1423 + $0x8] sm:$0xff]
    %v1426 = vld [vmem:[%s1423 + $0x10] sm:$0xff]
    %1427 = vmatprep.subr.mxu0 %v520
    %1428 = vmatpush1.msra.mxu0 %v519
    %1429 = vmatprep.subr.mxu0 %v517
    %1430 = vmatpush1.msra.mxu0 %v516
    %1431 = vmatprep.subr.mxu0 %v514
    %1432 = vmatpush1.msra.mxu0 %v513
    %1433 = vmatprep.subr.mxu0 %v511
    %1434 = vmatpush1.msra.mxu0 %v510
    %1435 = vmatprep.subr.mxu0 %v508
    %1436 = vmatpush1.msra.mxu0 %v507
    %1437 = vmatprep.subr.mxu0 %v505
    %1438 = vmatpush1.msra.mxu0 %v504
    %1439 = vmatprep.subr.mxu0 %v502
    %1440 = vmatpush1.msra.mxu0 %v501
    %1441 = vmatprep.subr.mxu0 %v499
    %1442 = vmatpush1.msra.mxu0 %v498
    %1443 = vmatprep.subr.mxu0 %v496
    %1444 = vmatpush1.msra.mxu0 %v495
    %1445 = vmatprep.subr.mxu0 %v493
    %1446 = vmatpush1.msra.mxu0 %v492
    %1447 = vmatprep.subr.mxu0 %v490
    %1448 = vmatpush1.msra.mxu0 %v489
    %1449 = vmatprep.subr.mxu0 %v487
    %1450 = vmatpush1.msra.mxu0 %v486
    %1451 = vmatprep.subr.mxu0 %v484
    %1452 = vmatpush1.msra.mxu0 %v483
    %1453 = vmatprep.subr.mxu0 %v481
    %1454 = vmatpush1.msra.mxu0 %v480
    %1455 = vmatprep.subr.mxu0 %v478
    %1456 = vmatpush1.msra.mxu0 %v477
    %1457 = vmatprep.subr.mxu0 %v475
    %1458 = vmatpush1.msra.mxu0 %v474
    %1459 = vmatprep.subr.mxu0 0.0
    %1460 = vmatpush2.msra.mxu0 0.0
    %1461 = vmatprep.subr.mxu0 0.0
    %1462 = vmatpush2.msra.mxu0 0.0
    %1463 = vmatprep.subr.mxu0 0.0
    %1464 = vmatpush2.msra.mxu0 0.0
    %1465 = vmatprep.subr.mxu0 0.0
    %1466 = vmatpush2.msra.mxu0 0.0
    %1467 = vmatprep.subr.mxu0 0.0
    %1468 = vmatpush2.msra.mxu0 0.0
    %1469 = vmatprep.subr.mxu0 0.0
    %1470 = vmatpush2.msra.mxu0 0.0
    %1471 = vmatprep.subr.mxu0 0.0
    %1472 = vmatpush2.msra.mxu0 0.0
    %1473 = vmatprep.subr.mxu0 0.0
    %1474 = vmatpush2.msra.mxu0 0.0
    %1475 = vmatprep.subr.mxu0 0.0
    %1476 = vmatpush2.msra.mxu0 0.0
    %1477 = vmatprep.subr.mxu0 0.0
    %1478 = vmatpush2.msra.mxu0 0.0
    %1479 = vmatprep.subr.mxu0 0.0
    %1480 = vmatpush2.msra.mxu0 0.0
    %1481 = vmatprep.subr.mxu0 0.0
    %1482 = vmatpush2.msra.mxu0 0.0
    %1483 = vmatprep.subr.mxu0 0.0
    %1484 = vmatpush2.msra.mxu0 0.0
    %1485 = vmatprep.subr.mxu0 0.0
    %1486 = vmatpush2.msra.mxu0 0.0
    %1487 = vmatprep.subr.mxu0 0.0
    %1488 = vmatpush2.msra.mxu0 0.0
    %1489 = vmatprep.subr.mxu0 0.0
    %1490 = vmatpush2.msra.mxu0 0.0
    %1491 = vmatprep.mubr.f32.mxu0 0.0
    %1492 = vmatmul.mubr.f32.gmra.mxu0 %v1421
    %v1493 = vpop.f32.mrf.mxu0
    %v1494 = vadd.f32 0.0, %v1493
    %v1495 = vpop.f32.mrf.mxu0
    %v1496 = vadd.f32 0.0, %v1495
    %1497 = vdwg.mxu0
    %1498 = vmatprep.subr.mxu0 0.0
    %1499 = vmatpush1.msra.mxu0 %v521
    %1500 = vmatprep.subr.mxu0 0.0
    %1501 = vmatpush1.msra.mxu0 %v518
    %1502 = vmatprep.subr.mxu0 0.0
    %1503 = vmatpush1.msra.mxu0 %v515
    %1504 = vmatprep.subr.mxu0 0.0
    %1505 = vmatpush1.msra.mxu0 %v512
    %1506 = vmatprep.subr.mxu0 0.0
    %1507 = vmatpush1.msra.mxu0 %v509
    %1508 = vmatprep.subr.mxu0 0.0
    %1509 = vmatpush1.msra.mxu0 %v506
    %1510 = vmatprep.subr.mxu0 0.0
    %1511 = vmatpush1.msra.mxu0 %v503
    %1512 = vmatprep.subr.mxu0 0.0
    %1513 = vmatpush1.msra.mxu0 %v500
    %1514 = vmatprep.subr.mxu0 0.0
    %1515 = vmatpush1.msra.mxu0 %v497
    %1516 = vmatprep.subr.mxu0 0.0
    %1517 = vmatpush1.msra.mxu0 %v494
    %1518 = vmatprep.subr.mxu0 0.0
    %1519 = vmatpush1.msra.mxu0 %v491
    %1520 = vmatprep.subr.mxu0 0.0
    %1521 = vmatpush1.msra.mxu0 %v488
    %1522 = vmatprep.subr.mxu0 0.0
    %1523 = vmatpush1.msra.mxu0 %v485
    %1524 = vmatprep.subr.mxu0 0.0
    %1525 = vmatpush1.msra.mxu0 %v482
    %1526 = vmatprep.subr.mxu0 0.0
    %1527 = vmatpush1.msra.mxu0 %v479
    %1528 = vmatprep.subr.mxu0 0.0
    %1529 = vmatpush1.msra.mxu0 %v476
    %1530 = vmatprep.subr.mxu0 0.0
    %1531 = vmatpush2.msra.mxu0 0.0
    %1532 = vmatprep.subr.mxu0 0.0
    %1533 = vmatpush2.msra.mxu0 0.0
    %1534 = vmatprep.subr.mxu0 0.0
    %1535 = vmatpush2.msra.mxu0 0.0
    %1536 = vmatprep.subr.mxu0 0.0
    %1537 = vmatpush2.msra.mxu0 0.0
    %1538 = vmatprep.subr.mxu0 0.0
    %1539 = vmatpush2.msra.mxu0 0.0
    %1540 = vmatprep.subr.mxu0 0.0
    %1541 = vmatpush2.msra.mxu0 0.0
    %1542 = vmatprep.subr.mxu0 0.0
    %1543 = vmatpush2.msra.mxu0 0.0
    %1544 = vmatprep.subr.mxu0 0.0
    %1545 = vmatpush2.msra.mxu0 0.0
    %1546 = vmatprep.subr.mxu0 0.0
    %1547 = vmatpush2.msra.mxu0 0.0
    %1548 = vmatprep.subr.mxu0 0.0
    %1549 = vmatpush2.msra.mxu0 0.0
    %1550 = vmatprep.subr.mxu0 0.0
    %1551 = vmatpush2.msra.mxu0 0.0
    %1552 = vmatprep.subr.mxu0 0.0
    %1553 = vmatpush2.msra.mxu0 0.0
    %1554 = vmatprep.subr.mxu0 0.0
    %1555 = vmatpush2.msra.mxu0 0.0
    %1556 = vmatprep.subr.mxu0 0.0
    %1557 = vmatpush2.msra.mxu0 0.0
    %1558 = vmatprep.subr.mxu0 0.0
    %1559 = vmatpush2.msra.mxu0 0.0
    %1560 = vmatprep.subr.mxu0 0.0
    %1561 = vmatpush2.msra.mxu0 0.0
    %1562 = vmatprep.mubr.f32.mxu0 0.0
    %1563 = vmatmul.mubr.f32.gmra.mxu0 %v1421
    %v1564 = vpop.f32.mrf.mxu0
    %v1565 = vadd.f32 0.0, %v1564
    %v1566 = vpop.f32.mrf.mxu0
    %1567 = vdwg.mxu0
    %v1568 = vadd.f32 %v1424, %v1494
    %v1569 = vxor.u32 %v1568, 2147483648
    %v1570 = vmul.f32 %v1569, 1.442695
    %v1571 = vpow.pop %v1570
    %v1572 = vadd.f32 %v1571, 1.0
    %v1573 = vrcp.pop %v1572
    %v1574 = vmul.f32 1.0, %v1573
    %v1575 = vadd.f32 %v1425, %v1496
    %v1576 = vxor.u32 %v1575, 2147483648
    %v1577 = vmul.f32 %v1576, 1.442695
    %v1578 = vpow.pop %v1577
    %v1579 = vadd.f32 %v1578, 1.0
    %v1580 = vrcp.pop %v1579
    %v1581 = vmul.f32 1.0, %v1580
    %v1582 = vadd.f32 %v1565, %v686
    %v1583 = vmul.f32 %v1574, %v1582
    %v1584 = vadd.f32 %v1426, %v1583
    %v1585 = vtanh.pop %v1584
    %v1586 = vsub.f32 1.0, %v1581
    %v1587 = vmul.f32 %v1586, %v1585
    %v1588 = vmul.f32 %v1581, %v1421
    %v1589 = vadd.f32 %v1587, %v1588
    %v1590 = vstv %s1422
    %vm1591 = vcmp.lt.s32.totalorder %v1590, %v473
    %v1592 = vsel %vm1591, 1, 0
    %1593 = vset.pattern.permute.xlu0 0
    %1594 = vperm.xlu0 %1593, %v1592
    %v1595 = vpop.permute.xlu0 %1594
    %vm1596 = vcmp.eq.s32.totalorder %v1595, 1
    %v1597 = vsel %vm1596, %v1589, 0.0
    %s1598 = scalar_lea.vmem %s7, 40
    %1599 = vst [vmem:[%s1598] sm:$0xff] %v1597
    %v1600 = vsel %vm1596, %v1589, %v1421
    %s1601 = sadd.s32 %s27, 6
    %s1602 = scalar_lea.vmem [#allocation3], 144
    %v1603 = vld [vmem:[%s1602] sm:$0xff]
    %v1604 = vld [vmem:[%s1602 + $0x8] sm:$0xff]
    %v1605 = vld [vmem:[%s1602 + $0x10] sm:$0xff]
    %1606 = vmatprep.subr.mxu0 %v520
    %1607 = vmatpush1.msra.mxu0 %v519
    %1608 = vmatprep.subr.mxu0 %v517
    %1609 = vmatpush1.msra.mxu0 %v516
    %1610 = vmatprep.subr.mxu0 %v514
    %1611 = vmatpush1.msra.mxu0 %v513
    %1612 = vmatprep.subr.mxu0 %v511
    %1613 = vmatpush1.msra.mxu0 %v510
    %1614 = vmatprep.subr.mxu0 %v508
    %1615 = vmatpush1.msra.mxu0 %v507
    %1616 = vmatprep.subr.mxu0 %v505
    %1617 = vmatpush1.msra.mxu0 %v504
    %1618 = vmatprep.subr.mxu0 %v502
    %1619 = vmatpush1.msra.mxu0 %v501
    %1620 = vmatprep.subr.mxu0 %v499
    %1621 = vmatpush1.msra.mxu0 %v498
    %1622 = vmatprep.subr.mxu0 %v496
    %1623 = vmatpush1.msra.mxu0 %v495
    %1624 = vmatprep.subr.mxu0 %v493
    %1625 = vmatpush1.msra.mxu0 %v492
    %1626 = vmatprep.subr.mxu0 %v490
    %1627 = vmatpush1.msra.mxu0 %v489
    %1628 = vmatprep.subr.mxu0 %v487
    %1629 = vmatpush1.msra.mxu0 %v486
    %1630 = vmatprep.subr.mxu0 %v484
    %1631 = vmatpush1.msra.mxu0 %v483
    %1632 = vmatprep.subr.mxu0 %v481
    %1633 = vmatpush1.msra.mxu0 %v480
    %1634 = vmatprep.subr.mxu0 %v478
    %1635 = vmatpush1.msra.mxu0 %v477
    %1636 = vmatprep.subr.mxu0 %v475
    %1637 = vmatpush1.msra.mxu0 %v474
    %1638 = vmatprep.subr.mxu0 0.0
    %1639 = vmatpush2.msra.mxu0 0.0
    %1640 = vmatprep.subr.mxu0 0.0
    %1641 = vmatpush2.msra.mxu0 0.0
    %1642 = vmatprep.subr.mxu0 0.0
    %1643 = vmatpush2.msra.mxu0 0.0
    %1644 = vmatprep.subr.mxu0 0.0
    %1645 = vmatpush2.msra.mxu0 0.0
    %1646 = vmatprep.subr.mxu0 0.0
    %1647 = vmatpush2.msra.mxu0 0.0
    %1648 = vmatprep.subr.mxu0 0.0
    %1649 = vmatpush2.msra.mxu0 0.0
    %1650 = vmatprep.subr.mxu0 0.0
    %1651 = vmatpush2.msra.mxu0 0.0
    %1652 = vmatprep.subr.mxu0 0.0
    %1653 = vmatpush2.msra.mxu0 0.0
    %1654 = vmatprep.subr.mxu0 0.0
    %1655 = vmatpush2.msra.mxu0 0.0
    %1656 = vmatprep.subr.mxu0 0.0
    %1657 = vmatpush2.msra.mxu0 0.0
    %1658 = vmatprep.subr.mxu0 0.0
    %1659 = vmatpush2.msra.mxu0 0.0
    %1660 = vmatprep.subr.mxu0 0.0
    %1661 = vmatpush2.msra.mxu0 0.0
    %1662 = vmatprep.subr.mxu0 0.0
    %1663 = vmatpush2.msra.mxu0 0.0
    %1664 = vmatprep.subr.mxu0 0.0
    %1665 = vmatpush2.msra.mxu0 0.0
    %1666 = vmatprep.subr.mxu0 0.0
    %1667 = vmatpush2.msra.mxu0 0.0
    %1668 = vmatprep.subr.mxu0 0.0
    %1669 = vmatpush2.msra.mxu0 0.0
    %1670 = vmatprep.mubr.f32.mxu0 0.0
    %1671 = vmatmul.mubr.f32.gmra.mxu0 %v1600
    %v1672 = vpop.f32.mrf.mxu0
    %v1673 = vadd.f32 0.0, %v1672
    %v1674 = vpop.f32.mrf.mxu0
    %v1675 = vadd.f32 0.0, %v1674
    %1676 = vdwg.mxu0
    %1677 = vmatprep.subr.mxu0 0.0
    %1678 = vmatpush1.msra.mxu0 %v521
    %1679 = vmatprep.subr.mxu0 0.0
    %1680 = vmatpush1.msra.mxu0 %v518
    %1681 = vmatprep.subr.mxu0 0.0
    %1682 = vmatpush1.msra.mxu0 %v515
    %1683 = vmatprep.subr.mxu0 0.0
    %1684 = vmatpush1.msra.mxu0 %v512
    %1685 = vmatprep.subr.mxu0 0.0
    %1686 = vmatpush1.msra.mxu0 %v509
    %1687 = vmatprep.subr.mxu0 0.0
    %1688 = vmatpush1.msra.mxu0 %v506
    %1689 = vmatprep.subr.mxu0 0.0
    %1690 = vmatpush1.msra.mxu0 %v503
    %1691 = vmatprep.subr.mxu0 0.0
    %1692 = vmatpush1.msra.mxu0 %v500
    %1693 = vmatprep.subr.mxu0 0.0
    %1694 = vmatpush1.msra.mxu0 %v497
    %1695 = vmatprep.subr.mxu0 0.0
    %1696 = vmatpush1.msra.mxu0 %v494
    %1697 = vmatprep.subr.mxu0 0.0
    %1698 = vmatpush1.msra.mxu0 %v491
    %1699 = vmatprep.subr.mxu0 0.0
    %1700 = vmatpush1.msra.mxu0 %v488
    %1701 = vmatprep.subr.mxu0 0.0
    %1702 = vmatpush1.msra.mxu0 %v485
    %1703 = vmatprep.subr.mxu0 0.0
    %1704 = vmatpush1.msra.mxu0 %v482
    %1705 = vmatprep.subr.mxu0 0.0
    %1706 = vmatpush1.msra.mxu0 %v479
    %1707 = vmatprep.subr.mxu0 0.0
    %1708 = vmatpush1.msra.mxu0 %v476
    %1709 = vmatprep.subr.mxu0 0.0
    %1710 = vmatpush2.msra.mxu0 0.0
    %1711 = vmatprep.subr.mxu0 0.0
    %1712 = vmatpush2.msra.mxu0 0.0
    %1713 = vmatprep.subr.mxu0 0.0
    %1714 = vmatpush2.msra.mxu0 0.0
    %1715 = vmatprep.subr.mxu0 0.0
    %1716 = vmatpush2.msra.mxu0 0.0
    %1717 = vmatprep.subr.mxu0 0.0
    %1718 = vmatpush2.msra.mxu0 0.0
    %1719 = vmatprep.subr.mxu0 0.0
    %1720 = vmatpush2.msra.mxu0 0.0
    %1721 = vmatprep.subr.mxu0 0.0
    %1722 = vmatpush2.msra.mxu0 0.0
    %1723 = vmatprep.subr.mxu0 0.0
    %1724 = vmatpush2.msra.mxu0 0.0
    %1725 = vmatprep.subr.mxu0 0.0
    %1726 = vmatpush2.msra.mxu0 0.0
    %1727 = vmatprep.subr.mxu0 0.0
    %1728 = vmatpush2.msra.mxu0 0.0
    %1729 = vmatprep.subr.mxu0 0.0
    %1730 = vmatpush2.msra.mxu0 0.0
    %1731 = vmatprep.subr.mxu0 0.0
    %1732 = vmatpush2.msra.mxu0 0.0
    %1733 = vmatprep.subr.mxu0 0.0
    %1734 = vmatpush2.msra.mxu0 0.0
    %1735 = vmatprep.subr.mxu0 0.0
    %1736 = vmatpush2.msra.mxu0 0.0
    %1737 = vmatprep.subr.mxu0 0.0
    %1738 = vmatpush2.msra.mxu0 0.0
    %1739 = vmatprep.subr.mxu0 0.0
    %1740 = vmatpush2.msra.mxu0 0.0
    %1741 = vmatprep.mubr.f32.mxu0 0.0
    %1742 = vmatmul.mubr.f32.gmra.mxu0 %v1600
    %v1743 = vpop.f32.mrf.mxu0
    %v1744 = vadd.f32 0.0, %v1743
    %v1745 = vpop.f32.mrf.mxu0
    %1746 = vdwg.mxu0
    %v1747 = vadd.f32 %v1603, %v1673
    %v1748 = vxor.u32 %v1747, 2147483648
    %v1749 = vmul.f32 %v1748, 1.442695
    %v1750 = vpow.pop %v1749
    %v1751 = vadd.f32 %v1750, 1.0
    %v1752 = vrcp.pop %v1751
    %v1753 = vmul.f32 1.0, %v1752
    %v1754 = vadd.f32 %v1604, %v1675
    %v1755 = vxor.u32 %v1754, 2147483648
    %v1756 = vmul.f32 %v1755, 1.442695
    %v1757 = vpow.pop %v1756
    %v1758 = vadd.f32 %v1757, 1.0
    %v1759 = vrcp.pop %v1758
    %v1760 = vmul.f32 1.0, %v1759
    %v1761 = vadd.f32 %v1744, %v686
    %v1762 = vmul.f32 %v1753, %v1761
    %v1763 = vadd.f32 %v1605, %v1762
    %v1764 = vtanh.pop %v1763
    %v1765 = vsub.f32 1.0, %v1760
    %v1766 = vmul.f32 %v1765, %v1764
    %v1767 = vmul.f32 %v1760, %v1600
    %v1768 = vadd.f32 %v1766, %v1767
    %v1769 = vstv %s1601
    %vm1770 = vcmp.lt.s32.totalorder %v1769, %v473
    %v1771 = vsel %vm1770, 1, 0
    %1772 = vset.pattern.permute.xlu0 0
    %1773 = vperm.xlu0 %1772, %v1771
    %v1774 = vpop.permute.xlu0 %1773
    %vm1775 = vcmp.eq.s32.totalorder %v1774, 1
    %v1776 = vsel %vm1775, %v1768, 0.0
    %s1777 = scalar_lea.vmem %s7, 48
    %1778 = vst [vmem:[%s1777] sm:$0xff] %v1776
    %v1779 = vsel %vm1775, %v1768, %v1600
    %s1780 = sadd.s32 %s27, 7
    %s1781 = scalar_lea.vmem [#allocation3], 168
    %v1782 = vld [vmem:[%s1781] sm:$0xff]
    %v1783 = vld [vmem:[%s1781 + $0x8] sm:$0xff]
    %v1784 = vld [vmem:[%s1781 + $0x10] sm:$0xff]
    %1785 = vmatprep.subr.mxu0 %v520
    %1786 = vmatpush1.msra.mxu0 %v519
    %1787 = vmatprep.subr.mxu0 %v517
    %1788 = vmatpush1.msra.mxu0 %v516
    %1789 = vmatprep.subr.mxu0 %v514
    %1790 = vmatpush1.msra.mxu0 %v513
    %1791 = vmatprep.subr.mxu0 %v511
    %1792 = vmatpush1.msra.mxu0 %v510
    %1793 = vmatprep.subr.mxu0 %v508
    %1794 = vmatpush1.msra.mxu0 %v507
    %1795 = vmatprep.subr.mxu0 %v505
    %1796 = vmatpush1.msra.mxu0 %v504
    %1797 = vmatprep.subr.mxu0 %v502
    %1798 = vmatpush1.msra.mxu0 %v501
    %1799 = vmatprep.subr.mxu0 %v499
    %1800 = vmatpush1.msra.mxu0 %v498
    %1801 = vmatprep.subr.mxu0 %v496
    %1802 = vmatpush1.msra.mxu0 %v495
    %1803 = vmatprep.subr.mxu0 %v493
    %1804 = vmatpush1.msra.mxu0 %v492
    %1805 = vmatprep.subr.mxu0 %v490
    %1806 = vmatpush1.msra.mxu0 %v489
    %1807 = vmatprep.subr.mxu0 %v487
    %1808 = vmatpush1.msra.mxu0 %v486
    %1809 = vmatprep.subr.mxu0 %v484
    %1810 = vmatpush1.msra.mxu0 %v483
    %1811 = vmatprep.subr.mxu0 %v481
    %1812 = vmatpush1.msra.mxu0 %v480
    %1813 = vmatprep.subr.mxu0 %v478
    %1814 = vmatpush1.msra.mxu0 %v477
    %1815 = vmatprep.subr.mxu0 %v475
    %1816 = vmatpush1.msra.mxu0 %v474
    %1817 = vmatprep.subr.mxu0 0.0
    %1818 = vmatpush2.msra.mxu0 0.0
    %1819 = vmatprep.subr.mxu0 0.0
    %1820 = vmatpush2.msra.mxu0 0.0
    %1821 = vmatprep.subr.mxu0 0.0
    %1822 = vmatpush2.msra.mxu0 0.0
    %1823 = vmatprep.subr.mxu0 0.0
    %1824 = vmatpush2.msra.mxu0 0.0
    %1825 = vmatprep.subr.mxu0 0.0
    %1826 = vmatpush2.msra.mxu0 0.0
    %1827 = vmatprep.subr.mxu0 0.0
    %1828 = vmatpush2.msra.mxu0 0.0
    %1829 = vmatprep.subr.mxu0 0.0
    %1830 = vmatpush2.msra.mxu0 0.0
    %1831 = vmatprep.subr.mxu0 0.0
    %1832 = vmatpush2.msra.mxu0 0.0
    %1833 = vmatprep.subr.mxu0 0.0
    %1834 = vmatpush2.msra.mxu0 0.0
    %1835 = vmatprep.subr.mxu0 0.0
    %1836 = vmatpush2.msra.mxu0 0.0
    %1837 = vmatprep.subr.mxu0 0.0
    %1838 = vmatpush2.msra.mxu0 0.0
    %1839 = vmatprep.subr.mxu0 0.0
    %1840 = vmatpush2.msra.mxu0 0.0
    %1841 = vmatprep.subr.mxu0 0.0
    %1842 = vmatpush2.msra.mxu0 0.0
    %1843 = vmatprep.subr.mxu0 0.0
    %1844 = vmatpush2.msra.mxu0 0.0
    %1845 = vmatprep.subr.mxu0 0.0
    %1846 = vmatpush2.msra.mxu0 0.0
    %1847 = vmatprep.subr.mxu0 0.0
    %1848 = vmatpush2.msra.mxu0 0.0
    %1849 = vmatprep.mubr.f32.mxu0 0.0
    %1850 = vmatmul.mubr.f32.gmra.mxu0 %v1779
    %v1851 = vpop.f32.mrf.mxu0
    %v1852 = vadd.f32 0.0, %v1851
    %v1853 = vpop.f32.mrf.mxu0
    %v1854 = vadd.f32 0.0, %v1853
    %1855 = vdwg.mxu0
    %1856 = vmatprep.subr.mxu0 0.0
    %1857 = vmatpush1.msra.mxu0 %v521
    %1858 = vmatprep.subr.mxu0 0.0
    %1859 = vmatpush1.msra.mxu0 %v518
    %1860 = vmatprep.subr.mxu0 0.0
    %1861 = vmatpush1.msra.mxu0 %v515
    %1862 = vmatprep.subr.mxu0 0.0
    %1863 = vmatpush1.msra.mxu0 %v512
    %1864 = vmatprep.subr.mxu0 0.0
    %1865 = vmatpush1.msra.mxu0 %v509
    %1866 = vmatprep.subr.mxu0 0.0
    %1867 = vmatpush1.msra.mxu0 %v506
    %1868 = vmatprep.subr.mxu0 0.0
    %1869 = vmatpush1.msra.mxu0 %v503
    %1870 = vmatprep.subr.mxu0 0.0
    %1871 = vmatpush1.msra.mxu0 %v500
    %1872 = vmatprep.subr.mxu0 0.0
    %1873 = vmatpush1.msra.mxu0 %v497
    %1874 = vmatprep.subr.mxu0 0.0
    %1875 = vmatpush1.msra.mxu0 %v494
    %1876 = vmatprep.subr.mxu0 0.0
    %1877 = vmatpush1.msra.mxu0 %v491
    %1878 = vmatprep.subr.mxu0 0.0
    %1879 = vmatpush1.msra.mxu0 %v488
    %1880 = vmatprep.subr.mxu0 0.0
    %1881 = vmatpush1.msra.mxu0 %v485
    %1882 = vmatprep.subr.mxu0 0.0
    %1883 = vmatpush1.msra.mxu0 %v482
    %1884 = vmatprep.subr.mxu0 0.0
    %1885 = vmatpush1.msra.mxu0 %v479
    %1886 = vmatprep.subr.mxu0 0.0
    %1887 = vmatpush1.msra.mxu0 %v476
    %1888 = vmatprep.subr.mxu0 0.0
    %1889 = vmatpush2.msra.mxu0 0.0
    %1890 = vmatprep.subr.mxu0 0.0
    %1891 = vmatpush2.msra.mxu0 0.0
    %1892 = vmatprep.subr.mxu0 0.0
    %1893 = vmatpush2.msra.mxu0 0.0
    %1894 = vmatprep.subr.mxu0 0.0
    %1895 = vmatpush2.msra.mxu0 0.0
    %1896 = vmatprep.subr.mxu0 0.0
    %1897 = vmatpush2.msra.mxu0 0.0
    %1898 = vmatprep.subr.mxu0 0.0
    %1899 = vmatpush2.msra.mxu0 0.0
    %1900 = vmatprep.subr.mxu0 0.0
    %1901 = vmatpush2.msra.mxu0 0.0
    %1902 = vmatprep.subr.mxu0 0.0
    %1903 = vmatpush2.msra.mxu0 0.0
    %1904 = vmatprep.subr.mxu0 0.0
    %1905 = vmatpush2.msra.mxu0 0.0
    %1906 = vmatprep.subr.mxu0 0.0
    %1907 = vmatpush2.msra.mxu0 0.0
    %1908 = vmatprep.subr.mxu0 0.0
    %1909 = vmatpush2.msra.mxu0 0.0
    %1910 = vmatprep.subr.mxu0 0.0
    %1911 = vmatpush2.msra.mxu0 0.0
    %1912 = vmatprep.subr.mxu0 0.0
    %1913 = vmatpush2.msra.mxu0 0.0
    %1914 = vmatprep.subr.mxu0 0.0
    %1915 = vmatpush2.msra.mxu0 0.0
    %1916 = vmatprep.subr.mxu0 0.0
    %1917 = vmatpush2.msra.mxu0 0.0
    %1918 = vmatprep.subr.mxu0 0.0
    %1919 = vmatpush2.msra.mxu0 0.0
    %1920 = vmatprep.mubr.f32.mxu0 0.0
    %1921 = vmatmul.mubr.f32.gmra.mxu0 %v1779
    %v1922 = vpop.f32.mrf.mxu0
    %v1923 = vadd.f32 0.0, %v1922
    %v1924 = vpop.f32.mrf.mxu0
    %1925 = vdwg.mxu0
    %v1926 = vadd.f32 %v1782, %v1852
    %v1927 = vxor.u32 %v1926, 2147483648
    %v1928 = vmul.f32 %v1927, 1.442695
    %v1929 = vpow.pop %v1928
    %v1930 = vadd.f32 %v1929, 1.0
    %v1931 = vrcp.pop %v1930
    %v1932 = vmul.f32 1.0, %v1931
    %v1933 = vadd.f32 %v1783, %v1854
    %v1934 = vxor.u32 %v1933, 2147483648
    %v1935 = vmul.f32 %v1934, 1.442695
    %v1936 = vpow.pop %v1935
    %v1937 = vadd.f32 %v1936, 1.0
    %v1938 = vrcp.pop %v1937
    %v1939 = vmul.f32 1.0, %v1938
    %v1940 = vadd.f32 %v1923, %v686
    %v1941 = vmul.f32 %v1932, %v1940
    %v1942 = vadd.f32 %v1784, %v1941
    %v1943 = vtanh.pop %v1942
    %v1944 = vsub.f32 1.0, %v1939
    %v1945 = vmul.f32 %v1944, %v1943
    %v1946 = vmul.f32 %v1939, %v1779
    %v1947 = vadd.f32 %v1945, %v1946
    %v1948 = vstv %s1780
    %vm1949 = vcmp.lt.s32.totalorder %v1948, %v473
    %v1950 = vsel %vm1949, 1, 0
    %1951 = vset.pattern.permute.xlu0 0
    %1952 = vperm.xlu0 %1951, %v1950
    %v1953 = vpop.permute.xlu0 %1952
    %vm1954 = vcmp.eq.s32.totalorder %v1953, 1
    %v1955 = vsel %vm1954, %v1947, 0.0
    %s1956 = scalar_lea.vmem %s7, 56
    %1957 = vst [vmem:[%s1956] sm:$0xff] %v1955
    %v1958 = vsel %vm1954, %v1947, %v1779
    %s1959 = sadd.s32 %s27, 8
    %s1960 = scalar_lea.vmem [#allocation3], 192
    %v1961 = vld [vmem:[%s1960] sm:$0xff]
    %v1962 = vld [vmem:[%s1960 + $0x8] sm:$0xff]
    %v1963 = vld [vmem:[%s1960 + $0x10] sm:$0xff]
    %1964 = vmatprep.subr.mxu0 %v520
    %1965 = vmatpush1.msra.mxu0 %v519
    %1966 = vmatprep.subr.mxu0 %v517
    %1967 = vmatpush1.msra.mxu0 %v516
    %1968 = vmatprep.subr.mxu0 %v514
    %1969 = vmatpush1.msra.mxu0 %v513
    %1970 = vmatprep.subr.mxu0 %v511
    %1971 = vmatpush1.msra.mxu0 %v510
    %1972 = vmatprep.subr.mxu0 %v508
    %1973 = vmatpush1.msra.mxu0 %v507
    %1974 = vmatprep.subr.mxu0 %v505
    %1975 = vmatpush1.msra.mxu0 %v504
    %1976 = vmatprep.subr.mxu0 %v502
    %1977 = vmatpush1.msra.mxu0 %v501
    %1978 = vmatprep.subr.mxu0 %v499
    %1979 = vmatpush1.msra.mxu0 %v498
    %1980 = vmatprep.subr.mxu0 %v496
    %1981 = vmatpush1.msra.mxu0 %v495
    %1982 = vmatprep.subr.mxu0 %v493
    %1983 = vmatpush1.msra.mxu0 %v492
    %1984 = vmatprep.subr.mxu0 %v490
    %1985 = vmatpush1.msra.mxu0 %v489
    %1986 = vmatprep.subr.mxu0 %v487
    %1987 = vmatpush1.msra.mxu0 %v486
    %1988 = vmatprep.subr.mxu0 %v484
    %1989 = vmatpush1.msra.mxu0 %v483
    %1990 = vmatprep.subr.mxu0 %v481
    %1991 = vmatpush1.msra.mxu0 %v480
    %1992 = vmatprep.subr.mxu0 %v478
    %1993 = vmatpush1.msra.mxu0 %v477
    %1994 = vmatprep.subr.mxu0 %v475
    %1995 = vmatpush1.msra.mxu0 %v474
    %1996 = vmatprep.subr.mxu0 0.0
    %1997 = vmatpush2.msra.mxu0 0.0
    %1998 = vmatprep.subr.mxu0 0.0
    %1999 = vmatpush2.msra.mxu0 0.0
    %2000 = vmatprep.subr.mxu0 0.0
    %2001 = vmatpush2.msra.mxu0 0.0
    %2002 = vmatprep.subr.mxu0 0.0
    %2003 = vmatpush2.msra.mxu0 0.0
    %2004 = vmatprep.subr.mxu0 0.0
    %2005 = vmatpush2.msra.mxu0 0.0
    %2006 = vmatprep.subr.mxu0 0.0
    %2007 = vmatpush2.msra.mxu0 0.0
    %2008 = vmatprep.subr.mxu0 0.0
    %2009 = vmatpush2.msra.mxu0 0.0
    %2010 = vmatprep.subr.mxu0 0.0
    %2011 = vmatpush2.msra.mxu0 0.0
    %2012 = vmatprep.subr.mxu0 0.0
    %2013 = vmatpush2.msra.mxu0 0.0
    %2014 = vmatprep.subr.mxu0 0.0
    %2015 = vmatpush2.msra.mxu0 0.0
    %2016 = vmatprep.subr.mxu0 0.0
    %2017 = vmatpush2.msra.mxu0 0.0
    %2018 = vmatprep.subr.mxu0 0.0
    %2019 = vmatpush2.msra.mxu0 0.0
    %2020 = vmatprep.subr.mxu0 0.0
    %2021 = vmatpush2.msra.mxu0 0.0
    %2022 = vmatprep.subr.mxu0 0.0
    %2023 = vmatpush2.msra.mxu0 0.0
    %2024 = vmatprep.subr.mxu0 0.0
    %2025 = vmatpush2.msra.mxu0 0.0
    %2026 = vmatprep.subr.mxu0 0.0
    %2027 = vmatpush2.msra.mxu0 0.0
    %2028 = vmatprep.mubr.f32.mxu0 0.0
    %2029 = vmatmul.mubr.f32.gmra.mxu0 %v1958
    %v2030 = vpop.f32.mrf.mxu0
    %v2031 = vadd.f32 0.0, %v2030
    %v2032 = vpop.f32.mrf.mxu0
    %v2033 = vadd.f32 0.0, %v2032
    %2034 = vdwg.mxu0
    %2035 = vmatprep.subr.mxu0 0.0
    %2036 = vmatpush1.msra.mxu0 %v521
    %2037 = vmatprep.subr.mxu0 0.0
    %2038 = vmatpush1.msra.mxu0 %v518
    %2039 = vmatprep.subr.mxu0 0.0
    %2040 = vmatpush1.msra.mxu0 %v515
    %2041 = vmatprep.subr.mxu0 0.0
    %2042 = vmatpush1.msra.mxu0 %v512
    %2043 = vmatprep.subr.mxu0 0.0
    %2044 = vmatpush1.msra.mxu0 %v509
    %2045 = vmatprep.subr.mxu0 0.0
    %2046 = vmatpush1.msra.mxu0 %v506
    %2047 = vmatprep.subr.mxu0 0.0
    %2048 = vmatpush1.msra.mxu0 %v503
    %2049 = vmatprep.subr.mxu0 0.0
    %2050 = vmatpush1.msra.mxu0 %v500
    %2051 = vmatprep.subr.mxu0 0.0
    %2052 = vmatpush1.msra.mxu0 %v497
    %2053 = vmatprep.subr.mxu0 0.0
    %2054 = vmatpush1.msra.mxu0 %v494
    %2055 = vmatprep.subr.mxu0 0.0
    %2056 = vmatpush1.msra.mxu0 %v491
    %2057 = vmatprep.subr.mxu0 0.0
    %2058 = vmatpush1.msra.mxu0 %v488
    %2059 = vmatprep.subr.mxu0 0.0
    %2060 = vmatpush1.msra.mxu0 %v485
    %2061 = vmatprep.subr.mxu0 0.0
    %2062 = vmatpush1.msra.mxu0 %v482
    %2063 = vmatprep.subr.mxu0 0.0
    %2064 = vmatpush1.msra.mxu0 %v479
    %2065 = vmatprep.subr.mxu0 0.0
    %2066 = vmatpush1.msra.mxu0 %v476
    %2067 = vmatprep.subr.mxu0 0.0
    %2068 = vmatpush2.msra.mxu0 0.0
    %2069 = vmatprep.subr.mxu0 0.0
    %2070 = vmatpush2.msra.mxu0 0.0
    %2071 = vmatprep.subr.mxu0 0.0
    %2072 = vmatpush2.msra.mxu0 0.0
    %2073 = vmatprep.subr.mxu0 0.0
    %2074 = vmatpush2.msra.mxu0 0.0
    %2075 = vmatprep.subr.mxu0 0.0
    %2076 = vmatpush2.msra.mxu0 0.0
    %2077 = vmatprep.subr.mxu0 0.0
    %2078 = vmatpush2.msra.mxu0 0.0
    %2079 = vmatprep.subr.mxu0 0.0
    %2080 = vmatpush2.msra.mxu0 0.0
    %2081 = vmatprep.subr.mxu0 0.0
    %2082 = vmatpush2.msra.mxu0 0.0
    %2083 = vmatprep.subr.mxu0 0.0
    %2084 = vmatpush2.msra.mxu0 0.0
    %2085 = vmatprep.subr.mxu0 0.0
    %2086 = vmatpush2.msra.mxu0 0.0
    %2087 = vmatprep.subr.mxu0 0.0
    %2088 = vmatpush2.msra.mxu0 0.0
    %2089 = vmatprep.subr.mxu0 0.0
    %2090 = vmatpush2.msra.mxu0 0.0
    %2091 = vmatprep.subr.mxu0 0.0
    %2092 = vmatpush2.msra.mxu0 0.0
    %2093 = vmatprep.subr.mxu0 0.0
    %2094 = vmatpush2.msra.mxu0 0.0
    %2095 = vmatprep.subr.mxu0 0.0
    %2096 = vmatpush2.msra.mxu0 0.0
    %2097 = vmatprep.subr.mxu0 0.0
    %2098 = vmatpush2.msra.mxu0 0.0
    %2099 = vmatprep.mubr.f32.mxu0 0.0
    %2100 = vmatmul.mubr.f32.gmra.mxu0 %v1958
    %v2101 = vpop.f32.mrf.mxu0
    %v2102 = vadd.f32 0.0, %v2101
    %v2103 = vpop.f32.mrf.mxu0
    %2104 = vdwg.mxu0
    %v2105 = vadd.f32 %v1961, %v2031
    %v2106 = vxor.u32 %v2105, 2147483648
    %v2107 = vmul.f32 %v2106, 1.442695
    %v2108 = vpow.pop %v2107
    %v2109 = vadd.f32 %v2108, 1.0
    %v2110 = vrcp.pop %v2109
    %v2111 = vmul.f32 1.0, %v2110
    %v2112 = vadd.f32 %v1962, %v2033
    %v2113 = vxor.u32 %v2112, 2147483648
    %v2114 = vmul.f32 %v2113, 1.442695
    %v2115 = vpow.pop %v2114
    %v2116 = vadd.f32 %v2115, 1.0
    %v2117 = vrcp.pop %v2116
    %v2118 = vmul.f32 1.0, %v2117
    %v2119 = vadd.f32 %v2102, %v686
    %v2120 = vmul.f32 %v2111, %v2119
    %v2121 = vadd.f32 %v1963, %v2120
    %v2122 = vtanh.pop %v2121
    %v2123 = vsub.f32 1.0, %v2118
    %v2124 = vmul.f32 %v2123, %v2122
    %v2125 = vmul.f32 %v2118, %v1958
    %v2126 = vadd.f32 %v2124, %v2125
    %v2127 = vstv %s1959
    %vm2128 = vcmp.lt.s32.totalorder %v2127, %v473
    %v2129 = vsel %vm2128, 1, 0
    %2130 = vset.pattern.permute.xlu0 0
    %2131 = vperm.xlu0 %2130, %v2129
    %v2132 = vpop.permute.xlu0 %2131
    %vm2133 = vcmp.eq.s32.totalorder %v2132, 1
    %v2134 = vsel %vm2133, %v2126, 0.0
    %s2135 = scalar_lea.vmem %s7, 64
    %2136 = vst [vmem:[%s2135] sm:$0xff] %v2134
    %v2137 = vsel %vm2133, %v2126, %v1958
    %s2138 = sadd.s32 %s27, 9
    %s2139 = scalar_lea.vmem [#allocation3], 216
    %v2140 = vld [vmem:[%s2139] sm:$0xff]
    %v2141 = vld [vmem:[%s2139 + $0x8] sm:$0xff]
    %v2142 = vld [vmem:[%s2139 + $0x10] sm:$0xff]
    %2143 = vmatprep.subr.mxu0 %v520
    %2144 = vmatpush1.msra.mxu0 %v519
    %2145 = vmatprep.subr.mxu0 %v517
    %2146 = vmatpush1.msra.mxu0 %v516
    %2147 = vmatprep.subr.mxu0 %v514
    %2148 = vmatpush1.msra.mxu0 %v513
    %2149 = vmatprep.subr.mxu0 %v511
    %2150 = vmatpush1.msra.mxu0 %v510
    %2151 = vmatprep.subr.mxu0 %v508
    %2152 = vmatpush1.msra.mxu0 %v507
    %2153 = vmatprep.subr.mxu0 %v505
    %2154 = vmatpush1.msra.mxu0 %v504
    %2155 = vmatprep.subr.mxu0 %v502
    %2156 = vmatpush1.msra.mxu0 %v501
    %2157 = vmatprep.subr.mxu0 %v499
    %2158 = vmatpush1.msra.mxu0 %v498
    %2159 = vmatprep.subr.mxu0 %v496
    %2160 = vmatpush1.msra.mxu0 %v495
    %2161 = vmatprep.subr.mxu0 %v493
    %2162 = vmatpush1.msra.mxu0 %v492
    %2163 = vmatprep.subr.mxu0 %v490
    %2164 = vmatpush1.msra.mxu0 %v489
    %2165 = vmatprep.subr.mxu0 %v487
    %2166 = vmatpush1.msra.mxu0 %v486
    %2167 = vmatprep.subr.mxu0 %v484
    %2168 = vmatpush1.msra.mxu0 %v483
    %2169 = vmatprep.subr.mxu0 %v481
    %2170 = vmatpush1.msra.mxu0 %v480
    %2171 = vmatprep.subr.mxu0 %v478
    %2172 = vmatpush1.msra.mxu0 %v477
    %2173 = vmatprep.subr.mxu0 %v475
    %2174 = vmatpush1.msra.mxu0 %v474
    %2175 = vmatprep.subr.mxu0 0.0
    %2176 = vmatpush2.msra.mxu0 0.0
    %2177 = vmatprep.subr.mxu0 0.0
    %2178 = vmatpush2.msra.mxu0 0.0
    %2179 = vmatprep.subr.mxu0 0.0
    %2180 = vmatpush2.msra.mxu0 0.0
    %2181 = vmatprep.subr.mxu0 0.0
    %2182 = vmatpush2.msra.mxu0 0.0
    %2183 = vmatprep.subr.mxu0 0.0
    %2184 = vmatpush2.msra.mxu0 0.0
    %2185 = vmatprep.subr.mxu0 0.0
    %2186 = vmatpush2.msra.mxu0 0.0
    %2187 = vmatprep.subr.mxu0 0.0
    %2188 = vmatpush2.msra.mxu0 0.0
    %2189 = vmatprep.subr.mxu0 0.0
    %2190 = vmatpush2.msra.mxu0 0.0
    %2191 = vmatprep.subr.mxu0 0.0
    %2192 = vmatpush2.msra.mxu0 0.0
    %2193 = vmatprep.subr.mxu0 0.0
    %2194 = vmatpush2.msra.mxu0 0.0
    %2195 = vmatprep.subr.mxu0 0.0
    %2196 = vmatpush2.msra.mxu0 0.0
    %2197 = vmatprep.subr.mxu0 0.0
    %2198 = vmatpush2.msra.mxu0 0.0
    %2199 = vmatprep.subr.mxu0 0.0
    %2200 = vmatpush2.msra.mxu0 0.0
    %2201 = vmatprep.subr.mxu0 0.0
    %2202 = vmatpush2.msra.mxu0 0.0
    %2203 = vmatprep.subr.mxu0 0.0
    %2204 = vmatpush2.msra.mxu0 0.0
    %2205 = vmatprep.subr.mxu0 0.0
    %2206 = vmatpush2.msra.mxu0 0.0
    %2207 = vmatprep.mubr.f32.mxu0 0.0
    %2208 = vmatmul.mubr.f32.gmra.mxu0 %v2137
    %v2209 = vpop.f32.mrf.mxu0
    %v2210 = vadd.f32 0.0, %v2209
    %v2211 = vpop.f32.mrf.mxu0
    %v2212 = vadd.f32 0.0, %v2211
    %2213 = vdwg.mxu0
    %2214 = vmatprep.subr.mxu0 0.0
    %2215 = vmatpush1.msra.mxu0 %v521
    %2216 = vmatprep.subr.mxu0 0.0
    %2217 = vmatpush1.msra.mxu0 %v518
    %2218 = vmatprep.subr.mxu0 0.0
    %2219 = vmatpush1.msra.mxu0 %v515
    %2220 = vmatprep.subr.mxu0 0.0
    %2221 = vmatpush1.msra.mxu0 %v512
    %2222 = vmatprep.subr.mxu0 0.0
    %2223 = vmatpush1.msra.mxu0 %v509
    %2224 = vmatprep.subr.mxu0 0.0
    %2225 = vmatpush1.msra.mxu0 %v506
    %2226 = vmatprep.subr.mxu0 0.0
    %2227 = vmatpush1.msra.mxu0 %v503
    %2228 = vmatprep.subr.mxu0 0.0
    %2229 = vmatpush1.msra.mxu0 %v500
    %2230 = vmatprep.subr.mxu0 0.0
    %2231 = vmatpush1.msra.mxu0 %v497
    %2232 = vmatprep.subr.mxu0 0.0
    %2233 = vmatpush1.msra.mxu0 %v494
    %2234 = vmatprep.subr.mxu0 0.0
    %2235 = vmatpush1.msra.mxu0 %v491
    %2236 = vmatprep.subr.mxu0 0.0
    %2237 = vmatpush1.msra.mxu0 %v488
    %2238 = vmatprep.subr.mxu0 0.0
    %2239 = vmatpush1.msra.mxu0 %v485
    %2240 = vmatprep.subr.mxu0 0.0
    %2241 = vmatpush1.msra.mxu0 %v482
    %2242 = vmatprep.subr.mxu0 0.0
    %2243 = vmatpush1.msra.mxu0 %v479
    %2244 = vmatprep.subr.mxu0 0.0
    %2245 = vmatpush1.msra.mxu0 %v476
    %2246 = vmatprep.subr.mxu0 0.0
    %2247 = vmatpush2.msra.mxu0 0.0
    %2248 = vmatprep.subr.mxu0 0.0
    %2249 = vmatpush2.msra.mxu0 0.0
    %2250 = vmatprep.subr.mxu0 0.0
    %2251 = vmatpush2.msra.mxu0 0.0
    %2252 = vmatprep.subr.mxu0 0.0
    %2253 = vmatpush2.msra.mxu0 0.0
    %2254 = vmatprep.subr.mxu0 0.0
    %2255 = vmatpush2.msra.mxu0 0.0
    %2256 = vmatprep.subr.mxu0 0.0
    %2257 = vmatpush2.msra.mxu0 0.0
    %2258 = vmatprep.subr.mxu0 0.0
    %2259 = vmatpush2.msra.mxu0 0.0
    %2260 = vmatprep.subr.mxu0 0.0
    %2261 = vmatpush2.msra.mxu0 0.0
    %2262 = vmatprep.subr.mxu0 0.0
    %2263 = vmatpush2.msra.mxu0 0.0
    %2264 = vmatprep.subr.mxu0 0.0
    %2265 = vmatpush2.msra.mxu0 0.0
    %2266 = vmatprep.subr.mxu0 0.0
    %2267 = vmatpush2.msra.mxu0 0.0
    %2268 = vmatprep.subr.mxu0 0.0
    %2269 = vmatpush2.msra.mxu0 0.0
    %2270 = vmatprep.subr.mxu0 0.0
    %2271 = vmatpush2.msra.mxu0 0.0
    %2272 = vmatprep.subr.mxu0 0.0
    %2273 = vmatpush2.msra.mxu0 0.0
    %2274 = vmatprep.subr.mxu0 0.0
    %2275 = vmatpush2.msra.mxu0 0.0
    %2276 = vmatprep.subr.mxu0 0.0
    %2277 = vmatpush2.msra.mxu0 0.0
    %2278 = vmatprep.mubr.f32.mxu0 0.0
    %2279 = vmatmul.mubr.f32.gmra.mxu0 %v2137
    %v2280 = vpop.f32.mrf.mxu0
    %v2281 = vadd.f32 0.0, %v2280
    %v2282 = vpop.f32.mrf.mxu0
    %2283 = vdwg.mxu0
    %v2284 = vadd.f32 %v2140, %v2210
    %v2285 = vxor.u32 %v2284, 2147483648
    %v2286 = vmul.f32 %v2285, 1.442695
    %v2287 = vpow.pop %v2286
    %v2288 = vadd.f32 %v2287, 1.0
    %v2289 = vrcp.pop %v2288
    %v2290 = vmul.f32 1.0, %v2289
    %v2291 = vadd.f32 %v2141, %v2212
    %v2292 = vxor.u32 %v2291, 2147483648
    %v2293 = vmul.f32 %v2292, 1.442695
    %v2294 = vpow.pop %v2293
    %v2295 = vadd.f32 %v2294, 1.0
    %v2296 = vrcp.pop %v2295
    %v2297 = vmul.f32 1.0, %v2296
    %v2298 = vadd.f32 %v2281, %v686
    %v2299 = vmul.f32 %v2290, %v2298
    %v2300 = vadd.f32 %v2142, %v2299
    %v2301 = vtanh.pop %v2300
    %v2302 = vsub.f32 1.0, %v2297
    %v2303 = vmul.f32 %v2302, %v2301
    %v2304 = vmul.f32 %v2297, %v2137
    %v2305 = vadd.f32 %v2303, %v2304
    %v2306 = vstv %s2138
    %vm2307 = vcmp.lt.s32.totalorder %v2306, %v473
    %v2308 = vsel %vm2307, 1, 0
    %2309 = vset.pattern.permute.xlu0 0
    %2310 = vperm.xlu0 %2309, %v2308
    %v2311 = vpop.permute.xlu0 %2310
    %vm2312 = vcmp.eq.s32.totalorder %v2311, 1
    %v2313 = vsel %vm2312, %v2305, 0.0
    %s2314 = scalar_lea.vmem %s7, 72
    %2315 = vst [vmem:[%s2314] sm:$0xff] %v2313
    %v2316 = vsel %vm2312, %v2305, %v2137
    %s2317 = sadd.s32 %s27, 10
    %s2318 = scalar_lea.vmem [#allocation3], 240
    %v2319 = vld [vmem:[%s2318] sm:$0xff]
    %v2320 = vld [vmem:[%s2318 + $0x8] sm:$0xff]
    %v2321 = vld [vmem:[%s2318 + $0x10] sm:$0xff]
    %2322 = vmatprep.subr.mxu0 %v520
    %2323 = vmatpush1.msra.mxu0 %v519
    %2324 = vmatprep.subr.mxu0 %v517
    %2325 = vmatpush1.msra.mxu0 %v516
    %2326 = vmatprep.subr.mxu0 %v514
    %2327 = vmatpush1.msra.mxu0 %v513
    %2328 = vmatprep.subr.mxu0 %v511
    %2329 = vmatpush1.msra.mxu0 %v510
    %2330 = vmatprep.subr.mxu0 %v508
    %2331 = vmatpush1.msra.mxu0 %v507
    %2332 = vmatprep.subr.mxu0 %v505
    %2333 = vmatpush1.msra.mxu0 %v504
    %2334 = vmatprep.subr.mxu0 %v502
    %2335 = vmatpush1.msra.mxu0 %v501
    %2336 = vmatprep.subr.mxu0 %v499
    %2337 = vmatpush1.msra.mxu0 %v498
    %2338 = vmatprep.subr.mxu0 %v496
    %2339 = vmatpush1.msra.mxu0 %v495
    %2340 = vmatprep.subr.mxu0 %v493
    %2341 = vmatpush1.msra.mxu0 %v492
    %2342 = vmatprep.subr.mxu0 %v490
    %2343 = vmatpush1.msra.mxu0 %v489
    %2344 = vmatprep.subr.mxu0 %v487
    %2345 = vmatpush1.msra.mxu0 %v486
    %2346 = vmatprep.subr.mxu0 %v484
    %2347 = vmatpush1.msra.mxu0 %v483
    %2348 = vmatprep.subr.mxu0 %v481
    %2349 = vmatpush1.msra.mxu0 %v480
    %2350 = vmatprep.subr.mxu0 %v478
    %2351 = vmatpush1.msra.mxu0 %v477
    %2352 = vmatprep.subr.mxu0 %v475
    %2353 = vmatpush1.msra.mxu0 %v474
    %2354 = vmatprep.subr.mxu0 0.0
    %2355 = vmatpush2.msra.mxu0 0.0
    %2356 = vmatprep.subr.mxu0 0.0
    %2357 = vmatpush2.msra.mxu0 0.0
    %2358 = vmatprep.subr.mxu0 0.0
    %2359 = vmatpush2.msra.mxu0 0.0
    %2360 = vmatprep.subr.mxu0 0.0
    %2361 = vmatpush2.msra.mxu0 0.0
    %2362 = vmatprep.subr.mxu0 0.0
    %2363 = vmatpush2.msra.mxu0 0.0
    %2364 = vmatprep.subr.mxu0 0.0
    %2365 = vmatpush2.msra.mxu0 0.0
    %2366 = vmatprep.subr.mxu0 0.0
    %2367 = vmatpush2.msra.mxu0 0.0
    %2368 = vmatprep.subr.mxu0 0.0
    %2369 = vmatpush2.msra.mxu0 0.0
    %2370 = vmatprep.subr.mxu0 0.0
    %2371 = vmatpush2.msra.mxu0 0.0
    %2372 = vmatprep.subr.mxu0 0.0
    %2373 = vmatpush2.msra.mxu0 0.0
    %2374 = vmatprep.subr.mxu0 0.0
    %2375 = vmatpush2.msra.mxu0 0.0
    %2376 = vmatprep.subr.mxu0 0.0
    %2377 = vmatpush2.msra.mxu0 0.0
    %2378 = vmatprep.subr.mxu0 0.0
    %2379 = vmatpush2.msra.mxu0 0.0
    %2380 = vmatprep.subr.mxu0 0.0
    %2381 = vmatpush2.msra.mxu0 0.0
    %2382 = vmatprep.subr.mxu0 0.0
    %2383 = vmatpush2.msra.mxu0 0.0
    %2384 = vmatprep.subr.mxu0 0.0
    %2385 = vmatpush2.msra.mxu0 0.0
    %2386 = vmatprep.mubr.f32.mxu0 0.0
    %2387 = vmatmul.mubr.f32.gmra.mxu0 %v2316
    %v2388 = vpop.f32.mrf.mxu0
    %v2389 = vadd.f32 0.0, %v2388
    %v2390 = vpop.f32.mrf.mxu0
    %v2391 = vadd.f32 0.0, %v2390
    %2392 = vdwg.mxu0
    %2393 = vmatprep.subr.mxu0 0.0
    %2394 = vmatpush1.msra.mxu0 %v521
    %2395 = vmatprep.subr.mxu0 0.0
    %2396 = vmatpush1.msra.mxu0 %v518
    %2397 = vmatprep.subr.mxu0 0.0
    %2398 = vmatpush1.msra.mxu0 %v515
    %2399 = vmatprep.subr.mxu0 0.0
    %2400 = vmatpush1.msra.mxu0 %v512
    %2401 = vmatprep.subr.mxu0 0.0
    %2402 = vmatpush1.msra.mxu0 %v509
    %2403 = vmatprep.subr.mxu0 0.0
    %2404 = vmatpush1.msra.mxu0 %v506
    %2405 = vmatprep.subr.mxu0 0.0
    %2406 = vmatpush1.msra.mxu0 %v503
    %2407 = vmatprep.subr.mxu0 0.0
    %2408 = vmatpush1.msra.mxu0 %v500
    %2409 = vmatprep.subr.mxu0 0.0
    %2410 = vmatpush1.msra.mxu0 %v497
    %2411 = vmatprep.subr.mxu0 0.0
    %2412 = vmatpush1.msra.mxu0 %v494
    %2413 = vmatprep.subr.mxu0 0.0
    %2414 = vmatpush1.msra.mxu0 %v491
    %2415 = vmatprep.subr.mxu0 0.0
    %2416 = vmatpush1.msra.mxu0 %v488
    %2417 = vmatprep.subr.mxu0 0.0
    %2418 = vmatpush1.msra.mxu0 %v485
    %2419 = vmatprep.subr.mxu0 0.0
    %2420 = vmatpush1.msra.mxu0 %v482
    %2421 = vmatprep.subr.mxu0 0.0
    %2422 = vmatpush1.msra.mxu0 %v479
    %2423 = vmatprep.subr.mxu0 0.0
    %2424 = vmatpush1.msra.mxu0 %v476
    %2425 = vmatprep.subr.mxu0 0.0
    %2426 = vmatpush2.msra.mxu0 0.0
    %2427 = vmatprep.subr.mxu0 0.0
    %2428 = vmatpush2.msra.mxu0 0.0
    %2429 = vmatprep.subr.mxu0 0.0
    %2430 = vmatpush2.msra.mxu0 0.0
    %2431 = vmatprep.subr.mxu0 0.0
    %2432 = vmatpush2.msra.mxu0 0.0
    %2433 = vmatprep.subr.mxu0 0.0
    %2434 = vmatpush2.msra.mxu0 0.0
    %2435 = vmatprep.subr.mxu0 0.0
    %2436 = vmatpush2.msra.mxu0 0.0
    %2437 = vmatprep.subr.mxu0 0.0
    %2438 = vmatpush2.msra.mxu0 0.0
    %2439 = vmatprep.subr.mxu0 0.0
    %2440 = vmatpush2.msra.mxu0 0.0
    %2441 = vmatprep.subr.mxu0 0.0
    %2442 = vmatpush2.msra.mxu0 0.0
    %2443 = vmatprep.subr.mxu0 0.0
    %2444 = vmatpush2.msra.mxu0 0.0
    %2445 = vmatprep.subr.mxu0 0.0
    %2446 = vmatpush2.msra.mxu0 0.0
    %2447 = vmatprep.subr.mxu0 0.0
    %2448 = vmatpush2.msra.mxu0 0.0
    %2449 = vmatprep.subr.mxu0 0.0
    %2450 = vmatpush2.msra.mxu0 0.0
    %2451 = vmatprep.subr.mxu0 0.0
    %2452 = vmatpush2.msra.mxu0 0.0
    %2453 = vmatprep.subr.mxu0 0.0
    %2454 = vmatpush2.msra.mxu0 0.0
    %2455 = vmatprep.subr.mxu0 0.0
    %2456 = vmatpush2.msra.mxu0 0.0
    %2457 = vmatprep.mubr.f32.mxu0 0.0
    %2458 = vmatmul.mubr.f32.gmra.mxu0 %v2316
    %v2459 = vpop.f32.mrf.mxu0
    %v2460 = vadd.f32 0.0, %v2459
    %v2461 = vpop.f32.mrf.mxu0
    %2462 = vdwg.mxu0
    %v2463 = vadd.f32 %v2319, %v2389
    %v2464 = vxor.u32 %v2463, 2147483648
    %v2465 = vmul.f32 %v2464, 1.442695
    %v2466 = vpow.pop %v2465
    %v2467 = vadd.f32 %v2466, 1.0
    %v2468 = vrcp.pop %v2467
    %v2469 = vmul.f32 1.0, %v2468
    %v2470 = vadd.f32 %v2320, %v2391
    %v2471 = vxor.u32 %v2470, 2147483648
    %v2472 = vmul.f32 %v2471, 1.442695
    %v2473 = vpow.pop %v2472
    %v2474 = vadd.f32 %v2473, 1.0
    %v2475 = vrcp.pop %v2474
    %v2476 = vmul.f32 1.0, %v2475
    %v2477 = vadd.f32 %v2460, %v686
    %v2478 = vmul.f32 %v2469, %v2477
    %v2479 = vadd.f32 %v2321, %v2478
    %v2480 = vtanh.pop %v2479
    %v2481 = vsub.f32 1.0, %v2476
    %v2482 = vmul.f32 %v2481, %v2480
    %v2483 = vmul.f32 %v2476, %v2316
    %v2484 = vadd.f32 %v2482, %v2483
    %v2485 = vstv %s2317
    %vm2486 = vcmp.lt.s32.totalorder %v2485, %v473
    %v2487 = vsel %vm2486, 1, 0
    %2488 = vset.pattern.permute.xlu0 0
    %2489 = vperm.xlu0 %2488, %v2487
    %v2490 = vpop.permute.xlu0 %2489
    %vm2491 = vcmp.eq.s32.totalorder %v2490, 1
    %v2492 = vsel %vm2491, %v2484, 0.0
    %s2493 = scalar_lea.vmem %s7, 80
    %2494 = vst [vmem:[%s2493] sm:$0xff] %v2492
    %v2495 = vsel %vm2491, %v2484, %v2316
    %s2496 = sadd.s32 %s27, 11
    %s2497 = scalar_lea.vmem [#allocation3], 264
    %v2498 = vld [vmem:[%s2497] sm:$0xff]
    %v2499 = vld [vmem:[%s2497 + $0x8] sm:$0xff]
    %v2500 = vld [vmem:[%s2497 + $0x10] sm:$0xff]
    %2501 = vmatprep.subr.mxu0 %v520
    %2502 = vmatpush1.msra.mxu0 %v519
    %2503 = vmatprep.subr.mxu0 %v517
    %2504 = vmatpush1.msra.mxu0 %v516
    %2505 = vmatprep.subr.mxu0 %v514
    %2506 = vmatpush1.msra.mxu0 %v513
    %2507 = vmatprep.subr.mxu0 %v511
    %2508 = vmatpush1.msra.mxu0 %v510
    %2509 = vmatprep.subr.mxu0 %v508
    %2510 = vmatpush1.msra.mxu0 %v507
    %2511 = vmatprep.subr.mxu0 %v505
    %2512 = vmatpush1.msra.mxu0 %v504
    %2513 = vmatprep.subr.mxu0 %v502
    %2514 = vmatpush1.msra.mxu0 %v501
    %2515 = vmatprep.subr.mxu0 %v499
    %2516 = vmatpush1.msra.mxu0 %v498
    %2517 = vmatprep.subr.mxu0 %v496
    %2518 = vmatpush1.msra.mxu0 %v495
    %2519 = vmatprep.subr.mxu0 %v493
    %2520 = vmatpush1.msra.mxu0 %v492
    %2521 = vmatprep.subr.mxu0 %v490
    %2522 = vmatpush1.msra.mxu0 %v489
    %2523 = vmatprep.subr.mxu0 %v487
    %2524 = vmatpush1.msra.mxu0 %v486
    %2525 = vmatprep.subr.mxu0 %v484
    %2526 = vmatpush1.msra.mxu0 %v483
    %2527 = vmatprep.subr.mxu0 %v481
    %2528 = vmatpush1.msra.mxu0 %v480
    %2529 = vmatprep.subr.mxu0 %v478
    %2530 = vmatpush1.msra.mxu0 %v477
    %2531 = vmatprep.subr.mxu0 %v475
    %2532 = vmatpush1.msra.mxu0 %v474
    %2533 = vmatprep.subr.mxu0 0.0
    %2534 = vmatpush2.msra.mxu0 0.0
    %2535 = vmatprep.subr.mxu0 0.0
    %2536 = vmatpush2.msra.mxu0 0.0
    %2537 = vmatprep.subr.mxu0 0.0
    %2538 = vmatpush2.msra.mxu0 0.0
    %2539 = vmatprep.subr.mxu0 0.0
    %2540 = vmatpush2.msra.mxu0 0.0
    %2541 = vmatprep.subr.mxu0 0.0
    %2542 = vmatpush2.msra.mxu0 0.0
    %2543 = vmatprep.subr.mxu0 0.0
    %2544 = vmatpush2.msra.mxu0 0.0
    %2545 = vmatprep.subr.mxu0 0.0
    %2546 = vmatpush2.msra.mxu0 0.0
    %2547 = vmatprep.subr.mxu0 0.0
    %2548 = vmatpush2.msra.mxu0 0.0
    %2549 = vmatprep.subr.mxu0 0.0
    %2550 = vmatpush2.msra.mxu0 0.0
    %2551 = vmatprep.subr.mxu0 0.0
    %2552 = vmatpush2.msra.mxu0 0.0
    %2553 = vmatprep.subr.mxu0 0.0
    %2554 = vmatpush2.msra.mxu0 0.0
    %2555 = vmatprep.subr.mxu0 0.0
    %2556 = vmatpush2.msra.mxu0 0.0
    %2557 = vmatprep.subr.mxu0 0.0
    %2558 = vmatpush2.msra.mxu0 0.0
    %2559 = vmatprep.subr.mxu0 0.0
    %2560 = vmatpush2.msra.mxu0 0.0
    %2561 = vmatprep.subr.mxu0 0.0
    %2562 = vmatpush2.msra.mxu0 0.0
    %2563 = vmatprep.subr.mxu0 0.0
    %2564 = vmatpush2.msra.mxu0 0.0
    %2565 = vmatprep.mubr.f32.mxu0 0.0
    %2566 = vmatmul.mubr.f32.gmra.mxu0 %v2495
    %v2567 = vpop.f32.mrf.mxu0
    %v2568 = vadd.f32 0.0, %v2567
    %v2569 = vpop.f32.mrf.mxu0
    %v2570 = vadd.f32 0.0, %v2569
    %2571 = vdwg.mxu0
    %2572 = vmatprep.subr.mxu0 0.0
    %2573 = vmatpush1.msra.mxu0 %v521
    %2574 = vmatprep.subr.mxu0 0.0
    %2575 = vmatpush1.msra.mxu0 %v518
    %2576 = vmatprep.subr.mxu0 0.0
    %2577 = vmatpush1.msra.mxu0 %v515
    %2578 = vmatprep.subr.mxu0 0.0
    %2579 = vmatpush1.msra.mxu0 %v512
    %2580 = vmatprep.subr.mxu0 0.0
    %2581 = vmatpush1.msra.mxu0 %v509
    %2582 = vmatprep.subr.mxu0 0.0
    %2583 = vmatpush1.msra.mxu0 %v506
    %2584 = vmatprep.subr.mxu0 0.0
    %2585 = vmatpush1.msra.mxu0 %v503
    %2586 = vmatprep.subr.mxu0 0.0
    %2587 = vmatpush1.msra.mxu0 %v500
    %2588 = vmatprep.subr.mxu0 0.0
    %2589 = vmatpush1.msra.mxu0 %v497
    %2590 = vmatprep.subr.mxu0 0.0
    %2591 = vmatpush1.msra.mxu0 %v494
    %2592 = vmatprep.subr.mxu0 0.0
    %2593 = vmatpush1.msra.mxu0 %v491
    %2594 = vmatprep.subr.mxu0 0.0
    %2595 = vmatpush1.msra.mxu0 %v488
    %2596 = vmatprep.subr.mxu0 0.0
    %2597 = vmatpush1.msra.mxu0 %v485
    %2598 = vmatprep.subr.mxu0 0.0
    %2599 = vmatpush1.msra.mxu0 %v482
    %2600 = vmatprep.subr.mxu0 0.0
    %2601 = vmatpush1.msra.mxu0 %v479
    %2602 = vmatprep.subr.mxu0 0.0
    %2603 = vmatpush1.msra.mxu0 %v476
    %2604 = vmatprep.subr.mxu0 0.0
    %2605 = vmatpush2.msra.mxu0 0.0
    %2606 = vmatprep.subr.mxu0 0.0
    %2607 = vmatpush2.msra.mxu0 0.0
    %2608 = vmatprep.subr.mxu0 0.0
    %2609 = vmatpush2.msra.mxu0 0.0
    %2610 = vmatprep.subr.mxu0 0.0
    %2611 = vmatpush2.msra.mxu0 0.0
    %2612 = vmatprep.subr.mxu0 0.0
    %2613 = vmatpush2.msra.mxu0 0.0
    %2614 = vmatprep.subr.mxu0 0.0
    %2615 = vmatpush2.msra.mxu0 0.0
    %2616 = vmatprep.subr.mxu0 0.0
    %2617 = vmatpush2.msra.mxu0 0.0
    %2618 = vmatprep.subr.mxu0 0.0
    %2619 = vmatpush2.msra.mxu0 0.0
    %2620 = vmatprep.subr.mxu0 0.0
    %2621 = vmatpush2.msra.mxu0 0.0
    %2622 = vmatprep.subr.mxu0 0.0
    %2623 = vmatpush2.msra.mxu0 0.0
    %2624 = vmatprep.subr.mxu0 0.0
    %2625 = vmatpush2.msra.mxu0 0.0
    %2626 = vmatprep.subr.mxu0 0.0
    %2627 = vmatpush2.msra.mxu0 0.0
    %2628 = vmatprep.subr.mxu0 0.0
    %2629 = vmatpush2.msra.mxu0 0.0
    %2630 = vmatprep.subr.mxu0 0.0
    %2631 = vmatpush2.msra.mxu0 0.0
    %2632 = vmatprep.subr.mxu0 0.0
    %2633 = vmatpush2.msra.mxu0 0.0
    %2634 = vmatprep.subr.mxu0 0.0
    %2635 = vmatpush2.msra.mxu0 0.0
    %2636 = vmatprep.mubr.f32.mxu0 0.0
    %2637 = vmatmul.mubr.f32.gmra.mxu0 %v2495
    %v2638 = vpop.f32.mrf.mxu0
    %v2639 = vadd.f32 0.0, %v2638
    %v2640 = vpop.f32.mrf.mxu0
    %2641 = vdwg.mxu0
    %v2642 = vadd.f32 %v2498, %v2568
    %v2643 = vxor.u32 %v2642, 2147483648
    %v2644 = vmul.f32 %v2643, 1.442695
    %v2645 = vpow.pop %v2644
    %v2646 = vadd.f32 %v2645, 1.0
    %v2647 = vrcp.pop %v2646
    %v2648 = vmul.f32 1.0, %v2647
    %v2649 = vadd.f32 %v2499, %v2570
    %v2650 = vxor.u32 %v2649, 2147483648
    %v2651 = vmul.f32 %v2650, 1.442695
    %v2652 = vpow.pop %v2651
    %v2653 = vadd.f32 %v2652, 1.0
    %v2654 = vrcp.pop %v2653
    %v2655 = vmul.f32 1.0, %v2654
    %v2656 = vadd.f32 %v2639, %v686
    %v2657 = vmul.f32 %v2648, %v2656
    %v2658 = vadd.f32 %v2500, %v2657
    %v2659 = vtanh.pop %v2658
    %v2660 = vsub.f32 1.0, %v2655
    %v2661 = vmul.f32 %v2660, %v2659
    %v2662 = vmul.f32 %v2655, %v2495
    %v2663 = vadd.f32 %v2661, %v2662
    %v2664 = vstv %s2496
    %vm2665 = vcmp.lt.s32.totalorder %v2664, %v473
    %v2666 = vsel %vm2665, 1, 0
    %2667 = vset.pattern.permute.xlu0 0
    %2668 = vperm.xlu0 %2667, %v2666
    %v2669 = vpop.permute.xlu0 %2668
    %vm2670 = vcmp.eq.s32.totalorder %v2669, 1
    %v2671 = vsel %vm2670, %v2663, 0.0
    %s2672 = scalar_lea.vmem %s7, 88
    %2673 = vst [vmem:[%s2672] sm:$0xff] %v2671
    %v2674 = vsel %vm2670, %v2663, %v2495
    %s2675 = sadd.s32 %s27, 12
    %s2676 = scalar_lea.vmem [#allocation3], 288
    %v2677 = vld [vmem:[%s2676] sm:$0xff]
    %v2678 = vld [vmem:[%s2676 + $0x8] sm:$0xff]
    %v2679 = vld [vmem:[%s2676 + $0x10] sm:$0xff]
    %2680 = vmatprep.subr.mxu0 %v520
    %2681 = vmatpush1.msra.mxu0 %v519
    %2682 = vmatprep.subr.mxu0 %v517
    %2683 = vmatpush1.msra.mxu0 %v516
    %2684 = vmatprep.subr.mxu0 %v514
    %2685 = vmatpush1.msra.mxu0 %v513
    %2686 = vmatprep.subr.mxu0 %v511
    %2687 = vmatpush1.msra.mxu0 %v510
    %2688 = vmatprep.subr.mxu0 %v508
    %2689 = vmatpush1.msra.mxu0 %v507
    %2690 = vmatprep.subr.mxu0 %v505
    %2691 = vmatpush1.msra.mxu0 %v504
    %2692 = vmatprep.subr.mxu0 %v502
    %2693 = vmatpush1.msra.mxu0 %v501
    %2694 = vmatprep.subr.mxu0 %v499
    %2695 = vmatpush1.msra.mxu0 %v498
    %2696 = vmatprep.subr.mxu0 %v496
    %2697 = vmatpush1.msra.mxu0 %v495
    %2698 = vmatprep.subr.mxu0 %v493
    %2699 = vmatpush1.msra.mxu0 %v492
    %2700 = vmatprep.subr.mxu0 %v490
    %2701 = vmatpush1.msra.mxu0 %v489
    %2702 = vmatprep.subr.mxu0 %v487
    %2703 = vmatpush1.msra.mxu0 %v486
    %2704 = vmatprep.subr.mxu0 %v484
    %2705 = vmatpush1.msra.mxu0 %v483
    %2706 = vmatprep.subr.mxu0 %v481
    %2707 = vmatpush1.msra.mxu0 %v480
    %2708 = vmatprep.subr.mxu0 %v478
    %2709 = vmatpush1.msra.mxu0 %v477
    %2710 = vmatprep.subr.mxu0 %v475
    %2711 = vmatpush1.msra.mxu0 %v474
    %2712 = vmatprep.subr.mxu0 0.0
    %2713 = vmatpush2.msra.mxu0 0.0
    %2714 = vmatprep.subr.mxu0 0.0
    %2715 = vmatpush2.msra.mxu0 0.0
    %2716 = vmatprep.subr.mxu0 0.0
    %2717 = vmatpush2.msra.mxu0 0.0
    %2718 = vmatprep.subr.mxu0 0.0
    %2719 = vmatpush2.msra.mxu0 0.0
    %2720 = vmatprep.subr.mxu0 0.0
    %2721 = vmatpush2.msra.mxu0 0.0
    %2722 = vmatprep.subr.mxu0 0.0
    %2723 = vmatpush2.msra.mxu0 0.0
    %2724 = vmatprep.subr.mxu0 0.0
    %2725 = vmatpush2.msra.mxu0 0.0
    %2726 = vmatprep.subr.mxu0 0.0
    %2727 = vmatpush2.msra.mxu0 0.0
    %2728 = vmatprep.subr.mxu0 0.0
    %2729 = vmatpush2.msra.mxu0 0.0
    %2730 = vmatprep.subr.mxu0 0.0
    %2731 = vmatpush2.msra.mxu0 0.0
    %2732 = vmatprep.subr.mxu0 0.0
    %2733 = vmatpush2.msra.mxu0 0.0
    %2734 = vmatprep.subr.mxu0 0.0
    %2735 = vmatpush2.msra.mxu0 0.0
    %2736 = vmatprep.subr.mxu0 0.0
    %2737 = vmatpush2.msra.mxu0 0.0
    %2738 = vmatprep.subr.mxu0 0.0
    %2739 = vmatpush2.msra.mxu0 0.0
    %2740 = vmatprep.subr.mxu0 0.0
    %2741 = vmatpush2.msra.mxu0 0.0
    %2742 = vmatprep.subr.mxu0 0.0
    %2743 = vmatpush2.msra.mxu0 0.0
    %2744 = vmatprep.mubr.f32.mxu0 0.0
    %2745 = vmatmul.mubr.f32.gmra.mxu0 %v2674
    %v2746 = vpop.f32.mrf.mxu0
    %v2747 = vadd.f32 0.0, %v2746
    %v2748 = vpop.f32.mrf.mxu0
    %v2749 = vadd.f32 0.0, %v2748
    %2750 = vdwg.mxu0
    %2751 = vmatprep.subr.mxu0 0.0
    %2752 = vmatpush1.msra.mxu0 %v521
    %2753 = vmatprep.subr.mxu0 0.0
    %2754 = vmatpush1.msra.mxu0 %v518
    %2755 = vmatprep.subr.mxu0 0.0
    %2756 = vmatpush1.msra.mxu0 %v515
    %2757 = vmatprep.subr.mxu0 0.0
    %2758 = vmatpush1.msra.mxu0 %v512
    %2759 = vmatprep.subr.mxu0 0.0
    %2760 = vmatpush1.msra.mxu0 %v509
    %2761 = vmatprep.subr.mxu0 0.0
    %2762 = vmatpush1.msra.mxu0 %v506
    %2763 = vmatprep.subr.mxu0 0.0
    %2764 = vmatpush1.msra.mxu0 %v503
    %2765 = vmatprep.subr.mxu0 0.0
    %2766 = vmatpush1.msra.mxu0 %v500
    %2767 = vmatprep.subr.mxu0 0.0
    %2768 = vmatpush1.msra.mxu0 %v497
    %2769 = vmatprep.subr.mxu0 0.0
    %2770 = vmatpush1.msra.mxu0 %v494
    %2771 = vmatprep.subr.mxu0 0.0
    %2772 = vmatpush1.msra.mxu0 %v491
    %2773 = vmatprep.subr.mxu0 0.0
    %2774 = vmatpush1.msra.mxu0 %v488
    %2775 = vmatprep.subr.mxu0 0.0
    %2776 = vmatpush1.msra.mxu0 %v485
    %2777 = vmatprep.subr.mxu0 0.0
    %2778 = vmatpush1.msra.mxu0 %v482
    %2779 = vmatprep.subr.mxu0 0.0
    %2780 = vmatpush1.msra.mxu0 %v479
    %2781 = vmatprep.subr.mxu0 0.0
    %2782 = vmatpush1.msra.mxu0 %v476
    %2783 = vmatprep.subr.mxu0 0.0
    %2784 = vmatpush2.msra.mxu0 0.0
    %2785 = vmatprep.subr.mxu0 0.0
    %2786 = vmatpush2.msra.mxu0 0.0
    %2787 = vmatprep.subr.mxu0 0.0
    %2788 = vmatpush2.msra.mxu0 0.0
    %2789 = vmatprep.subr.mxu0 0.0
    %2790 = vmatpush2.msra.mxu0 0.0
    %2791 = vmatprep.subr.mxu0 0.0
    %2792 = vmatpush2.msra.mxu0 0.0
    %2793 = vmatprep.subr.mxu0 0.0
    %2794 = vmatpush2.msra.mxu0 0.0
    %2795 = vmatprep.subr.mxu0 0.0
    %2796 = vmatpush2.msra.mxu0 0.0
    %2797 = vmatprep.subr.mxu0 0.0
    %2798 = vmatpush2.msra.mxu0 0.0
    %2799 = vmatprep.subr.mxu0 0.0
    %2800 = vmatpush2.msra.mxu0 0.0
    %2801 = vmatprep.subr.mxu0 0.0
    %2802 = vmatpush2.msra.mxu0 0.0
    %2803 = vmatprep.subr.mxu0 0.0
    %2804 = vmatpush2.msra.mxu0 0.0
    %2805 = vmatprep.subr.mxu0 0.0
    %2806 = vmatpush2.msra.mxu0 0.0
    %2807 = vmatprep.subr.mxu0 0.0
    %2808 = vmatpush2.msra.mxu0 0.0
    %2809 = vmatprep.subr.mxu0 0.0
    %2810 = vmatpush2.msra.mxu0 0.0
    %2811 = vmatprep.subr.mxu0 0.0
    %2812 = vmatpush2.msra.mxu0 0.0
    %2813 = vmatprep.subr.mxu0 0.0
    %2814 = vmatpush2.msra.mxu0 0.0
    %2815 = vmatprep.mubr.f32.mxu0 0.0
    %2816 = vmatmul.mubr.f32.gmra.mxu0 %v2674
    %v2817 = vpop.f32.mrf.mxu0
    %v2818 = vadd.f32 0.0, %v2817
    %v2819 = vpop.f32.mrf.mxu0
    %2820 = vdwg.mxu0
    %v2821 = vadd.f32 %v2677, %v2747
    %v2822 = vxor.u32 %v2821, 2147483648
    %v2823 = vmul.f32 %v2822, 1.442695
    %v2824 = vpow.pop %v2823
    %v2825 = vadd.f32 %v2824, 1.0
    %v2826 = vrcp.pop %v2825
    %v2827 = vmul.f32 1.0, %v2826
    %v2828 = vadd.f32 %v2678, %v2749
    %v2829 = vxor.u32 %v2828, 2147483648
    %v2830 = vmul.f32 %v2829, 1.442695
    %v2831 = vpow.pop %v2830
    %v2832 = vadd.f32 %v2831, 1.0
    %v2833 = vrcp.pop %v2832
    %v2834 = vmul.f32 1.0, %v2833
    %v2835 = vadd.f32 %v2818, %v686
    %v2836 = vmul.f32 %v2827, %v2835
    %v2837 = vadd.f32 %v2679, %v2836
    %v2838 = vtanh.pop %v2837
    %v2839 = vsub.f32 1.0, %v2834
    %v2840 = vmul.f32 %v2839, %v2838
    %v2841 = vmul.f32 %v2834, %v2674
    %v2842 = vadd.f32 %v2840, %v2841
    %v2843 = vstv %s2675
    %vm2844 = vcmp.lt.s32.totalorder %v2843, %v473
    %v2845 = vsel %vm2844, 1, 0
    %2846 = vset.pattern.permute.xlu0 0
    %2847 = vperm.xlu0 %2846, %v2845
    %v2848 = vpop.permute.xlu0 %2847
    %vm2849 = vcmp.eq.s32.totalorder %v2848, 1
    %v2850 = vsel %vm2849, %v2842, 0.0
    %s2851 = scalar_lea.vmem %s7, 96
    %2852 = vst [vmem:[%s2851] sm:$0xff] %v2850
    %v2853 = vsel %vm2849, %v2842, %v2674
    %s2854 = sadd.s32 %s27, 13
    %s2855 = scalar_lea.vmem [#allocation3], 312
    %v2856 = vld [vmem:[%s2855] sm:$0xff]
    %v2857 = vld [vmem:[%s2855 + $0x8] sm:$0xff]
    %v2858 = vld [vmem:[%s2855 + $0x10] sm:$0xff]
    %2859 = vmatprep.subr.mxu0 %v520
    %2860 = vmatpush1.msra.mxu0 %v519
    %2861 = vmatprep.subr.mxu0 %v517
    %2862 = vmatpush1.msra.mxu0 %v516
    %2863 = vmatprep.subr.mxu0 %v514
    %2864 = vmatpush1.msra.mxu0 %v513
    %2865 = vmatprep.subr.mxu0 %v511
    %2866 = vmatpush1.msra.mxu0 %v510
    %2867 = vmatprep.subr.mxu0 %v508
    %2868 = vmatpush1.msra.mxu0 %v507
    %2869 = vmatprep.subr.mxu0 %v505
    %2870 = vmatpush1.msra.mxu0 %v504
    %2871 = vmatprep.subr.mxu0 %v502
    %2872 = vmatpush1.msra.mxu0 %v501
    %2873 = vmatprep.subr.mxu0 %v499
    %2874 = vmatpush1.msra.mxu0 %v498
    %2875 = vmatprep.subr.mxu0 %v496
    %2876 = vmatpush1.msra.mxu0 %v495
    %2877 = vmatprep.subr.mxu0 %v493
    %2878 = vmatpush1.msra.mxu0 %v492
    %2879 = vmatprep.subr.mxu0 %v490
    %2880 = vmatpush1.msra.mxu0 %v489
    %2881 = vmatprep.subr.mxu0 %v487
    %2882 = vmatpush1.msra.mxu0 %v486
    %2883 = vmatprep.subr.mxu0 %v484
    %2884 = vmatpush1.msra.mxu0 %v483
    %2885 = vmatprep.subr.mxu0 %v481
    %2886 = vmatpush1.msra.mxu0 %v480
    %2887 = vmatprep.subr.mxu0 %v478
    %2888 = vmatpush1.msra.mxu0 %v477
    %2889 = vmatprep.subr.mxu0 %v475
    %2890 = vmatpush1.msra.mxu0 %v474
    %2891 = vmatprep.subr.mxu0 0.0
    %2892 = vmatpush2.msra.mxu0 0.0
    %2893 = vmatprep.subr.mxu0 0.0
    %2894 = vmatpush2.msra.mxu0 0.0
    %2895 = vmatprep.subr.mxu0 0.0
    %2896 = vmatpush2.msra.mxu0 0.0
    %2897 = vmatprep.subr.mxu0 0.0
    %2898 = vmatpush2.msra.mxu0 0.0
    %2899 = vmatprep.subr.mxu0 0.0
    %2900 = vmatpush2.msra.mxu0 0.0
    %2901 = vmatprep.subr.mxu0 0.0
    %2902 = vmatpush2.msra.mxu0 0.0
    %2903 = vmatprep.subr.mxu0 0.0
    %2904 = vmatpush2.msra.mxu0 0.0
    %2905 = vmatprep.subr.mxu0 0.0
    %2906 = vmatpush2.msra.mxu0 0.0
    %2907 = vmatprep.subr.mxu0 0.0
    %2908 = vmatpush2.msra.mxu0 0.0
    %2909 = vmatprep.subr.mxu0 0.0
    %2910 = vmatpush2.msra.mxu0 0.0
    %2911 = vmatprep.subr.mxu0 0.0
    %2912 = vmatpush2.msra.mxu0 0.0
    %2913 = vmatprep.subr.mxu0 0.0
    %2914 = vmatpush2.msra.mxu0 0.0
    %2915 = vmatprep.subr.mxu0 0.0
    %2916 = vmatpush2.msra.mxu0 0.0
    %2917 = vmatprep.subr.mxu0 0.0
    %2918 = vmatpush2.msra.mxu0 0.0
    %2919 = vmatprep.subr.mxu0 0.0
    %2920 = vmatpush2.msra.mxu0 0.0
    %2921 = vmatprep.subr.mxu0 0.0
    %2922 = vmatpush2.msra.mxu0 0.0
    %2923 = vmatprep.mubr.f32.mxu0 0.0
    %2924 = vmatmul.mubr.f32.gmra.mxu0 %v2853
    %v2925 = vpop.f32.mrf.mxu0
    %v2926 = vadd.f32 0.0, %v2925
    %v2927 = vpop.f32.mrf.mxu0
    %v2928 = vadd.f32 0.0, %v2927
    %2929 = vdwg.mxu0
    %2930 = vmatprep.subr.mxu0 0.0
    %2931 = vmatpush1.msra.mxu0 %v521
    %2932 = vmatprep.subr.mxu0 0.0
    %2933 = vmatpush1.msra.mxu0 %v518
    %2934 = vmatprep.subr.mxu0 0.0
    %2935 = vmatpush1.msra.mxu0 %v515
    %2936 = vmatprep.subr.mxu0 0.0
    %2937 = vmatpush1.msra.mxu0 %v512
    %2938 = vmatprep.subr.mxu0 0.0
    %2939 = vmatpush1.msra.mxu0 %v509
    %2940 = vmatprep.subr.mxu0 0.0
    %2941 = vmatpush1.msra.mxu0 %v506
    %2942 = vmatprep.subr.mxu0 0.0
    %2943 = vmatpush1.msra.mxu0 %v503
    %2944 = vmatprep.subr.mxu0 0.0
    %2945 = vmatpush1.msra.mxu0 %v500
    %2946 = vmatprep.subr.mxu0 0.0
    %2947 = vmatpush1.msra.mxu0 %v497
    %2948 = vmatprep.subr.mxu0 0.0
    %2949 = vmatpush1.msra.mxu0 %v494
    %2950 = vmatprep.subr.mxu0 0.0
    %2951 = vmatpush1.msra.mxu0 %v491
    %2952 = vmatprep.subr.mxu0 0.0
    %2953 = vmatpush1.msra.mxu0 %v488
    %2954 = vmatprep.subr.mxu0 0.0
    %2955 = vmatpush1.msra.mxu0 %v485
    %2956 = vmatprep.subr.mxu0 0.0
    %2957 = vmatpush1.msra.mxu0 %v482
    %2958 = vmatprep.subr.mxu0 0.0
    %2959 = vmatpush1.msra.mxu0 %v479
    %2960 = vmatprep.subr.mxu0 0.0
    %2961 = vmatpush1.msra.mxu0 %v476
    %2962 = vmatprep.subr.mxu0 0.0
    %2963 = vmatpush2.msra.mxu0 0.0
    %2964 = vmatprep.subr.mxu0 0.0
    %2965 = vmatpush2.msra.mxu0 0.0
    %2966 = vmatprep.subr.mxu0 0.0
    %2967 = vmatpush2.msra.mxu0 0.0
    %2968 = vmatprep.subr.mxu0 0.0
    %2969 = vmatpush2.msra.mxu0 0.0
    %2970 = vmatprep.subr.mxu0 0.0
    %2971 = vmatpush2.msra.mxu0 0.0
    %2972 = vmatprep.subr.mxu0 0.0
    %2973 = vmatpush2.msra.mxu0 0.0
    %2974 = vmatprep.subr.mxu0 0.0
    %2975 = vmatpush2.msra.mxu0 0.0
    %2976 = vmatprep.subr.mxu0 0.0
    %2977 = vmatpush2.msra.mxu0 0.0
    %2978 = vmatprep.subr.mxu0 0.0
    %2979 = vmatpush2.msra.mxu0 0.0
    %2980 = vmatprep.subr.mxu0 0.0
    %2981 = vmatpush2.msra.mxu0 0.0
    %2982 = vmatprep.subr.mxu0 0.0
    %2983 = vmatpush2.msra.mxu0 0.0
    %2984 = vmatprep.subr.mxu0 0.0
    %2985 = vmatpush2.msra.mxu0 0.0
    %2986 = vmatprep.subr.mxu0 0.0
    %2987 = vmatpush2.msra.mxu0 0.0
    %2988 = vmatprep.subr.mxu0 0.0
    %2989 = vmatpush2.msra.mxu0 0.0
    %2990 = vmatprep.subr.mxu0 0.0
    %2991 = vmatpush2.msra.mxu0 0.0
    %2992 = vmatprep.subr.mxu0 0.0
    %2993 = vmatpush2.msra.mxu0 0.0
    %2994 = vmatprep.mubr.f32.mxu0 0.0
    %2995 = vmatmul.mubr.f32.gmra.mxu0 %v2853
    %v2996 = vpop.f32.mrf.mxu0
    %v2997 = vadd.f32 0.0, %v2996
    %v2998 = vpop.f32.mrf.mxu0
    %2999 = vdwg.mxu0
    %v3000 = vadd.f32 %v2856, %v2926
    %v3001 = vxor.u32 %v3000, 2147483648
    %v3002 = vmul.f32 %v3001, 1.442695
    %v3003 = vpow.pop %v3002
    %v3004 = vadd.f32 %v3003, 1.0
    %v3005 = vrcp.pop %v3004
    %v3006 = vmul.f32 1.0, %v3005
    %v3007 = vadd.f32 %v2857, %v2928
    %v3008 = vxor.u32 %v3007, 2147483648
    %v3009 = vmul.f32 %v3008, 1.442695
    %v3010 = vpow.pop %v3009
    %v3011 = vadd.f32 %v3010, 1.0
    %v3012 = vrcp.pop %v3011
    %v3013 = vmul.f32 1.0, %v3012
    %v3014 = vadd.f32 %v2997, %v686
    %v3015 = vmul.f32 %v3006, %v3014
    %v3016 = vadd.f32 %v2858, %v3015
    %v3017 = vtanh.pop %v3016
    %v3018 = vsub.f32 1.0, %v3013
    %v3019 = vmul.f32 %v3018, %v3017
    %v3020 = vmul.f32 %v3013, %v2853
    %v3021 = vadd.f32 %v3019, %v3020
    %v3022 = vstv %s2854
    %vm3023 = vcmp.lt.s32.totalorder %v3022, %v473
    %v3024 = vsel %vm3023, 1, 0
    %3025 = vset.pattern.permute.xlu0 0
    %3026 = vperm.xlu0 %3025, %v3024
    %v3027 = vpop.permute.xlu0 %3026
    %vm3028 = vcmp.eq.s32.totalorder %v3027, 1
    %v3029 = vsel %vm3028, %v3021, 0.0
    %s3030 = scalar_lea.vmem %s7, 104
    %3031 = vst [vmem:[%s3030] sm:$0xff] %v3029
    %v3032 = vsel %vm3028, %v3021, %v2853
    %s3033 = sadd.s32 %s27, 14
    %s3034 = scalar_lea.vmem [#allocation3], 336
    %v3035 = vld [vmem:[%s3034] sm:$0xff]
    %v3036 = vld [vmem:[%s3034 + $0x8] sm:$0xff]
    %v3037 = vld [vmem:[%s3034 + $0x10] sm:$0xff]
    %3038 = vmatprep.subr.mxu0 %v520
    %3039 = vmatpush1.msra.mxu0 %v519
    %3040 = vmatprep.subr.mxu0 %v517
    %3041 = vmatpush1.msra.mxu0 %v516
    %3042 = vmatprep.subr.mxu0 %v514
    %3043 = vmatpush1.msra.mxu0 %v513
    %3044 = vmatprep.subr.mxu0 %v511
    %3045 = vmatpush1.msra.mxu0 %v510
    %3046 = vmatprep.subr.mxu0 %v508
    %3047 = vmatpush1.msra.mxu0 %v507
    %3048 = vmatprep.subr.mxu0 %v505
    %3049 = vmatpush1.msra.mxu0 %v504
    %3050 = vmatprep.subr.mxu0 %v502
    %3051 = vmatpush1.msra.mxu0 %v501
    %3052 = vmatprep.subr.mxu0 %v499
    %3053 = vmatpush1.msra.mxu0 %v498
    %3054 = vmatprep.subr.mxu0 %v496
    %3055 = vmatpush1.msra.mxu0 %v495
    %3056 = vmatprep.subr.mxu0 %v493
    %3057 = vmatpush1.msra.mxu0 %v492
    %3058 = vmatprep.subr.mxu0 %v490
    %3059 = vmatpush1.msra.mxu0 %v489
    %3060 = vmatprep.subr.mxu0 %v487
    %3061 = vmatpush1.msra.mxu0 %v486
    %3062 = vmatprep.subr.mxu0 %v484
    %3063 = vmatpush1.msra.mxu0 %v483
    %3064 = vmatprep.subr.mxu0 %v481
    %3065 = vmatpush1.msra.mxu0 %v480
    %3066 = vmatprep.subr.mxu0 %v478
    %3067 = vmatpush1.msra.mxu0 %v477
    %3068 = vmatprep.subr.mxu0 %v475
    %3069 = vmatpush1.msra.mxu0 %v474
    %3070 = vmatprep.subr.mxu0 0.0
    %3071 = vmatpush2.msra.mxu0 0.0
    %3072 = vmatprep.subr.mxu0 0.0
    %3073 = vmatpush2.msra.mxu0 0.0
    %3074 = vmatprep.subr.mxu0 0.0
    %3075 = vmatpush2.msra.mxu0 0.0
    %3076 = vmatprep.subr.mxu0 0.0
    %3077 = vmatpush2.msra.mxu0 0.0
    %3078 = vmatprep.subr.mxu0 0.0
    %3079 = vmatpush2.msra.mxu0 0.0
    %3080 = vmatprep.subr.mxu0 0.0
    %3081 = vmatpush2.msra.mxu0 0.0
    %3082 = vmatprep.subr.mxu0 0.0
    %3083 = vmatpush2.msra.mxu0 0.0
    %3084 = vmatprep.subr.mxu0 0.0
    %3085 = vmatpush2.msra.mxu0 0.0
    %3086 = vmatprep.subr.mxu0 0.0
    %3087 = vmatpush2.msra.mxu0 0.0
    %3088 = vmatprep.subr.mxu0 0.0
    %3089 = vmatpush2.msra.mxu0 0.0
    %3090 = vmatprep.subr.mxu0 0.0
    %3091 = vmatpush2.msra.mxu0 0.0
    %3092 = vmatprep.subr.mxu0 0.0
    %3093 = vmatpush2.msra.mxu0 0.0
    %3094 = vmatprep.subr.mxu0 0.0
    %3095 = vmatpush2.msra.mxu0 0.0
    %3096 = vmatprep.subr.mxu0 0.0
    %3097 = vmatpush2.msra.mxu0 0.0
    %3098 = vmatprep.subr.mxu0 0.0
    %3099 = vmatpush2.msra.mxu0 0.0
    %3100 = vmatprep.subr.mxu0 0.0
    %3101 = vmatpush2.msra.mxu0 0.0
    %3102 = vmatprep.mubr.f32.mxu0 0.0
    %3103 = vmatmul.mubr.f32.gmra.mxu0 %v3032
    %v3104 = vpop.f32.mrf.mxu0
    %v3105 = vadd.f32 0.0, %v3104
    %v3106 = vpop.f32.mrf.mxu0
    %v3107 = vadd.f32 0.0, %v3106
    %3108 = vdwg.mxu0
    %3109 = vmatprep.subr.mxu0 0.0
    %3110 = vmatpush1.msra.mxu0 %v521
    %3111 = vmatprep.subr.mxu0 0.0
    %3112 = vmatpush1.msra.mxu0 %v518
    %3113 = vmatprep.subr.mxu0 0.0
    %3114 = vmatpush1.msra.mxu0 %v515
    %3115 = vmatprep.subr.mxu0 0.0
    %3116 = vmatpush1.msra.mxu0 %v512
    %3117 = vmatprep.subr.mxu0 0.0
    %3118 = vmatpush1.msra.mxu0 %v509
    %3119 = vmatprep.subr.mxu0 0.0
    %3120 = vmatpush1.msra.mxu0 %v506
    %3121 = vmatprep.subr.mxu0 0.0
    %3122 = vmatpush1.msra.mxu0 %v503
    %3123 = vmatprep.subr.mxu0 0.0
    %3124 = vmatpush1.msra.mxu0 %v500
    %3125 = vmatprep.subr.mxu0 0.0
    %3126 = vmatpush1.msra.mxu0 %v497
    %3127 = vmatprep.subr.mxu0 0.0
    %3128 = vmatpush1.msra.mxu0 %v494
    %3129 = vmatprep.subr.mxu0 0.0
    %3130 = vmatpush1.msra.mxu0 %v491
    %3131 = vmatprep.subr.mxu0 0.0
    %3132 = vmatpush1.msra.mxu0 %v488
    %3133 = vmatprep.subr.mxu0 0.0
    %3134 = vmatpush1.msra.mxu0 %v485
    %3135 = vmatprep.subr.mxu0 0.0
    %3136 = vmatpush1.msra.mxu0 %v482
    %3137 = vmatprep.subr.mxu0 0.0
    %3138 = vmatpush1.msra.mxu0 %v479
    %3139 = vmatprep.subr.mxu0 0.0
    %3140 = vmatpush1.msra.mxu0 %v476
    %3141 = vmatprep.subr.mxu0 0.0
    %3142 = vmatpush2.msra.mxu0 0.0
    %3143 = vmatprep.subr.mxu0 0.0
    %3144 = vmatpush2.msra.mxu0 0.0
    %3145 = vmatprep.subr.mxu0 0.0
    %3146 = vmatpush2.msra.mxu0 0.0
    %3147 = vmatprep.subr.mxu0 0.0
    %3148 = vmatpush2.msra.mxu0 0.0
    %3149 = vmatprep.subr.mxu0 0.0
    %3150 = vmatpush2.msra.mxu0 0.0
    %3151 = vmatprep.subr.mxu0 0.0
    %3152 = vmatpush2.msra.mxu0 0.0
    %3153 = vmatprep.subr.mxu0 0.0
    %3154 = vmatpush2.msra.mxu0 0.0
    %3155 = vmatprep.subr.mxu0 0.0
    %3156 = vmatpush2.msra.mxu0 0.0
    %3157 = vmatprep.subr.mxu0 0.0
    %3158 = vmatpush2.msra.mxu0 0.0
    %3159 = vmatprep.subr.mxu0 0.0
    %3160 = vmatpush2.msra.mxu0 0.0
    %3161 = vmatprep.subr.mxu0 0.0
    %3162 = vmatpush2.msra.mxu0 0.0
    %3163 = vmatprep.subr.mxu0 0.0
    %3164 = vmatpush2.msra.mxu0 0.0
    %3165 = vmatprep.subr.mxu0 0.0
    %3166 = vmatpush2.msra.mxu0 0.0
    %3167 = vmatprep.subr.mxu0 0.0
    %3168 = vmatpush2.msra.mxu0 0.0
    %3169 = vmatprep.subr.mxu0 0.0
    %3170 = vmatpush2.msra.mxu0 0.0
    %3171 = vmatprep.subr.mxu0 0.0
    %3172 = vmatpush2.msra.mxu0 0.0
    %3173 = vmatprep.mubr.f32.mxu0 0.0
    %3174 = vmatmul.mubr.f32.gmra.mxu0 %v3032
    %v3175 = vpop.f32.mrf.mxu0
    %v3176 = vadd.f32 0.0, %v3175
    %v3177 = vpop.f32.mrf.mxu0
    %3178 = vdwg.mxu0
    %v3179 = vadd.f32 %v3035, %v3105
    %v3180 = vxor.u32 %v3179, 2147483648
    %v3181 = vmul.f32 %v3180, 1.442695
    %v3182 = vpow.pop %v3181
    %v3183 = vadd.f32 %v3182, 1.0
    %v3184 = vrcp.pop %v3183
    %v3185 = vmul.f32 1.0, %v3184
    %v3186 = vadd.f32 %v3036, %v3107
    %v3187 = vxor.u32 %v3186, 2147483648
    %v3188 = vmul.f32 %v3187, 1.442695
    %v3189 = vpow.pop %v3188
    %v3190 = vadd.f32 %v3189, 1.0
    %v3191 = vrcp.pop %v3190
    %v3192 = vmul.f32 1.0, %v3191
    %v3193 = vadd.f32 %v3176, %v686
    %v3194 = vmul.f32 %v3185, %v3193
    %v3195 = vadd.f32 %v3037, %v3194
    %v3196 = vtanh.pop %v3195
    %v3197 = vsub.f32 1.0, %v3192
    %v3198 = vmul.f32 %v3197, %v3196
    %v3199 = vmul.f32 %v3192, %v3032
    %v3200 = vadd.f32 %v3198, %v3199
    %v3201 = vstv %s3033
    %vm3202 = vcmp.lt.s32.totalorder %v3201, %v473
    %v3203 = vsel %vm3202, 1, 0
    %3204 = vset.pattern.permute.xlu0 0
    %3205 = vperm.xlu0 %3204, %v3203
    %v3206 = vpop.permute.xlu0 %3205
    %vm3207 = vcmp.eq.s32.totalorder %v3206, 1
    %v3208 = vsel %vm3207, %v3200, 0.0
    %s3209 = scalar_lea.vmem %s7, 112
    %3210 = vst [vmem:[%s3209] sm:$0xff] %v3208
    %v3211 = vsel %vm3207, %v3200, %v3032
    %s3212 = sadd.s32 %s27, 15
    %s3213 = scalar_lea.vmem [#allocation3], 360
    %v3214 = vld [vmem:[%s3213] sm:$0xff]
    %v3215 = vld [vmem:[%s3213 + $0x8] sm:$0xff]
    %v3216 = vld [vmem:[%s3213 + $0x10] sm:$0xff]
    %3217 = vmatprep.subr.mxu0 %v520
    %3218 = vmatpush1.msra.mxu0 %v519
    %3219 = vmatprep.subr.mxu0 %v517
    %3220 = vmatpush1.msra.mxu0 %v516
    %3221 = vmatprep.subr.mxu0 %v514
    %3222 = vmatpush1.msra.mxu0 %v513
    %3223 = vmatprep.subr.mxu0 %v511
    %3224 = vmatpush1.msra.mxu0 %v510
    %3225 = vmatprep.subr.mxu0 %v508
    %3226 = vmatpush1.msra.mxu0 %v507
    %3227 = vmatprep.subr.mxu0 %v505
    %3228 = vmatpush1.msra.mxu0 %v504
    %3229 = vmatprep.subr.mxu0 %v502
    %3230 = vmatpush1.msra.mxu0 %v501
    %3231 = vmatprep.subr.mxu0 %v499
    %3232 = vmatpush1.msra.mxu0 %v498
    %3233 = vmatprep.subr.mxu0 %v496
    %3234 = vmatpush1.msra.mxu0 %v495
    %3235 = vmatprep.subr.mxu0 %v493
    %3236 = vmatpush1.msra.mxu0 %v492
    %3237 = vmatprep.subr.mxu0 %v490
    %3238 = vmatpush1.msra.mxu0 %v489
    %3239 = vmatprep.subr.mxu0 %v487
    %3240 = vmatpush1.msra.mxu0 %v486
    %3241 = vmatprep.subr.mxu0 %v484
    %3242 = vmatpush1.msra.mxu0 %v483
    %3243 = vmatprep.subr.mxu0 %v481
    %3244 = vmatpush1.msra.mxu0 %v480
    %3245 = vmatprep.subr.mxu0 %v478
    %3246 = vmatpush1.msra.mxu0 %v477
    %3247 = vmatprep.subr.mxu0 %v475
    %3248 = vmatpush1.msra.mxu0 %v474
    %3249 = vmatprep.subr.mxu0 0.0
    %3250 = vmatpush2.msra.mxu0 0.0
    %3251 = vmatprep.subr.mxu0 0.0
    %3252 = vmatpush2.msra.mxu0 0.0
    %3253 = vmatprep.subr.mxu0 0.0
    %3254 = vmatpush2.msra.mxu0 0.0
    %3255 = vmatprep.subr.mxu0 0.0
    %3256 = vmatpush2.msra.mxu0 0.0
    %3257 = vmatprep.subr.mxu0 0.0
    %3258 = vmatpush2.msra.mxu0 0.0
    %3259 = vmatprep.subr.mxu0 0.0
    %3260 = vmatpush2.msra.mxu0 0.0
    %3261 = vmatprep.subr.mxu0 0.0
    %3262 = vmatpush2.msra.mxu0 0.0
    %3263 = vmatprep.subr.mxu0 0.0
    %3264 = vmatpush2.msra.mxu0 0.0
    %3265 = vmatprep.subr.mxu0 0.0
    %3266 = vmatpush2.msra.mxu0 0.0
    %3267 = vmatprep.subr.mxu0 0.0
    %3268 = vmatpush2.msra.mxu0 0.0
    %3269 = vmatprep.subr.mxu0 0.0
    %3270 = vmatpush2.msra.mxu0 0.0
    %3271 = vmatprep.subr.mxu0 0.0
    %3272 = vmatpush2.msra.mxu0 0.0
    %3273 = vmatprep.subr.mxu0 0.0
    %3274 = vmatpush2.msra.mxu0 0.0
    %3275 = vmatprep.subr.mxu0 0.0
    %3276 = vmatpush2.msra.mxu0 0.0
    %3277 = vmatprep.subr.mxu0 0.0
    %3278 = vmatpush2.msra.mxu0 0.0
    %3279 = vmatprep.subr.mxu0 0.0
    %3280 = vmatpush2.msra.mxu0 0.0
    %3281 = vmatprep.mubr.f32.mxu0 0.0
    %3282 = vmatmul.mubr.f32.gmra.mxu0 %v3211
    %v3283 = vpop.f32.mrf.mxu0
    %v3284 = vadd.f32 0.0, %v3283
    %v3285 = vpop.f32.mrf.mxu0
    %v3286 = vadd.f32 0.0, %v3285
    %3287 = vdwg.mxu0
    %3288 = vmatprep.subr.mxu0 0.0
    %3289 = vmatpush1.msra.mxu0 %v521
    %3290 = vmatprep.subr.mxu0 0.0
    %3291 = vmatpush1.msra.mxu0 %v518
    %3292 = vmatprep.subr.mxu0 0.0
    %3293 = vmatpush1.msra.mxu0 %v515
    %3294 = vmatprep.subr.mxu0 0.0
    %3295 = vmatpush1.msra.mxu0 %v512
    %3296 = vmatprep.subr.mxu0 0.0
    %3297 = vmatpush1.msra.mxu0 %v509
    %3298 = vmatprep.subr.mxu0 0.0
    %3299 = vmatpush1.msra.mxu0 %v506
    %3300 = vmatprep.subr.mxu0 0.0
    %3301 = vmatpush1.msra.mxu0 %v503
    %3302 = vmatprep.subr.mxu0 0.0
    %3303 = vmatpush1.msra.mxu0 %v500
    %3304 = vmatprep.subr.mxu0 0.0
    %3305 = vmatpush1.msra.mxu0 %v497
    %3306 = vmatprep.subr.mxu0 0.0
    %3307 = vmatpush1.msra.mxu0 %v494
    %3308 = vmatprep.subr.mxu0 0.0
    %3309 = vmatpush1.msra.mxu0 %v491
    %3310 = vmatprep.subr.mxu0 0.0
    %3311 = vmatpush1.msra.mxu0 %v488
    %3312 = vmatprep.subr.mxu0 0.0
    %3313 = vmatpush1.msra.mxu0 %v485
    %3314 = vmatprep.subr.mxu0 0.0
    %3315 = vmatpush1.msra.mxu0 %v482
    %3316 = vmatprep.subr.mxu0 0.0
    %3317 = vmatpush1.msra.mxu0 %v479
    %3318 = vmatprep.subr.mxu0 0.0
    %3319 = vmatpush1.msra.mxu0 %v476
    %3320 = vmatprep.subr.mxu0 0.0
    %3321 = vmatpush2.msra.mxu0 0.0
    %3322 = vmatprep.subr.mxu0 0.0
    %3323 = vmatpush2.msra.mxu0 0.0
    %3324 = vmatprep.subr.mxu0 0.0
    %3325 = vmatpush2.msra.mxu0 0.0
    %3326 = vmatprep.subr.mxu0 0.0
    %3327 = vmatpush2.msra.mxu0 0.0
    %3328 = vmatprep.subr.mxu0 0.0
    %3329 = vmatpush2.msra.mxu0 0.0
    %3330 = vmatprep.subr.mxu0 0.0
    %3331 = vmatpush2.msra.mxu0 0.0
    %3332 = vmatprep.subr.mxu0 0.0
    %3333 = vmatpush2.msra.mxu0 0.0
    %3334 = vmatprep.subr.mxu0 0.0
    %3335 = vmatpush2.msra.mxu0 0.0
    %3336 = vmatprep.subr.mxu0 0.0
    %3337 = vmatpush2.msra.mxu0 0.0
    %3338 = vmatprep.subr.mxu0 0.0
    %3339 = vmatpush2.msra.mxu0 0.0
    %3340 = vmatprep.subr.mxu0 0.0
    %3341 = vmatpush2.msra.mxu0 0.0
    %3342 = vmatprep.subr.mxu0 0.0
    %3343 = vmatpush2.msra.mxu0 0.0
    %3344 = vmatprep.subr.mxu0 0.0
    %3345 = vmatpush2.msra.mxu0 0.0
    %3346 = vmatprep.subr.mxu0 0.0
    %3347 = vmatpush2.msra.mxu0 0.0
    %3348 = vmatprep.subr.mxu0 0.0
    %3349 = vmatpush2.msra.mxu0 0.0
    %3350 = vmatprep.subr.mxu0 0.0
    %3351 = vmatpush2.msra.mxu0 0.0
    %3352 = vmatprep.mubr.f32.mxu0 0.0
    %3353 = vmatmul.mubr.f32.gmra.mxu0 %v3211
    %v3354 = vpop.f32.mrf.mxu0
    %v3355 = vadd.f32 0.0, %v3354
    %v3356 = vpop.f32.mrf.mxu0
    %3357 = vdwg.mxu0
    %v3358 = vadd.f32 %v3214, %v3284
    %v3359 = vxor.u32 %v3358, 2147483648
    %v3360 = vmul.f32 %v3359, 1.442695
    %v3361 = vpow.pop %v3360
    %v3362 = vadd.f32 %v3361, 1.0
    %v3363 = vrcp.pop %v3362
    %v3364 = vmul.f32 1.0, %v3363
    %v3365 = vadd.f32 %v3215, %v3286
    %v3366 = vxor.u32 %v3365, 2147483648
    %v3367 = vmul.f32 %v3366, 1.442695
    %v3368 = vpow.pop %v3367
    %v3369 = vadd.f32 %v3368, 1.0
    %v3370 = vrcp.pop %v3369
    %v3371 = vmul.f32 1.0, %v3370
    %v3372 = vadd.f32 %v3355, %v686
    %v3373 = vmul.f32 %v3364, %v3372
    %v3374 = vadd.f32 %v3216, %v3373
    %v3375 = vtanh.pop %v3374
    %v3376 = vsub.f32 1.0, %v3371
    %v3377 = vmul.f32 %v3376, %v3375
    %v3378 = vmul.f32 %v3371, %v3211
    %v3379 = vadd.f32 %v3377, %v3378
    %v3380 = vstv %s3212
    %vm3381 = vcmp.lt.s32.totalorder %v3380, %v473
    %v3382 = vsel %vm3381, 1, 0
    %3383 = vset.pattern.permute.xlu0 0
    %3384 = vperm.xlu0 %3383, %v3382
    %v3385 = vpop.permute.xlu0 %3384
    %vm3386 = vcmp.eq.s32.totalorder %v3385, 1
    %v3387 = vsel %vm3386, %v3379, 0.0
    %s3388 = scalar_lea.vmem %s7, 120
    %3389 = vst [vmem:[%s3388] sm:$0xff] %v3387
    %v3390 = vsel %vm3386, %v3379, %v3211
    %3391 = vst [vmem:[#allocation2] sm:$0xff] %v3390
  $region33: #{_lambda_.1} parent=0 // pred_fallthru
    _
  %p3392 = scmp.ge.s32.totalorder %s27, %s33
  // Predicated region
  $region34: #{_lambda_.1} parent=0 // pred_check
    %p3393 = pneg %p3392
  $region35: #{_lambda_.1} parent=0 // pred_check_branch
    %3395 = sbr.rel (%p3393) target = $region37
  $region36: #{_lambda_.1} parent=0 // pred_region
    %3396 = vst [vmem:[%s7] sm:$0xff] 0.0
    %3397 = vst [vmem:[%s7 + $0x8] sm:$0xff] 0.0
    %3398 = vst [vmem:[%s7 + $0x10] sm:$0xff] 0.0
    %3399 = vst [vmem:[%s7 + $0x18] sm:$0xff] 0.0
    %3400 = vst [vmem:[%s7 + $0x20] sm:$0xff] 0.0
    %3401 = vst [vmem:[%s7 + $0x28] sm:$0xff] 0.0
    %3402 = vst [vmem:[%s7 + $0x30] sm:$0xff] 0.0
    %3403 = vst [vmem:[%s7 + $0x38] sm:$0xff] 0.0
    %3404 = vst [vmem:[%s7 + $0x40] sm:$0xff] 0.0
    %3405 = vst [vmem:[%s7 + $0x48] sm:$0xff] 0.0
    %3406 = vst [vmem:[%s7 + $0x50] sm:$0xff] 0.0
    %3407 = vst [vmem:[%s7 + $0x58] sm:$0xff] 0.0
    %3408 = vst [vmem:[%s7 + $0x60] sm:$0xff] 0.0
    %3409 = vst [vmem:[%s7 + $0x68] sm:$0xff] 0.0
    %3410 = vst [vmem:[%s7 + $0x70] sm:$0xff] 0.0
    %3411 = vst [vmem:[%s7 + $0x78] sm:$0xff] 0.0
  $region37: #{_lambda_.1} parent=0 // pred_fallthru
    _
  %v3412 = vld [vmem:[#allocation2] sm:$0xff]
  %3413 = vst [vmem:[%s8] sm:$0xff] %v3412
  // Predicated region
  $region38: #{_lambda_.1} parent=0 // pred_check
    _
  $region39: #{_lambda_.1} parent=0 // pred_check_branch
    %3415 = sbr.rel (0) target = $region41
  $region40: #{_lambda_.1} parent=0 // pred_region
    _
  $region41: #{_lambda_.1} parent=0 // pred_fallthru
    _
  // Predicated region
  $region42: #{_lambda_.1} parent=0 // pred_check
    _
  $region43: #{_lambda_.1} parent=0 // pred_check_branch
    %3417 = sbr.rel (0) target = $region45
  $region44: #{_lambda_.1} parent=0 // pred_region
    _
  $region45: #{_lambda_.1} parent=0 // pred_fallthru
    _
  // Predicated region
  $region46: #{_lambda_.1} parent=0 // pred_check
    _
  $region47: #{_lambda_.1} parent=0 // pred_check_branch
    %3419 = sbr.rel (0) target = $region49
  $region48: #{_lambda_.1} parent=0 // pred_region
    _
  $region49: #{_lambda_.1} parent=0 // pred_fallthru
    _
  // Predicated region
  $region50: #{_lambda_.1} parent=0 // pred_check
    _
  $region51: #{_lambda_.1} parent=0 // pred_check_branch
    %3421 = sbr.rel (0) target = $region53
  $region52: #{_lambda_.1} parent=0 // pred_region
    _
  $region53: #{_lambda_.1} parent=0 // pred_fallthru
    _

// kernel: _lambda_.1
$region0: #{_lambda_.1}
  #allocation0 [shape = 'u32[]', space=smem, size = 0x4, offset = 0x4, fixed_abs, tag = 'smem constant byte address 0x4 - core index']
  #allocation1 [shape = 'u32[144,128]{1,0:T(1,128)}', space=vmem, size = 0x12000, scoped, tag = 'internal scratch']
  #allocation2 [shape = 'f32[8,128]{1,0:T(8,128)}', space=vmem, size = 0x1000, scoped, tag = 'scratch operand']
  #allocation3 [shape = 'f32[16,8,384]{2,1,0:T(8,128)}', space=vmem, size = 0x30000, scoped, tag = 'scratch operand']
  #allocation4 [shape = 's32[1]{0}', space=sflag, size = 0x4, scoped, tag = 'scoped memory for _lambda_.1']
  #allocation5 [shape = 's32[1]{0:T(128)S(6)}', space=smem, size = 0x200, scoped, tag = 'prefetched SMEM operand 0']
  %s0 = inlined_call_operand.<no memory space> [shape: s32[1], index: 0, kind: input, shape index: {}]
  %s1 = inlined_call_operand.vmem [shape: s32[8,1], index: 1, kind: input, shape index: {}]
  %s2 = inlined_call_operand.vmem [shape: f32[16,8,128], index: 2, kind: input, shape index: {}]
  %s3 = inlined_call_operand.vmem [shape: f32[128,384], index: 3, kind: input, shape index: {}]
  %s4 = inlined_call_operand.vmem [shape: f32[1,384], index: 4, kind: input, shape index: {}]
  %s5 = inlined_call_operand.vmem [shape: f32[128,384], index: 5, kind: input, shape index: {}]
  %s6 = inlined_call_operand.vmem [shape: f32[1,128], index: 6, kind: input, shape index: {}]
  %s7 = inlined_call_operand.vmem [shape: f32[16,8,128], index: 7, kind: output, shape index: {0}]
  %s8 = inlined_call_operand.vmem [shape: f32[1,8,128], index: 8, kind: output, shape index: {1}]
  %9 = xla_tuple %s7, %s8
  %s10 = sld [smem:[#allocation0]]
  $region54: #{_lambda_.1} parent=0
    _
  %s12 = ssub.s32 1, %s10
  %s13 = scalar_select 0, %s12, %s10
  %14 = sst [smem:[#allocation5]] %s0
  // Predicated region
  $region2: #{_lambda_.1} parent=0 // pred_check
    _
  $region3: #{_lambda_.1} parent=0 // pred_check_branch
    %16 = sbr.rel (0) target = $region5
  $region4: #{_lambda_.1} parent=0 // pred_region
    _
  $region5: #{_lambda_.1} parent=0 // pred_fallthru
    _
  // Predicated region
  $region6: #{_lambda_.1} parent=0 // pred_check
    _
  $region7: #{_lambda_.1} parent=0 // pred_check_branch
    %18 = sbr.rel (0) target = $region9
  $region8: #{_lambda_.1} parent=0 // pred_region
    _
  $region9: #{_lambda_.1} parent=0 // pred_fallthru
    _
  // Predicated region
  $region10: #{_lambda_.1} parent=0 // pred_check
    _
  $region11: #{_lambda_.1} parent=0 // pred_check_branch
    %20 = sbr.rel (0) target = $region13
  $region12: #{_lambda_.1} parent=0 // pred_region
    _
  $region13: #{_lambda_.1} parent=0 // pred_fallthru
    _
  // Predicated region
  $region14: #{_lambda_.1} parent=0 // pred_check
    _
  $region15: #{_lambda_.1} parent=0 // pred_check_branch
    %22 = sbr.rel (0) target = $region17
  $region16: #{_lambda_.1} parent=0 // pred_region
    _
  $region17: #{_lambda_.1} parent=0 // pred_fallthru
    _
  // Predicated region
  $region18: #{_lambda_.1} parent=0 // pred_check
    _
  $region19: #{_lambda_.1} parent=0 // pred_check_branch
    %24 = sbr.rel (0) target = $region21
  $region20: #{_lambda_.1} parent=0 // pred_region
    _
  $region21: #{_lambda_.1} parent=0 // pred_fallthru
    _
  // Predicated region
  $region22: #{_lambda_.1} parent=0 // pred_check
    _
  $region23: #{_lambda_.1} parent=0 // pred_check_branch
    %26 = sbr.rel (0) target = $region25
  $region24: #{_lambda_.1} parent=0 // pred_region
    _
  $region25: #{_lambda_.1} parent=0 // pred_fallthru
    _
  %s27 = smul.u32 0, 16
  %p28 = scmp.eq.s32.totalorder 0, 0
  // Predicated region
  $region26: #{_lambda_.1} parent=0 // pred_check
    %p29 = pneg %p28
  $region27: #{_lambda_.1} parent=0 // pred_check_branch
    %31 = sbr.rel (%p29) target = $region29
  $region28: #{_lambda_.1} parent=0 // pred_region
    %32 = vst [vmem:[#allocation2] sm:$0xff] 0.0
  $region29: #{_lambda_.1} parent=0 // pred_fallthru
    _
  %s33 = sld [smem:[#allocation5]]
  %p34 = scmp.lt.s32.totalorder %s27, %s33
  // Predicated region
  $region30: #{_lambda_.1} parent=0 // pred_check
    %p35 = pneg %p34
  $region31: #{_lambda_.1} parent=0 // pred_check_branch
    %37 = sbr.rel (%p35) target = $region33
  $region32: #{_lambda_.1} parent=0 // pred_region
    %v38 = vld [vmem:[%s2] sm:$0xff]
    %v39 = vld [vmem:[%s2 + $0x8] sm:$0xff]
    %v40 = vld [vmem:[%s2 + $0x10] sm:$0xff]
    %v41 = vld [vmem:[%s2 + $0x18] sm:$0xff]
    %v42 = vld [vmem:[%s2 + $0x20] sm:$0xff]
    %v43 = vld [vmem:[%s2 + $0x28] sm:$0xff]
    %v44 = vld [vmem:[%s2 + $0x30] sm:$0xff]
    %v45 = vld [vmem:[%s2 + $0x38] sm:$0xff]
    %v46 = vld [vmem:[%s2 + $0x40] sm:$0xff]
    %v47 = vld [vmem:[%s2 + $0x48] sm:$0xff]
    %v48 = vld [vmem:[%s2 + $0x50] sm:$0xff]
    %v49 = vld [vmem:[%s2 + $0x58] sm:$0xff]
    %v50 = vld [vmem:[%s2 + $0x60] sm:$0xff]
    %v51 = vld [vmem:[%s2 + $0x68] sm:$0xff]
    %v52 = vld [vmem:[%s2 + $0x70] sm:$0xff]
    %v53 = vld [vmem:[%s2 + $0x78] sm:$0xff]
    %v54 = vld [vmem:[%s3] sm:$0xff]
    %v55 = vld [vmem:[%s3 + $0x8] sm:$0xff]
    %v56 = vld [vmem:[%s3 + $0x10] sm:$0xff]
    %v57 = vld [vmem:[%s3 + $0x18] sm:$0xff]
    %v58 = vld [vmem:[%s3 + $0x20] sm:$0xff]
    %v59 = vld [vmem:[%s3 + $0x28] sm:$0xff]
    %v60 = vld [vmem:[%s3 + $0x30] sm:$0xff]
    %v61 = vld [vmem:[%s3 + $0x38] sm:$0xff]
    %v62 = vld [vmem:[%s3 + $0x40] sm:$0xff]
    %v63 = vld [vmem:[%s3 + $0x48] sm:$0xff]
    %v64 = vld [vmem:[%s3 + $0x50] sm:$0xff]
    %v65 = vld [vmem:[%s3 + $0x58] sm:$0xff]
    %v66 = vld [vmem:[%s3 + $0x60] sm:$0xff]
    %v67 = vld [vmem:[%s3 + $0x68] sm:$0xff]
    %v68 = vld [vmem:[%s3 + $0x70] sm:$0xff]
    %v69 = vld [vmem:[%s3 + $0x78] sm:$0xff]
    %v70 = vld [vmem:[%s3 + $0x80] sm:$0xff]
    %v71 = vld [vmem:[%s3 + $0x88] sm:$0xff]
    %v72 = vld [vmem:[%s3 + $0x90] sm:$0xff]
    %v73 = vld [vmem:[%s3 + $0x98] sm:$0xff]
    %v74 = vld [vmem:[%s3 + $0xa0] sm:$0xff]
    %v75 = vld [vmem:[%s3 + $0xa8] sm:$0xff]
    %v76 = vld [vmem:[%s3 + $0xb0] sm:$0xff]
    %v77 = vld [vmem:[%s3 + $0xb8] sm:$0xff]
    %v78 = vld [vmem:[%s3 + $0xc0] sm:$0xff]
    %v79 = vld [vmem:[%s3 + $0xc8] sm:$0xff]
    %v80 = vld [vmem:[%s3 + $0xd0] sm:$0xff]
    %v81 = vld [vmem:[%s3 + $0xd8] sm:$0xff]
    %v82 = vld [vmem:[%s3 + $0xe0] sm:$0xff]
    %v83 = vld [vmem:[%s3 + $0xe8] sm:$0xff]
    %v84 = vld [vmem:[%s3 + $0xf0] sm:$0xff]
    %v85 = vld [vmem:[%s3 + $0xf8] sm:$0xff]
    %v86 = vld [vmem:[%s3 + $0x100] sm:$0xff]
    %v87 = vld [vmem:[%s3 + $0x108] sm:$0xff]
    %v88 = vld [vmem:[%s3 + $0x110] sm:$0xff]
    %v89 = vld [vmem:[%s3 + $0x118] sm:$0xff]
    %v90 = vld [vmem:[%s3 + $0x120] sm:$0xff]
    %v91 = vld [vmem:[%s3 + $0x128] sm:$0xff]
    %v92 = vld [vmem:[%s3 + $0x130] sm:$0xff]
    %v93 = vld [vmem:[%s3 + $0x138] sm:$0xff]
    %v94 = vld [vmem:[%s3 + $0x140] sm:$0xff]
    %v95 = vld [vmem:[%s3 + $0x148] sm:$0xff]
    %v96 = vld [vmem:[%s3 + $0x150] sm:$0xff]
    %v97 = vld [vmem:[%s3 + $0x158] sm:$0xff]
    %v98 = vld [vmem:[%s3 + $0x160] sm:$0xff]
    %v99 = vld [vmem:[%s3 + $0x168] sm:$0xff]
    %v100 = vld [vmem:[%s3 + $0x170] sm:$0xff]
    %v101 = vld [vmem:[%s3 + $0x178] sm:$0xff]
    %v102 = vld [vmem:[%s4] sm:$0x7]
    %v104 = vlaneseq
    %v105 = vshrl.u32 %v104, 7
    %v106 = vsub.s32 0, %v105
    %v107 = vrot.slane %v102, %v106
    %v108 = vlaneseq
    %v109 = vshrl.u32 %v108, 7
    %v110 = vsub.s32 1, %v109
    %v111 = vrot.slane %v102, %v110
    %v112 = vlaneseq
    %v113 = vshrl.u32 %v112, 7
    %v114 = vsub.s32 2, %v113
    %v115 = vrot.slane %v102, %v114
    %119 = vmatprep.subr.mxu0 %v100
    %120 = vmatpush1.msra.mxu0 %v99
    %121 = vmatprep.subr.mxu0 %v97
    %122 = vmatpush1.msra.mxu0 %v96
    %123 = vmatprep.subr.mxu0 %v94
    %124 = vmatpush1.msra.mxu0 %v93
    %125 = vmatprep.subr.mxu0 %v91
    %126 = vmatpush1.msra.mxu0 %v90
    %127 = vmatprep.subr.mxu0 %v88
    %128 = vmatpush1.msra.mxu0 %v87
    %129 = vmatprep.subr.mxu0 %v85
    %130 = vmatpush1.msra.mxu0 %v84
    %131 = vmatprep.subr.mxu0 %v82
    %132 = vmatpush1.msra.mxu0 %v81
    %133 = vmatprep.subr.mxu0 %v79
    %134 = vmatpush1.msra.mxu0 %v78
    %135 = vmatprep.subr.mxu0 %v76
    %136 = vmatpush1.msra.mxu0 %v75
    %137 = vmatprep.subr.mxu0 %v73
    %138 = vmatpush1.msra.mxu0 %v72
    %139 = vmatprep.subr.mxu0 %v70
    %140 = vmatpush1.msra.mxu0 %v69
    %141 = vmatprep.subr.mxu0 %v67
    %142 = vmatpush1.msra.mxu0 %v66
    %143 = vmatprep.subr.mxu0 %v64
    %144 = vmatpush1.msra.mxu0 %v63
    %145 = vmatprep.subr.mxu0 %v61
    %146 = vmatpush1.msra.mxu0 %v60
    %147 = vmatprep.subr.mxu0 %v58
    %148 = vmatpush1.msra.mxu0 %v57
    %149 = vmatprep.subr.mxu0 %v55
    %150 = vmatpush1.msra.mxu0 %v54
    %151 = vmatprep.subr.mxu0 0.0
    %152 = vmatpush2.msra.mxu0 0.0
    %153 = vmatprep.subr.mxu0 0.0
    %154 = vmatpush2.msra.mxu0 0.0
    %155 = vmatprep.subr.mxu0 0.0
    %156 = vmatpush2.msra.mxu0 0.0
    %157 = vmatprep.subr.mxu0 0.0
    %158 = vmatpush2.msra.mxu0 0.0
    %159 = vmatprep.subr.mxu0 0.0
    %160 = vmatpush2.msra.mxu0 0.0
    %161 = vmatprep.subr.mxu0 0.0
    %162 = vmatpush2.msra.mxu0 0.0
    %163 = vmatprep.subr.mxu0 0.0
    %164 = vmatpush2.msra.mxu0 0.0
    %165 = vmatprep.subr.mxu0 0.0
    %166 = vmatpush2.msra.mxu0 0.0
    %167 = vmatprep.subr.mxu0 0.0
    %168 = vmatpush2.msra.mxu0 0.0
    %169 = vmatprep.subr.mxu0 0.0
    %170 = vmatpush2.msra.mxu0 0.0
    %171 = vmatprep.subr.mxu0 0.0
    %172 = vmatpush2.msra.mxu0 0.0
    %173 = vmatprep.subr.mxu0 0.0
    %174 = vmatpush2.msra.mxu0 0.0
    %175 = vmatprep.subr.mxu0 0.0
    %176 = vmatpush2.msra.mxu0 0.0
    %177 = vmatprep.subr.mxu0 0.0
    %178 = vmatpush2.msra.mxu0 0.0
    %179 = vmatprep.subr.mxu0 0.0
    %180 = vmatpush2.msra.mxu0 0.0
    %181 = vmatprep.subr.mxu0 0.0
    %182 = vmatpush2.msra.mxu0 0.0
    %183 = vmatprep.mubr.f32.mxu0 0.0
    %184 = vmatmul.mubr.f32.gmra.mxu0 %v38
    %v185 = vpop.f32.mrf.mxu0
    %v186 = vadd.f32 %v107, %v185
    %v187 = vpop.f32.mrf.mxu0
    %v188 = vadd.f32 %v111, %v187
    %189 = vmatprep.mubr.f32.mxu0 0.0
    %190 = vmatmul.mubr.f32.gmra.mxu0 %v39
    %v191 = vpop.f32.mrf.mxu0
    %v192 = vadd.f32 %v107, %v191
    %v193 = vpop.f32.mrf.mxu0
    %v194 = vadd.f32 %v111, %v193
    %195 = vmatprep.mubr.f32.mxu0 0.0
    %196 = vmatmul.mubr.f32.gmra.mxu0 %v40
    %v197 = vpop.f32.mrf.mxu0
    %v198 = vadd.f32 %v107, %v197
    %v199 = vpop.f32.mrf.mxu0
    %v200 = vadd.f32 %v111, %v199
    %201 = vmatprep.mubr.f32.mxu0 0.0
    %202 = vmatmul.mubr.f32.gmra.mxu0 %v41
    %v203 = vpop.f32.mrf.mxu0
    %v204 = vadd.f32 %v107, %v203
    %v205 = vpop.f32.mrf.mxu0
    %v206 = vadd.f32 %v111, %v205
    %207 = vmatprep.mubr.f32.mxu0 0.0
    %208 = vmatmul.mubr.f32.gmra.mxu0 %v42
    %v209 = vpop.f32.mrf.mxu0
    %v210 = vadd.f32 %v107, %v209
    %v211 = vpop.f32.mrf.mxu0
    %v212 = vadd.f32 %v111, %v211
    %213 = vmatprep.mubr.f32.mxu0 0.0
    %214 = vmatmul.mubr.f32.gmra.mxu0 %v43
    %v215 = vpop.f32.mrf.mxu0
    %v216 = vadd.f32 %v107, %v215
    %v217 = vpop.f32.mrf.mxu0
    %v218 = vadd.f32 %v111, %v217
    %219 = vmatprep.mubr.f32.mxu0 0.0
    %220 = vmatmul.mubr.f32.gmra.mxu0 %v44
    %v221 = vpop.f32.mrf.mxu0
    %v222 = vadd.f32 %v107, %v221
    %v223 = vpop.f32.mrf.mxu0
    %v224 = vadd.f32 %v111, %v223
    %225 = vmatprep.mubr.f32.mxu0 0.0
    %226 = vmatmul.mubr.f32.gmra.mxu0 %v45
    %v227 = vpop.f32.mrf.mxu0
    %v228 = vadd.f32 %v107, %v227
    %v229 = vpop.f32.mrf.mxu0
    %v230 = vadd.f32 %v111, %v229
    %231 = vmatprep.mubr.f32.mxu0 0.0
    %232 = vmatmul.mubr.f32.gmra.mxu0 %v46
    %v233 = vpop.f32.mrf.mxu0
    %v234 = vadd.f32 %v107, %v233
    %v235 = vpop.f32.mrf.mxu0
    %v236 = vadd.f32 %v111, %v235
    %237 = vmatprep.mubr.f32.mxu0 0.0
    %238 = vmatmul.mubr.f32.gmra.mxu0 %v47
    %v239 = vpop.f32.mrf.mxu0
    %v240 = vadd.f32 %v107, %v239
    %v241 = vpop.f32.mrf.mxu0
    %v242 = vadd.f32 %v111, %v241
    %243 = vmatprep.mubr.f32.mxu0 0.0
    %244 = vmatmul.mubr.f32.gmra.mxu0 %v48
    %v245 = vpop.f32.mrf.mxu0
    %v246 = vadd.f32 %v107, %v245
    %v247 = vpop.f32.mrf.mxu0
    %v248 = vadd.f32 %v111, %v247
    %249 = vmatprep.mubr.f32.mxu0 0.0
    %250 = vmatmul.mubr.f32.gmra.mxu0 %v49
    %v251 = vpop.f32.mrf.mxu0
    %v252 = vadd.f32 %v107, %v251
    %v253 = vpop.f32.mrf.mxu0
    %v254 = vadd.f32 %v111, %v253
    %255 = vmatprep.mubr.f32.mxu0 0.0
    %256 = vmatmul.mubr.f32.gmra.mxu0 %v50
    %v257 = vpop.f32.mrf.mxu0
    %v258 = vadd.f32 %v107, %v257
    %v259 = vpop.f32.mrf.mxu0
    %v260 = vadd.f32 %v111, %v259
    %261 = vmatprep.mubr.f32.mxu0 0.0
    %262 = vmatmul.mubr.f32.gmra.mxu0 %v51
    %v263 = vpop.f32.mrf.mxu0
    %v264 = vadd.f32 %v107, %v263
    %v265 = vpop.f32.mrf.mxu0
    %v266 = vadd.f32 %v111, %v265
    %267 = vmatprep.mubr.f32.mxu0 0.0
    %268 = vmatmul.mubr.f32.gmra.mxu0 %v52
    %v269 = vpop.f32.mrf.mxu0
    %v270 = vadd.f32 %v107, %v269
    %v271 = vpop.f32.mrf.mxu0
    %v272 = vadd.f32 %v111, %v271
    %273 = vmatprep.mubr.f32.mxu0 0.0
    %274 = vmatmul.mubr.f32.gmra.mxu0 %v53
    %v275 = vpop.f32.mrf.mxu0
    %v276 = vadd.f32 %v107, %v275
    %v277 = vpop.f32.mrf.mxu0
    %v278 = vadd.f32 %v111, %v277
    %279 = vdwg.mxu0
    %280 = vmatprep.subr.mxu0 0.0
    %281 = vmatpush1.msra.mxu0 %v101
    %282 = vmatprep.subr.mxu0 0.0
    %283 = vmatpush1.msra.mxu0 %v98
    %284 = vmatprep.subr.mxu0 0.0
    %285 = vmatpush1.msra.mxu0 %v95
    %286 = vmatprep.subr.mxu0 0.0
    %287 = vmatpush1.msra.mxu0 %v92
    %288 = vmatprep.subr.mxu0 0.0
    %289 = vmatpush1.msra.mxu0 %v89
    %290 = vmatprep.subr.mxu0 0.0
    %291 = vmatpush1.msra.mxu0 %v86
    %292 = vmatprep.subr.mxu0 0.0
    %293 = vmatpush1.msra.mxu0 %v83
    %294 = vmatprep.subr.mxu0 0.0
    %295 = vmatpush1.msra.mxu0 %v80
    %296 = vmatprep.subr.mxu0 0.0
    %297 = vmatpush1.msra.mxu0 %v77
    %298 = vmatprep.subr.mxu0 0.0
    %299 = vmatpush1.msra.mxu0 %v74
    %300 = vmatprep.subr.mxu0 0.0
    %301 = vmatpush1.msra.mxu0 %v71
    %302 = vmatprep.subr.mxu0 0.0
    %303 = vmatpush1.msra.mxu0 %v68
    %304 = vmatprep.subr.mxu0 0.0
    %305 = vmatpush1.msra.mxu0 %v65
    %306 = vmatprep.subr.mxu0 0.0
    %307 = vmatpush1.msra.mxu0 %v62
    %308 = vmatprep.subr.mxu0 0.0
    %309 = vmatpush1.msra.mxu0 %v59
    %310 = vmatprep.subr.mxu0 0.0
    %311 = vmatpush1.msra.mxu0 %v56
    %312 = vmatprep.subr.mxu0 0.0
    %313 = vmatpush2.msra.mxu0 0.0
    %314 = vmatprep.subr.mxu0 0.0
    %315 = vmatpush2.msra.mxu0 0.0
    %316 = vmatprep.subr.mxu0 0.0
    %317 = vmatpush2.msra.mxu0 0.0
    %318 = vmatprep.subr.mxu0 0.0
    %319 = vmatpush2.msra.mxu0 0.0
    %320 = vmatprep.subr.mxu0 0.0
    %321 = vmatpush2.msra.mxu0 0.0
    %322 = vmatprep.subr.mxu0 0.0
    %323 = vmatpush2.msra.mxu0 0.0
    %324 = vmatprep.subr.mxu0 0.0
    %325 = vmatpush2.msra.mxu0 0.0
    %326 = vmatprep.subr.mxu0 0.0
    %327 = vmatpush2.msra.mxu0 0.0
    %328 = vmatprep.subr.mxu0 0.0
    %329 = vmatpush2.msra.mxu0 0.0
    %330 = vmatprep.subr.mxu0 0.0
    %331 = vmatpush2.msra.mxu0 0.0
    %332 = vmatprep.subr.mxu0 0.0
    %333 = vmatpush2.msra.mxu0 0.0
    %334 = vmatprep.subr.mxu0 0.0
    %335 = vmatpush2.msra.mxu0 0.0
    %336 = vmatprep.subr.mxu0 0.0
    %337 = vmatpush2.msra.mxu0 0.0
    %338 = vmatprep.subr.mxu0 0.0
    %339 = vmatpush2.msra.mxu0 0.0
    %340 = vmatprep.subr.mxu0 0.0
    %341 = vmatpush2.msra.mxu0 0.0
    %342 = vmatprep.subr.mxu0 0.0
    %343 = vmatpush2.msra.mxu0 0.0
    %344 = vmatprep.mubr.f32.mxu0 0.0
    %345 = vmatmul.mubr.f32.gmra.mxu0 %v38
    %v346 = vpop.f32.mrf.mxu0
    %v347 = vadd.f32 %v115, %v346
    %v348 = vpop.f32.mrf.mxu0
    %349 = vmatprep.mubr.f32.mxu0 0.0
    %350 = vmatmul.mubr.f32.gmra.mxu0 %v39
    %v351 = vpop.f32.mrf.mxu0
    %v352 = vadd.f32 %v115, %v351
    %v353 = vpop.f32.mrf.mxu0
    %354 = vmatprep.mubr.f32.mxu0 0.0
    %355 = vmatmul.mubr.f32.gmra.mxu0 %v40
    %v356 = vpop.f32.mrf.mxu0
    %v357 = vadd.f32 %v115, %v356
    %v358 = vpop.f32.mrf.mxu0
    %359 = vmatprep.mubr.f32.mxu0 0.0
    %360 = vmatmul.mubr.f32.gmra.mxu0 %v41
    %v361 = vpop.f32.mrf.mxu0
    %v362 = vadd.f32 %v115, %v361
    %v363 = vpop.f32.mrf.mxu0
    %364 = vmatprep.mubr.f32.mxu0 0.0
    %365 = vmatmul.mubr.f32.gmra.mxu0 %v42
    %v366 = vpop.f32.mrf.mxu0
    %v367 = vadd.f32 %v115, %v366
    %v368 = vpop.f32.mrf.mxu0
    %369 = vmatprep.mubr.f32.mxu0 0.0
    %370 = vmatmul.mubr.f32.gmra.mxu0 %v43
    %v371 = vpop.f32.mrf.mxu0
    %v372 = vadd.f32 %v115, %v371
    %v373 = vpop.f32.mrf.mxu0
    %374 = vmatprep.mubr.f32.mxu0 0.0
    %375 = vmatmul.mubr.f32.gmra.mxu0 %v44
    %v376 = vpop.f32.mrf.mxu0
    %v377 = vadd.f32 %v115, %v376
    %v378 = vpop.f32.mrf.mxu0
    %379 = vmatprep.mubr.f32.mxu0 0.0
    %380 = vmatmul.mubr.f32.gmra.mxu0 %v45
    %v381 = vpop.f32.mrf.mxu0
    %v382 = vadd.f32 %v115, %v381
    %v383 = vpop.f32.mrf.mxu0
    %384 = vmatprep.mubr.f32.mxu0 0.0
    %385 = vmatmul.mubr.f32.gmra.mxu0 %v46
    %v386 = vpop.f32.mrf.mxu0
    %v387 = vadd.f32 %v115, %v386
    %v388 = vpop.f32.mrf.mxu0
    %389 = vmatprep.mubr.f32.mxu0 0.0
    %390 = vmatmul.mubr.f32.gmra.mxu0 %v47
    %v391 = vpop.f32.mrf.mxu0
    %v392 = vadd.f32 %v115, %v391
    %v393 = vpop.f32.mrf.mxu0
    %394 = vmatprep.mubr.f32.mxu0 0.0
    %395 = vmatmul.mubr.f32.gmra.mxu0 %v48
    %v396 = vpop.f32.mrf.mxu0
    %v397 = vadd.f32 %v115, %v396
    %v398 = vpop.f32.mrf.mxu0
    %399 = vmatprep.mubr.f32.mxu0 0.0
    %400 = vmatmul.mubr.f32.gmra.mxu0 %v49
    %v401 = vpop.f32.mrf.mxu0
    %v402 = vadd.f32 %v115, %v401
    %v403 = vpop.f32.mrf.mxu0
    %404 = vmatprep.mubr.f32.mxu0 0.0
    %405 = vmatmul.mubr.f32.gmra.mxu0 %v50
    %v406 = vpop.f32.mrf.mxu0
    %v407 = vadd.f32 %v115, %v406
    %v408 = vpop.f32.mrf.mxu0
    %409 = vmatprep.mubr.f32.mxu0 0.0
    %410 = vmatmul.mubr.f32.gmra.mxu0 %v51
    %v411 = vpop.f32.mrf.mxu0
    %v412 = vadd.f32 %v115, %v411
    %v413 = vpop.f32.mrf.mxu0
    %414 = vmatprep.mubr.f32.mxu0 0.0
    %415 = vmatmul.mubr.f32.gmra.mxu0 %v52
    %v416 = vpop.f32.mrf.mxu0
    %v417 = vadd.f32 %v115, %v416
    %v418 = vpop.f32.mrf.mxu0
    %419 = vmatprep.mubr.f32.mxu0 0.0
    %420 = vmatmul.mubr.f32.gmra.mxu0 %v53
    %v421 = vpop.f32.mrf.mxu0
    %v422 = vadd.f32 %v115, %v421
    %v423 = vpop.f32.mrf.mxu0
    %424 = vdwg.mxu0
    %425 = vst [vmem:[#allocation3] sm:$0xff] %v186
    %426 = vst [vmem:[#allocation3 + $0x8] sm:$0xff] %v188
    %427 = vst [vmem:[#allocation3 + $0x10] sm:$0xff] %v347
    %428 = vst [vmem:[#allocation3 + $0x18] sm:$0xff] %v192
    %429 = vst [vmem:[#allocation3 + $0x20] sm:$0xff] %v194
    %430 = vst [vmem:[#allocation3 + $0x28] sm:$0xff] %v352
    %431 = vst [vmem:[#allocation3 + $0x30] sm:$0xff] %v198
    %432 = vst [vmem:[#allocation3 + $0x38] sm:$0xff] %v200
    %433 = vst [vmem:[#allocation3 + $0x40] sm:$0xff] %v357
    %434 = vst [vmem:[#allocation3 + $0x48] sm:$0xff] %v204
    %435 = vst [vmem:[#allocation3 + $0x50] sm:$0xff] %v206
    %436 = vst [vmem:[#allocation3 + $0x58] sm:$0xff] %v362
    %437 = vst [vmem:[#allocation3 + $0x60] sm:$0xff] %v210
    %438 = vst [vmem:[#allocation3 + $0x68] sm:$0xff] %v212
    %439 = vst [vmem:[#allocation3 + $0x70] sm:$0xff] %v367
    %440 = vst [vmem:[#allocation3 + $0x78] sm:$0xff] %v216
    %441 = vst [vmem:[#allocation3 + $0x80] sm:$0xff] %v218
    %442 = vst [vmem:[#allocation3 + $0x88] sm:$0xff] %v372
    %443 = vst [vmem:[#allocation3 + $0x90] sm:$0xff] %v222
    %444 = vst [vmem:[#allocation3 + $0x98] sm:$0xff] %v224
    %445 = vst [vmem:[#allocation3 + $0xa0] sm:$0xff] %v377
    %446 = vst [vmem:[#allocation3 + $0xa8] sm:$0xff] %v228
    %447 = vst [vmem:[#allocation3 + $0xb0] sm:$0xff] %v230
    %448 = vst [vmem:[#allocation3 + $0xb8] sm:$0xff] %v382
    %449 = vst [vmem:[#allocation3 + $0xc0] sm:$0xff] %v234
    %450 = vst [vmem:[#allocation3 + $0xc8] sm:$0xff] %v236
    %451 = vst [vmem:[#allocation3 + $0xd0] sm:$0xff] %v387
    %452 = vst [vmem:[#allocation3 + $0xd8] sm:$0xff] %v240
    %453 = vst [vmem:[#allocation3 + $0xe0] sm:$0xff] %v242
    %454 = vst [vmem:[#allocation3 + $0xe8] sm:$0xff] %v392
    %455 = vst [vmem:[#allocation3 + $0xf0] sm:$0xff] %v246
    %456 = vst [vmem:[#allocation3 + $0xf8] sm:$0xff] %v248
    %457 = vst [vmem:[#allocation3 + $0x100] sm:$0xff] %v397
    %458 = vst [vmem:[#allocation3 + $0x108] sm:$0xff] %v252
    %459 = vst [vmem:[#allocation3 + $0x110] sm:$0xff] %v254
    %460 = vst [vmem:[#allocation3 + $0x118] sm:$0xff] %v402
    %461 = vst [vmem:[#allocation3 + $0x120] sm:$0xff] %v258
    %462 = vst [vmem:[#allocation3 + $0x128] sm:$0xff] %v260
    %463 = vst [vmem:[#allocation3 + $0x130] sm:$0xff] %v407
    %464 = vst [vmem:[#allocation3 + $0x138] sm:$0xff] %v264
    %465 = vst [vmem:[#allocation3 + $0x140] sm:$0xff] %v266
    %466 = vst [vmem:[#allocation3 + $0x148] sm:$0xff] %v412
    %467 = vst [vmem:[#allocation3 + $0x150] sm:$0xff] %v270
    %468 = vst [vmem:[#allocation3 + $0x158] sm:$0xff] %v272
    %469 = vst [vmem:[#allocation3 + $0x160] sm:$0xff] %v417
    %470 = vst [vmem:[#allocation3 + $0x168] sm:$0xff] %v276
    %471 = vst [vmem:[#allocation3 + $0x170] sm:$0xff] %v278
    %472 = vst [vmem:[#allocation3 + $0x178] sm:$0xff] %v422
    %v473 = vld [vmem:[%s1] sm:$0xff]
    %v474 = vld [vmem:[%s5] sm:$0xff]
    %v475 = vld [vmem:[%s5 + $0x8] sm:$0xff]
    %v476 = vld [vmem:[%s5 + $0x10] sm:$0xff]
    %v477 = vld [vmem:[%s5 + $0x18] sm:$0xff]
    %v478 = vld [vmem:[%s5 + $0x20] sm:$0xff]
    %v479 = vld [vmem:[%s5 + $0x28] sm:$0xff]
    %v480 = vld [vmem:[%s5 + $0x30] sm:$0xff]
    %v481 = vld [vmem:[%s5 + $0x38] sm:$0xff]
    %v482 = vld [vmem:[%s5 + $0x40] sm:$0xff]
    %v483 = vld [vmem:[%s5 + $0x48] sm:$0xff]
    %v484 = vld [vmem:[%s5 + $0x50] sm:$0xff]
    %v485 = vld [vmem:[%s5 + $0x58] sm:$0xff]
    %v486 = vld [vmem:[%s5 + $0x60] sm:$0xff]
    %v487 = vld [vmem:[%s5 + $0x68] sm:$0xff]
    %v488 = vld [vmem:[%s5 + $0x70] sm:$0xff]
    %v489 = vld [vmem:[%s5 + $0x78] sm:$0xff]
    %v490 = vld [vmem:[%s5 + $0x80] sm:$0xff]
    %v491 = vld [vmem:[%s5 + $0x88] sm:$0xff]
    %v492 = vld [vmem:[%s5 + $0x90] sm:$0xff]
    %v493 = vld [vmem:[%s5 + $0x98] sm:$0xff]
    %v494 = vld [vmem:[%s5 + $0xa0] sm:$0xff]
    %v495 = vld [vmem:[%s5 + $0xa8] sm:$0xff]
    %v496 = vld [vmem:[%s5 + $0xb0] sm:$0xff]
    %v497 = vld [vmem:[%s5 + $0xb8] sm:$0xff]
    %v498 = vld [vmem:[%s5 + $0xc0] sm:$0xff]
    %v499 = vld [vmem:[%s5 + $0xc8] sm:$0xff]
    %v500 = vld [vmem:[%s5 + $0xd0] sm:$0xff]
    %v501 = vld [vmem:[%s5 + $0xd8] sm:$0xff]
    %v502 = vld [vmem:[%s5 + $0xe0] sm:$0xff]
    %v503 = vld [vmem:[%s5 + $0xe8] sm:$0xff]
    %v504 = vld [vmem:[%s5 + $0xf0] sm:$0xff]
    %v505 = vld [vmem:[%s5 + $0xf8] sm:$0xff]
    %v506 = vld [vmem:[%s5 + $0x100] sm:$0xff]
    %v507 = vld [vmem:[%s5 + $0x108] sm:$0xff]
    %v508 = vld [vmem:[%s5 + $0x110] sm:$0xff]
    %v509 = vld [vmem:[%s5 + $0x118] sm:$0xff]
    %v510 = vld [vmem:[%s5 + $0x120] sm:$0xff]
    %v511 = vld [vmem:[%s5 + $0x128] sm:$0xff]
    %v512 = vld [vmem:[%s5 + $0x130] sm:$0xff]
    %v513 = vld [vmem:[%s5 + $0x138] sm:$0xff]
    %v514 = vld [vmem:[%s5 + $0x140] sm:$0xff]
    %v515 = vld [vmem:[%s5 + $0x148] sm:$0xff]
    %v516 = vld [vmem:[%s5 + $0x150] sm:$0xff]
    %v517 = vld [vmem:[%s5 + $0x158] sm:$0xff]
    %v518 = vld [vmem:[%s5 + $0x160] sm:$0xff]
    %v519 = vld [vmem:[%s5 + $0x168] sm:$0xff]
    %v520 = vld [vmem:[%s5 + $0x170] sm:$0xff]
    %v521 = vld [vmem:[%s5 + $0x178] sm:$0xff]
    %v522 = vld [vmem:[%s6] sm:$0x1]
    %v523 = vld [vmem:[#allocation2] sm:$0xff]
    %v524 = vld [vmem:[#allocation3] sm:$0xff]
    %v525 = vld [vmem:[#allocation3 + $0x8] sm:$0xff]
    %v526 = vld [vmem:[#allocation3 + $0x10] sm:$0xff]
    %527 = vmatprep.subr.mxu0 %v520
    %528 = vmatpush1.msra.mxu0 %v519
    %529 = vmatprep.subr.mxu0 %v517
    %530 = vmatpush1.msra.mxu0 %v516
    %531 = vmatprep.subr.mxu0 %v514
    %532 = vmatpush1.msra.mxu0 %v513
    %533 = vmatprep.subr.mxu0 %v511
    %534 = vmatpush1.msra.mxu0 %v510
    %535 = vmatprep.subr.mxu0 %v508
    %536 = vmatpush1.msra.mxu0 %v507
    %537 = vmatprep.subr.mxu0 %v505
    %538 = vmatpush1.msra.mxu0 %v504
    %539 = vmatprep.subr.mxu0 %v502
    %540 = vmatpush1.msra.mxu0 %v501
    %541 = vmatprep.subr.mxu0 %v499
    %542 = vmatpush1.msra.mxu0 %v498
    %543 = vmatprep.subr.mxu0 %v496
    %544 = vmatpush1.msra.mxu0 %v495
    %545 = vmatprep.subr.mxu0 %v493
    %546 = vmatpush1.msra.mxu0 %v492
    %547 = vmatprep.subr.mxu0 %v490
    %548 = vmatpush1.msra.mxu0 %v489
    %549 = vmatprep.subr.mxu0 %v487
    %550 = vmatpush1.msra.mxu0 %v486
    %551 = vmatprep.subr.mxu0 %v484
    %552 = vmatpush1.msra.mxu0 %v483
    %553 = vmatprep.subr.mxu0 %v481
    %554 = vmatpush1.msra.mxu0 %v480
    %555 = vmatprep.subr.mxu0 %v478
    %556 = vmatpush1.msra.mxu0 %v477
    %557 = vmatprep.subr.mxu0 %v475
    %558 = vmatpush1.msra.mxu0 %v474
    %559 = vmatprep.subr.mxu0 0.0
    %560 = vmatpush2.msra.mxu0 0.0
    %561 = vmatprep.subr.mxu0 0.0
    %562 = vmatpush2.msra.mxu0 0.0
    %563 = vmatprep.subr.mxu0 0.0
    %564 = vmatpush2.msra.mxu0 0.0
    %565 = vmatprep.subr.mxu0 0.0
    %566 = vmatpush2.msra.mxu0 0.0
    %567 = vmatprep.subr.mxu0 0.0
    %568 = vmatpush2.msra.mxu0 0.0
    %569 = vmatprep.subr.mxu0 0.0
    %570 = vmatpush2.msra.mxu0 0.0
    %571 = vmatprep.subr.mxu0 0.0
    %572 = vmatpush2.msra.mxu0 0.0
    %573 = vmatprep.subr.mxu0 0.0
    %574 = vmatpush2.msra.mxu0 0.0
    %575 = vmatprep.subr.mxu0 0.0
    %576 = vmatpush2.msra.mxu0 0.0
    %577 = vmatprep.subr.mxu0 0.0
    %578 = vmatpush2.msra.mxu0 0.0
    %579 = vmatprep.subr.mxu0 0.0
    %580 = vmatpush2.msra.mxu0 0.0
    %581 = vmatprep.subr.mxu0 0.0
    %582 = vmatpush2.msra.mxu0 0.0
    %583 = vmatprep.subr.mxu0 0.0
    %584 = vmatpush2.msra.mxu0 0.0
    %585 = vmatprep.subr.mxu0 0.0
    %586 = vmatpush2.msra.mxu0 0.0
    %587 = vmatprep.subr.mxu0 0.0
    %588 = vmatpush2.msra.mxu0 0.0
    %589 = vmatprep.subr.mxu0 0.0
    %590 = vmatpush2.msra.mxu0 0.0
    %591 = vmatprep.mubr.f32.mxu0 0.0
    %592 = vmatmul.mubr.f32.gmra.mxu0 %v523
    %v593 = vpop.f32.mrf.mxu0
    %v594 = vadd.f32 0.0, %v593
    %v595 = vpop.f32.mrf.mxu0
    %v596 = vadd.f32 0.0, %v595
    %597 = vdwg.mxu0
    %598 = vmatprep.subr.mxu0 0.0
    %599 = vmatpush1.msra.mxu0 %v521
    %600 = vmatprep.subr.mxu0 0.0
    %601 = vmatpush1.msra.mxu0 %v518
    %602 = vmatprep.subr.mxu0 0.0
    %603 = vmatpush1.msra.mxu0 %v515
    %604 = vmatprep.subr.mxu0 0.0
    %605 = vmatpush1.msra.mxu0 %v512
    %606 = vmatprep.subr.mxu0 0.0
    %607 = vmatpush1.msra.mxu0 %v509
    %608 = vmatprep.subr.mxu0 0.0
    %609 = vmatpush1.msra.mxu0 %v506
    %610 = vmatprep.subr.mxu0 0.0
    %611 = vmatpush1.msra.mxu0 %v503
    %612 = vmatprep.subr.mxu0 0.0
    %613 = vmatpush1.msra.mxu0 %v500
    %614 = vmatprep.subr.mxu0 0.0
    %615 = vmatpush1.msra.mxu0 %v497
    %616 = vmatprep.subr.mxu0 0.0
    %617 = vmatpush1.msra.mxu0 %v494
    %618 = vmatprep.subr.mxu0 0.0
    %619 = vmatpush1.msra.mxu0 %v491
    %620 = vmatprep.subr.mxu0 0.0
    %621 = vmatpush1.msra.mxu0 %v488
    %622 = vmatprep.subr.mxu0 0.0
    %623 = vmatpush1.msra.mxu0 %v485
    %624 = vmatprep.subr.mxu0 0.0
    %625 = vmatpush1.msra.mxu0 %v482
    %626 = vmatprep.subr.mxu0 0.0
    %627 = vmatpush1.msra.mxu0 %v479
    %628 = vmatprep.subr.mxu0 0.0
    %629 = vmatpush1.msra.mxu0 %v476
    %630 = vmatprep.subr.mxu0 0.0
    %631 = vmatpush2.msra.mxu0 0.0
    %632 = vmatprep.subr.mxu0 0.0
    %633 = vmatpush2.msra.mxu0 0.0
    %634 = vmatprep.subr.mxu0 0.0
    %635 = vmatpush2.msra.mxu0 0.0
    %636 = vmatprep.subr.mxu0 0.0
    %637 = vmatpush2.msra.mxu0 0.0
    %638 = vmatprep.subr.mxu0 0.0
    %639 = vmatpush2.msra.mxu0 0.0
    %640 = vmatprep.subr.mxu0 0.0
    %641 = vmatpush2.msra.mxu0 0.0
    %642 = vmatprep.subr.mxu0 0.0
    %643 = vmatpush2.msra.mxu0 0.0
    %644 = vmatprep.subr.mxu0 0.0
    %645 = vmatpush2.msra.mxu0 0.0
    %646 = vmatprep.subr.mxu0 0.0
    %647 = vmatpush2.msra.mxu0 0.0
    %648 = vmatprep.subr.mxu0 0.0
    %649 = vmatpush2.msra.mxu0 0.0
    %650 = vmatprep.subr.mxu0 0.0
    %651 = vmatpush2.msra.mxu0 0.0
    %652 = vmatprep.subr.mxu0 0.0
    %653 = vmatpush2.msra.mxu0 0.0
    %654 = vmatprep.subr.mxu0 0.0
    %655 = vmatpush2.msra.mxu0 0.0
    %656 = vmatprep.subr.mxu0 0.0
    %657 = vmatpush2.msra.mxu0 0.0
    %658 = vmatprep.subr.mxu0 0.0
    %659 = vmatpush2.msra.mxu0 0.0
    %660 = vmatprep.subr.mxu0 0.0
    %661 = vmatpush2.msra.mxu0 0.0
    %662 = vmatprep.mubr.f32.mxu0 0.0
    %663 = vmatmul.mubr.f32.gmra.mxu0 %v523
    %v664 = vpop.f32.mrf.mxu0
    %v665 = vadd.f32 0.0, %v664
    %v666 = vpop.f32.mrf.mxu0
    %667 = vdwg.mxu0
    %v668 = vadd.f32 %v524, %v594
    %v669 = vxor.u32 %v668, 2147483648
    %v670 = vmul.f32 %v669, 1.442695
    %v671 = vpow.pop %v670
    %v672 = vadd.f32 %v671, 1.0
    %v673 = vrcp.pop %v672
    %v674 = vmul.f32 1.0, %v673
    %v675 = vadd.f32 %v525, %v596
    %v676 = vxor.u32 %v675, 2147483648
    %v677 = vmul.f32 %v676, 1.442695
    %v678 = vpow.pop %v677
    %v679 = vadd.f32 %v678, 1.0
    %v680 = vrcp.pop %v679
    %v681 = vmul.f32 1.0, %v680
    %v683 = vlaneseq
    %v684 = vshrl.u32 %v683, 7
    %v685 = vsub.s32 0, %v684
    %v686 = vrot.slane %v522, %v685
    %v688 = vadd.f32 %v665, %v686
    %v689 = vmul.f32 %v674, %v688
    %v690 = vadd.f32 %v526, %v689
    %v691 = vtanh.pop %v690
    %v692 = vsub.f32 1.0, %v681
    %v693 = vmul.f32 %v692, %v691
    %v694 = vmul.f32 %v681, %v523
    %v695 = vadd.f32 %v693, %v694
    %v696 = vstv %s27
    %vm697 = vcmp.lt.s32.totalorder %v696, %v473
    %v698 = vsel %vm697, 1, 0
    %699 = vset.pattern.permute.xlu0 0
    %700 = vperm.xlu0 %699, %v698
    %v701 = vpop.permute.xlu0 %700
    %vm702 = vcmp.eq.s32.totalorder %v701, 1
    %v703 = vsel %vm702, %v695, 0.0
    %704 = vst [vmem:[%s7] sm:$0xff] %v703
    %v705 = vsel %vm702, %v695, %v523
    %s706 = sadd.s32 %s27, 1
    %s707 = scalar_lea.vmem [#allocation3], 24
    %v708 = vld [vmem:[%s707] sm:$0xff]
    %v709 = vld [vmem:[%s707 + $0x8] sm:$0xff]
    %v710 = vld [vmem:[%s707 + $0x10] sm:$0xff]
    %711 = vmatprep.subr.mxu0 %v520
    %712 = vmatpush1.msra.mxu0 %v519
    %713 = vmatprep.subr.mxu0 %v517
    %714 = vmatpush1.msra.mxu0 %v516
    %715 = vmatprep.subr.mxu0 %v514
    %716 = vmatpush1.msra.mxu0 %v513
    %717 = vmatprep.subr.mxu0 %v511
    %718 = vmatpush1.msra.mxu0 %v510
    %719 = vmatprep.subr.mxu0 %v508
    %720 = vmatpush1.msra.mxu0 %v507
    %721 = vmatprep.subr.mxu0 %v505
    %722 = vmatpush1.msra.mxu0 %v504
    %723 = vmatprep.subr.mxu0 %v502
    %724 = vmatpush1.msra.mxu0 %v501
    %725 = vmatprep.subr.mxu0 %v499
    %726 = vmatpush1.msra.mxu0 %v498
    %727 = vmatprep.subr.mxu0 %v496
    %728 = vmatpush1.msra.mxu0 %v495
    %729 = vmatprep.subr.mxu0 %v493
    %730 = vmatpush1.msra.mxu0 %v492
    %731 = vmatprep.subr.mxu0 %v490
    %732 = vmatpush1.msra.mxu0 %v489
    %733 = vmatprep.subr.mxu0 %v487
    %734 = vmatpush1.msra.mxu0 %v486
    %735 = vmatprep.subr.mxu0 %v484
    %736 = vmatpush1.msra.mxu0 %v483
    %737 = vmatprep.subr.mxu0 %v481
    %738 = vmatpush1.msra.mxu0 %v480
    %739 = vmatprep.subr.mxu0 %v478
    %740 = vmatpush1.msra.mxu0 %v477
    %741 = vmatprep.subr.mxu0 %v475
    %742 = vmatpush1.msra.mxu0 %v474
    %743 = vmatprep.subr.mxu0 0.0
    %744 = vmatpush2.msra.mxu0 0.0
    %745 = vmatprep.subr.mxu0 0.0
    %746 = vmatpush2.msra.mxu0 0.0
    %747 = vmatprep.subr.mxu0 0.0
    %748 = vmatpush2.msra.mxu0 0.0
    %749 = vmatprep.subr.mxu0 0.0
    %750 = vmatpush2.msra.mxu0 0.0
    %751 = vmatprep.subr.mxu0 0.0
    %752 = vmatpush2.msra.mxu0 0.0
    %753 = vmatprep.subr.mxu0 0.0
    %754 = vmatpush2.msra.mxu0 0.0
    %755 = vmatprep.subr.mxu0 0.0
    %756 = vmatpush2.msra.mxu0 0.0
    %757 = vmatprep.subr.mxu0 0.0
    %758 = vmatpush2.msra.mxu0 0.0
    %759 = vmatprep.subr.mxu0 0.0
    %760 = vmatpush2.msra.mxu0 0.0
    %761 = vmatprep.subr.mxu0 0.0
    %762 = vmatpush2.msra.mxu0 0.0
    %763 = vmatprep.subr.mxu0 0.0
    %764 = vmatpush2.msra.mxu0 0.0
    %765 = vmatprep.subr.mxu0 0.0
    %766 = vmatpush2.msra.mxu0 0.0
    %767 = vmatprep.subr.mxu0 0.0
    %768 = vmatpush2.msra.mxu0 0.0
    %769 = vmatprep.subr.mxu0 0.0
    %770 = vmatpush2.msra.mxu0 0.0
    %771 = vmatprep.subr.mxu0 0.0
    %772 = vmatpush2.msra.mxu0 0.0
    %773 = vmatprep.subr.mxu0 0.0
    %774 = vmatpush2.msra.mxu0 0.0
    %775 = vmatprep.mubr.f32.mxu0 0.0
    %776 = vmatmul.mubr.f32.gmra.mxu0 %v705
    %v777 = vpop.f32.mrf.mxu0
    %v778 = vadd.f32 0.0, %v777
    %v779 = vpop.f32.mrf.mxu0
    %v780 = vadd.f32 0.0, %v779
    %781 = vdwg.mxu0
    %782 = vmatprep.subr.mxu0 0.0
    %783 = vmatpush1.msra.mxu0 %v521
    %784 = vmatprep.subr.mxu0 0.0
    %785 = vmatpush1.msra.mxu0 %v518
    %786 = vmatprep.subr.mxu0 0.0
    %787 = vmatpush1.msra.mxu0 %v515
    %788 = vmatprep.subr.mxu0 0.0
    %789 = vmatpush1.msra.mxu0 %v512
    %790 = vmatprep.subr.mxu0 0.0
    %791 = vmatpush1.msra.mxu0 %v509
    %792 = vmatprep.subr.mxu0 0.0
    %793 = vmatpush1.msra.mxu0 %v506
    %794 = vmatprep.subr.mxu0 0.0
    %795 = vmatpush1.msra.mxu0 %v503
    %796 = vmatprep.subr.mxu0 0.0
    %797 = vmatpush1.msra.mxu0 %v500
    %798 = vmatprep.subr.mxu0 0.0
    %799 = vmatpush1.msra.mxu0 %v497
    %800 = vmatprep.subr.mxu0 0.0
    %801 = vmatpush1.msra.mxu0 %v494
    %802 = vmatprep.subr.mxu0 0.0
    %803 = vmatpush1.msra.mxu0 %v491
    %804 = vmatprep.subr.mxu0 0.0
    %805 = vmatpush1.msra.mxu0 %v488
    %806 = vmatprep.subr.mxu0 0.0
    %807 = vmatpush1.msra.mxu0 %v485
    %808 = vmatprep.subr.mxu0 0.0
    %809 = vmatpush1.msra.mxu0 %v482
    %810 = vmatprep.subr.mxu0 0.0
    %811 = vmatpush1.msra.mxu0 %v479
    %812 = vmatprep.subr.mxu0 0.0
    %813 = vmatpush1.msra.mxu0 %v476
    %814 = vmatprep.subr.mxu0 0.0
    %815 = vmatpush2.msra.mxu0 0.0
    %816 = vmatprep.subr.mxu0 0.0
    %817 = vmatpush2.msra.mxu0 0.0
    %818 = vmatprep.subr.mxu0 0.0
    %819 = vmatpush2.msra.mxu0 0.0
    %820 = vmatprep.subr.mxu0 0.0
    %821 = vmatpush2.msra.mxu0 0.0
    %822 = vmatprep.subr.mxu0 0.0
    %823 = vmatpush2.msra.mxu0 0.0
    %824 = vmatprep.subr.mxu0 0.0
    %825 = vmatpush2.msra.mxu0 0.0
    %826 = vmatprep.subr.mxu0 0.0
    %827 = vmatpush2.msra.mxu0 0.0
    %828 = vmatprep.subr.mxu0 0.0
    %829 = vmatpush2.msra.mxu0 0.0
    %830 = vmatprep.subr.mxu0 0.0
    %831 = vmatpush2.msra.mxu0 0.0
    %832 = vmatprep.subr.mxu0 0.0
    %833 = vmatpush2.msra.mxu0 0.0
    %834 = vmatprep.subr.mxu0 0.0
    %835 = vmatpush2.msra.mxu0 0.0
    %836 = vmatprep.subr.mxu0 0.0
    %837 = vmatpush2.msra.mxu0 0.0
    %838 = vmatprep.subr.mxu0 0.0
    %839 = vmatpush2.msra.mxu0 0.0
    %840 = vmatprep.subr.mxu0 0.0
    %841 = vmatpush2.msra.mxu0 0.0
    %842 = vmatprep.subr.mxu0 0.0
    %843 = vmatpush2.msra.mxu0 0.0
    %844 = vmatprep.subr.mxu0 0.0
    %845 = vmatpush2.msra.mxu0 0.0
    %846 = vmatprep.mubr.f32.mxu0 0.0
    %847 = vmatmul.mubr.f32.gmra.mxu0 %v705
    %v848 = vpop.f32.mrf.mxu0
    %v849 = vadd.f32 0.0, %v848
    %v850 = vpop.f32.mrf.mxu0
    %851 = vdwg.mxu0
    %v852 = vadd.f32 %v708, %v778
    %v853 = vxor.u32 %v852, 2147483648
    %v854 = vmul.f32 %v853, 1.442695
    %v855 = vpow.pop %v854
    %v856 = vadd.f32 %v855, 1.0
    %v857 = vrcp.pop %v856
    %v858 = vmul.f32 1.0, %v857
    %v859 = vadd.f32 %v709, %v780
    %v860 = vxor.u32 %v859, 2147483648
    %v861 = vmul.f32 %v860, 1.442695
    %v862 = vpow.pop %v861
    %v863 = vadd.f32 %v862, 1.0
    %v864 = vrcp.pop %v863
    %v865 = vmul.f32 1.0, %v864
    %v866 = vadd.f32 %v849, %v686
    %v867 = vmul.f32 %v858, %v866
    %v868 = vadd.f32 %v710, %v867
    %v869 = vtanh.pop %v868
    %v870 = vsub.f32 1.0, %v865
    %v871 = vmul.f32 %v870, %v869
    %v872 = vmul.f32 %v865, %v705
    %v873 = vadd.f32 %v871, %v872
    %v874 = vstv %s706
    %vm875 = vcmp.lt.s32.totalorder %v874, %v473
    %v876 = vsel %vm875, 1, 0
    %877 = vset.pattern.permute.xlu0 0
    %878 = vperm.xlu0 %877, %v876
    %v879 = vpop.permute.xlu0 %878
    %vm880 = vcmp.eq.s32.totalorder %v879, 1
    %v881 = vsel %vm880, %v873, 0.0
    %s882 = scalar_lea.vmem %s7, 8
    %883 = vst [vmem:[%s882] sm:$0xff] %v881
    %v884 = vsel %vm880, %v873, %v705
    %s885 = sadd.s32 %s27, 2
    %s886 = scalar_lea.vmem [#allocation3], 48
    %v887 = vld [vmem:[%s886] sm:$0xff]
    %v888 = vld [vmem:[%s886 + $0x8] sm:$0xff]
    %v889 = vld [vmem:[%s886 + $0x10] sm:$0xff]
    %890 = vmatprep.subr.mxu0 %v520
    %891 = vmatpush1.msra.mxu0 %v519
    %892 = vmatprep.subr.mxu0 %v517
    %893 = vmatpush1.msra.mxu0 %v516
    %894 = vmatprep.subr.mxu0 %v514
    %895 = vmatpush1.msra.mxu0 %v513
    %896 = vmatprep.subr.mxu0 %v511
    %897 = vmatpush1.msra.mxu0 %v510
    %898 = vmatprep.subr.mxu0 %v508
    %899 = vmatpush1.msra.mxu0 %v507
    %900 = vmatprep.subr.mxu0 %v505
    %901 = vmatpush1.msra.mxu0 %v504
    %902 = vmatprep.subr.mxu0 %v502
    %903 = vmatpush1.msra.mxu0 %v501
    %904 = vmatprep.subr.mxu0 %v499
    %905 = vmatpush1.msra.mxu0 %v498
    %906 = vmatprep.subr.mxu0 %v496
    %907 = vmatpush1.msra.mxu0 %v495
    %908 = vmatprep.subr.mxu0 %v493
    %909 = vmatpush1.msra.mxu0 %v492
    %910 = vmatprep.subr.mxu0 %v490
    %911 = vmatpush1.msra.mxu0 %v489
    %912 = vmatprep.subr.mxu0 %v487
    %913 = vmatpush1.msra.mxu0 %v486
    %914 = vmatprep.subr.mxu0 %v484
    %915 = vmatpush1.msra.mxu0 %v483
    %916 = vmatprep.subr.mxu0 %v481
    %917 = vmatpush1.msra.mxu0 %v480
    %918 = vmatprep.subr.mxu0 %v478
    %919 = vmatpush1.msra.mxu0 %v477
    %920 = vmatprep.subr.mxu0 %v475
    %921 = vmatpush1.msra.mxu0 %v474
    %922 = vmatprep.subr.mxu0 0.0
    %923 = vmatpush2.msra.mxu0 0.0
    %924 = vmatprep.subr.mxu0 0.0
    %925 = vmatpush2.msra.mxu0 0.0
    %926 = vmatprep.subr.mxu0 0.0
    %927 = vmatpush2.msra.mxu0 0.0
    %928 = vmatprep.subr.mxu0 0.0
    %929 = vmatpush2.msra.mxu0 0.0
    %930 = vmatprep.subr.mxu0 0.0
    %931 = vmatpush2.msra.mxu0 0.0
    %932 = vmatprep.subr.mxu0 0.0
    %933 = vmatpush2.msra.mxu0 0.0
    %934 = vmatprep.subr.mxu0 0.0
    %935 = vmatpush2.msra.mxu0 0.0
    %936 = vmatprep.subr.mxu0 0.0
    %937 = vmatpush2.msra.mxu0 0.0
    %938 = vmatprep.subr.mxu0 0.0
    %939 = vmatpush2.msra.mxu0 0.0
    %940 = vmatprep.subr.mxu0 0.0
    %941 = vmatpush2.msra.mxu0 0.0
    %942 = vmatprep.subr.mxu0 0.0
    %943 = vmatpush2.msra.mxu0 0.0
    %944 = vmatprep.subr.mxu0 0.0
    %945 = vmatpush2.msra.mxu0 0.0
    %946 = vmatprep.subr.mxu0 0.0
    %947 = vmatpush2.msra.mxu0 0.0
    %948 = vmatprep.subr.mxu0 0.0
    %949 = vmatpush2.msra.mxu0 0.0
    %950 = vmatprep.subr.mxu0 0.0
    %951 = vmatpush2.msra.mxu0 0.0
    %952 = vmatprep.subr.mxu0 0.0
    %953 = vmatpush2.msra.mxu0 0.0
    %954 = vmatprep.mubr.f32.mxu0 0.0
    %955 = vmatmul.mubr.f32.gmra.mxu0 %v884
    %v956 = vpop.f32.mrf.mxu0
    %v957 = vadd.f32 0.0, %v956
    %v958 = vpop.f32.mrf.mxu0
    %v959 = vadd.f32 0.0, %v958
    %960 = vdwg.mxu0
    %961 = vmatprep.subr.mxu0 0.0
    %962 = vmatpush1.msra.mxu0 %v521
    %963 = vmatprep.subr.mxu0 0.0
    %964 = vmatpush1.msra.mxu0 %v518
    %965 = vmatprep.subr.mxu0 0.0
    %966 = vmatpush1.msra.mxu0 %v515
    %967 = vmatprep.subr.mxu0 0.0
    %968 = vmatpush1.msra.mxu0 %v512
    %969 = vmatprep.subr.mxu0 0.0
    %970 = vmatpush1.msra.mxu0 %v509
    %971 = vmatprep.subr.mxu0 0.0
    %972 = vmatpush1.msra.mxu0 %v506
    %973 = vmatprep.subr.mxu0 0.0
    %974 = vmatpush1.msra.mxu0 %v503
    %975 = vmatprep.subr.mxu0 0.0
    %976 = vmatpush1.msra.mxu0 %v500
    %977 = vmatprep.subr.mxu0 0.0
    %978 = vmatpush1.msra.mxu0 %v497
    %979 = vmatprep.subr.mxu0 0.0
    %980 = vmatpush1.msra.mxu0 %v494
    %981 = vmatprep.subr.mxu0 0.0
    %982 = vmatpush1.msra.mxu0 %v491
    %983 = vmatprep.subr.mxu0 0.0
    %984 = vmatpush1.msra.mxu0 %v488
    %985 = vmatprep.subr.mxu0 0.0
    %986 = vmatpush1.msra.mxu0 %v485
    %987 = vmatprep.subr.mxu0 0.0
    %988 = vmatpush1.msra.mxu0 %v482
    %989 = vmatprep.subr.mxu0 0.0
    %990 = vmatpush1.msra.mxu0 %v479
    %991 = vmatprep.subr.mxu0 0.0
    %992 = vmatpush1.msra.mxu0 %v476
    %993 = vmatprep.subr.mxu0 0.0
    %994 = vmatpush2.msra.mxu0 0.0
    %995 = vmatprep.subr.mxu0 0.0
    %996 = vmatpush2.msra.mxu0 0.0
    %997 = vmatprep.subr.mxu0 0.0
    %998 = vmatpush2.msra.mxu0 0.0
    %999 = vmatprep.subr.mxu0 0.0
    %1000 = vmatpush2.msra.mxu0 0.0
    %1001 = vmatprep.subr.mxu0 0.0
    %1002 = vmatpush2.msra.mxu0 0.0
    %1003 = vmatprep.subr.mxu0 0.0
    %1004 = vmatpush2.msra.mxu0 0.0
    %1005 = vmatprep.subr.mxu0 0.0
    %1006 = vmatpush2.msra.mxu0 0.0
    %1007 = vmatprep.subr.mxu0 0.0
    %1008 = vmatpush2.msra.mxu0 0.0
    %1009 = vmatprep.subr.mxu0 0.0
    %1010 = vmatpush2.msra.mxu0 0.0
    %1011 = vmatprep.subr.mxu0 0.0
    %1012 = vmatpush2.msra.mxu0 0.0
    %1013 = vmatprep.subr.mxu0 0.0
    %1014 = vmatpush2.msra.mxu0 0.0
    %1015 = vmatprep.subr.mxu0 0.0
    %1016 = vmatpush2.msra.mxu0 0.0
    %1017 = vmatprep.subr.mxu0 0.0
    %1018 = vmatpush2.msra.mxu0 0.0
    %1019 = vmatprep.subr.mxu0 0.0
    %1020 = vmatpush2.msra.mxu0 0.0
    %1021 = vmatprep.subr.mxu0 0.0
    %1022 = vmatpush2.msra.mxu0 0.0
    %1023 = vmatprep.subr.mxu0 0.0
    %1024 = vmatpush2.msra.mxu0 0.0
    %1025 = vmatprep.mubr.f32.mxu0 0.0
    %1026 = vmatmul.mubr.f32.gmra.mxu0 %v884
    %v1027 = vpop.f32.mrf.mxu0
    %v1028 = vadd.f32 0.0, %v1027
    %v1029 = vpop.f32.mrf.mxu0
    %1030 = vdwg.mxu0
    %v1031 = vadd.f32 %v887, %v957
    %v1032 = vxor.u32 %v1031, 2147483648
    %v1033 = vmul.f32 %v1032, 1.442695
    %v1034 = vpow.pop %v1033
    %v1035 = vadd.f32 %v1034, 1.0
    %v1036 = vrcp.pop %v1035
    %v1037 = vmul.f32 1.0, %v1036
    %v1038 = vadd.f32 %v888, %v959
    %v1039 = vxor.u32 %v1038, 2147483648
    %v1040 = vmul.f32 %v1039, 1.442695
    %v1041 = vpow.pop %v1040
    %v1042 = vadd.f32 %v1041, 1.0
    %v1043 = vrcp.pop %v1042
    %v1044 = vmul.f32 1.0, %v1043
    %v1045 = vadd.f32 %v1028, %v686
    %v1046 = vmul.f32 %v1037, %v1045
    %v1047 = vadd.f32 %v889, %v1046
    %v1048 = vtanh.pop %v1047
    %v1049 = vsub.f32 1.0, %v1044
    %v1050 = vmul.f32 %v1049, %v1048
    %v1051 = vmul.f32 %v1044, %v884
    %v1052 = vadd.f32 %v1050, %v1051
    %v1053 = vstv %s885
    %vm1054 = vcmp.lt.s32.totalorder %v1053, %v473
    %v1055 = vsel %vm1054, 1, 0
    %1056 = vset.pattern.permute.xlu0 0
    %1057 = vperm.xlu0 %1056, %v1055
    %v1058 = vpop.permute.xlu0 %1057
    %vm1059 = vcmp.eq.s32.totalorder %v1058, 1
    %v1060 = vsel %vm1059, %v1052, 0.0
    %s1061 = scalar_lea.vmem %s7, 16
    %1062 = vst [vmem:[%s1061] sm:$0xff] %v1060
    %v1063 = vsel %vm1059, %v1052, %v884
    %s1064 = sadd.s32 %s27, 3
    %s1065 = scalar_lea.vmem [#allocation3], 72
    %v1066 = vld [vmem:[%s1065] sm:$0xff]
    %v1067 = vld [vmem:[%s1065 + $0x8] sm:$0xff]
    %v1068 = vld [vmem:[%s1065 + $0x10] sm:$0xff]
    %1069 = vmatprep.subr.mxu0 %v520
    %1070 = vmatpush1.msra.mxu0 %v519
    %1071 = vmatprep.subr.mxu0 %v517
    %1072 = vmatpush1.msra.mxu0 %v516
    %1073 = vmatprep.subr.mxu0 %v514
    %1074 = vmatpush1.msra.mxu0 %v513
    %1075 = vmatprep.subr.mxu0 %v511
    %1076 = vmatpush1.msra.mxu0 %v510
    %1077 = vmatprep.subr.mxu0 %v508
    %1078 = vmatpush1.msra.mxu0 %v507
    %1079 = vmatprep.subr.mxu0 %v505
    %1080 = vmatpush1.msra.mxu0 %v504
    %1081 = vmatprep.subr.mxu0 %v502
    %1082 = vmatpush1.msra.mxu0 %v501
    %1083 = vmatprep.subr.mxu0 %v499
    %1084 = vmatpush1.msra.mxu0 %v498
    %1085 = vmatprep.subr.mxu0 %v496
    %1086 = vmatpush1.msra.mxu0 %v495
    %1087 = vmatprep.subr.mxu0 %v493
    %1088 = vmatpush1.msra.mxu0 %v492
    %1089 = vmatprep.subr.mxu0 %v490
    %1090 = vmatpush1.msra.mxu0 %v489
    %1091 = vmatprep.subr.mxu0 %v487
    %1092 = vmatpush1.msra.mxu0 %v486
    %1093 = vmatprep.subr.mxu0 %v484
    %1094 = vmatpush1.msra.mxu0 %v483
    %1095 = vmatprep.subr.mxu0 %v481
    %1096 = vmatpush1.msra.mxu0 %v480
    %1097 = vmatprep.subr.mxu0 %v478
    %1098 = vmatpush1.msra.mxu0 %v477
    %1099 = vmatprep.subr.mxu0 %v475
    %1100 = vmatpush1.msra.mxu0 %v474
    %1101 = vmatprep.subr.mxu0 0.0
    %1102 = vmatpush2.msra.mxu0 0.0
    %1103 = vmatprep.subr.mxu0 0.0
    %1104 = vmatpush2.msra.mxu0 0.0
    %1105 = vmatprep.subr.mxu0 0.0
    %1106 = vmatpush2.msra.mxu0 0.0
    %1107 = vmatprep.subr.mxu0 0.0
    %1108 = vmatpush2.msra.mxu0 0.0
    %1109 = vmatprep.subr.mxu0 0.0
    %1110 = vmatpush2.msra.mxu0 0.0
    %1111 = vmatprep.subr.mxu0 0.0
    %1112 = vmatpush2.msra.mxu0 0.0
    %1113 = vmatprep.subr.mxu0 0.0
    %1114 = vmatpush2.msra.mxu0 0.0
    %1115 = vmatprep.subr.mxu0 0.0
    %1116 = vmatpush2.msra.mxu0 0.0
    %1117 = vmatprep.subr.mxu0 0.0
    %1118 = vmatpush2.msra.mxu0 0.0
    %1119 = vmatprep.subr.mxu0 0.0
    %1120 = vmatpush2.msra.mxu0 0.0
    %1121 = vmatprep.subr.mxu0 0.0
    %1122 = vmatpush2.msra.mxu0 0.0
    %1123 = vmatprep.subr.mxu0 0.0
    %1124 = vmatpush2.msra.mxu0 0.0
    %1125 = vmatprep.subr.mxu0 0.0
    %1126 = vmatpush2.msra.mxu0 0.0
    %1127 = vmatprep.subr.mxu0 0.0
    %1128 = vmatpush2.msra.mxu0 0.0
    %1129 = vmatprep.subr.mxu0 0.0
    %1130 = vmatpush2.msra.mxu0 0.0
    %1131 = vmatprep.subr.mxu0 0.0
    %1132 = vmatpush2.msra.mxu0 0.0
    %1133 = vmatprep.mubr.f32.mxu0 0.0
    %1134 = vmatmul.mubr.f32.gmra.mxu0 %v1063
    %v1135 = vpop.f32.mrf.mxu0
    %v1136 = vadd.f32 0.0, %v1135
    %v1137 = vpop.f32.mrf.mxu0
    %v1138 = vadd.f32 0.0, %v1137
    %1139 = vdwg.mxu0
    %1140 = vmatprep.subr.mxu0 0.0
    %1141 = vmatpush1.msra.mxu0 %v521
    %1142 = vmatprep.subr.mxu0 0.0
    %1143 = vmatpush1.msra.mxu0 %v518
    %1144 = vmatprep.subr.mxu0 0.0
    %1145 = vmatpush1.msra.mxu0 %v515
    %1146 = vmatprep.subr.mxu0 0.0
    %1147 = vmatpush1.msra.mxu0 %v512
    %1148 = vmatprep.subr.mxu0 0.0
    %1149 = vmatpush1.msra.mxu0 %v509
    %1150 = vmatprep.subr.mxu0 0.0
    %1151 = vmatpush1.msra.mxu0 %v506
    %1152 = vmatprep.subr.mxu0 0.0
    %1153 = vmatpush1.msra.mxu0 %v503
    %1154 = vmatprep.subr.mxu0 0.0
    %1155 = vmatpush1.msra.mxu0 %v500
    %1156 = vmatprep.subr.mxu0 0.0
    %1157 = vmatpush1.msra.mxu0 %v497
    %1158 = vmatprep.subr.mxu0 0.0
    %1159 = vmatpush1.msra.mxu0 %v494
    %1160 = vmatprep.subr.mxu0 0.0
    %1161 = vmatpush1.msra.mxu0 %v491
    %1162 = vmatprep.subr.mxu0 0.0
    %1163 = vmatpush1.msra.mxu0 %v488
    %1164 = vmatprep.subr.mxu0 0.0
    %1165 = vmatpush1.msra.mxu0 %v485
    %1166 = vmatprep.subr.mxu0 0.0
    %1167 = vmatpush1.msra.mxu0 %v482
    %1168 = vmatprep.subr.mxu0 0.0
    %1169 = vmatpush1.msra.mxu0 %v479
    %1170 = vmatprep.subr.mxu0 0.0
    %1171 = vmatpush1.msra.mxu0 %v476
    %1172 = vmatprep.subr.mxu0 0.0
    %1173 = vmatpush2.msra.mxu0 0.0
    %1174 = vmatprep.subr.mxu0 0.0
    %1175 = vmatpush2.msra.mxu0 0.0
    %1176 = vmatprep.subr.mxu0 0.0
    %1177 = vmatpush2.msra.mxu0 0.0
    %1178 = vmatprep.subr.mxu0 0.0
    %1179 = vmatpush2.msra.mxu0 0.0
    %1180 = vmatprep.subr.mxu0 0.0
    %1181 = vmatpush2.msra.mxu0 0.0
    %1182 = vmatprep.subr.mxu0 0.0
    %1183 = vmatpush2.msra.mxu0 0.0
    %1184 = vmatprep.subr.mxu0 0.0
    %1185 = vmatpush2.msra.mxu0 0.0
    %1186 = vmatprep.subr.mxu0 0.0
    %1187 = vmatpush2.msra.mxu0 0.0
    %1188 = vmatprep.subr.mxu0 0.0
    %1189 = vmatpush2.msra.mxu0 0.0
    %1190 = vmatprep.subr.mxu0 0.0
    %1191 = vmatpush2.msra.mxu0 0.0
    %1192 = vmatprep.subr.mxu0 0.0
    %1193 = vmatpush2.msra.mxu0 0.0
    %1194 = vmatprep.subr.mxu0 0.0
    %1195 = vmatpush2.msra.mxu0 0.0
    %1196 = vmatprep.subr.mxu0 0.0
    %1197 = vmatpush2.msra.mxu0 0.0
    %1198 = vmatprep.subr.mxu0 0.0
    %1199 = vmatpush2.msra.mxu0 0.0
    %1200 = vmatprep.subr.mxu0 0.0
    %1201 = vmatpush2.msra.mxu0 0.0
    %1202 = vmatprep.subr.mxu0 0.0
    %1203 = vmatpush2.msra.mxu0 0.0
    %1204 = vmatprep.mubr.f32.mxu0 0.0
    %1205 = vmatmul.mubr.f32.gmra.mxu0 %v1063
    %v1206 = vpop.f32.mrf.mxu0
    %v1207 = vadd.f32 0.0, %v1206
    %v1208 = vpop.f32.mrf.mxu0
    %1209 = vdwg.mxu0
    %v1210 = vadd.f32 %v1066, %v1136
    %v1211 = vxor.u32 %v1210, 2147483648
    %v1212 = vmul.f32 %v1211, 1.442695
    %v1213 = vpow.pop %v1212
    %v1214 = vadd.f32 %v1213, 1.0
    %v1215 = vrcp.pop %v1214
    %v1216 = vmul.f32 1.0, %v1215
    %v1217 = vadd.f32 %v1067, %v1138
    %v1218 = vxor.u32 %v1217, 2147483648
    %v1219 = vmul.f32 %v1218, 1.442695
    %v1220 = vpow.pop %v1219
    %v1221 = vadd.f32 %v1220, 1.0
    %v1222 = vrcp.pop %v1221
    %v1223 = vmul.f32 1.0, %v1222
    %v1224 = vadd.f32 %v1207, %v686
    %v1225 = vmul.f32 %v1216, %v1224
    %v1226 = vadd.f32 %v1068, %v1225
    %v1227 = vtanh.pop %v1226
    %v1228 = vsub.f32 1.0, %v1223
    %v1229 = vmul.f32 %v1228, %v1227
    %v1230 = vmul.f32 %v1223, %v1063
    %v1231 = vadd.f32 %v1229, %v1230
    %v1232 = vstv %s1064
    %vm1233 = vcmp.lt.s32.totalorder %v1232, %v473
    %v1234 = vsel %vm1233, 1, 0
    %1235 = vset.pattern.permute.xlu0 0
    %1236 = vperm.xlu0 %1235, %v1234
    %v1237 = vpop.permute.xlu0 %1236
    %vm1238 = vcmp.eq.s32.totalorder %v1237, 1
    %v1239 = vsel %vm1238, %v1231, 0.0
    %s1240 = scalar_lea.vmem %s7, 24
    %1241 = vst [vmem:[%s1240] sm:$0xff] %v1239
    %v1242 = vsel %vm1238, %v1231, %v1063
    %s1243 = sadd.s32 %s27, 4
    %s1244 = scalar_lea.vmem [#allocation3], 96
    %v1245 = vld [vmem:[%s1244] sm:$0xff]
    %v1246 = vld [vmem:[%s1244 + $0x8] sm:$0xff]
    %v1247 = vld [vmem:[%s1244 + $0x10] sm:$0xff]
    %1248 = vmatprep.subr.mxu0 %v520
    %1249 = vmatpush1.msra.mxu0 %v519
    %1250 = vmatprep.subr.mxu0 %v517
    %1251 = vmatpush1.msra.mxu0 %v516
    %1252 = vmatprep.subr.mxu0 %v514
    %1253 = vmatpush1.msra.mxu0 %v513
    %1254 = vmatprep.subr.mxu0 %v511
    %1255 = vmatpush1.msra.mxu0 %v510
    %1256 = vmatprep.subr.mxu0 %v508
    %1257 = vmatpush1.msra.mxu0 %v507
    %1258 = vmatprep.subr.mxu0 %v505
    %1259 = vmatpush1.msra.mxu0 %v504
    %1260 = vmatprep.subr.mxu0 %v502
    %1261 = vmatpush1.msra.mxu0 %v501
    %1262 = vmatprep.subr.mxu0 %v499
    %1263 = vmatpush1.msra.mxu0 %v498
    %1264 = vmatprep.subr.mxu0 %v496
    %1265 = vmatpush1.msra.mxu0 %v495
    %1266 = vmatprep.subr.mxu0 %v493
    %1267 = vmatpush1.msra.mxu0 %v492
    %1268 = vmatprep.subr.mxu0 %v490
    %1269 = vmatpush1.msra.mxu0 %v489
    %1270 = vmatprep.subr.mxu0 %v487
    %1271 = vmatpush1.msra.mxu0 %v486
    %1272 = vmatprep.subr.mxu0 %v484
    %1273 = vmatpush1.msra.mxu0 %v483
    %1274 = vmatprep.subr.mxu0 %v481
    %1275 = vmatpush1.msra.mxu0 %v480
    %1276 = vmatprep.subr.mxu0 %v478
    %1277 = vmatpush1.msra.mxu0 %v477
    %1278 = vmatprep.subr.mxu0 %v475
    %1279 = vmatpush1.msra.mxu0 %v474
    %1280 = vmatprep.subr.mxu0 0.0
    %1281 = vmatpush2.msra.mxu0 0.0
    %1282 = vmatprep.subr.mxu0 0.0
    %1283 = vmatpush2.msra.mxu0 0.0
    %1284 = vmatprep.subr.mxu0 0.0
    %1285 = vmatpush2.msra.mxu0 0.0
    %1286 = vmatprep.subr.mxu0 0.0
    %1287 = vmatpush2.msra.mxu0 0.0
    %1288 = vmatprep.subr.mxu0 0.0
    %1289 = vmatpush2.msra.mxu0 0.0
    %1290 = vmatprep.subr.mxu0 0.0
    %1291 = vmatpush2.msra.mxu0 0.0
    %1292 = vmatprep.subr.mxu0 0.0
    %1293 = vmatpush2.msra.mxu0 0.0
    %1294 = vmatprep.subr.mxu0 0.0
    %1295 = vmatpush2.msra.mxu0 0.0
    %1296 = vmatprep.subr.mxu0 0.0
    %1297 = vmatpush2.msra.mxu0 0.0
    %1298 = vmatprep.subr.mxu0 0.0
    %1299 = vmatpush2.msra.mxu0 0.0
    %1300 = vmatprep.subr.mxu0 0.0
    %1301 = vmatpush2.msra.mxu0 0.0
    %1302 = vmatprep.subr.mxu0 0.0
    %1303 = vmatpush2.msra.mxu0 0.0
    %1304 = vmatprep.subr.mxu0 0.0
    %1305 = vmatpush2.msra.mxu0 0.0
    %1306 = vmatprep.subr.mxu0 0.0
    %1307 = vmatpush2.msra.mxu0 0.0
    %1308 = vmatprep.subr.mxu0 0.0
    %1309 = vmatpush2.msra.mxu0 0.0
    %1310 = vmatprep.subr.mxu0 0.0
    %1311 = vmatpush2.msra.mxu0 0.0
    %1312 = vmatprep.mubr.f32.mxu0 0.0
    %1313 = vmatmul.mubr.f32.gmra.mxu0 %v1242
    %v1314 = vpop.f32.mrf.mxu0
    %v1315 = vadd.f32 0.0, %v1314
    %v1316 = vpop.f32.mrf.mxu0
    %v1317 = vadd.f32 0.0, %v1316
    %1318 = vdwg.mxu0
    %1319 = vmatprep.subr.mxu0 0.0
    %1320 = vmatpush1.msra.mxu0 %v521
    %1321 = vmatprep.subr.mxu0 0.0
    %1322 = vmatpush1.msra.mxu0 %v518
    %1323 = vmatprep.subr.mxu0 0.0
    %1324 = vmatpush1.msra.mxu0 %v515
    %1325 = vmatprep.subr.mxu0 0.0
    %1326 = vmatpush1.msra.mxu0 %v512
    %1327 = vmatprep.subr.mxu0 0.0
    %1328 = vmatpush1.msra.mxu0 %v509
    %1329 = vmatprep.subr.mxu0 0.0
    %1330 = vmatpush1.msra.mxu0 %v506
    %1331 = vmatprep.subr.mxu0 0.0
    %1332 = vmatpush1.msra.mxu0 %v503
    %1333 = vmatprep.subr.mxu0 0.0
    %1334 = vmatpush1.msra.mxu0 %v500
    %1335 = vmatprep.subr.mxu0 0.0
    %1336 = vmatpush1.msra.mxu0 %v497
    %1337 = vmatprep.subr.mxu0 0.0
    %1338 = vmatpush1.msra.mxu0 %v494
    %1339 = vmatprep.subr.mxu0 0.0
    %1340 = vmatpush1.msra.mxu0 %v491
    %1341 = vmatprep.subr.mxu0 0.0
    %1342 = vmatpush1.msra.mxu0 %v488
    %1343 = vmatprep.subr.mxu0 0.0
    %1344 = vmatpush1.msra.mxu0 %v485
    %1345 = vmatprep.subr.mxu0 0.0
    %1346 = vmatpush1.msra.mxu0 %v482
    %1347 = vmatprep.subr.mxu0 0.0
    %1348 = vmatpush1.msra.mxu0 %v479
    %1349 = vmatprep.subr.mxu0 0.0
    %1350 = vmatpush1.msra.mxu0 %v476
    %1351 = vmatprep.subr.mxu0 0.0
    %1352 = vmatpush2.msra.mxu0 0.0
    %1353 = vmatprep.subr.mxu0 0.0
    %1354 = vmatpush2.msra.mxu0 0.0
    %1355 = vmatprep.subr.mxu0 0.0
    %1356 = vmatpush2.msra.mxu0 0.0
    %1357 = vmatprep.subr.mxu0 0.0
    %1358 = vmatpush2.msra.mxu0 0.0
    %1359 = vmatprep.subr.mxu0 0.0
    %1360 = vmatpush2.msra.mxu0 0.0
    %1361 = vmatprep.subr.mxu0 0.0
    %1362 = vmatpush2.msra.mxu0 0.0
    %1363 = vmatprep.subr.mxu0 0.0
    %1364 = vmatpush2.msra.mxu0 0.0
    %1365 = vmatprep.subr.mxu0 0.0
    %1366 = vmatpush2.msra.mxu0 0.0
    %1367 = vmatprep.subr.mxu0 0.0
    %1368 = vmatpush2.msra.mxu0 0.0
    %1369 = vmatprep.subr.mxu0 0.0
    %1370 = vmatpush2.msra.mxu0 0.0
    %1371 = vmatprep.subr.mxu0 0.0
    %1372 = vmatpush2.msra.mxu0 0.0
    %1373 = vmatprep.subr.mxu0 0.0
    %1374 = vmatpush2.msra.mxu0 0.0
    %1375 = vmatprep.subr.mxu0 0.0
    %1376 = vmatpush2.msra.mxu0 0.0
    %1377 = vmatprep.subr.mxu0 0.0
    %1378 = vmatpush2.msra.mxu0 0.0
    %1379 = vmatprep.subr.mxu0 0.0
    %1380 = vmatpush2.msra.mxu0 0.0
    %1381 = vmatprep.subr.mxu0 0.0
    %1382 = vmatpush2.msra.mxu0 0.0
    %1383 = vmatprep.mubr.f32.mxu0 0.0
    %1384 = vmatmul.mubr.f32.gmra.mxu0 %v1242
    %v1385 = vpop.f32.mrf.mxu0
    %v1386 = vadd.f32 0.0, %v1385
    %v1387 = vpop.f32.mrf.mxu0
    %1388 = vdwg.mxu0
    %v1389 = vadd.f32 %v1245, %v1315
    %v1390 = vxor.u32 %v1389, 2147483648
    %v1391 = vmul.f32 %v1390, 1.442695
    %v1392 = vpow.pop %v1391
    %v1393 = vadd.f32 %v1392, 1.0
    %v1394 = vrcp.pop %v1393
    %v1395 = vmul.f32 1.0, %v1394
    %v1396 = vadd.f32 %v1246, %v1317
    %v1397 = vxor.u32 %v1396, 2147483648
    %v1398 = vmul.f32 %v1397, 1.442695
    %v1399 = vpow.pop %v1398
    %v1400 = vadd.f32 %v1399, 1.0
    %v1401 = vrcp.pop %v1400
    %v1402 = vmul.f32 1.0, %v1401
    %v1403 = vadd.f32 %v1386, %v686
    %v1404 = vmul.f32 %v1395, %v1403
    %v1405 = vadd.f32 %v1247, %v1404
    %v1406 = vtanh.pop %v1405
    %v1407 = vsub.f32 1.0, %v1402
    %v1408 = vmul.f32 %v1407, %v1406
    %v1409 = vmul.f32 %v1402, %v1242
    %v1410 = vadd.f32 %v1408, %v1409
    %v1411 = vstv %s1243
    %vm1412 = vcmp.lt.s32.totalorder %v1411, %v473
    %v1413 = vsel %vm1412, 1, 0
    %1414 = vset.pattern.permute.xlu0 0
    %1415 = vperm.xlu0 %1414, %v1413
    %v1416 = vpop.permute.xlu0 %1415
    %vm1417 = vcmp.eq.s32.totalorder %v1416, 1
    %v1418 = vsel %vm1417, %v1410, 0.0
    %s1419 = scalar_lea.vmem %s7, 32
    %1420 = vst [vmem:[%s1419] sm:$0xff] %v1418
    %v1421 = vsel %vm1417, %v1410, %v1242
    %s1422 = sadd.s32 %s27, 5
    %s1423 = scalar_lea.vmem [#allocation3], 120
    %v1424 = vld [vmem:[%s1423] sm:$0xff]
    %v1425 = vld [vmem:[%s1423 + $0x8] sm:$0xff]
    %v1426 = vld [vmem:[%s1423 + $0x10] sm:$0xff]
    %1427 = vmatprep.subr.mxu0 %v520
    %1428 = vmatpush1.msra.mxu0 %v519
    %1429 = vmatprep.subr.mxu0 %v517
    %1430 = vmatpush1.msra.mxu0 %v516
    %1431 = vmatprep.subr.mxu0 %v514
    %1432 = vmatpush1.msra.mxu0 %v513
    %1433 = vmatprep.subr.mxu0 %v511
    %1434 = vmatpush1.msra.mxu0 %v510
    %1435 = vmatprep.subr.mxu0 %v508
    %1436 = vmatpush1.msra.mxu0 %v507
    %1437 = vmatprep.subr.mxu0 %v505
    %1438 = vmatpush1.msra.mxu0 %v504
    %1439 = vmatprep.subr.mxu0 %v502
    %1440 = vmatpush1.msra.mxu0 %v501
    %1441 = vmatprep.subr.mxu0 %v499
    %1442 = vmatpush1.msra.mxu0 %v498
    %1443 = vmatprep.subr.mxu0 %v496
    %1444 = vmatpush1.msra.mxu0 %v495
    %1445 = vmatprep.subr.mxu0 %v493
    %1446 = vmatpush1.msra.mxu0 %v492
    %1447 = vmatprep.subr.mxu0 %v490
    %1448 = vmatpush1.msra.mxu0 %v489
    %1449 = vmatprep.subr.mxu0 %v487
    %1450 = vmatpush1.msra.mxu0 %v486
    %1451 = vmatprep.subr.mxu0 %v484
    %1452 = vmatpush1.msra.mxu0 %v483
    %1453 = vmatprep.subr.mxu0 %v481
    %1454 = vmatpush1.msra.mxu0 %v480
    %1455 = vmatprep.subr.mxu0 %v478
    %1456 = vmatpush1.msra.mxu0 %v477
    %1457 = vmatprep.subr.mxu0 %v475
    %1458 = vmatpush1.msra.mxu0 %v474
    %1459 = vmatprep.subr.mxu0 0.0
    %1460 = vmatpush2.msra.mxu0 0.0
    %1461 = vmatprep.subr.mxu0 0.0
    %1462 = vmatpush2.msra.mxu0 0.0
    %1463 = vmatprep.subr.mxu0 0.0
    %1464 = vmatpush2.msra.mxu0 0.0
    %1465 = vmatprep.subr.mxu0 0.0
    %1466 = vmatpush2.msra.mxu0 0.0
    %1467 = vmatprep.subr.mxu0 0.0
    %1468 = vmatpush2.msra.mxu0 0.0
    %1469 = vmatprep.subr.mxu0 0.0
    %1470 = vmatpush2.msra.mxu0 0.0
    %1471 = vmatprep.subr.mxu0 0.0
    %1472 = vmatpush2.msra.mxu0 0.0
    %1473 = vmatprep.subr.mxu0 0.0
    %1474 = vmatpush2.msra.mxu0 0.0
    %1475 = vmatprep.subr.mxu0 0.0
    %1476 = vmatpush2.msra.mxu0 0.0
    %1477 = vmatprep.subr.mxu0 0.0
    %1478 = vmatpush2.msra.mxu0 0.0
    %1479 = vmatprep.subr.mxu0 0.0
    %1480 = vmatpush2.msra.mxu0 0.0
    %1481 = vmatprep.subr.mxu0 0.0
    %1482 = vmatpush2.msra.mxu0 0.0
    %1483 = vmatprep.subr.mxu0 0.0
    %1484 = vmatpush2.msra.mxu0 0.0
    %1485 = vmatprep.subr.mxu0 0.0
    %1486 = vmatpush2.msra.mxu0 0.0
    %1487 = vmatprep.subr.mxu0 0.0
    %1488 = vmatpush2.msra.mxu0 0.0
    %1489 = vmatprep.subr.mxu0 0.0
    %1490 = vmatpush2.msra.mxu0 0.0
    %1491 = vmatprep.mubr.f32.mxu0 0.0
    %1492 = vmatmul.mubr.f32.gmra.mxu0 %v1421
    %v1493 = vpop.f32.mrf.mxu0
    %v1494 = vadd.f32 0.0, %v1493
    %v1495 = vpop.f32.mrf.mxu0
    %v1496 = vadd.f32 0.0, %v1495
    %1497 = vdwg.mxu0
    %1498 = vmatprep.subr.mxu0 0.0
    %1499 = vmatpush1.msra.mxu0 %v521
    %1500 = vmatprep.subr.mxu0 0.0
    %1501 = vmatpush1.msra.mxu0 %v518
    %1502 = vmatprep.subr.mxu0 0.0
    %1503 = vmatpush1.msra.mxu0 %v515
    %1504 = vmatprep.subr.mxu0 0.0
    %1505 = vmatpush1.msra.mxu0 %v512
    %1506 = vmatprep.subr.mxu0 0.0
    %1507 = vmatpush1.msra.mxu0 %v509
    %1508 = vmatprep.subr.mxu0 0.0
    %1509 = vmatpush1.msra.mxu0 %v506
    %1510 = vmatprep.subr.mxu0 0.0
    %1511 = vmatpush1.msra.mxu0 %v503
    %1512 = vmatprep.subr.mxu0 0.0
    %1513 = vmatpush1.msra.mxu0 %v500
    %1514 = vmatprep.subr.mxu0 0.0
    %1515 = vmatpush1.msra.mxu0 %v497
    %1516 = vmatprep.subr.mxu0 0.0
    %1517 = vmatpush1.msra.mxu0 %v494
    %1518 = vmatprep.subr.mxu0 0.0
    %1519 = vmatpush1.msra.mxu0 %v491
    %1520 = vmatprep.subr.mxu0 0.0
    %1521 = vmatpush1.msra.mxu0 %v488
    %1522 = vmatprep.subr.mxu0 0.0
    %1523 = vmatpush1.msra.mxu0 %v485
    %1524 = vmatprep.subr.mxu0 0.0
    %1525 = vmatpush1.msra.mxu0 %v482
    %1526 = vmatprep.subr.mxu0 0.0
    %1527 = vmatpush1.msra.mxu0 %v479
    %1528 = vmatprep.subr.mxu0 0.0
    %1529 = vmatpush1.msra.mxu0 %v476
    %1530 = vmatprep.subr.mxu0 0.0
    %1531 = vmatpush2.msra.mxu0 0.0
    %1532 = vmatprep.subr.mxu0 0.0
    %1533 = vmatpush2.msra.mxu0 0.0
    %1534 = vmatprep.subr.mxu0 0.0
    %1535 = vmatpush2.msra.mxu0 0.0
    %1536 = vmatprep.subr.mxu0 0.0
    %1537 = vmatpush2.msra.mxu0 0.0
    %1538 = vmatprep.subr.mxu0 0.0
    %1539 = vmatpush2.msra.mxu0 0.0
    %1540 = vmatprep.subr.mxu0 0.0
    %1541 = vmatpush2.msra.mxu0 0.0
    %1542 = vmatprep.subr.mxu0 0.0
    %1543 = vmatpush2.msra.mxu0 0.0
    %1544 = vmatprep.subr.mxu0 0.0
    %1545 = vmatpush2.msra.mxu0 0.0
    %1546 = vmatprep.subr.mxu0 0.0
    %1547 = vmatpush2.msra.mxu0 0.0
    %1548 = vmatprep.subr.mxu0 0.0
    %1549 = vmatpush2.msra.mxu0 0.0
    %1550 = vmatprep.subr.mxu0 0.0
    %1551 = vmatpush2.msra.mxu0 0.0
    %1552 = vmatprep.subr.mxu0 0.0
    %1553 = vmatpush2.msra.mxu0 0.0
    %1554 = vmatprep.subr.mxu0 0.0
    %1555 = vmatpush2.msra.mxu0 0.0
    %1556 = vmatprep.subr.mxu0 0.0
    %1557 = vmatpush2.msra.mxu0 0.0
    %1558 = vmatprep.subr.mxu0 0.0
    %1559 = vmatpush2.msra.mxu0 0.0
    %1560 = vmatprep.subr.mxu0 0.0
    %1561 = vmatpush2.msra.mxu0 0.0
    %1562 = vmatprep.mubr.f32.mxu0 0.0
    %1563 = vmatmul.mubr.f32.gmra.mxu0 %v1421
    %v1564 = vpop.f32.mrf.mxu0
    %v1565 = vadd.f32 0.0, %v1564
    %v1566 = vpop.f32.mrf.mxu0
    %1567 = vdwg.mxu0
    %v1568 = vadd.f32 %v1424, %v1494
    %v1569 = vxor.u32 %v1568, 2147483648
    %v1570 = vmul.f32 %v1569, 1.442695
    %v1571 = vpow.pop %v1570
    %v1572 = vadd.f32 %v1571, 1.0
    %v1573 = vrcp.pop %v1572
    %v1574 = vmul.f32 1.0, %v1573
    %v1575 = vadd.f32 %v1425, %v1496
    %v1576 = vxor.u32 %v1575, 2147483648
    %v1577 = vmul.f32 %v1576, 1.442695
    %v1578 = vpow.pop %v1577
    %v1579 = vadd.f32 %v1578, 1.0
    %v1580 = vrcp.pop %v1579
    %v1581 = vmul.f32 1.0, %v1580
    %v1582 = vadd.f32 %v1565, %v686
    %v1583 = vmul.f32 %v1574, %v1582
    %v1584 = vadd.f32 %v1426, %v1583
    %v1585 = vtanh.pop %v1584
    %v1586 = vsub.f32 1.0, %v1581
    %v1587 = vmul.f32 %v1586, %v1585
    %v1588 = vmul.f32 %v1581, %v1421
    %v1589 = vadd.f32 %v1587, %v1588
    %v1590 = vstv %s1422
    %vm1591 = vcmp.lt.s32.totalorder %v1590, %v473
    %v1592 = vsel %vm1591, 1, 0
    %1593 = vset.pattern.permute.xlu0 0
    %1594 = vperm.xlu0 %1593, %v1592
    %v1595 = vpop.permute.xlu0 %1594
    %vm1596 = vcmp.eq.s32.totalorder %v1595, 1
    %v1597 = vsel %vm1596, %v1589, 0.0
    %s1598 = scalar_lea.vmem %s7, 40
    %1599 = vst [vmem:[%s1598] sm:$0xff] %v1597
    %v1600 = vsel %vm1596, %v1589, %v1421
    %s1601 = sadd.s32 %s27, 6
    %s1602 = scalar_lea.vmem [#allocation3], 144
    %v1603 = vld [vmem:[%s1602] sm:$0xff]
    %v1604 = vld [vmem:[%s1602 + $0x8] sm:$0xff]
    %v1605 = vld [vmem:[%s1602 + $0x10] sm:$0xff]
    %1606 = vmatprep.subr.mxu0 %v520
    %1607 = vmatpush1.msra.mxu0 %v519
    %1608 = vmatprep.subr.mxu0 %v517
    %1609 = vmatpush1.msra.mxu0 %v516
    %1610 = vmatprep.subr.mxu0 %v514
    %1611 = vmatpush1.msra.mxu0 %v513
    %1612 = vmatprep.subr.mxu0 %v511
    %1613 = vmatpush1.msra.mxu0 %v510
    %1614 = vmatprep.subr.mxu0 %v508
    %1615 = vmatpush1.msra.mxu0 %v507
    %1616 = vmatprep.subr.mxu0 %v505
    %1617 = vmatpush1.msra.mxu0 %v504
    %1618 = vmatprep.subr.mxu0 %v502
    %1619 = vmatpush1.msra.mxu0 %v501
    %1620 = vmatprep.subr.mxu0 %v499
    %1621 = vmatpush1.msra.mxu0 %v498
    %1622 = vmatprep.subr.mxu0 %v496
    %1623 = vmatpush1.msra.mxu0 %v495
    %1624 = vmatprep.subr.mxu0 %v493
    %1625 = vmatpush1.msra.mxu0 %v492
    %1626 = vmatprep.subr.mxu0 %v490
    %1627 = vmatpush1.msra.mxu0 %v489
    %1628 = vmatprep.subr.mxu0 %v487
    %1629 = vmatpush1.msra.mxu0 %v486
    %1630 = vmatprep.subr.mxu0 %v484
    %1631 = vmatpush1.msra.mxu0 %v483
    %1632 = vmatprep.subr.mxu0 %v481
    %1633 = vmatpush1.msra.mxu0 %v480
    %1634 = vmatprep.subr.mxu0 %v478
    %1635 = vmatpush1.msra.mxu0 %v477
    %1636 = vmatprep.subr.mxu0 %v475
    %1637 = vmatpush1.msra.mxu0 %v474
    %1638 = vmatprep.subr.mxu0 0.0
    %1639 = vmatpush2.msra.mxu0 0.0
    %1640 = vmatprep.subr.mxu0 0.0
    %1641 = vmatpush2.msra.mxu0 0.0
    %1642 = vmatprep.subr.mxu0 0.0
    %1643 = vmatpush2.msra.mxu0 0.0
    %1644 = vmatprep.subr.mxu0 0.0
    %1645 = vmatpush2.msra.mxu0 0.0
    %1646 = vmatprep.subr.mxu0 0.0
    %1647 = vmatpush2.msra.mxu0 0.0
    %1648 = vmatprep.subr.mxu0 0.0
    %1649 = vmatpush2.msra.mxu0 0.0
    %1650 = vmatprep.subr.mxu0 0.0
    %1651 = vmatpush2.msra.mxu0 0.0
    %1652 = vmatprep.subr.mxu0 0.0
    %1653 = vmatpush2.msra.mxu0 0.0
    %1654 = vmatprep.subr.mxu0 0.0
    %1655 = vmatpush2.msra.mxu0 0.0
    %1656 = vmatprep.subr.mxu0 0.0
    %1657 = vmatpush2.msra.mxu0 0.0
    %1658 = vmatprep.subr.mxu0 0.0
    %1659 = vmatpush2.msra.mxu0 0.0
    %1660 = vmatprep.subr.mxu0 0.0
    %1661 = vmatpush2.msra.mxu0 0.0
    %1662 = vmatprep.subr.mxu0 0.0
    %1663 = vmatpush2.msra.mxu0 0.0
    %1664 = vmatprep.subr.mxu0 0.0
    %1665 = vmatpush2.msra.mxu0 0.0
    %1666 = vmatprep.subr.mxu0 0.0
    %1667 = vmatpush2.msra.mxu0 0.0
    %1668 = vmatprep.subr.mxu0 0.0
    %1669 = vmatpush2.msra.mxu0 0.0
    %1670 = vmatprep.mubr.f32.mxu0 0.0
    %1671 = vmatmul.mubr.f32.gmra.mxu0 %v1600
    %v1672 = vpop.f32.mrf.mxu0
    %v1673 = vadd.f32 0.0, %v1672
    %v1674 = vpop.f32.mrf.mxu0
    %v1675 = vadd.f32 0.0, %v1674
    %1676 = vdwg.mxu0
    %1677 = vmatprep.subr.mxu0 0.0
    %1678 = vmatpush1.msra.mxu0 %v521
    %1679 = vmatprep.subr.mxu0 0.0
    %1680 = vmatpush1.msra.mxu0 %v518
    %1681 = vmatprep.subr.mxu0 0.0
    %1682 = vmatpush1.msra.mxu0 %v515
    %1683 = vmatprep.subr.mxu0 0.0
    %1684 = vmatpush1.msra.mxu0 %v512
    %1685 = vmatprep.subr.mxu0 0.0
    %1686 = vmatpush1.msra.mxu0 %v509
    %1687 = vmatprep.subr.mxu0 0.0
    %1688 = vmatpush1.msra.mxu0 %v506
    %1689 = vmatprep.subr.mxu0 0.0
    %1690 = vmatpush1.msra.mxu0 %v503
    %1691 = vmatprep.subr.mxu0 0.0
    %1692 = vmatpush1.msra.mxu0 %v500
    %1693 = vmatprep.subr.mxu0 0.0
    %1694 = vmatpush1.msra.mxu0 %v497
    %1695 = vmatprep.subr.mxu0 0.0
    %1696 = vmatpush1.msra.mxu0 %v494
    %1697 = vmatprep.subr.mxu0 0.0
    %1698 = vmatpush1.msra.mxu0 %v491
    %1699 = vmatprep.subr.mxu0 0.0
    %1700 = vmatpush1.msra.mxu0 %v488
    %1701 = vmatprep.subr.mxu0 0.0
    %1702 = vmatpush1.msra.mxu0 %v485
    %1703 = vmatprep.subr.mxu0 0.0
    %1704 = vmatpush1.msra.mxu0 %v482
    %1705 = vmatprep.subr.mxu0 0.0
    %1706 = vmatpush1.msra.mxu0 %v479
    %1707 = vmatprep.subr.mxu0 0.0
    %1708 = vmatpush1.msra.mxu0 %v476
    %1709 = vmatprep.subr.mxu0 0.0
    %1710 = vmatpush2.msra.mxu0 0.0
    %1711 = vmatprep.subr.mxu0 0.0
    %1712 = vmatpush2.msra.mxu0 0.0
    %1713 = vmatprep.subr.mxu0 0.0
    %1714 = vmatpush2.msra.mxu0 0.0
    %1715 = vmatprep.subr.mxu0 0.0
    %1716 = vmatpush2.msra.mxu0 0.0
    %1717 = vmatprep.subr.mxu0 0.0
    %1718 = vmatpush2.msra.mxu0 0.0
    %1719 = vmatprep.subr.mxu0 0.0
    %1720 = vmatpush2.msra.mxu0 0.0
    %1721 = vmatprep.subr.mxu0 0.0
    %1722 = vmatpush2.msra.mxu0 0.0
    %1723 = vmatprep.subr.mxu0 0.0
    %1724 = vmatpush2.msra.mxu0 0.0
    %1725 = vmatprep.subr.mxu0 0.0
    %1726 = vmatpush2.msra.mxu0 0.0
    %1727 = vmatprep.subr.mxu0 0.0
    %1728 = vmatpush2.msra.mxu0 0.0
    %1729 = vmatprep.subr.mxu0 0.0
    %1730 = vmatpush2.msra.mxu0 0.0
    %1731 = vmatprep.subr.mxu0 0.0
    %1732 = vmatpush2.msra.mxu0 0.0
    %1733 = vmatprep.subr.mxu0 0.0
    %1734 = vmatpush2.msra.mxu0 0.0
    %1735 = vmatprep.subr.mxu0 0.0
    %1736 = vmatpush2.msra.mxu0 0.0
    %1737 = vmatprep.subr.mxu0 0.0
    %1738 = vmatpush2.msra.mxu0 0.0
    %1739 = vmatprep.subr.mxu0 0.0
    %1740 = vmatpush2.msra.mxu0 0.0
    %1741 = vmatprep.mubr.f32.mxu0 0.0
    %1742 = vmatmul.mubr.f32.gmra.mxu0 %v1600
    %v1743 = vpop.f32.mrf.mxu0
    %v1744 = vadd.f32 0.0, %v1743
    %v1745 = vpop.f32.mrf.mxu0
    %1746 = vdwg.mxu0
    %v1747 = vadd.f32 %v1603, %v1673
    %v1748 = vxor.u32 %v1747, 2147483648
    %v1749 = vmul.f32 %v1748, 1.442695
    %v1750 = vpow.pop %v1749
    %v1751 = vadd.f32 %v1750, 1.0
    %v1752 = vrcp.pop %v1751
    %v1753 = vmul.f32 1.0, %v1752
    %v1754 = vadd.f32 %v1604, %v1675
    %v1755 = vxor.u32 %v1754, 2147483648
    %v1756 = vmul.f32 %v1755, 1.442695
    %v1757 = vpow.pop %v1756
    %v1758 = vadd.f32 %v1757, 1.0
    %v1759 = vrcp.pop %v1758
    %v1760 = vmul.f32 1.0, %v1759
    %v1761 = vadd.f32 %v1744, %v686
    %v1762 = vmul.f32 %v1753, %v1761
    %v1763 = vadd.f32 %v1605, %v1762
    %v1764 = vtanh.pop %v1763
    %v1765 = vsub.f32 1.0, %v1760
    %v1766 = vmul.f32 %v1765, %v1764
    %v1767 = vmul.f32 %v1760, %v1600
    %v1768 = vadd.f32 %v1766, %v1767
    %v1769 = vstv %s1601
    %vm1770 = vcmp.lt.s32.totalorder %v1769, %v473
    %v1771 = vsel %vm1770, 1, 0
    %1772 = vset.pattern.permute.xlu0 0
    %1773 = vperm.xlu0 %1772, %v1771
    %v1774 = vpop.permute.xlu0 %1773
    %vm1775 = vcmp.eq.s32.totalorder %v1774, 1
    %v1776 = vsel %vm1775, %v1768, 0.0
    %s1777 = scalar_lea.vmem %s7, 48
    %1778 = vst [vmem:[%s1777] sm:$0xff] %v1776
    %v1779 = vsel %vm1775, %v1768, %v1600
    %s1780 = sadd.s32 %s27, 7
    %s1781 = scalar_lea.vmem [#allocation3], 168
    %v1782 = vld [vmem:[%s1781] sm:$0xff]
    %v1783 = vld [vmem:[%s1781 + $0x8] sm:$0xff]
    %v1784 = vld [vmem:[%s1781 + $0x10] sm:$0xff]
    %1785 = vmatprep.subr.mxu0 %v520
    %1786 = vmatpush1.msra.mxu0 %v519
    %1787 = vmatprep.subr.mxu0 %v517
    %1788 = vmatpush1.msra.mxu0 %v516
    %1789 = vmatprep.subr.mxu0 %v514
    %1790 = vmatpush1.msra.mxu0 %v513
    %1791 = vmatprep.subr.mxu0 %v511
    %1792 = vmatpush1.msra.mxu0 %v510
    %1793 = vmatprep.subr.mxu0 %v508
    %1794 = vmatpush1.msra.mxu0 %v507
    %1795 = vmatprep.subr.mxu0 %v505
    %1796 = vmatpush1.msra.mxu0 %v504
    %1797 = vmatprep.subr.mxu0 %v502
    %1798 = vmatpush1.msra.mxu0 %v501
    %1799 = vmatprep.subr.mxu0 %v499
    %1800 = vmatpush1.msra.mxu0 %v498
    %1801 = vmatprep.subr.mxu0 %v496
    %1802 = vmatpush1.msra.mxu0 %v495
    %1803 = vmatprep.subr.mxu0 %v493
    %1804 = vmatpush1.msra.mxu0 %v492
    %1805 = vmatprep.subr.mxu0 %v490
    %1806 = vmatpush1.msra.mxu0 %v489
    %1807 = vmatprep.subr.mxu0 %v487
    %1808 = vmatpush1.msra.mxu0 %v486
    %1809 = vmatprep.subr.mxu0 %v484
    %1810 = vmatpush1.msra.mxu0 %v483
    %1811 = vmatprep.subr.mxu0 %v481
    %1812 = vmatpush1.msra.mxu0 %v480
    %1813 = vmatprep.subr.mxu0 %v478
    %1814 = vmatpush1.msra.mxu0 %v477
    %1815 = vmatprep.subr.mxu0 %v475
    %1816 = vmatpush1.msra.mxu0 %v474
    %1817 = vmatprep.subr.mxu0 0.0
    %1818 = vmatpush2.msra.mxu0 0.0
    %1819 = vmatprep.subr.mxu0 0.0
    %1820 = vmatpush2.msra.mxu0 0.0
    %1821 = vmatprep.subr.mxu0 0.0
    %1822 = vmatpush2.msra.mxu0 0.0
    %1823 = vmatprep.subr.mxu0 0.0
    %1824 = vmatpush2.msra.mxu0 0.0
    %1825 = vmatprep.subr.mxu0 0.0
    %1826 = vmatpush2.msra.mxu0 0.0
    %1827 = vmatprep.subr.mxu0 0.0
    %1828 = vmatpush2.msra.mxu0 0.0
    %1829 = vmatprep.subr.mxu0 0.0
    %1830 = vmatpush2.msra.mxu0 0.0
    %1831 = vmatprep.subr.mxu0 0.0
    %1832 = vmatpush2.msra.mxu0 0.0
    %1833 = vmatprep.subr.mxu0 0.0
    %1834 = vmatpush2.msra.mxu0 0.0
    %1835 = vmatprep.subr.mxu0 0.0
    %1836 = vmatpush2.msra.mxu0 0.0
    %1837 = vmatprep.subr.mxu0 0.0
    %1838 = vmatpush2.msra.mxu0 0.0
    %1839 = vmatprep.subr.mxu0 0.0
    %1840 = vmatpush2.msra.mxu0 0.0
    %1841 = vmatprep.subr.mxu0 0.0
    %1842 = vmatpush2.msra.mxu0 0.0
    %1843 = vmatprep.subr.mxu0 0.0
    %1844 = vmatpush2.msra.mxu0 0.0
    %1845 = vmatprep.subr.mxu0 0.0
    %1846 = vmatpush2.msra.mxu0 0.0
    %1847 = vmatprep.subr.mxu0 0.0
    %1848 = vmatpush2.msra.mxu0 0.0
    %1849 = vmatprep.mubr.f32.mxu0 0.0
    %1850 = vmatmul.mubr.f32.gmra.mxu0 %v1779
    %v1851 = vpop.f32.mrf.mxu0
    %v1852 = vadd.f32 0.0, %v1851
    %v1853 = vpop.f32.mrf.mxu0
    %v1854 = vadd.f32 0.0, %v1853
    %1855 = vdwg.mxu0
    %1856 = vmatprep.subr.mxu0 0.0
    %1857 = vmatpush1.msra.mxu0 %v521
    %1858 = vmatprep.subr.mxu0 0.0
    %1859 = vmatpush1.msra.mxu0 %v518
    %1860 = vmatprep.subr.mxu0 0.0
    %1861 = vmatpush1.msra.mxu0 %v515
    %1862 = vmatprep.subr.mxu0 0.0
    %1863 = vmatpush1.msra.mxu0 %v512
    %1864 = vmatprep.subr.mxu0 0.0
    %1865 = vmatpush1.msra.mxu0 %v509
    %1866 = vmatprep.subr.mxu0 0.0
    %1867 = vmatpush1.msra.mxu0 %v506
    %1868 = vmatprep.subr.mxu0 0.0
    %1869 = vmatpush1.msra.mxu0 %v503
    %1870 = vmatprep.subr.mxu0 0.0
    %1871 = vmatpush1.msra.mxu0 %v500
    %1872 = vmatprep.subr.mxu0 0.0
    %1873 = vmatpush1.msra.mxu0 %v497
    %1874 = vmatprep.subr.mxu0 0.0
    %1875 = vmatpush1.msra.mxu0 %v494
    %1876 = vmatprep.subr.mxu0 0.0
    %1877 = vmatpush1.msra.mxu0 %v491
    %1878 = vmatprep.subr.mxu0 0.0
    %1879 = vmatpush1.msra.mxu0 %v488
    %1880 = vmatprep.subr.mxu0 0.0
    %1881 = vmatpush1.msra.mxu0 %v485
    %1882 = vmatprep.subr.mxu0 0.0
    %1883 = vmatpush1.msra.mxu0 %v482
    %1884 = vmatprep.subr.mxu0 0.0
    %1885 = vmatpush1.msra.mxu0 %v479
    %1886 = vmatprep.subr.mxu0 0.0
    %1887 = vmatpush1.msra.mxu0 %v476
    %1888 = vmatprep.subr.mxu0 0.0
    %1889 = vmatpush2.msra.mxu0 0.0
    %1890 = vmatprep.subr.mxu0 0.0
    %1891 = vmatpush2.msra.mxu0 0.0
    %1892 = vmatprep.subr.mxu0 0.0
    %1893 = vmatpush2.msra.mxu0 0.0
    %1894 = vmatprep.subr.mxu0 0.0
    %1895 = vmatpush2.msra.mxu0 0.0
    %1896 = vmatprep.subr.mxu0 0.0
    %1897 = vmatpush2.msra.mxu0 0.0
    %1898 = vmatprep.subr.mxu0 0.0
    %1899 = vmatpush2.msra.mxu0 0.0
    %1900 = vmatprep.subr.mxu0 0.0
    %1901 = vmatpush2.msra.mxu0 0.0
    %1902 = vmatprep.subr.mxu0 0.0
    %1903 = vmatpush2.msra.mxu0 0.0
    %1904 = vmatprep.subr.mxu0 0.0
    %1905 = vmatpush2.msra.mxu0 0.0
    %1906 = vmatprep.subr.mxu0 0.0
    %1907 = vmatpush2.msra.mxu0 0.0
    %1908 = vmatprep.subr.mxu0 0.0
    %1909 = vmatpush2.msra.mxu0 0.0
    %1910 = vmatprep.subr.mxu0 0.0
    %1911 = vmatpush2.msra.mxu0 0.0
    %1912 = vmatprep.subr.mxu0 0.0
    %1913 = vmatpush2.msra.mxu0 0.0
    %1914 = vmatprep.subr.mxu0 0.0
    %1915 = vmatpush2.msra.mxu0 0.0
    %1916 = vmatprep.subr.mxu0 0.0
    %1917 = vmatpush2.msra.mxu0 0.0
    %1918 = vmatprep.subr.mxu0 0.0
    %1919 = vmatpush2.msra.mxu0 0.0
    %1920 = vmatprep.mubr.f32.mxu0 0.0
    %1921 = vmatmul.mubr.f32.gmra.mxu0 %v1779
    %v1922 = vpop.f32.mrf.mxu0
    %v1923 = vadd.f32 0.0, %v1922
    %v1924 = vpop.f32.mrf.mxu0
    %1925 = vdwg.mxu0
    %v1926 = vadd.f32 %v1782, %v1852
    %v1927 = vxor.u32 %v1926, 2147483648
    %v1928 = vmul.f32 %v1927, 1.442695
    %v1929 = vpow.pop %v1928
    %v1930 = vadd.f32 %v1929, 1.0
    %v1931 = vrcp.pop %v1930
    %v1932 = vmul.f32 1.0, %v1931
    %v1933 = vadd.f32 %v1783, %v1854
    %v1934 = vxor.u32 %v1933, 2147483648
    %v1935 = vmul.f32 %v1934, 1.442695
    %v1936 = vpow.pop %v1935
    %v1937 = vadd.f32 %v1936, 1.0
    %v1938 = vrcp.pop %v1937
    %v1939 = vmul.f32 1.0, %v1938
    %v1940 = vadd.f32 %v1923, %v686
    %v1941 = vmul.f32 %v1932, %v1940
    %v1942 = vadd.f32 %v1784, %v1941
    %v1943 = vtanh.pop %v1942
    %v1944 = vsub.f32 1.0, %v1939
    %v1945 = vmul.f32 %v1944, %v1943
    %v1946 = vmul.f32 %v1939, %v1779
    %v1947 = vadd.f32 %v1945, %v1946
    %v1948 = vstv %s1780
    %vm1949 = vcmp.lt.s32.totalorder %v1948, %v473
    %v1950 = vsel %vm1949, 1, 0
    %1951 = vset.pattern.permute.xlu0 0
    %1952 = vperm.xlu0 %1951, %v1950
    %v1953 = vpop.permute.xlu0 %1952
    %vm1954 = vcmp.eq.s32.totalorder %v1953, 1
    %v1955 = vsel %vm1954, %v1947, 0.0
    %s1956 = scalar_lea.vmem %s7, 56
    %1957 = vst [vmem:[%s1956] sm:$0xff] %v1955
    %v1958 = vsel %vm1954, %v1947, %v1779
    %s1959 = sadd.s32 %s27, 8
    %s1960 = scalar_lea.vmem [#allocation3], 192
    %v1961 = vld [vmem:[%s1960] sm:$0xff]
    %v1962 = vld [vmem:[%s1960 + $0x8] sm:$0xff]
    %v1963 = vld [vmem:[%s1960 + $0x10] sm:$0xff]
    %1964 = vmatprep.subr.mxu0 %v520
    %1965 = vmatpush1.msra.mxu0 %v519
    %1966 = vmatprep.subr.mxu0 %v517
    %1967 = vmatpush1.msra.mxu0 %v516
    %1968 = vmatprep.subr.mxu0 %v514
    %1969 = vmatpush1.msra.mxu0 %v513
    %1970 = vmatprep.subr.mxu0 %v511
    %1971 = vmatpush1.msra.mxu0 %v510
    %1972 = vmatprep.subr.mxu0 %v508
    %1973 = vmatpush1.msra.mxu0 %v507
    %1974 = vmatprep.subr.mxu0 %v505
    %1975 = vmatpush1.msra.mxu0 %v504
    %1976 = vmatprep.subr.mxu0 %v502
    %1977 = vmatpush1.msra.mxu0 %v501
    %1978 = vmatprep.subr.mxu0 %v499
    %1979 = vmatpush1.msra.mxu0 %v498
    %1980 = vmatprep.subr.mxu0 %v496
    %1981 = vmatpush1.msra.mxu0 %v495
    %1982 = vmatprep.subr.mxu0 %v493
    %1983 = vmatpush1.msra.mxu0 %v492
    %1984 = vmatprep.subr.mxu0 %v490
    %1985 = vmatpush1.msra.mxu0 %v489
    %1986 = vmatprep.subr.mxu0 %v487
    %1987 = vmatpush1.msra.mxu0 %v486
    %1988 = vmatprep.subr.mxu0 %v484
    %1989 = vmatpush1.msra.mxu0 %v483
    %1990 = vmatprep.subr.mxu0 %v481
    %1991 = vmatpush1.msra.mxu0 %v480
    %1992 = vmatprep.subr.mxu0 %v478
    %1993 = vmatpush1.msra.mxu0 %v477
    %1994 = vmatprep.subr.mxu0 %v475
    %1995 = vmatpush1.msra.mxu0 %v474
    %1996 = vmatprep.subr.mxu0 0.0
    %1997 = vmatpush2.msra.mxu0 0.0
    %1998 = vmatprep.subr.mxu0 0.0
    %1999 = vmatpush2.msra.mxu0 0.0
    %2000 = vmatprep.subr.mxu0 0.0
    %2001 = vmatpush2.msra.mxu0 0.0
    %2002 = vmatprep.subr.mxu0 0.0
    %2003 = vmatpush2.msra.mxu0 0.0
    %2004 = vmatprep.subr.mxu0 0.0
    %2005 = vmatpush2.msra.mxu0 0.0
    %2006 = vmatprep.subr.mxu0 0.0
    %2007 = vmatpush2.msra.mxu0 0.0
    %2008 = vmatprep.subr.mxu0 0.0
    %2009 = vmatpush2.msra.mxu0 0.0
    %2010 = vmatprep.subr.mxu0 0.0
    %2011 = vmatpush2.msra.mxu0 0.0
    %2012 = vmatprep.subr.mxu0 0.0
    %2013 = vmatpush2.msra.mxu0 0.0
    %2014 = vmatprep.subr.mxu0 0.0
    %2015 = vmatpush2.msra.mxu0 0.0
    %2016 = vmatprep.subr.mxu0 0.0
    %2017 = vmatpush2.msra.mxu0 0.0
    %2018 = vmatprep.subr.mxu0 0.0
    %2019 = vmatpush2.msra.mxu0 0.0
    %2020 = vmatprep.subr.mxu0 0.0
    %2021 = vmatpush2.msra.mxu0 0.0
    %2022 = vmatprep.subr.mxu0 0.0
    %2023 = vmatpush2.msra.mxu0 0.0
    %2024 = vmatprep.subr.mxu0 0.0
    %2025 = vmatpush2.msra.mxu0 0.0
    %2026 = vmatprep.subr.mxu0 0.0
    %2027 = vmatpush2.msra.mxu0 0.0
    %2028 = vmatprep.mubr.f32.mxu0 0.0
    %2029 = vmatmul.mubr.f32.gmra.mxu0 %v1958
    %v2030 = vpop.f32.mrf.mxu0
    %v2031 = vadd.f32 0.0, %v2030
    %v2032 = vpop.f32.mrf.mxu0
    %v2033 = vadd.f32 0.0, %v2032
    %2034 = vdwg.mxu0
    %2035 = vmatprep.subr.mxu0 0.0
    %2036 = vmatpush1.msra.mxu0 %v521
    %2037 = vmatprep.subr.mxu0 0.0
    %2038 = vmatpush1.msra.mxu0 %v518
    %2039 = vmatprep.subr.mxu0 0.0
    %2040 = vmatpush1.msra.mxu0 %v515
    %2041 = vmatprep.subr.mxu0 0.0
    %2042 = vmatpush1.msra.mxu0 %v512
    %2043 = vmatprep.subr.mxu0 0.0
    %2044 = vmatpush1.msra.mxu0 %v509
    %2045 = vmatprep.subr.mxu0 0.0
    %2046 = vmatpush1.msra.mxu0 %v506
    %2047 = vmatprep.subr.mxu0 0.0
    %2048 = vmatpush1.msra.mxu0 %v503
    %2049 = vmatprep.subr.mxu0 0.0
    %2050 = vmatpush1.msra.mxu0 %v500
    %2051 = vmatprep.subr.mxu0 0.0
    %2052 = vmatpush1.msra.mxu0 %v497
    %2053 = vmatprep.subr.mxu0 0.0
    %2054 = vmatpush1.msra.mxu0 %v494
    %2055 = vmatprep.subr.mxu0 0.0
    %2056 = vmatpush1.msra.mxu0 %v491
    %2057 = vmatprep.subr.mxu0 0.0
    %2058 = vmatpush1.msra.mxu0 %v488
    %2059 = vmatprep.subr.mxu0 0.0
    %2060 = vmatpush1.msra.mxu0 %v485
    %2061 = vmatprep.subr.mxu0 0.0
    %2062 = vmatpush1.msra.mxu0 %v482
    %2063 = vmatprep.subr.mxu0 0.0
    %2064 = vmatpush1.msra.mxu0 %v479
    %2065 = vmatprep.subr.mxu0 0.0
    %2066 = vmatpush1.msra.mxu0 %v476
    %2067 = vmatprep.subr.mxu0 0.0
    %2068 = vmatpush2.msra.mxu0 0.0
    %2069 = vmatprep.subr.mxu0 0.0
    %2070 = vmatpush2.msra.mxu0 0.0
    %2071 = vmatprep.subr.mxu0 0.0
    %2072 = vmatpush2.msra.mxu0 0.0
    %2073 = vmatprep.subr.mxu0 0.0
    %2074 = vmatpush2.msra.mxu0 0.0
    %2075 = vmatprep.subr.mxu0 0.0
    %2076 = vmatpush2.msra.mxu0 0.0
    %2077 = vmatprep.subr.mxu0 0.0
    %2078 = vmatpush2.msra.mxu0 0.0
    %2079 = vmatprep.subr.mxu0 0.0
    %2080 = vmatpush2.msra.mxu0 0.0
    %2081 = vmatprep.subr.mxu0 0.0
    %2082 = vmatpush2.msra.mxu0 0.0
    %2083 = vmatprep.subr.mxu0 0.0
    %2084 = vmatpush2.msra.mxu0 0.0
    %2085 = vmatprep.subr.mxu0 0.0
    %2086 = vmatpush2.msra.mxu0 0.0
    %2087 = vmatprep.subr.mxu0 0.0
    %2088 = vmatpush2.msra.mxu0 0.0
    %2089 = vmatprep.subr.mxu0 0.0
    %2090 = vmatpush2.msra.mxu0 0.0
    %2091 = vmatprep.subr.mxu0 0.0
    %2092 = vmatpush2.msra.mxu0 0.0
    %2093 = vmatprep.subr.mxu0 0.0
    %2094 = vmatpush2.msra.mxu0 0.0
    %2095 = vmatprep.subr.mxu0 0.0
    %2096 = vmatpush2.msra.mxu0 0.0
    %2097 = vmatprep.subr.mxu0 0.0
    %2098 = vmatpush2.msra.mxu0 0.0
    %2099 = vmatprep.mubr.f32.mxu0 0.0
    %2100 = vmatmul.mubr.f32.gmra.mxu0 %v1958
    %v2101 = vpop.f32.mrf.mxu0
    %v2102 = vadd.f32 0.0, %v2101
    %v2103 = vpop.f32.mrf.mxu0
    %2104 = vdwg.mxu0
    %v2105 = vadd.f32 %v1961, %v2031
    %v2106 = vxor.u32 %v2105, 2147483648
    %v2107 = vmul.f32 %v2106, 1.442695
    %v2108 = vpow.pop %v2107
    %v2109 = vadd.f32 %v2108, 1.0
    %v2110 = vrcp.pop %v2109
    %v2111 = vmul.f32 1.0, %v2110
    %v2112 = vadd.f32 %v1962, %v2033
    %v2113 = vxor.u32 %v2112, 2147483648
    %v2114 = vmul.f32 %v2113, 1.442695
    %v2115 = vpow.pop %v2114
    %v2116 = vadd.f32 %v2115, 1.0
    %v2117 = vrcp.pop %v2116
    %v2118 = vmul.f32 1.0, %v2117
    %v2119 = vadd.f32 %v2102, %v686
    %v2120 = vmul.f32 %v2111, %v2119
    %v2121 = vadd.f32 %v1963, %v2120
    %v2122 = vtanh.pop %v2121
    %v2123 = vsub.f32 1.0, %v2118
    %v2124 = vmul.f32 %v2123, %v2122
    %v2125 = vmul.f32 %v2118, %v1958
    %v2126 = vadd.f32 %v2124, %v2125
    %v2127 = vstv %s1959
    %vm2128 = vcmp.lt.s32.totalorder %v2127, %v473
    %v2129 = vsel %vm2128, 1, 0
    %2130 = vset.pattern.permute.xlu0 0
    %2131 = vperm.xlu0 %2130, %v2129
    %v2132 = vpop.permute.xlu0 %2131
    %vm2133 = vcmp.eq.s32.totalorder %v2132, 1
    %v2134 = vsel %vm2133, %v2126, 0.0
    %s2135 = scalar_lea.vmem %s7, 64
    %2136 = vst [vmem:[%s2135] sm:$0xff] %v2134
    %v2137 = vsel %vm2133, %v2126, %v1958
    %s2138 = sadd.s32 %s27, 9
    %s2139 = scalar_lea.vmem [#allocation3], 216
    %v2140 = vld [vmem:[%s2139] sm:$0xff]
    %v2141 = vld [vmem:[%s2139 + $0x8] sm:$0xff]
    %v2142 = vld [vmem:[%s2139 + $0x10] sm:$0xff]
    %2143 = vmatprep.subr.mxu0 %v520
    %2144 = vmatpush1.msra.mxu0 %v519
    %2145 = vmatprep.subr.mxu0 %v517
    %2146 = vmatpush1.msra.mxu0 %v516
    %2147 = vmatprep.subr.mxu0 %v514
    %2148 = vmatpush1.msra.mxu0 %v513
    %2149 = vmatprep.subr.mxu0 %v511
    %2150 = vmatpush1.msra.mxu0 %v510
    %2151 = vmatprep.subr.mxu0 %v508
    %2152 = vmatpush1.msra.mxu0 %v507
    %2153 = vmatprep.subr.mxu0 %v505
    %2154 = vmatpush1.msra.mxu0 %v504
    %2155 = vmatprep.subr.mxu0 %v502
    %2156 = vmatpush1.msra.mxu0 %v501
    %2157 = vmatprep.subr.mxu0 %v499
    %2158 = vmatpush1.msra.mxu0 %v498
    %2159 = vmatprep.subr.mxu0 %v496
    %2160 = vmatpush1.msra.mxu0 %v495
    %2161 = vmatprep.subr.mxu0 %v493
    %2162 = vmatpush1.msra.mxu0 %v492
    %2163 = vmatprep.subr.mxu0 %v490
    %2164 = vmatpush1.msra.mxu0 %v489
    %2165 = vmatprep.subr.mxu0 %v487
    %2166 = vmatpush1.msra.mxu0 %v486
    %2167 = vmatprep.subr.mxu0 %v484
    %2168 = vmatpush1.msra.mxu0 %v483
    %2169 = vmatprep.subr.mxu0 %v481
    %2170 = vmatpush1.msra.mxu0 %v480
    %2171 = vmatprep.subr.mxu0 %v478
    %2172 = vmatpush1.msra.mxu0 %v477
    %2173 = vmatprep.subr.mxu0 %v475
    %2174 = vmatpush1.msra.mxu0 %v474
    %2175 = vmatprep.subr.mxu0 0.0
    %2176 = vmatpush2.msra.mxu0 0.0
    %2177 = vmatprep.subr.mxu0 0.0
    %2178 = vmatpush2.msra.mxu0 0.0
    %2179 = vmatprep.subr.mxu0 0.0
    %2180 = vmatpush2.msra.mxu0 0.0
    %2181 = vmatprep.subr.mxu0 0.0
    %2182 = vmatpush2.msra.mxu0 0.0
    %2183 = vmatprep.subr.mxu0 0.0
    %2184 = vmatpush2.msra.mxu0 0.0
    %2185 = vmatprep.subr.mxu0 0.0
    %2186 = vmatpush2.msra.mxu0 0.0
    %2187 = vmatprep.subr.mxu0 0.0
    %2188 = vmatpush2.msra.mxu0 0.0
    %2189 = vmatprep.subr.mxu0 0.0
    %2190 = vmatpush2.msra.mxu0 0.0
    %2191 = vmatprep.subr.mxu0 0.0
    %2192 = vmatpush2.msra.mxu0 0.0
    %2193 = vmatprep.subr.mxu0 0.0
    %2194 = vmatpush2.msra.mxu0 0.0
    %2195 = vmatprep.subr.mxu0 0.0
    %2196 = vmatpush2.msra.mxu0 0.0
    %2197 = vmatprep.subr.mxu0 0.0
    %2198 = vmatpush2.msra.mxu0 0.0
    %2199 = vmatprep.subr.mxu0 0.0
    %2200 = vmatpush2.msra.mxu0 0.0
    %2201 = vmatprep.subr.mxu0 0.0
    %2202 = vmatpush2.msra.mxu0 0.0
    %2203 = vmatprep.subr.mxu0 0.0
    %2204 = vmatpush2.msra.mxu0 0.0
    %2205 = vmatprep.subr.mxu0 0.0
    %2206 = vmatpush2.msra.mxu0 0.0
    %2207 = vmatprep.mubr.f32.mxu0 0.0
    %2208 = vmatmul.mubr.f32.gmra.mxu0 %v2137
    %v2209 = vpop.f32.mrf.mxu0
    %v2210 = vadd.f32 0.0, %v2209
    %v2211 = vpop.f32.mrf.mxu0
    %v2212 = vadd.f32 0.0, %v2211
    %2213 = vdwg.mxu0
    %2214 = vmatprep.subr.mxu0 0.0
    %2215 = vmatpush1.msra.mxu0 %v521
    %2216 = vmatprep.subr.mxu0 0.0
    %2217 = vmatpush1.msra.mxu0 %v518
    %2218 = vmatprep.subr.mxu0 0.0
    %2219 = vmatpush1.msra.mxu0 %v515
    %2220 = vmatprep.subr.mxu0 0.0
    %2221 = vmatpush1.msra.mxu0 %v512
    %2222 = vmatprep.subr.mxu0 0.0
    %2223 = vmatpush1.msra.mxu0 %v509
    %2224 = vmatprep.subr.mxu0 0.0
    %2225 = vmatpush1.msra.mxu0 %v506
    %2226 = vmatprep.subr.mxu0 0.0
    %2227 = vmatpush1.msra.mxu0 %v503
    %2228 = vmatprep.subr.mxu0 0.0
    %2229 = vmatpush1.msra.mxu0 %v500
    %2230 = vmatprep.subr.mxu0 0.0
    %2231 = vmatpush1.msra.mxu0 %v497
    %2232 = vmatprep.subr.mxu0 0.0
    %2233 = vmatpush1.msra.mxu0 %v494
    %2234 = vmatprep.subr.mxu0 0.0
    %2235 = vmatpush1.msra.mxu0 %v491
    %2236 = vmatprep.subr.mxu0 0.0
    %2237 = vmatpush1.msra.mxu0 %v488
    %2238 = vmatprep.subr.mxu0 0.0
    %2239 = vmatpush1.msra.mxu0 %v485
    %2240 = vmatprep.subr.mxu0 0.0
    %2241 = vmatpush1.msra.mxu0 %v482
    %2242 = vmatprep.subr.mxu0 0.0
    %2243 = vmatpush1.msra.mxu0 %v479
    %2244 = vmatprep.subr.mxu0 0.0
    %2245 = vmatpush1.msra.mxu0 %v476
    %2246 = vmatprep.subr.mxu0 0.0
    %2247 = vmatpush2.msra.mxu0 0.0
    %2248 = vmatprep.subr.mxu0 0.0
    %2249 = vmatpush2.msra.mxu0 0.0
    %2250 = vmatprep.subr.mxu0 0.0
    %2251 = vmatpush2.msra.mxu0 0.0
    %2252 = vmatprep.subr.mxu0 0.0
    %2253 = vmatpush2.msra.mxu0 0.0
    %2254 = vmatprep.subr.mxu0 0.0
    %2255 = vmatpush2.msra.mxu0 0.0
    %2256 = vmatprep.subr.mxu0 0.0
    %2257 = vmatpush2.msra.mxu0 0.0
    %2258 = vmatprep.subr.mxu0 0.0
    %2259 = vmatpush2.msra.mxu0 0.0
    %2260 = vmatprep.subr.mxu0 0.0
    %2261 = vmatpush2.msra.mxu0 0.0
    %2262 = vmatprep.subr.mxu0 0.0
    %2263 = vmatpush2.msra.mxu0 0.0
    %2264 = vmatprep.subr.mxu0 0.0
    %2265 = vmatpush2.msra.mxu0 0.0
    %2266 = vmatprep.subr.mxu0 0.0
    %2267 = vmatpush2.msra.mxu0 0.0
    %2268 = vmatprep.subr.mxu0 0.0
    %2269 = vmatpush2.msra.mxu0 0.0
    %2270 = vmatprep.subr.mxu0 0.0
    %2271 = vmatpush2.msra.mxu0 0.0
    %2272 = vmatprep.subr.mxu0 0.0
    %2273 = vmatpush2.msra.mxu0 0.0
    %2274 = vmatprep.subr.mxu0 0.0
    %2275 = vmatpush2.msra.mxu0 0.0
    %2276 = vmatprep.subr.mxu0 0.0
    %2277 = vmatpush2.msra.mxu0 0.0
    %2278 = vmatprep.mubr.f32.mxu0 0.0
    %2279 = vmatmul.mubr.f32.gmra.mxu0 %v2137
    %v2280 = vpop.f32.mrf.mxu0
    %v2281 = vadd.f32 0.0, %v2280
    %v2282 = vpop.f32.mrf.mxu0
    %2283 = vdwg.mxu0
    %v2284 = vadd.f32 %v2140, %v2210
    %v2285 = vxor.u32 %v2284, 2147483648
    %v2286 = vmul.f32 %v2285, 1.442695
    %v2287 = vpow.pop %v2286
    %v2288 = vadd.f32 %v2287, 1.0
    %v2289 = vrcp.pop %v2288
    %v2290 = vmul.f32 1.0, %v2289
    %v2291 = vadd.f32 %v2141, %v2212
    %v2292 = vxor.u32 %v2291, 2147483648
    %v2293 = vmul.f32 %v2292, 1.442695
    %v2294 = vpow.pop %v2293
    %v2295 = vadd.f32 %v2294, 1.0
    %v2296 = vrcp.pop %v2295
    %v2297 = vmul.f32 1.0, %v2296
    %v2298 = vadd.f32 %v2281, %v686
    %v2299 = vmul.f32 %v2290, %v2298
    %v2300 = vadd.f32 %v2142, %v2299
    %v2301 = vtanh.pop %v2300
    %v2302 = vsub.f32 1.0, %v2297
    %v2303 = vmul.f32 %v2302, %v2301
    %v2304 = vmul.f32 %v2297, %v2137
    %v2305 = vadd.f32 %v2303, %v2304
    %v2306 = vstv %s2138
    %vm2307 = vcmp.lt.s32.totalorder %v2306, %v473
    %v2308 = vsel %vm2307, 1, 0
    %2309 = vset.pattern.permute.xlu0 0
    %2310 = vperm.xlu0 %2309, %v2308
    %v2311 = vpop.permute.xlu0 %2310
    %vm2312 = vcmp.eq.s32.totalorder %v2311, 1
    %v2313 = vsel %vm2312, %v2305, 0.0
    %s2314 = scalar_lea.vmem %s7, 72
    %2315 = vst [vmem:[%s2314] sm:$0xff] %v2313
    %v2316 = vsel %vm2312, %v2305, %v2137
    %s2317 = sadd.s32 %s27, 10
    %s2318 = scalar_lea.vmem [#allocation3], 240
    %v2319 = vld [vmem:[%s2318] sm:$0xff]
    %v2320 = vld [vmem:[%s2318 + $0x8] sm:$0xff]
    %v2321 = vld [vmem:[%s2318 + $0x10] sm:$0xff]
    %2322 = vmatprep.subr.mxu0 %v520
    %2323 = vmatpush1.msra.mxu0 %v519
    %2324 = vmatprep.subr.mxu0 %v517
    %2325 = vmatpush1.msra.mxu0 %v516
    %2326 = vmatprep.subr.mxu0 %v514
    %2327 = vmatpush1.msra.mxu0 %v513
    %2328 = vmatprep.subr.mxu0 %v511
    %2329 = vmatpush1.msra.mxu0 %v510
    %2330 = vmatprep.subr.mxu0 %v508
    %2331 = vmatpush1.msra.mxu0 %v507
    %2332 = vmatprep.subr.mxu0 %v505
    %2333 = vmatpush1.msra.mxu0 %v504
    %2334 = vmatprep.subr.mxu0 %v502
    %2335 = vmatpush1.msra.mxu0 %v501
    %2336 = vmatprep.subr.mxu0 %v499
    %2337 = vmatpush1.msra.mxu0 %v498
    %2338 = vmatprep.subr.mxu0 %v496
    %2339 = vmatpush1.msra.mxu0 %v495
    %2340 = vmatprep.subr.mxu0 %v493
    %2341 = vmatpush1.msra.mxu0 %v492
    %2342 = vmatprep.subr.mxu0 %v490
    %2343 = vmatpush1.msra.mxu0 %v489
    %2344 = vmatprep.subr.mxu0 %v487
    %2345 = vmatpush1.msra.mxu0 %v486
    %2346 = vmatprep.subr.mxu0 %v484
    %2347 = vmatpush1.msra.mxu0 %v483
    %2348 = vmatprep.subr.mxu0 %v481
    %2349 = vmatpush1.msra.mxu0 %v480
    %2350 = vmatprep.subr.mxu0 %v478
    %2351 = vmatpush1.msra.mxu0 %v477
    %2352 = vmatprep.subr.mxu0 %v475
    %2353 = vmatpush1.msra.mxu0 %v474
    %2354 = vmatprep.subr.mxu0 0.0
    %2355 = vmatpush2.msra.mxu0 0.0
    %2356 = vmatprep.subr.mxu0 0.0
    %2357 = vmatpush2.msra.mxu0 0.0
    %2358 = vmatprep.subr.mxu0 0.0
    %2359 = vmatpush2.msra.mxu0 0.0
    %2360 = vmatprep.subr.mxu0 0.0
    %2361 = vmatpush2.msra.mxu0 0.0
    %2362 = vmatprep.subr.mxu0 0.0
    %2363 = vmatpush2.msra.mxu0 0.0
    %2364 = vmatprep.subr.mxu0 0.0
    %2365 = vmatpush2.msra.mxu0 0.0
    %2366 = vmatprep.subr.mxu0 0.0
    %2367 = vmatpush2.msra.mxu0 0.0
    %2368 = vmatprep.subr.mxu0 0.0
    %2369 = vmatpush2.msra.mxu0 0.0
    %2370 = vmatprep.subr.mxu0 0.0
    %2371 = vmatpush2.msra.mxu0 0.0
    %2372 = vmatprep.subr.mxu0 0.0
    %2373 = vmatpush2.msra.mxu0 0.0
    %2374 = vmatprep.subr.mxu0 0.0
    %2375 = vmatpush2.msra.mxu0 0.0
    %2376 = vmatprep.subr.mxu0 0.0
    %2377 = vmatpush2.msra.mxu0 0.0
    %2378 = vmatprep.subr.mxu0 0.0
    %2379 = vmatpush2.msra.mxu0 0.0
    %2380 = vmatprep.subr.mxu0 0.0
    %2381 = vmatpush2.msra.mxu0 0.0
    %2382 = vmatprep.subr.mxu0 0.0
    %2383 = vmatpush2.msra.mxu0 0.0
    %2384 = vmatprep.subr.mxu0 0.0
    %2385 = vmatpush2.msra.mxu0 0.0
    %2386 = vmatprep.mubr.f32.mxu0 0.0
    %2387 = vmatmul.mubr.f32.gmra.mxu0 %v2316
    %v2388 = vpop.f32.mrf.mxu0
    %v2389 = vadd.f32 0.0, %v2388
    %v2390 = vpop.f32.mrf.mxu0
    %v2391 = vadd.f32 0.0, %v2390
    %2392 = vdwg.mxu0
    %2393 = vmatprep.subr.mxu0 0.0
    %2394 = vmatpush1.msra.mxu0 %v521
    %2395 = vmatprep.subr.mxu0 0.0
    %2396 = vmatpush1.msra.mxu0 %v518
    %2397 = vmatprep.subr.mxu0 0.0
    %2398 = vmatpush1.msra.mxu0 %v515
    %2399 = vmatprep.subr.mxu0 0.0
    %2400 = vmatpush1.msra.mxu0 %v512
    %2401 = vmatprep.subr.mxu0 0.0
    %2402 = vmatpush1.msra.mxu0 %v509
    %2403 = vmatprep.subr.mxu0 0.0
    %2404 = vmatpush1.msra.mxu0 %v506
    %2405 = vmatprep.subr.mxu0 0.0
    %2406 = vmatpush1.msra.mxu0 %v503
    %2407 = vmatprep.subr.mxu0 0.0
    %2408 = vmatpush1.msra.mxu0 %v500
    %2409 = vmatprep.subr.mxu0 0.0
    %2410 = vmatpush1.msra.mxu0 %v497
    %2411 = vmatprep.subr.mxu0 0.0
    %2412 = vmatpush1.msra.mxu0 %v494
    %2413 = vmatprep.subr.mxu0 0.0
    %2414 = vmatpush1.msra.mxu0 %v491
    %2415 = vmatprep.subr.mxu0 0.0
    %2416 = vmatpush1.msra.mxu0 %v488
    %2417 = vmatprep.subr.mxu0 0.0
    %2418 = vmatpush1.msra.mxu0 %v485
    %2419 = vmatprep.subr.mxu0 0.0
    %2420 = vmatpush1.msra.mxu0 %v482
    %2421 = vmatprep.subr.mxu0 0.0
    %2422 = vmatpush1.msra.mxu0 %v479
    %2423 = vmatprep.subr.mxu0 0.0
    %2424 = vmatpush1.msra.mxu0 %v476
    %2425 = vmatprep.subr.mxu0 0.0
    %2426 = vmatpush2.msra.mxu0 0.0
    %2427 = vmatprep.subr.mxu0 0.0
    %2428 = vmatpush2.msra.mxu0 0.0
    %2429 = vmatprep.subr.mxu0 0.0
    %2430 = vmatpush2.msra.mxu0 0.0
    %2431 = vmatprep.subr.mxu0 0.0
    %2432 = vmatpush2.msra.mxu0 0.0
    %2433 = vmatprep.subr.mxu0 0.0
    %2434 = vmatpush2.msra.mxu0 0.0
    %2435 = vmatprep.subr.mxu0 0.0
    %2436 = vmatpush2.msra.mxu0 0.0
    %2437 = vmatprep.subr.mxu0 0.0
    %2438 = vmatpush2.msra.mxu0 0.0
    %2439 = vmatprep.subr.mxu0 0.0
    %2440 = vmatpush2.msra.mxu0 0.0
    %2441 = vmatprep.subr.mxu0 0.0
    %2442 = vmatpush2.msra.mxu0 0.0
    %2443 = vmatprep.subr.mxu0 0.0
    %2444 = vmatpush2.msra.mxu0 0.0
    %2445 = vmatprep.subr.mxu0 0.0
    %2446 = vmatpush2.msra.mxu0 0.0
    %2447 = vmatprep.subr.mxu0 0.0
    %2448 = vmatpush2.msra.mxu0 0.0
    %2449 = vmatprep.subr.mxu0 0.0
    %2450 = vmatpush2.msra.mxu0 0.0
    %2451 = vmatprep.subr.mxu0 0.0
    %2452 = vmatpush2.msra.mxu0 0.0
    %2453 = vmatprep.subr.mxu0 0.0
    %2454 = vmatpush2.msra.mxu0 0.0
    %2455 = vmatprep.subr.mxu0 0.0
    %2456 = vmatpush2.msra.mxu0 0.0
    %2457 = vmatprep.mubr.f32.mxu0 0.0
    %2458 = vmatmul.mubr.f32.gmra.mxu0 %v2316
    %v2459 = vpop.f32.mrf.mxu0
    %v2460 = vadd.f32 0.0, %v2459
    %v2461 = vpop.f32.mrf.mxu0
    %2462 = vdwg.mxu0
    %v2463 = vadd.f32 %v2319, %v2389
    %v2464 = vxor.u32 %v2463, 2147483648
    %v2465 = vmul.f32 %v2464, 1.442695
    %v2466 = vpow.pop %v2465
    %v2467 = vadd.f32 %v2466, 1.0
    %v2468 = vrcp.pop %v2467
    %v2469 = vmul.f32 1.0, %v2468
    %v2470 = vadd.f32 %v2320, %v2391
    %v2471 = vxor.u32 %v2470, 2147483648
    %v2472 = vmul.f32 %v2471, 1.442695
    %v2473 = vpow.pop %v2472
    %v2474 = vadd.f32 %v2473, 1.0
    %v2475 = vrcp.pop %v2474
    %v2476 = vmul.f32 1.0, %v2475
    %v2477 = vadd.f32 %v2460, %v686
    %v2478 = vmul.f32 %v2469, %v2477
    %v2479 = vadd.f32 %v2321, %v2478
    %v2480 = vtanh.pop %v2479
    %v2481 = vsub.f32 1.0, %v2476
    %v2482 = vmul.f32 %v2481, %v2480
    %v2483 = vmul.f32 %v2476, %v2316
    %v2484 = vadd.f32 %v2482, %v2483
    %v2485 = vstv %s2317
    %vm2486 = vcmp.lt.s32.totalorder %v2485, %v473
    %v2487 = vsel %vm2486, 1, 0
    %2488 = vset.pattern.permute.xlu0 0
    %2489 = vperm.xlu0 %2488, %v2487
    %v2490 = vpop.permute.xlu0 %2489
    %vm2491 = vcmp.eq.s32.totalorder %v2490, 1
    %v2492 = vsel %vm2491, %v2484, 0.0
    %s2493 = scalar_lea.vmem %s7, 80
    %2494 = vst [vmem:[%s2493] sm:$0xff] %v2492
    %v2495 = vsel %vm2491, %v2484, %v2316
    %s2496 = sadd.s32 %s27, 11
    %s2497 = scalar_lea.vmem [#allocation3], 264
    %v2498 = vld [vmem:[%s2497] sm:$0xff]
    %v2499 = vld [vmem:[%s2497 + $0x8] sm:$0xff]
    %v2500 = vld [vmem:[%s2497 + $0x10] sm:$0xff]
    %2501 = vmatprep.subr.mxu0 %v520
    %2502 = vmatpush1.msra.mxu0 %v519
    %2503 = vmatprep.subr.mxu0 %v517
    %2504 = vmatpush1.msra.mxu0 %v516
    %2505 = vmatprep.subr.mxu0 %v514
    %2506 = vmatpush1.msra.mxu0 %v513
    %2507 = vmatprep.subr.mxu0 %v511
    %2508 = vmatpush1.msra.mxu0 %v510
    %2509 = vmatprep.subr.mxu0 %v508
    %2510 = vmatpush1.msra.mxu0 %v507
    %2511 = vmatprep.subr.mxu0 %v505
    %2512 = vmatpush1.msra.mxu0 %v504
    %2513 = vmatprep.subr.mxu0 %v502
    %2514 = vmatpush1.msra.mxu0 %v501
    %2515 = vmatprep.subr.mxu0 %v499
    %2516 = vmatpush1.msra.mxu0 %v498
    %2517 = vmatprep.subr.mxu0 %v496
    %2518 = vmatpush1.msra.mxu0 %v495
    %2519 = vmatprep.subr.mxu0 %v493
    %2520 = vmatpush1.msra.mxu0 %v492
    %2521 = vmatprep.subr.mxu0 %v490
    %2522 = vmatpush1.msra.mxu0 %v489
    %2523 = vmatprep.subr.mxu0 %v487
    %2524 = vmatpush1.msra.mxu0 %v486
    %2525 = vmatprep.subr.mxu0 %v484
    %2526 = vmatpush1.msra.mxu0 %v483
    %2527 = vmatprep.subr.mxu0 %v481
    %2528 = vmatpush1.msra.mxu0 %v480
    %2529 = vmatprep.subr.mxu0 %v478
    %2530 = vmatpush1.msra.mxu0 %v477
    %2531 = vmatprep.subr.mxu0 %v475
    %2532 = vmatpush1.msra.mxu0 %v474
    %2533 = vmatprep.subr.mxu0 0.0
    %2534 = vmatpush2.msra.mxu0 0.0
    %2535 = vmatprep.subr.mxu0 0.0
    %2536 = vmatpush2.msra.mxu0 0.0
    %2537 = vmatprep.subr.mxu0 0.0
    %2538 = vmatpush2.msra.mxu0 0.0
    %2539 = vmatprep.subr.mxu0 0.0
    %2540 = vmatpush2.msra.mxu0 0.0
    %2541 = vmatprep.subr.mxu0 0.0
    %2542 = vmatpush2.msra.mxu0 0.0
    %2543 = vmatprep.subr.mxu0 0.0
    %2544 = vmatpush2.msra.mxu0 0.0
    %2545 = vmatprep.subr.mxu0 0.0
    %2546 = vmatpush2.msra.mxu0 0.0
    %2547 = vmatprep.subr.mxu0 0.0
    %2548 = vmatpush2.msra.mxu0 0.0
    %2549 = vmatprep.subr.mxu0 0.0
    %2550 = vmatpush2.msra.mxu0 0.0
    %2551 = vmatprep.subr.mxu0 0.0
    %2552 = vmatpush2.msra.mxu0 0.0
    %2553 = vmatprep.subr.mxu0 0.0
    %2554 = vmatpush2.msra.mxu0 0.0
    %2555 = vmatprep.subr.mxu0 0.0
    %2556 = vmatpush2.msra.mxu0 0.0
    %2557 = vmatprep.subr.mxu0 0.0
    %2558 = vmatpush2.msra.mxu0 0.0
    %2559 = vmatprep.subr.mxu0 0.0
    %2560 = vmatpush2.msra.mxu0 0.0
    %2561 = vmatprep.subr.mxu0 0.0
    %2562 = vmatpush2.msra.mxu0 0.0
    %2563 = vmatprep.subr.mxu0 0.0
    %2564 = vmatpush2.msra.mxu0 0.0
    %2565 = vmatprep.mubr.f32.mxu0 0.0
    %2566 = vmatmul.mubr.f32.gmra.mxu0 %v2495
    %v2567 = vpop.f32.mrf.mxu0
    %v2568 = vadd.f32 0.0, %v2567
    %v2569 = vpop.f32.mrf.mxu0
    %v2570 = vadd.f32 0.0, %v2569
    %2571 = vdwg.mxu0
    %2572 = vmatprep.subr.mxu0 0.0
    %2573 = vmatpush1.msra.mxu0 %v521
    %2574 = vmatprep.subr.mxu0 0.0
    %2575 = vmatpush1.msra.mxu0 %v518
    %2576 = vmatprep.subr.mxu0 0.0
    %2577 = vmatpush1.msra.mxu0 %v515
    %2578 = vmatprep.subr.mxu0 0.0
    %2579 = vmatpush1.msra.mxu0 %v512
    %2580 = vmatprep.subr.mxu0 0.0
    %2581 = vmatpush1.msra.mxu0 %v509
    %2582 = vmatprep.subr.mxu0 0.0
    %2583 = vmatpush1.msra.mxu0 %v506
    %2584 = vmatprep.subr.mxu0 0.0
    %2585 = vmatpush1.msra.mxu0 %v503
    %2586 = vmatprep.subr.mxu0 0.0
    %2587 = vmatpush1.msra.mxu0 %v500
    %2588 = vmatprep.subr.mxu0 0.0
    %2589 = vmatpush1.msra.mxu0 %v497
    %2590 = vmatprep.subr.mxu0 0.0
    %2591 = vmatpush1.msra.mxu0 %v494
    %2592 = vmatprep.subr.mxu0 0.0
    %2593 = vmatpush1.msra.mxu0 %v491
    %2594 = vmatprep.subr.mxu0 0.0
    %2595 = vmatpush1.msra.mxu0 %v488
    %2596 = vmatprep.subr.mxu0 0.0
    %2597 = vmatpush1.msra.mxu0 %v485
    %2598 = vmatprep.subr.mxu0 0.0
    %2599 = vmatpush1.msra.mxu0 %v482
    %2600 = vmatprep.subr.mxu0 0.0
    %2601 = vmatpush1.msra.mxu0 %v479
    %2602 = vmatprep.subr.mxu0 0.0
    %2603 = vmatpush1.msra.mxu0 %v476
    %2604 = vmatprep.subr.mxu0 0.0
    %2605 = vmatpush2.msra.mxu0 0.0
    %2606 = vmatprep.subr.mxu0 0.0
    %2607 = vmatpush2.msra.mxu0 0.0
    %2608 = vmatprep.subr.mxu0 0.0
    %2609 = vmatpush2.msra.mxu0 0.0
    %2610 = vmatprep.subr.mxu0 0.0
    %2611 = vmatpush2.msra.mxu0 0.0
    %2612 = vmatprep.subr.mxu0 0.0
    %2613 = vmatpush2.msra.mxu0 0.0
    %2614 = vmatprep.subr.mxu0 0.0
    %2615 = vmatpush2.msra.mxu0 0.0
    %2616 = vmatprep.subr.mxu0 0.0
    %2617 = vmatpush2.msra.mxu0 0.0
    %2618 = vmatprep.subr.mxu0 0.0
    %2619 = vmatpush2.msra.mxu0 0.0
    %2620 = vmatprep.subr.mxu0 0.0
    %2621 = vmatpush2.msra.mxu0 0.0
    %2622 = vmatprep.subr.mxu0 0.0
    %2623 = vmatpush2.msra.mxu0 0.0
    %2624 = vmatprep.subr.mxu0 0.0
    %2625 = vmatpush2.msra.mxu0 0.0
    %2626 = vmatprep.subr.mxu0 0.0
    %2627 = vmatpush2.msra.mxu0 0.0
    %2628 = vmatprep.subr.mxu0 0.0
    %2629 = vmatpush2.msra.mxu0 0.0
    %2630 = vmatprep.subr.mxu0 0.0
    %2631 = vmatpush2.msra.mxu0 0.0
    %2632 = vmatprep.subr.mxu0 0.0
    %2633 = vmatpush2.msra.mxu0 0.0
    %2634 = vmatprep.subr.mxu0 0.0
    %2635 = vmatpush2.msra.mxu0 0.0
    %2636 = vmatprep.mubr.f32.mxu0 0.0
    %2637 = vmatmul.mubr.f32.gmra.mxu0 %v2495
    %v2638 = vpop.f32.mrf.mxu0
    %v2639 = vadd.f32 0.0, %v2638
    %v2640 = vpop.f32.mrf.mxu0
    %2641 = vdwg.mxu0
    %v2642 = vadd.f32 %v2498, %v2568
    %v2643 = vxor.u32 %v2642, 2147483648
    %v2644 = vmul.f32 %v2643, 1.442695
    %v2645 = vpow.pop %v2644
    %v2646 = vadd.f32 %v2645, 1.0
    %v2647 = vrcp.pop %v2646
    %v2648 = vmul.f32 1.0, %v2647
    %v2649 = vadd.f32 %v2499, %v2570
    %v2650 = vxor.u32 %v2649, 2147483648
    %v2651 = vmul.f32 %v2650, 1.442695
    %v2652 = vpow.pop %v2651
    %v2653 = vadd.f32 %v2652, 1.0
    %v2654 = vrcp.pop %v2653
    %v2655 = vmul.f32 1.0, %v2654
    %v2656 = vadd.f32 %v2639, %v686
    %v2657 = vmul.f32 %v2648, %v2656
    %v2658 = vadd.f32 %v2500, %v2657
    %v2659 = vtanh.pop %v2658
    %v2660 = vsub.f32 1.0, %v2655
    %v2661 = vmul.f32 %v2660, %v2659
    %v2662 = vmul.f32 %v2655, %v2495
    %v2663 = vadd.f32 %v2661, %v2662
    %v2664 = vstv %s2496
    %vm2665 = vcmp.lt.s32.totalorder %v2664, %v473
    %v2666 = vsel %vm2665, 1, 0
    %2667 = vset.pattern.permute.xlu0 0
    %2668 = vperm.xlu0 %2667, %v2666
    %v2669 = vpop.permute.xlu0 %2668
    %vm2670 = vcmp.eq.s32.totalorder %v2669, 1
    %v2671 = vsel %vm2670, %v2663, 0.0
    %s2672 = scalar_lea.vmem %s7, 88
    %2673 = vst [vmem:[%s2672] sm:$0xff] %v2671
    %v2674 = vsel %vm2670, %v2663, %v2495
    %s2675 = sadd.s32 %s27, 12
    %s2676 = scalar_lea.vmem [#allocation3], 288
    %v2677 = vld [vmem:[%s2676] sm:$0xff]
    %v2678 = vld [vmem:[%s2676 + $0x8] sm:$0xff]
    %v2679 = vld [vmem:[%s2676 + $0x10] sm:$0xff]
    %2680 = vmatprep.subr.mxu0 %v520
    %2681 = vmatpush1.msra.mxu0 %v519
    %2682 = vmatprep.subr.mxu0 %v517
    %2683 = vmatpush1.msra.mxu0 %v516
    %2684 = vmatprep.subr.mxu0 %v514
    %2685 = vmatpush1.msra.mxu0 %v513
    %2686 = vmatprep.subr.mxu0 %v511
    %2687 = vmatpush1.msra.mxu0 %v510
    %2688 = vmatprep.subr.mxu0 %v508
    %2689 = vmatpush1.msra.mxu0 %v507
    %2690 = vmatprep.subr.mxu0 %v505
    %2691 = vmatpush1.msra.mxu0 %v504
    %2692 = vmatprep.subr.mxu0 %v502
    %2693 = vmatpush1.msra.mxu0 %v501
    %2694 = vmatprep.subr.mxu0 %v499
    %2695 = vmatpush1.msra.mxu0 %v498
    %2696 = vmatprep.subr.mxu0 %v496
    %2697 = vmatpush1.msra.mxu0 %v495
    %2698 = vmatprep.subr.mxu0 %v493
    %2699 = vmatpush1.msra.mxu0 %v492
    %2700 = vmatprep.subr.mxu0 %v490
    %2701 = vmatpush1.msra.mxu0 %v489
    %2702 = vmatprep.subr.mxu0 %v487
    %2703 = vmatpush1.msra.mxu0 %v486
    %2704 = vmatprep.subr.mxu0 %v484
    %2705 = vmatpush1.msra.mxu0 %v483
    %2706 = vmatprep.subr.mxu0 %v481
    %2707 = vmatpush1.msra.mxu0 %v480
    %2708 = vmatprep.subr.mxu0 %v478
    %2709 = vmatpush1.msra.mxu0 %v477
    %2710 = vmatprep.subr.mxu0 %v475
    %2711 = vmatpush1.msra.mxu0 %v474
    %2712 = vmatprep.subr.mxu0 0.0
    %2713 = vmatpush2.msra.mxu0 0.0
    %2714 = vmatprep.subr.mxu0 0.0
    %2715 = vmatpush2.msra.mxu0 0.0
    %2716 = vmatprep.subr.mxu0 0.0
    %2717 = vmatpush2.msra.mxu0 0.0
    %2718 = vmatprep.subr.mxu0 0.0
    %2719 = vmatpush2.msra.mxu0 0.0
    %2720 = vmatprep.subr.mxu0 0.0
    %2721 = vmatpush2.msra.mxu0 0.0
    %2722 = vmatprep.subr.mxu0 0.0
    %2723 = vmatpush2.msra.mxu0 0.0
    %2724 = vmatprep.subr.mxu0 0.0
    %2725 = vmatpush2.msra.mxu0 0.0
    %2726 = vmatprep.subr.mxu0 0.0
    %2727 = vmatpush2.msra.mxu0 0.0
    %2728 = vmatprep.subr.mxu0 0.0
    %2729 = vmatpush2.msra.mxu0 0.0
    %2730 = vmatprep.subr.mxu0 0.0
    %2731 = vmatpush2.msra.mxu0 0.0
    %2732 = vmatprep.subr.mxu0 0.0
    %2733 = vmatpush2.msra.mxu0 0.0
    %2734 = vmatprep.subr.mxu0 0.0
    %2735 = vmatpush2.msra.mxu0 0.0
    %2736 = vmatprep.subr.mxu0 0.0
    %2737 = vmatpush2.msra.mxu0 0.0
    %2738 = vmatprep.subr.mxu0 0.0
    %2739 = vmatpush2.msra.mxu0 0.0
    %2740 = vmatprep.subr.mxu0 0.0
    %2741 = vmatpush2.msra.mxu0 0.0
    %2742 = vmatprep.subr.mxu0 0.0
    %2743 = vmatpush2.msra.mxu0 0.0
    %2744 = vmatprep.mubr.f32.mxu0 0.0
    %2745 = vmatmul.mubr.f32.gmra.mxu0 %v2674
    %v2746 = vpop.f32.mrf.mxu0
    %v2747 = vadd.f32 0.0, %v2746
    %v2748 = vpop.f32.mrf.mxu0
    %v2749 = vadd.f32 0.0, %v2748
    %2750 = vdwg.mxu0
    %2751 = vmatprep.subr.mxu0 0.0
    %2752 = vmatpush1.msra.mxu0 %v521
    %2753 = vmatprep.subr.mxu0 0.0
    %2754 = vmatpush1.msra.mxu0 %v518
    %2755 = vmatprep.subr.mxu0 0.0
    %2756 = vmatpush1.msra.mxu0 %v515
    %2757 = vmatprep.subr.mxu0 0.0
    %2758 = vmatpush1.msra.mxu0 %v512
    %2759 = vmatprep.subr.mxu0 0.0
    %2760 = vmatpush1.msra.mxu0 %v509
    %2761 = vmatprep.subr.mxu0 0.0
    %2762 = vmatpush1.msra.mxu0 %v506
    %2763 = vmatprep.subr.mxu0 0.0
    %2764 = vmatpush1.msra.mxu0 %v503
    %2765 = vmatprep.subr.mxu0 0.0
    %2766 = vmatpush1.msra.mxu0 %v500
    %2767 = vmatprep.subr.mxu0 0.0
    %2768 = vmatpush1.msra.mxu0 %v497
    %2769 = vmatprep.subr.mxu0 0.0
    %2770 = vmatpush1.msra.mxu0 %v494
    %2771 = vmatprep.subr.mxu0 0.0
    %2772 = vmatpush1.msra.mxu0 %v491
    %2773 = vmatprep.subr.mxu0 0.0
    %2774 = vmatpush1.msra.mxu0 %v488
    %2775 = vmatprep.subr.mxu0 0.0
    %2776 = vmatpush1.msra.mxu0 %v485
    %2777 = vmatprep.subr.mxu0 0.0
    %2778 = vmatpush1.msra.mxu0 %v482
    %2779 = vmatprep.subr.mxu0 0.0
    %2780 = vmatpush1.msra.mxu0 %v479
    %2781 = vmatprep.subr.mxu0 0.0
    %2782 = vmatpush1.msra.mxu0 %v476
    %2783 = vmatprep.subr.mxu0 0.0
    %2784 = vmatpush2.msra.mxu0 0.0
    %2785 = vmatprep.subr.mxu0 0.0
    %2786 = vmatpush2.msra.mxu0 0.0
    %2787 = vmatprep.subr.mxu0 0.0
    %2788 = vmatpush2.msra.mxu0 0.0
    %2789 = vmatprep.subr.mxu0 0.0
    %2790 = vmatpush2.msra.mxu0 0.0
    %2791 = vmatprep.subr.mxu0 0.0
    %2792 = vmatpush2.msra.mxu0 0.0
    %2793 = vmatprep.subr.mxu0 0.0
    %2794 = vmatpush2.msra.mxu0 0.0
    %2795 = vmatprep.subr.mxu0 0.0
    %2796 = vmatpush2.msra.mxu0 0.0
    %2797 = vmatprep.subr.mxu0 0.0
    %2798 = vmatpush2.msra.mxu0 0.0
    %2799 = vmatprep.subr.mxu0 0.0
    %2800 = vmatpush2.msra.mxu0 0.0
    %2801 = vmatprep.subr.mxu0 0.0
    %2802 = vmatpush2.msra.mxu0 0.0
    %2803 = vmatprep.subr.mxu0 0.0
    %2804 = vmatpush2.msra.mxu0 0.0
    %2805 = vmatprep.subr.mxu0 0.0
    %2806 = vmatpush2.msra.mxu0 0.0
    %2807 = vmatprep.subr.mxu0 0.0
    %2808 = vmatpush2.msra.mxu0 0.0
    %2809 = vmatprep.subr.mxu0 0.0
    %2810 = vmatpush2.msra.mxu0 0.0
    %2811 = vmatprep.subr.mxu0 0.0
    %2812 = vmatpush2.msra.mxu0 0.0
    %2813 = vmatprep.subr.mxu0 0.0
    %2814 = vmatpush2.msra.mxu0 0.0
    %2815 = vmatprep.mubr.f32.mxu0 0.0
    %2816 = vmatmul.mubr.f32.gmra.mxu0 %v2674
    %v2817 = vpop.f32.mrf.mxu0
    %v2818 = vadd.f32 0.0, %v2817
    %v2819 = vpop.f32.mrf.mxu0
    %2820 = vdwg.mxu0
    %v2821 = vadd.f32 %v2677, %v2747
    %v2822 = vxor.u32 %v2821, 2147483648
    %v2823 = vmul.f32 %v2822, 1.442695
    %v2824 = vpow.pop %v2823
    %v2825 = vadd.f32 %v2824, 1.0
    %v2826 = vrcp.pop %v2825
    %v2827 = vmul.f32 1.0, %v2826
    %v2828 = vadd.f32 %v2678, %v2749
    %v2829 = vxor.u32 %v2828, 2147483648
    %v2830 = vmul.f32 %v2829, 1.442695
    %v2831 = vpow.pop %v2830
    %v2832 = vadd.f32 %v2831, 1.0
    %v2833 = vrcp.pop %v2832
    %v2834 = vmul.f32 1.0, %v2833
    %v2835 = vadd.f32 %v2818, %v686
    %v2836 = vmul.f32 %v2827, %v2835
    %v2837 = vadd.f32 %v2679, %v2836
    %v2838 = vtanh.pop %v2837
    %v2839 = vsub.f32 1.0, %v2834
    %v2840 = vmul.f32 %v2839, %v2838
    %v2841 = vmul.f32 %v2834, %v2674
    %v2842 = vadd.f32 %v2840, %v2841
    %v2843 = vstv %s2675
    %vm2844 = vcmp.lt.s32.totalorder %v2843, %v473
    %v2845 = vsel %vm2844, 1, 0
    %2846 = vset.pattern.permute.xlu0 0
    %2847 = vperm.xlu0 %2846, %v2845
    %v2848 = vpop.permute.xlu0 %2847
    %vm2849 = vcmp.eq.s32.totalorder %v2848, 1
    %v2850 = vsel %vm2849, %v2842, 0.0
    %s2851 = scalar_lea.vmem %s7, 96
    %2852 = vst [vmem:[%s2851] sm:$0xff] %v2850
    %v2853 = vsel %vm2849, %v2842, %v2674
    %s2854 = sadd.s32 %s27, 13
    %s2855 = scalar_lea.vmem [#allocation3], 312
    %v2856 = vld [vmem:[%s2855] sm:$0xff]
    %v2857 = vld [vmem:[%s2855 + $0x8] sm:$0xff]
    %v2858 = vld [vmem:[%s2855 + $0x10] sm:$0xff]
    %2859 = vmatprep.subr.mxu0 %v520
    %2860 = vmatpush1.msra.mxu0 %v519
    %2861 = vmatprep.subr.mxu0 %v517
    %2862 = vmatpush1.msra.mxu0 %v516
    %2863 = vmatprep.subr.mxu0 %v514
    %2864 = vmatpush1.msra.mxu0 %v513
    %2865 = vmatprep.subr.mxu0 %v511
    %2866 = vmatpush1.msra.mxu0 %v510
    %2867 = vmatprep.subr.mxu0 %v508
    %2868 = vmatpush1.msra.mxu0 %v507
    %2869 = vmatprep.subr.mxu0 %v505
    %2870 = vmatpush1.msra.mxu0 %v504
    %2871 = vmatprep.subr.mxu0 %v502
    %2872 = vmatpush1.msra.mxu0 %v501
    %2873 = vmatprep.subr.mxu0 %v499
    %2874 = vmatpush1.msra.mxu0 %v498
    %2875 = vmatprep.subr.mxu0 %v496
    %2876 = vmatpush1.msra.mxu0 %v495
    %2877 = vmatprep.subr.mxu0 %v493
    %2878 = vmatpush1.msra.mxu0 %v492
    %2879 = vmatprep.subr.mxu0 %v490
    %2880 = vmatpush1.msra.mxu0 %v489
    %2881 = vmatprep.subr.mxu0 %v487
    %2882 = vmatpush1.msra.mxu0 %v486
    %2883 = vmatprep.subr.mxu0 %v484
    %2884 = vmatpush1.msra.mxu0 %v483
    %2885 = vmatprep.subr.mxu0 %v481
    %2886 = vmatpush1.msra.mxu0 %v480
    %2887 = vmatprep.subr.mxu0 %v478
    %2888 = vmatpush1.msra.mxu0 %v477
    %2889 = vmatprep.subr.mxu0 %v475
    %2890 = vmatpush1.msra.mxu0 %v474
    %2891 = vmatprep.subr.mxu0 0.0
    %2892 = vmatpush2.msra.mxu0 0.0
    %2893 = vmatprep.subr.mxu0 0.0
    %2894 = vmatpush2.msra.mxu0 0.0
    %2895 = vmatprep.subr.mxu0 0.0
    %2896 = vmatpush2.msra.mxu0 0.0
    %2897 = vmatprep.subr.mxu0 0.0
    %2898 = vmatpush2.msra.mxu0 0.0
    %2899 = vmatprep.subr.mxu0 0.0
    %2900 = vmatpush2.msra.mxu0 0.0
    %2901 = vmatprep.subr.mxu0 0.0
    %2902 = vmatpush2.msra.mxu0 0.0
    %2903 = vmatprep.subr.mxu0 0.0
    %2904 = vmatpush2.msra.mxu0 0.0
    %2905 = vmatprep.subr.mxu0 0.0
    %2906 = vmatpush2.msra.mxu0 0.0
    %2907 = vmatprep.subr.mxu0 0.0
    %2908 = vmatpush2.msra.mxu0 0.0
    %2909 = vmatprep.subr.mxu0 0.0
    %2910 = vmatpush2.msra.mxu0 0.0
    %2911 = vmatprep.subr.mxu0 0.0
    %2912 = vmatpush2.msra.mxu0 0.0
    %2913 = vmatprep.subr.mxu0 0.0
    %2914 = vmatpush2.msra.mxu0 0.0
    %2915 = vmatprep.subr.mxu0 0.0
    %2916 = vmatpush2.msra.mxu0 0.0
    %2917 = vmatprep.subr.mxu0 0.0
    %2918 = vmatpush2.msra.mxu0 0.0
    %2919 = vmatprep.subr.mxu0 0.0
    %2920 = vmatpush2.msra.mxu0 0.0
    %2921 = vmatprep.subr.mxu0 0.0
    %2922 = vmatpush2.msra.mxu0 0.0
    %2923 = vmatprep.mubr.f32.mxu0 0.0
    %2924 = vmatmul.mubr.f32.gmra.mxu0 %v2853
    %v2925 = vpop.f32.mrf.mxu0
    %v2926 = vadd.f32 0.0, %v2925
    %v2927 = vpop.f32.mrf.mxu0
    %v2928 = vadd.f32 0.0, %v2927
    %2929 = vdwg.mxu0
    %2930 = vmatprep.subr.mxu0 0.0
    %2931 = vmatpush1.msra.mxu0 %v521
    %2932 = vmatprep.subr.mxu0 0.0
    %2933 = vmatpush1.msra.mxu0 %v518
    %2934 = vmatprep.subr.mxu0 0.0
    %2935 = vmatpush1.msra.mxu0 %v515
    %2936 = vmatprep.subr.mxu0 0.0
    %2937 = vmatpush1.msra.mxu0 %v512
    %2938 = vmatprep.subr.mxu0 0.0
    %2939 = vmatpush1.msra.mxu0 %v509
    %2940 = vmatprep.subr.mxu0 0.0
    %2941 = vmatpush1.msra.mxu0 %v506
    %2942 = vmatprep.subr.mxu0 0.0
    %2943 = vmatpush1.msra.mxu0 %v503
    %2944 = vmatprep.subr.mxu0 0.0
    %2945 = vmatpush1.msra.mxu0 %v500
    %2946 = vmatprep.subr.mxu0 0.0
    %2947 = vmatpush1.msra.mxu0 %v497
    %2948 = vmatprep.subr.mxu0 0.0
    %2949 = vmatpush1.msra.mxu0 %v494
    %2950 = vmatprep.subr.mxu0 0.0
    %2951 = vmatpush1.msra.mxu0 %v491
    %2952 = vmatprep.subr.mxu0 0.0
    %2953 = vmatpush1.msra.mxu0 %v488
    %2954 = vmatprep.subr.mxu0 0.0
    %2955 = vmatpush1.msra.mxu0 %v485
    %2956 = vmatprep.subr.mxu0 0.0
    %2957 = vmatpush1.msra.mxu0 %v482
    %2958 = vmatprep.subr.mxu0 0.0
    %2959 = vmatpush1.msra.mxu0 %v479
    %2960 = vmatprep.subr.mxu0 0.0
    %2961 = vmatpush1.msra.mxu0 %v476
    %2962 = vmatprep.subr.mxu0 0.0
    %2963 = vmatpush2.msra.mxu0 0.0
    %2964 = vmatprep.subr.mxu0 0.0
    %2965 = vmatpush2.msra.mxu0 0.0
    %2966 = vmatprep.subr.mxu0 0.0
    %2967 = vmatpush2.msra.mxu0 0.0
    %2968 = vmatprep.subr.mxu0 0.0
    %2969 = vmatpush2.msra.mxu0 0.0
    %2970 = vmatprep.subr.mxu0 0.0
    %2971 = vmatpush2.msra.mxu0 0.0
    %2972 = vmatprep.subr.mxu0 0.0
    %2973 = vmatpush2.msra.mxu0 0.0
    %2974 = vmatprep.subr.mxu0 0.0
    %2975 = vmatpush2.msra.mxu0 0.0
    %2976 = vmatprep.subr.mxu0 0.0
    %2977 = vmatpush2.msra.mxu0 0.0
    %2978 = vmatprep.subr.mxu0 0.0
    %2979 = vmatpush2.msra.mxu0 0.0
    %2980 = vmatprep.subr.mxu0 0.0
    %2981 = vmatpush2.msra.mxu0 0.0
    %2982 = vmatprep.subr.mxu0 0.0
    %2983 = vmatpush2.msra.mxu0 0.0
    %2984 = vmatprep.subr.mxu0 0.0
    %2985 = vmatpush2.msra.mxu0 0.0
    %2986 = vmatprep.subr.mxu0 0.0
    %2987 = vmatpush2.msra.mxu0 0.0
    %2988 = vmatprep.subr.mxu0 0.0
    %2989 = vmatpush2.msra.mxu0 0.0
    %2990 = vmatprep.subr.mxu0 0.0
    %2991 = vmatpush2.msra.mxu0 0.0
    %2992 = vmatprep.subr.mxu0 0.0
    %2993 = vmatpush2.msra.mxu0 0.0
    %2994 = vmatprep.mubr.f32.mxu0 0.0
    %2995 = vmatmul.mubr.f32.gmra.mxu0 %v2853
    %v2996 = vpop.f32.mrf.mxu0
    %v2997 = vadd.f32 0.0, %v2996
    %v2998 = vpop.f32.mrf.mxu0
    %2999 = vdwg.mxu0
    %v3000 = vadd.f32 %v2856, %v2926
    %v3001 = vxor.u32 %v3000, 2147483648
    %v3002 = vmul.f32 %v3001, 1.442695
    %v3003 = vpow.pop %v3002
    %v3004 = vadd.f32 %v3003, 1.0
    %v3005 = vrcp.pop %v3004
    %v3006 = vmul.f32 1.0, %v3005
    %v3007 = vadd.f32 %v2857, %v2928
    %v3008 = vxor.u32 %v3007, 2147483648
    %v3009 = vmul.f32 %v3008, 1.442695
    %v3010 = vpow.pop %v3009
    %v3011 = vadd.f32 %v3010, 1.0
    %v3012 = vrcp.pop %v3011
    %v3013 = vmul.f32 1.0, %v3012
    %v3014 = vadd.f32 %v2997, %v686
    %v3015 = vmul.f32 %v3006, %v3014
    %v3016 = vadd.f32 %v2858, %v3015
    %v3017 = vtanh.pop %v3016
    %v3018 = vsub.f32 1.0, %v3013
    %v3019 = vmul.f32 %v3018, %v3017
    %v3020 = vmul.f32 %v3013, %v2853
    %v3021 = vadd.f32 %v3019, %v3020
    %v3022 = vstv %s2854
    %vm3023 = vcmp.lt.s32.totalorder %v3022, %v473
    %v3024 = vsel %vm3023, 1, 0
    %3025 = vset.pattern.permute.xlu0 0
    %3026 = vperm.xlu0 %3025, %v3024
    %v3027 = vpop.permute.xlu0 %3026
    %vm3028 = vcmp.eq.s32.totalorder %v3027, 1
    %v3029 = vsel %vm3028, %v3021, 0.0
    %s3030 = scalar_lea.vmem %s7, 104
    %3031 = vst [vmem:[%s3030] sm:$0xff] %v3029
    %v3032 = vsel %vm3028, %v3021, %v2853
    %s3033 = sadd.s32 %s27, 14
    %s3034 = scalar_lea.vmem [#allocation3], 336
    %v3035 = vld [vmem:[%s3034] sm:$0xff]
    %v3036 = vld [vmem:[%s3034 + $0x8] sm:$0xff]
    %v3037 = vld [vmem:[%s3034 + $0x10] sm:$0xff]
    %3038 = vmatprep.subr.mxu0 %v520
    %3039 = vmatpush1.msra.mxu0 %v519
    %3040 = vmatprep.subr.mxu0 %v517
    %3041 = vmatpush1.msra.mxu0 %v516
    %3042 = vmatprep.subr.mxu0 %v514
    %3043 = vmatpush1.msra.mxu0 %v513
    %3044 = vmatprep.subr.mxu0 %v511
    %3045 = vmatpush1.msra.mxu0 %v510
    %3046 = vmatprep.subr.mxu0 %v508
    %3047 = vmatpush1.msra.mxu0 %v507
    %3048 = vmatprep.subr.mxu0 %v505
    %3049 = vmatpush1.msra.mxu0 %v504
    %3050 = vmatprep.subr.mxu0 %v502
    %3051 = vmatpush1.msra.mxu0 %v501
    %3052 = vmatprep.subr.mxu0 %v499
    %3053 = vmatpush1.msra.mxu0 %v498
    %3054 = vmatprep.subr.mxu0 %v496
    %3055 = vmatpush1.msra.mxu0 %v495
    %3056 = vmatprep.subr.mxu0 %v493
    %3057 = vmatpush1.msra.mxu0 %v492
    %3058 = vmatprep.subr.mxu0 %v490
    %3059 = vmatpush1.msra.mxu0 %v489
    %3060 = vmatprep.subr.mxu0 %v487
    %3061 = vmatpush1.msra.mxu0 %v486
    %3062 = vmatprep.subr.mxu0 %v484
    %3063 = vmatpush1.msra.mxu0 %v483
    %3064 = vmatprep.subr.mxu0 %v481
    %3065 = vmatpush1.msra.mxu0 %v480
    %3066 = vmatprep.subr.mxu0 %v478
    %3067 = vmatpush1.msra.mxu0 %v477
    %3068 = vmatprep.subr.mxu0 %v475
    %3069 = vmatpush1.msra.mxu0 %v474
    %3070 = vmatprep.subr.mxu0 0.0
    %3071 = vmatpush2.msra.mxu0 0.0
    %3072 = vmatprep.subr.mxu0 0.0
    %3073 = vmatpush2.msra.mxu0 0.0
    %3074 = vmatprep.subr.mxu0 0.0
    %3075 = vmatpush2.msra.mxu0 0.0
    %3076 = vmatprep.subr.mxu0 0.0
    %3077 = vmatpush2.msra.mxu0 0.0
    %3078 = vmatprep.subr.mxu0 0.0
    %3079 = vmatpush2.msra.mxu0 0.0
    %3080 = vmatprep.subr.mxu0 0.0
    %3081 = vmatpush2.msra.mxu0 0.0
    %3082 = vmatprep.subr.mxu0 0.0
    %3083 = vmatpush2.msra.mxu0 0.0
    %3084 = vmatprep.subr.mxu0 0.0
    %3085 = vmatpush2.msra.mxu0 0.0
    %3086 = vmatprep.subr.mxu0 0.0
    %3087 = vmatpush2.msra.mxu0 0.0
    %3088 = vmatprep.subr.mxu0 0.0
    %3089 = vmatpush2.msra.mxu0 0.0
    %3090 = vmatprep.subr.mxu0 0.0
    %3091 = vmatpush2.msra.mxu0 0.0
    %3092 = vmatprep.subr.mxu0 0.0
    %3093 = vmatpush2.msra.mxu0 0.0
    %3094 = vmatprep.subr.mxu0 0.0
    %3095 = vmatpush2.msra.mxu0 0.0
    %3096 = vmatprep.subr.mxu0 0.0
    %3097 = vmatpush2.msra.mxu0 0.0
    %3098 = vmatprep.subr.mxu0 0.0
    %3099 = vmatpush2.msra.mxu0 0.0
    %3100 = vmatprep.subr.mxu0 0.0
    %3101 = vmatpush2.msra.mxu0 0.0
    %3102 = vmatprep.mubr.f32.mxu0 0.0
    %3103 = vmatmul.mubr.f32.gmra.mxu0 %v3032
    %v3104 = vpop.f32.mrf.mxu0
    %v3105 = vadd.f32 0.0, %v3104
    %v3106 = vpop.f32.mrf.mxu0
    %v3107 = vadd.f32 0.0, %v3106
    %3108 = vdwg.mxu0
    %3109 = vmatprep.subr.mxu0 0.0
    %3110 = vmatpush1.msra.mxu0 %v521
    %3111 = vmatprep.subr.mxu0 0.0
    %3112 = vmatpush1.msra.mxu0 %v518
    %3113 = vmatprep.subr.mxu0 0.0
    %3114 = vmatpush1.msra.mxu0 %v515
    %3115 = vmatprep.subr.mxu0 0.0
    %3116 = vmatpush1.msra.mxu0 %v512
    %3117 = vmatprep.subr.mxu0 0.0
    %3118 = vmatpush1.msra.mxu0 %v509
    %3119 = vmatprep.subr.mxu0 0.0
    %3120 = vmatpush1.msra.mxu0 %v506
    %3121 = vmatprep.subr.mxu0 0.0
    %3122 = vmatpush1.msra.mxu0 %v503
    %3123 = vmatprep.subr.mxu0 0.0
    %3124 = vmatpush1.msra.mxu0 %v500
    %3125 = vmatprep.subr.mxu0 0.0
    %3126 = vmatpush1.msra.mxu0 %v497
    %3127 = vmatprep.subr.mxu0 0.0
    %3128 = vmatpush1.msra.mxu0 %v494
    %3129 = vmatprep.subr.mxu0 0.0
    %3130 = vmatpush1.msra.mxu0 %v491
    %3131 = vmatprep.subr.mxu0 0.0
    %3132 = vmatpush1.msra.mxu0 %v488
    %3133 = vmatprep.subr.mxu0 0.0
    %3134 = vmatpush1.msra.mxu0 %v485
    %3135 = vmatprep.subr.mxu0 0.0
    %3136 = vmatpush1.msra.mxu0 %v482
    %3137 = vmatprep.subr.mxu0 0.0
    %3138 = vmatpush1.msra.mxu0 %v479
    %3139 = vmatprep.subr.mxu0 0.0
    %3140 = vmatpush1.msra.mxu0 %v476
    %3141 = vmatprep.subr.mxu0 0.0
    %3142 = vmatpush2.msra.mxu0 0.0
    %3143 = vmatprep.subr.mxu0 0.0
    %3144 = vmatpush2.msra.mxu0 0.0
    %3145 = vmatprep.subr.mxu0 0.0
    %3146 = vmatpush2.msra.mxu0 0.0
    %3147 = vmatprep.subr.mxu0 0.0
    %3148 = vmatpush2.msra.mxu0 0.0
    %3149 = vmatprep.subr.mxu0 0.0
    %3150 = vmatpush2.msra.mxu0 0.0
    %3151 = vmatprep.subr.mxu0 0.0
    %3152 = vmatpush2.msra.mxu0 0.0
    %3153 = vmatprep.subr.mxu0 0.0
    %3154 = vmatpush2.msra.mxu0 0.0
    %3155 = vmatprep.subr.mxu0 0.0
    %3156 = vmatpush2.msra.mxu0 0.0
    %3157 = vmatprep.subr.mxu0 0.0
    %3158 = vmatpush2.msra.mxu0 0.0
    %3159 = vmatprep.subr.mxu0 0.0
    %3160 = vmatpush2.msra.mxu0 0.0
    %3161 = vmatprep.subr.mxu0 0.0
    %3162 = vmatpush2.msra.mxu0 0.0
    %3163 = vmatprep.subr.mxu0 0.0
    %3164 = vmatpush2.msra.mxu0 0.0
    %3165 = vmatprep.subr.mxu0 0.0
    %3166 = vmatpush2.msra.mxu0 0.0
    %3167 = vmatprep.subr.mxu0 0.0
    %3168 = vmatpush2.msra.mxu0 0.0
    %3169 = vmatprep.subr.mxu0 0.0
    %3170 = vmatpush2.msra.mxu0 0.0
    %3171 = vmatprep.subr.mxu0 0.0
    %3172 = vmatpush2.msra.mxu0 0.0
    %3173 = vmatprep.mubr.f32.mxu0 0.0
    %3174 = vmatmul.mubr.f32.gmra.mxu0 %v3032
    %v3175 = vpop.f32.mrf.mxu0
    %v3176 = vadd.f32 0.0, %v3175
    %v3177 = vpop.f32.mrf.mxu0
    %3178 = vdwg.mxu0
    %v3179 = vadd.f32 %v3035, %v3105
    %v3180 = vxor.u32 %v3179, 2147483648
    %v3181 = vmul.f32 %v3180, 1.442695
    %v3182 = vpow.pop %v3181
    %v3183 = vadd.f32 %v3182, 1.0
    %v3184 = vrcp.pop %v3183
    %v3185 = vmul.f32 1.0, %v3184
    %v3186 = vadd.f32 %v3036, %v3107
    %v3187 = vxor.u32 %v3186, 2147483648
    %v3188 = vmul.f32 %v3187, 1.442695
    %v3189 = vpow.pop %v3188
    %v3190 = vadd.f32 %v3189, 1.0
    %v3191 = vrcp.pop %v3190
    %v3192 = vmul.f32 1.0, %v3191
    %v3193 = vadd.f32 %v3176, %v686
    %v3194 = vmul.f32 %v3185, %v3193
    %v3195 = vadd.f32 %v3037, %v3194
    %v3196 = vtanh.pop %v3195
    %v3197 = vsub.f32 1.0, %v3192
    %v3198 = vmul.f32 %v3197, %v3196
    %v3199 = vmul.f32 %v3192, %v3032
    %v3200 = vadd.f32 %v3198, %v3199
    %v3201 = vstv %s3033
    %vm3202 = vcmp.lt.s32.totalorder %v3201, %v473
    %v3203 = vsel %vm3202, 1, 0
    %3204 = vset.pattern.permute.xlu0 0
    %3205 = vperm.xlu0 %3204, %v3203
    %v3206 = vpop.permute.xlu0 %3205
    %vm3207 = vcmp.eq.s32.totalorder %v3206, 1
    %v3208 = vsel %vm3207, %v3200, 0.0
    %s3209 = scalar_lea.vmem %s7, 112
    %3210 = vst [vmem:[%s3209] sm:$0xff] %v3208
    %v3211 = vsel %vm3207, %v3200, %v3032
    %s3212 = sadd.s32 %s27, 15
    %s3213 = scalar_lea.vmem [#allocation3], 360
    %v3214 = vld [vmem:[%s3213] sm:$0xff]
    %v3215 = vld [vmem:[%s3213 + $0x8] sm:$0xff]
    %v3216 = vld [vmem:[%s3213 + $0x10] sm:$0xff]
    %3217 = vmatprep.subr.mxu0 %v520
    %3218 = vmatpush1.msra.mxu0 %v519
    %3219 = vmatprep.subr.mxu0 %v517
    %3220 = vmatpush1.msra.mxu0 %v516
    %3221 = vmatprep.subr.mxu0 %v514
    %3222 = vmatpush1.msra.mxu0 %v513
    %3223 = vmatprep.subr.mxu0 %v511
    %3224 = vmatpush1.msra.mxu0 %v510
    %3225 = vmatprep.subr.mxu0 %v508
    %3226 = vmatpush1.msra.mxu0 %v507
    %3227 = vmatprep.subr.mxu0 %v505
    %3228 = vmatpush1.msra.mxu0 %v504
    %3229 = vmatprep.subr.mxu0 %v502
    %3230 = vmatpush1.msra.mxu0 %v501
    %3231 = vmatprep.subr.mxu0 %v499
    %3232 = vmatpush1.msra.mxu0 %v498
    %3233 = vmatprep.subr.mxu0 %v496
    %3234 = vmatpush1.msra.mxu0 %v495
    %3235 = vmatprep.subr.mxu0 %v493
    %3236 = vmatpush1.msra.mxu0 %v492
    %3237 = vmatprep.subr.mxu0 %v490
    %3238 = vmatpush1.msra.mxu0 %v489
    %3239 = vmatprep.subr.mxu0 %v487
    %3240 = vmatpush1.msra.mxu0 %v486
    %3241 = vmatprep.subr.mxu0 %v484
    %3242 = vmatpush1.msra.mxu0 %v483
    %3243 = vmatprep.subr.mxu0 %v481
    %3244 = vmatpush1.msra.mxu0 %v480
    %3245 = vmatprep.subr.mxu0 %v478
    %3246 = vmatpush1.msra.mxu0 %v477
    %3247 = vmatprep.subr.mxu0 %v475
    %3248 = vmatpush1.msra.mxu0 %v474
    %3249 = vmatprep.subr.mxu0 0.0
    %3250 = vmatpush2.msra.mxu0 0.0
    %3251 = vmatprep.subr.mxu0 0.0
    %3252 = vmatpush2.msra.mxu0 0.0
    %3253 = vmatprep.subr.mxu0 0.0
    %3254 = vmatpush2.msra.mxu0 0.0
    %3255 = vmatprep.subr.mxu0 0.0
    %3256 = vmatpush2.msra.mxu0 0.0
    %3257 = vmatprep.subr.mxu0 0.0
    %3258 = vmatpush2.msra.mxu0 0.0
    %3259 = vmatprep.subr.mxu0 0.0
    %3260 = vmatpush2.msra.mxu0 0.0
    %3261 = vmatprep.subr.mxu0 0.0
    %3262 = vmatpush2.msra.mxu0 0.0
    %3263 = vmatprep.subr.mxu0 0.0
    %3264 = vmatpush2.msra.mxu0 0.0
    %3265 = vmatprep.subr.mxu0 0.0
    %3266 = vmatpush2.msra.mxu0 0.0
    %3267 = vmatprep.subr.mxu0 0.0
    %3268 = vmatpush2.msra.mxu0 0.0
    %3269 = vmatprep.subr.mxu0 0.0
    %3270 = vmatpush2.msra.mxu0 0.0
    %3271 = vmatprep.subr.mxu0 0.0
    %3272 = vmatpush2.msra.mxu0 0.0
    %3273 = vmatprep.subr.mxu0 0.0
    %3274 = vmatpush2.msra.mxu0 0.0
    %3275 = vmatprep.subr.mxu0 0.0
    %3276 = vmatpush2.msra.mxu0 0.0
    %3277 = vmatprep.subr.mxu0 0.0
    %3278 = vmatpush2.msra.mxu0 0.0
    %3279 = vmatprep.subr.mxu0 0.0
    %3280 = vmatpush2.msra.mxu0 0.0
    %3281 = vmatprep.mubr.f32.mxu0 0.0
    %3282 = vmatmul.mubr.f32.gmra.mxu0 %v3211
    %v3283 = vpop.f32.mrf.mxu0
    %v3284 = vadd.f32 0.0, %v3283
    %v3285 = vpop.f32.mrf.mxu0
    %v3286 = vadd.f32 0.0, %v3285
    %3287 = vdwg.mxu0
    %3288 = vmatprep.subr.mxu0 0.0
    %3289 = vmatpush1.msra.mxu0 %v521
    %3290 = vmatprep.subr.mxu0 0.0
    %3291 = vmatpush1.msra.mxu0 %v518
    %3292 = vmatprep.subr.mxu0 0.0
    %3293 = vmatpush1.msra.mxu0 %v515
    %3294 = vmatprep.subr.mxu0 0.0
    %3295 = vmatpush1.msra.mxu0 %v512
    %3296 = vmatprep.subr.mxu0 0.0
    %3297 = vmatpush1.msra.mxu0 %v509
    %3298 = vmatprep.subr.mxu0 0.0
    %3299 = vmatpush1.msra.mxu0 %v506
    %3300 = vmatprep.subr.mxu0 0.0
    %3301 = vmatpush1.msra.mxu0 %v503
    %3302 = vmatprep.subr.mxu0 0.0
    %3303 = vmatpush1.msra.mxu0 %v500
    %3304 = vmatprep.subr.mxu0 0.0
    %3305 = vmatpush1.msra.mxu0 %v497
    %3306 = vmatprep.subr.mxu0 0.0
    %3307 = vmatpush1.msra.mxu0 %v494
    %3308 = vmatprep.subr.mxu0 0.0
    %3309 = vmatpush1.msra.mxu0 %v491
    %3310 = vmatprep.subr.mxu0 0.0
    %3311 = vmatpush1.msra.mxu0 %v488
    %3312 = vmatprep.subr.mxu0 0.0
    %3313 = vmatpush1.msra.mxu0 %v485
    %3314 = vmatprep.subr.mxu0 0.0
    %3315 = vmatpush1.msra.mxu0 %v482
    %3316 = vmatprep.subr.mxu0 0.0
    %3317 = vmatpush1.msra.mxu0 %v479
    %3318 = vmatprep.subr.mxu0 0.0
    %3319 = vmatpush1.msra.mxu0 %v476
    %3320 = vmatprep.subr.mxu0 0.0
    %3321 = vmatpush2.msra.mxu0 0.0
    %3322 = vmatprep.subr.mxu0 0.0
    %3323 = vmatpush2.msra.mxu0 0.0
    %3324 = vmatprep.subr.mxu0 0.0
    %3325 = vmatpush2.msra.mxu0 0.0
    %3326 = vmatprep.subr.mxu0 0.0
    %3327 = vmatpush2.msra.mxu0 0.0
    %3328 = vmatprep.subr.mxu0 0.0
    %3329 = vmatpush2.msra.mxu0 0.0
    %3330 = vmatprep.subr.mxu0 0.0
    %3331 = vmatpush2.msra.mxu0 0.0
    %3332 = vmatprep.subr.mxu0 0.0
    %3333 = vmatpush2.msra.mxu0 0.0
    %3334 = vmatprep.subr.mxu0 0.0
    %3335 = vmatpush2.msra.mxu0 0.0
    %3336 = vmatprep.subr.mxu0 0.0
    %3337 = vmatpush2.msra.mxu0 0.0
    %3338 = vmatprep.subr.mxu0 0.0
    %3339 = vmatpush2.msra.mxu0 0.0
    %3340 = vmatprep.subr.mxu0 0.0
    %3341 = vmatpush2.msra.mxu0 0.0
    %3342 = vmatprep.subr.mxu0 0.0
    %3343 = vmatpush2.msra.mxu0 0.0
    %3344 = vmatprep.subr.mxu0 0.0
    %3345 = vmatpush2.msra.mxu0 0.0
    %3346 = vmatprep.subr.mxu0 0.0
    %3347 = vmatpush2.msra.mxu0 0.0
    %3348 = vmatprep.subr.mxu0 0.0
    %3349 = vmatpush2.msra.mxu0 0.0
    %3350 = vmatprep.subr.mxu0 0.0
    %3351 = vmatpush2.msra.mxu0 0.0
    %3352 = vmatprep.mubr.f32.mxu0 0.0
    %3353 = vmatmul.mubr.f32.gmra.mxu0 %v3211
    %v3354 = vpop.f32.mrf.mxu0
    %v3355 = vadd.f32 0.0, %v3354
    %v3356 = vpop.f32.mrf.mxu0
    %3357 = vdwg.mxu0
    %v3358 = vadd.f32 %v3214, %v3284
    %v3359 = vxor.u32 %v3358, 2147483648
    %v3360 = vmul.f32 %v3359, 1.442695
    %v3361 = vpow.pop %v3360
    %v3362 = vadd.f32 %v3361, 1.0
    %v3363 = vrcp.pop %v3362
    %v3364 = vmul.f32 1.0, %v3363
    %v3365 = vadd.f32 %v3215, %v3286
    %v3366 = vxor.u32 %v3365, 2147483648
    %v3367 = vmul.f32 %v3366, 1.442695
    %v3368 = vpow.pop %v3367
    %v3369 = vadd.f32 %v3368, 1.0
    %v3370 = vrcp.pop %v3369
    %v3371 = vmul.f32 1.0, %v3370
    %v3372 = vadd.f32 %v3355, %v686
    %v3373 = vmul.f32 %v3364, %v3372
    %v3374 = vadd.f32 %v3216, %v3373
    %v3375 = vtanh.pop %v3374
    %v3376 = vsub.f32 1.0, %v3371
    %v3377 = vmul.f32 %v3376, %v3375
    %v3378 = vmul.f32 %v3371, %v3211
    %v3379 = vadd.f32 %v3377, %v3378
    %v3380 = vstv %s3212
    %vm3381 = vcmp.lt.s32.totalorder %v3380, %v473
    %v3382 = vsel %vm3381, 1, 0
    %3383 = vset.pattern.permute.xlu0 0
    %3384 = vperm.xlu0 %3383, %v3382
    %v3385 = vpop.permute.xlu0 %3384
    %vm3386 = vcmp.eq.s32.totalorder %v3385, 1
    %v3387 = vsel %vm3386, %v3379, 0.0
    %s3388 = scalar_lea.vmem %s7, 120
    %3389 = vst [vmem:[%s3388] sm:$0xff] %v3387
    %v3390 = vsel %vm3386, %v3379, %v3211
    %3391 = vst [vmem:[#allocation2] sm:$0xff] %v3390
  $region33: #{_lambda_.1} parent=0 // pred_fallthru
    _
  %p3392 = scmp.ge.s32.totalorder %s27, %s33
  // Predicated region
  $region34: #{_lambda_.1} parent=0 // pred_check
    %p3393 = pneg %p3392
  $region35: #{_lambda_.1} parent=0 // pred_check_branch
    %3395 = sbr.rel (%p3393) target = $region37
  $region36: #{_lambda_.1} parent=0 // pred_region
    %3396 = vst [vmem:[%s7] sm:$0xff] 0.0
    %3397 = vst [vmem:[%s7 + $0x8] sm:$0xff] 0.0
    %3398 = vst [vmem:[%s7 + $0x10] sm:$0xff] 0.0
    %3399 = vst [vmem:[%s7 + $0x18] sm:$0xff] 0.0
    %3400 = vst [vmem:[%s7 + $0x20] sm:$0xff] 0.0
    %3401 = vst [vmem:[%s7 + $0x28] sm:$0xff] 0.0
    %3402 = vst [vmem:[%s7 + $0x30] sm:$0xff] 0.0
    %3403 = vst [vmem:[%s7 + $0x38] sm:$0xff] 0.0
    %3404 = vst [vmem:[%s7 + $0x40] sm:$0xff] 0.0
    %3405 = vst [vmem:[%s7 + $0x48] sm:$0xff] 0.0
    %3406 = vst [vmem:[%s7 + $0x50] sm:$0xff] 0.0
    %3407 = vst [vmem:[%s7 + $0x58] sm:$0xff] 0.0
    %3408 = vst [vmem:[%s7 + $0x60] sm:$0xff] 0.0
    %3409 = vst [vmem:[%s7 + $0x68] sm:$0xff] 0.0
    %3410 = vst [vmem:[%s7 + $0x70] sm:$0xff] 0.0
    %3411 = vst [vmem:[%s7 + $0x78] sm:$0xff] 0.0
  $region37: #{_lambda_.1} parent=0 // pred_fallthru
    _
  %v3412 = vld [vmem:[#allocation2] sm:$0xff]
  %3413 = vst [vmem:[%s8] sm:$0xff] %v3412
  // Predicated region
  $region38: #{_lambda_.1} parent=0 // pred_check
    _
  $region39: #{_lambda_.1} parent=0 // pred_check_branch
    %3415 = sbr.rel (0) target = $region41
  $region40: #{_lambda_.1} parent=0 // pred_region
    _
  $region41: #{_lambda_.1} parent=0 // pred_fallthru
    _
  // Predicated region
  $region42: #{_lambda_.1} parent=0 // pred_check
    _
  $region43: #{_lambda_.1} parent=0 // pred_check_branch
    %3417 = sbr.rel (0) target = $region45
  $region44: #{_lambda_.1} parent=0 // pred_region
    _
  $region45: #{_lambda_.1} parent=0 // pred_fallthru
    _
  // Predicated region
  $region46: #{_lambda_.1} parent=0 // pred_check
    _
  $region47: #{_lambda_.1} parent=0 // pred_check_branch
    %3419 = sbr.rel (0) target = $region49
  $region48: #{_lambda_.1} parent=0 // pred_region
    _
  $region49: #{_lambda_.1} parent=0 // pred_fallthru
    _
  // Predicated region
  $region50: #{_lambda_.1} parent=0 // pred_check
    _
  $region51: #{_lambda_.1} parent=0 // pred_check_branch
    %3421 = sbr.rel (0) target = $region53
  $region52: #{_lambda_.1} parent=0 // pred_region
    _
  $region53: #{_lambda_.1} parent=0 // pred_fallthru
    _

</llo_original>
